<compile_context>
chip_gen: v5e
topology: v5e:2x2
jax: 0.10.0
libtpu: 0.0.40
codegen_flags: <defaults>
</compile_context>

<pallas_src>
import jax
import jax.numpy as jnp
from jax.experimental import pallas as pl
from jax.experimental.pallas import tpu as pltpu

# ---- model dimensions implied by the module ----
D = 100                   # embedding dim
KH = 5                    # conv kernel height
C = 64                    # conv out channels
L = 100                   # sequence length (fc expects 64*1*96 -> H_OUT = 96)
LP = 104                  # L padded to a sublane (8) multiple for aligned reshapes
H_OUT = L - KH + 1        # 96
F_IN = C * H_OUT          # 6144
HID = 50                  # fc hidden
HID_PAD = 128             # padded hidden (lane-dense)
NCLS = 6                  # output classes
NCLS_PAD = 128            # padded classes (lane-dense output store)
EPS = 1e-5                # BatchNorm eps
BT_MAX = 128              # max batch rows per grid step
GH = 8                    # conv rows flattened per store (8 * C = 512 lanes, unmasked)


def _round_up(x, m):
    return ((x + m - 1) // m) * m


def _conv_chunk_rows(bt):
    """Largest chunk (<=32 rows, multiple of 8) dividing bt — bounds the conv's f32
    intermediate to a few MiB regardless of the batch tile size."""
    for cand in (32, 24, 16, 8):
        if bt % cand == 0:
            return min(cand, bt)
    return bt


# ---------------- fused Pallas kernel ----------------

def fused_kernel(x_ref, wconv_ref, bconv_ref, scale_ref, shift_ref,
                 wfc_ref, bfc_ref, wout_ref, bout_ref, o_ref, flat_sc):
    """Fused conv + ReLU + BN(eval) + NCHW flatten + fc + out_layer + sigmoid.

    x_ref:     (bt, LP, D)          bf16 embedded sentences (L zero-padded to LP)
    wconv_ref: (D, KH*C)            bf16 tap-concatenated conv weight
    bconv_ref: (1, C)               f32 conv bias
    scale_ref: (1, C)               f32 gamma / sqrt(running_var + eps)
    shift_ref: (1, C)               f32 beta - running_mean * scale
    wfc_ref:   (F_IN, HID_PAD)      bf16, rows ordered h*C + c (matches flatten)
    bfc_ref:   (1, HID_PAD)         f32
    wout_ref:  (HID_PAD, NCLS_PAD)  bf16
    bout_ref:  (1, NCLS_PAD)        f32
    o_ref:     (bt, NCLS_PAD)       f32 (lane-dense, unmasked store)
    flat_sc:   (bt, F_IN)           bf16 scratch (flattened activations)
    """
    bt = x_ref.shape[0]
    cb = _conv_chunk_rows(bt)
    n_chunks = bt // cb

    def conv_flatten_chunk(row0):
        # --- Conv2d(1, C, (KH, D)) as ONE tap-concatenated matmul:
        #     (cb*LP, D) @ (D, KH*C); the 5 taps are combined afterwards with 4
        #     shifted slice+adds of the small f32 result (XLU/VPU work), instead of
        #     5 separate N=64 matmuls over 5 shifted copies of the big LHS.
        xc = x_ref[pl.ds(row0, cb), :, :]                        # (cb, LP, D) bf16
        m = jnp.dot(xc.reshape(cb * LP, D), wconv_ref[...],
                    preferred_element_type=jnp.float32)          # (cb*LP, KH*C) f32
        m3 = m.reshape(cb, LP, KH * C)
        acc = m3[:, 0:H_OUT, 0:C]
        for kh in range(1, KH):
            acc = acc + m3[:, kh:kh + H_OUT, kh * C:(kh + 1) * C]

        # bias + ReLU (module order), then BatchNorm2d (eval) as per-channel
        # scale/shift.  Dropout layers are identity at inference.
        y = jnp.maximum(acc + bconv_ref[...], 0.0)
        y = y * scale_ref[...] + shift_ref[...]
        yb = y.astype(jnp.bfloat16)                              # (cb, H_OUT, C)

        # --- flatten to flat index h*C + c, built GH rows at a time so every store
        #     is a 512-lane unmasked store straight from the live value.
        for h0 in range(0, H_OUT, GH):
            blk = jnp.concatenate([yb[:, h0 + g, :] for g in range(GH)], axis=-1)
            flat_sc[pl.ds(row0, cb), pl.ds(h0 * C, GH * C)] = blk

    if n_chunks == 1:
        conv_flatten_chunk(0)
    else:
        @pl.loop(0, n_chunks)
        def _(ci):
            conv_flatten_chunk(pl.multiple_of(ci * cb, 8))

    # ---- MLP head on the full batch tile: fc -> (Dropout = identity) -> out -> sigmoid
    hmid = jnp.dot(flat_sc[...], wfc_ref[...],
                   preferred_element_type=jnp.float32) + bfc_ref[...]
    logits = jnp.dot(hmid.astype(jnp.bfloat16), wout_ref[...],
                     preferred_element_type=jnp.float32) + bout_ref[...]
    o_ref[...] = jax.nn.sigmoid(logits)


# ---------------- wrapper ----------------

def _choose_bt(B):
    b8 = _round_up(B, 8)
    # At least 2 grid steps when the batch allows (v7x megacore); tile capped at 128.
    return min(BT_MAX, max(8, _round_up((b8 + 1) // 2, 8)))


def _vmem_limit_bytes(bt):
    cb = _conv_chunk_rows(bt)
    lane = 128
    persistent = (
        2 * bt * LP * lane * 2                    # x block (double-buffered, lane-padded)
        + 2 * bt * NCLS_PAD * 4                   # output block (double-buffered)
        + 2 * (LP * _round_up(KH * C, lane) * 2   # conv weight
               + F_IN * HID_PAD * 2               # fc weight
               + HID_PAD * NCLS_PAD * 2           # out weight
               + 6 * 8 * lane * 4)                # biases / BN vectors
        + bt * F_IN * 2                           # flat_sc scratch
    )
    transient = (
        cb * LP * _round_up(KH * C, lane) * 4     # conv matmul result (f32)
        + 3 * cb * H_OUT * lane * 4               # tap accumulator + slice temporaries
        + 2 * cb * H_OUT * lane * 2               # bf16 activations / concat temporaries
        + cb * LP * lane * 2                      # x chunk value
        + bt * F_IN * 2                           # flat value feeding the fc matmul
        + 4 * bt * HID_PAD * 4                    # hmid / logits temporaries
    )
    est = persistent + transient
    # 2x safety factor, floored at 32 MiB, capped under v7x's 64 MiB physical VMEM.
    return int(min(max(2 * est, 32 * 1024 * 1024), 56 * 1024 * 1024))


def tc_cnn_forward(sentences, p):
    """sentences: (B, 1, L) int32 token ids -> (B, 6) sigmoid probabilities."""
    B = sentences.shape[0]

    # TODO(synk): the embedding gather stays in XLA; for VMEM-sized vocabularies it
    # could be fused in-kernel (scalar-prefetched ids + resident table) to remove the
    # (B, L, D) HBM round trip.
    emb = jnp.take(p["emb"], sentences[:, 0, :], axis=0)        # (B, L, D) bf16

    bt = _choose_bt(B)
    Bp = _round_up(B, bt)
    emb = jnp.pad(emb, ((0, Bp - B), (0, LP - L), (0, 0)))      # (Bp, LP, D)
    grid = (Bp // bt,)

    flops = 2 * Bp * (LP * D * KH * C + F_IN * HID_PAD + HID_PAD * NCLS_PAD)
    bytes_accessed = (Bp * LP * D * 2 + D * KH * C * 2 + F_IN * HID_PAD * 2
                      + HID_PAD * NCLS_PAD * 2 + Bp * NCLS_PAD * 4
                      + (3 * C + HID_PAD + NCLS_PAD) * 4)

    out = pl.pallas_call(
        fused_kernel,
        out_shape=jax.ShapeDtypeStruct((Bp, NCLS_PAD), jnp.float32),
        grid_spec=pltpu.PrefetchScalarGridSpec(
            num_scalar_prefetch=0,
            grid=grid,
            in_specs=[
                pl.BlockSpec((bt, LP, D), lambda i: (i, 0, 0)),
                # Remaining operands are grid-invariant (fetched once).  Default
                # double-buffering costs ~1.7 MiB extra for wfc; left at default.
                pl.BlockSpec((D, KH * C), lambda i: (0, 0)),
                pl.BlockSpec((1, C), lambda i: (0, 0)),
                pl.BlockSpec((1, C), lambda i: (0, 0)),
                pl.BlockSpec((1, C), lambda i: (0, 0)),
                pl.BlockSpec((F_IN, HID_PAD), lambda i: (0, 0)),
                pl.BlockSpec((1, HID_PAD), lambda i: (0, 0)),
                pl.BlockSpec((HID_PAD, NCLS_PAD), lambda i: (0, 0)),
                pl.BlockSpec((1, NCLS_PAD), lambda i: (0, 0)),
            ],
            out_specs=pl.BlockSpec((bt, NCLS_PAD), lambda i: (i, 0)),
            scratch_shapes=[
                pltpu.VMEM((bt, F_IN), jnp.bfloat16),
            ],
        ),
        compiler_params=pltpu.CompilerParams(
            dimension_semantics=("parallel",),
            vmem_limit_bytes=_vmem_limit_bytes(bt),
        ),
        cost_estimate=pl.CostEstimate(
            flops=flops,
            transcendentals=Bp * NCLS_PAD,
            bytes_accessed=bytes_accessed,
        ),
    )(emb, p["w_conv"], p["b_conv"], p["bn_scale"], p["bn_shift"],
      p["w_fc"], p["b_fc"], p["w_out"], p["b_out"])

    return out[:B, :NCLS]


# ---------------- parameter construction (PyTorch layouts) & packing ----------------

def init_torch_params(key, vocab_size):
    """Parameters in PyTorch-native layouts (deterministic, for reference & packing)."""
    ks = jax.random.split(key, 8)
    return dict(
        emb=jax.random.normal(ks[0], (vocab_size, D), jnp.float32) * 0.1,   # Embedding.weight
        conv_w=jax.random.normal(ks[1], (C, 1, KH, D), jnp.float32) * 0.05, # Conv2d.weight
        conv_b=jax.random.normal(ks[2], (C,), jnp.float32) * 0.01,
        bn_gamma=1.0 + 0.1 * jax.random.normal(ks[3], (C,), jnp.float32),
        bn_beta=0.1 * jax.random.normal(ks[4], (C,), jnp.float32),
        bn_mean=jnp.zeros((C,), jnp.float32),                               # running stats (eval)
        bn_var=jnp.ones((C,), jnp.float32),
        fc_w=jax.random.normal(ks[5], (HID, F_IN), jnp.float32) * 0.01,     # Linear(6144, 50)
        fc_b=jnp.zeros((HID,), jnp.float32),
        out_w=jax.random.normal(ks[6], (NCLS, HID), jnp.float32) * 0.1,     # Linear(50, 6)
        out_b=0.01 * jax.random.normal(ks[7], (NCLS,), jnp.float32),
    )


def pack_params(tp):
    """Pack PyTorch-layout params into kernel layouts (bf16 MXU operands, padded head)."""
    scale = tp["bn_gamma"] / jnp.sqrt(tp["bn_var"] + EPS)
    shift = tp["bn_beta"] - tp["bn_mean"] * scale
    # Conv2d weight (C, 1, KH, D) -> tap-concatenated (D, KH*C):
    # w_conv[d, kh*C + c] = conv_w[c, 0, kh, d].
    w_conv = (jnp.transpose(tp["conv_w"][:, 0], (2, 1, 0))
              .reshape(D, KH * C).astype(jnp.bfloat16))
    # fc weight (HID, F_IN) with input index c*H_OUT + h (NCHW flatten) ->
    # (F_IN, HID_PAD) with row index h*C + c (kernel flatten order), zero-padded cols.
    w_fc = tp["fc_w"].T.reshape(C, H_OUT, HID).transpose(1, 0, 2).reshape(F_IN, HID)
    w_fc = jnp.pad(w_fc, ((0, 0), (0, HID_PAD - HID))).astype(jnp.bfloat16)
    b_fc = jnp.pad(tp["fc_b"], (0, HID_PAD - HID)).reshape(1, HID_PAD)
    w_out = jnp.pad(tp["out_w"].T, ((0, HID_PAD - HID), (0, NCLS_PAD - NCLS)))
    b_out = jnp.pad(tp["out_b"], (0, NCLS_PAD - NCLS)).reshape(1, NCLS_PAD)
    return dict(
        emb=tp["emb"].astype(jnp.bfloat16),
        w_conv=w_conv,
        b_conv=tp["conv_b"].reshape(1, C).astype(jnp.float32),
        bn_scale=scale.reshape(1, C).astype(jnp.float32),
        bn_shift=shift.reshape(1, C).astype(jnp.float32),
        w_fc=w_fc, b_fc=b_fc.astype(jnp.float32),
        w_out=w_out.astype(jnp.bfloat16), b_out=b_out.astype(jnp.float32),
    )


# ---------------- pure-JAX reference (f32, PyTorch semantics) ----------------

def reference_forward(sentences, tp):
    B = sentences.shape[0]
    emb = jnp.take(tp["emb"], sentences[:, 0, :], axis=0)       # (B, L, D)
    conv = jnp.zeros((B, H_OUT, C), jnp.float32)
    for kh in range(KH):
        conv = conv + jnp.einsum('bld,cd->blc',
                                 emb[:, kh:kh + H_OUT, :], tp["conv_w"][:, 0, kh, :])
    conv = conv + tp["conv_b"][None, None, :]
    conv = jnp.maximum(conv, 0.0)                               # ReLU (Dropout = id)
    scale = tp["bn_gamma"] / jnp.sqrt(tp["bn_var"] + EPS)
    shift = tp["bn_beta"] - tp["bn_mean"] * scale
    conv = conv * scale + shift                                 # BN eval
    flat = jnp.transpose(conv, (0, 2, 1)).reshape(B, F_IN)      # NCHW flatten
    h = flat @ tp["fc_w"].T + tp["fc_b"]                        # fc (Dropout = id)
    logits = h @ tp["out_w"].T + tp["out_b"]
    return jax.nn.sigmoid(logits)


if __name__ == "__main__":
    key = jax.random.PRNGKey(0)
    vocab_size = 200
    batch = 8

    k_param, k_ids = jax.random.split(key)
    torch_params = init_torch_params(k_param, vocab_size)
    packed = pack_params(torch_params)
    sentences = jax.random.randint(k_ids, (batch, 1, L), 0, vocab_size, dtype=jnp.int32)

    out = jax.jit(tc_cnn_forward)(sentences, packed)
    out = jax.block_until_ready(out)
    assert out.shape == (batch, NCLS), out.shape
    assert bool(jnp.all((out >= 0.0) & (out <= 1.0)))

    ref = reference_forward(sentences, torch_params)
    max_err = float(jnp.max(jnp.abs(out - ref)))
    assert max_err < 2e-2, f"max abs err vs f32 reference: {max_err}"

    print("KERNEL_OK")
</pallas_src>

<mosaic_0001>
module attributes {stable_mosaic.version = 11 : i64} {
  func.func @fused_kernel(%arg0: i32, %arg1: memref<8x104x100xbf16, #tpu.memory_space<vmem>>, %arg2: memref<100x320xbf16, #tpu.memory_space<vmem>>, %arg3: memref<1x64xf32, #tpu.memory_space<vmem>>, %arg4: memref<1x64xf32, #tpu.memory_space<vmem>>, %arg5: memref<1x64xf32, #tpu.memory_space<vmem>>, %arg6: memref<6144x128xbf16, #tpu.memory_space<vmem>>, %arg7: memref<1x128xf32, #tpu.memory_space<vmem>>, %arg8: memref<128x128xbf16, #tpu.memory_space<vmem>>, %arg9: memref<1x128xf32, #tpu.memory_space<vmem>>, %arg10: memref<8x128xf32, #tpu.memory_space<vmem>>, %arg11: memref<8x6144xbf16, #tpu.memory_space<vmem>>) attributes {dimension_semantics = [#tpu.dimension_semantics<parallel>], iteration_bounds = array<i64: 1>, scalar_prefetch = 0 : i64, scratch_operands = 1 : i64, tpu.core_type = #tpu.core_type<tc>, window_params = [{transform_indices = @transform_0, window_bounds = array<i64: 8, 104, 100>}, {pipeline_mode = #tpu.pipeline_mode<synchronous>, transform_indices = @transform_1, window_bounds = array<i64: 100, 320>}, {pipeline_mode = #tpu.pipeline_mode<synchronous>, transform_indices = @transform_2, window_bounds = array<i64: 1, 64>}, {pipeline_mode = #tpu.pipeline_mode<synchronous>, transform_indices = @transform_3, window_bounds = array<i64: 1, 64>}, {pipeline_mode = #tpu.pipeline_mode<synchronous>, transform_indices = @transform_4, window_bounds = array<i64: 1, 64>}, {pipeline_mode = #tpu.pipeline_mode<synchronous>, transform_indices = @transform_5, window_bounds = array<i64: 6144, 128>}, {pipeline_mode = #tpu.pipeline_mode<synchronous>, transform_indices = @transform_6, window_bounds = array<i64: 1, 128>}, {pipeline_mode = #tpu.pipeline_mode<synchronous>, transform_indices = @transform_7, window_bounds = array<i64: 128, 128>}, {pipeline_mode = #tpu.pipeline_mode<synchronous>, transform_indices = @transform_8, window_bounds = array<i64: 1, 128>}, {transform_indices = @transform_9, window_bounds = array<i64: 8, 128>}]} {
    %c0 = arith.constant 0 : index
    %c0_0 = arith.constant 0 : index
    %c0_1 = arith.constant 0 : index
    %0 = vector.load %arg1[%c0, %c0_0, %c0_1] : memref<8x104x100xbf16, #tpu.memory_space<vmem>>, vector<8x104x100xbf16>
    %1 = vector.shape_cast %0 : vector<8x104x100xbf16> to vector<832x100xbf16>
    %c0_2 = arith.constant 0 : index
    %c0_3 = arith.constant 0 : index
    %2 = vector.load %arg2[%c0_2, %c0_3] : memref<100x320xbf16, #tpu.memory_space<vmem>>, vector<100x320xbf16>
    %cst = arith.constant dense<0.000000e+00> : vector<832x320xf32>
    %3 = tpu.matmul %1, %2, %cst {dimension_numbers = #tpu.dot_dimension_numbers<[1], [0], [0], [1], [0, 0, 1, 1], [], []>} : vector<832x100xbf16>, vector<100x320xbf16>, vector<832x320xf32> -> vector<832x320xf32>
    %4 = vector.shape_cast %3 : vector<832x320xf32> to vector<8x104x320xf32>
    %5 = vector.extract_strided_slice %4 {offsets = [0, 0, 0], sizes = [8, 96, 64], strides = [1, 1, 1]} : vector<8x104x320xf32> to vector<8x96x64xf32>
    %6 = vector.extract_strided_slice %4 {offsets = [0, 1, 64], sizes = [8, 96, 64], strides = [1, 1, 1]} : vector<8x104x320xf32> to vector<8x96x64xf32>
    %7 = arith.addf %5, %6 : vector<8x96x64xf32>
    %8 = vector.extract_strided_slice %4 {offsets = [0, 2, 128], sizes = [8, 96, 64], strides = [1, 1, 1]} : vector<8x104x320xf32> to vector<8x96x64xf32>
    %9 = arith.addf %7, %8 : vector<8x96x64xf32>
    %10 = vector.extract_strided_slice %4 {offsets = [0, 3, 192], sizes = [8, 96, 64], strides = [1, 1, 1]} : vector<8x104x320xf32> to vector<8x96x64xf32>
    %11 = arith.addf %9, %10 : vector<8x96x64xf32>
    %12 = vector.extract_strided_slice %4 {offsets = [0, 4, 256], sizes = [8, 96, 64], strides = [1, 1, 1]} : vector<8x104x320xf32> to vector<8x96x64xf32>
    %13 = arith.addf %11, %12 : vector<8x96x64xf32>
    %c0_4 = arith.constant 0 : index
    %c0_5 = arith.constant 0 : index
    %14 = vector.load %arg3[%c0_4, %c0_5] : memref<1x64xf32, #tpu.memory_space<vmem>>, vector<1x64xf32>
    %15 = vector.shape_cast %14 : vector<1x64xf32> to vector<1x1x64xf32>
    %16 = vector.broadcast %15 : vector<1x1x64xf32> to vector<8x96x64xf32>
    %17 = arith.addf %13, %16 : vector<8x96x64xf32>
    %cst_6 = arith.constant 0.000000e+00 : f32
    %18 = vector.broadcast %cst_6 : f32 to vector<8x96x64xf32>
    %19 = arith.maximumf %17, %18 : vector<8x96x64xf32>
    %c0_7 = arith.constant 0 : index
    %c0_8 = arith.constant 0 : index
    %20 = vector.load %arg4[%c0_7, %c0_8] : memref<1x64xf32, #tpu.memory_space<vmem>>, vector<1x64xf32>
    %21 = vector.shape_cast %20 : vector<1x64xf32> to vector<1x1x64xf32>
    %22 = vector.broadcast %21 : vector<1x1x64xf32> to vector<8x96x64xf32>
    %23 = arith.mulf %19, %22 : vector<8x96x64xf32>
    %c0_9 = arith.constant 0 : index
    %c0_10 = arith.constant 0 : index
    %24 = vector.load %arg5[%c0_9, %c0_10] : memref<1x64xf32, #tpu.memory_space<vmem>>, vector<1x64xf32>
    %25 = vector.shape_cast %24 : vector<1x64xf32> to vector<1x1x64xf32>
    %26 = vector.broadcast %25 : vector<1x1x64xf32> to vector<8x96x64xf32>
    %27 = arith.addf %23, %26 : vector<8x96x64xf32>
    %28 = arith.truncf %27 : vector<8x96x64xf32> to vector<8x96x64xbf16>
    %29 = vector.extract_strided_slice %28 {offsets = [0, 0, 0], sizes = [8, 1, 64], strides = [1, 1, 1]} : vector<8x96x64xbf16> to vector<8x1x64xbf16>
    %30 = vector.shape_cast %29 : vector<8x1x64xbf16> to vector<8x64xbf16>
    %31 = vector.extract_strided_slice %28 {offsets = [0, 1, 0], sizes = [8, 1, 64], strides = [1, 1, 1]} : vector<8x96x64xbf16> to vector<8x1x64xbf16>
    %32 = vector.shape_cast %31 : vector<8x1x64xbf16> to vector<8x64xbf16>
    %33 = vector.extract_strided_slice %28 {offsets = [0, 2, 0], sizes = [8, 1, 64], strides = [1, 1, 1]} : vector<8x96x64xbf16> to vector<8x1x64xbf16>
    %34 = vector.shape_cast %33 : vector<8x1x64xbf16> to vector<8x64xbf16>
    %35 = vector.extract_strided_slice %28 {offsets = [0, 3, 0], sizes = [8, 1, 64], strides = [1, 1, 1]} : vector<8x96x64xbf16> to vector<8x1x64xbf16>
    %36 = vector.shape_cast %35 : vector<8x1x64xbf16> to vector<8x64xbf16>
    %37 = vector.extract_strided_slice %28 {offsets = [0, 4, 0], sizes = [8, 1, 64], strides = [1, 1, 1]} : vector<8x96x64xbf16> to vector<8x1x64xbf16>
    %38 = vector.shape_cast %37 : vector<8x1x64xbf16> to vector<8x64xbf16>
    %39 = vector.extract_strided_slice %28 {offsets = [0, 5, 0], sizes = [8, 1, 64], strides = [1, 1, 1]} : vector<8x96x64xbf16> to vector<8x1x64xbf16>
    %40 = vector.shape_cast %39 : vector<8x1x64xbf16> to vector<8x64xbf16>
    %41 = vector.extract_strided_slice %28 {offsets = [0, 6, 0], sizes = [8, 1, 64], strides = [1, 1, 1]} : vector<8x96x64xbf16> to vector<8x1x64xbf16>
    %42 = vector.shape_cast %41 : vector<8x1x64xbf16> to vector<8x64xbf16>
    %43 = vector.extract_strided_slice %28 {offsets = [0, 7, 0], sizes = [8, 1, 64], strides = [1, 1, 1]} : vector<8x96x64xbf16> to vector<8x1x64xbf16>
    %44 = vector.shape_cast %43 : vector<8x1x64xbf16> to vector<8x64xbf16>
    %45 = tpu.concatenate %30, %32, %34, %36, %38, %40, %42, %44 in 1 : vector<8x64xbf16>, vector<8x64xbf16>, vector<8x64xbf16>, vector<8x64xbf16>, vector<8x64xbf16>, vector<8x64xbf16>, vector<8x64xbf16>, vector<8x64xbf16> -> vector<8x512xbf16>
    %c0_11 = arith.constant 0 : index
    %c0_12 = arith.constant 0 : index
    %46 = vector.load %arg11[%c0_11, %c0_12] : memref<8x6144xbf16, #tpu.memory_space<vmem>>, vector<8x512xbf16>
    tpu.vector_store %arg11[%c0_11, %c0_12], %45 {strides = array<i32>} : memref<8x6144xbf16, #tpu.memory_space<vmem>>, vector<8x512xbf16>,
    %47 = vector.extract_strided_slice %28 {offsets = [0, 8, 0], sizes = [8, 1, 64], strides = [1, 1, 1]} : vector<8x96x64xbf16> to vector<8x1x64xbf16>
    %48 = vector.shape_cast %47 : vector<8x1x64xbf16> to vector<8x64xbf16>
    %49 = vector.extract_strided_slice %28 {offsets = [0, 9, 0], sizes = [8, 1, 64], strides = [1, 1, 1]} : vector<8x96x64xbf16> to vector<8x1x64xbf16>
    %50 = vector.shape_cast %49 : vector<8x1x64xbf16> to vector<8x64xbf16>
    %51 = vector.extract_strided_slice %28 {offsets = [0, 10, 0], sizes = [8, 1, 64], strides = [1, 1, 1]} : vector<8x96x64xbf16> to vector<8x1x64xbf16>
    %52 = vector.shape_cast %51 : vector<8x1x64xbf16> to vector<8x64xbf16>
    %53 = vector.extract_strided_slice %28 {offsets = [0, 11, 0], sizes = [8, 1, 64], strides = [1, 1, 1]} : vector<8x96x64xbf16> to vector<8x1x64xbf16>
    %54 = vector.shape_cast %53 : vector<8x1x64xbf16> to vector<8x64xbf16>
    %55 = vector.extract_strided_slice %28 {offsets = [0, 12, 0], sizes = [8, 1, 64], strides = [1, 1, 1]} : vector<8x96x64xbf16> to vector<8x1x64xbf16>
    %56 = vector.shape_cast %55 : vector<8x1x64xbf16> to vector<8x64xbf16>
    %57 = vector.extract_strided_slice %28 {offsets = [0, 13, 0], sizes = [8, 1, 64], strides = [1, 1, 1]} : vector<8x96x64xbf16> to vector<8x1x64xbf16>
    %58 = vector.shape_cast %57 : vector<8x1x64xbf16> to vector<8x64xbf16>
    %59 = vector.extract_strided_slice %28 {offsets = [0, 14, 0], sizes = [8, 1, 64], strides = [1, 1, 1]} : vector<8x96x64xbf16> to vector<8x1x64xbf16>
    %60 = vector.shape_cast %59 : vector<8x1x64xbf16> to vector<8x64xbf16>
    %61 = vector.extract_strided_slice %28 {offsets = [0, 15, 0], sizes = [8, 1, 64], strides = [1, 1, 1]} : vector<8x96x64xbf16> to vector<8x1x64xbf16>
    %62 = vector.shape_cast %61 : vector<8x1x64xbf16> to vector<8x64xbf16>
    %63 = tpu.concatenate %48, %50, %52, %54, %56, %58, %60, %62 in 1 : vector<8x64xbf16>, vector<8x64xbf16>, vector<8x64xbf16>, vector<8x64xbf16>, vector<8x64xbf16>, vector<8x64xbf16>, vector<8x64xbf16>, vector<8x64xbf16> -> vector<8x512xbf16>
    %c0_13 = arith.constant 0 : index
    %c512 = arith.constant 512 : index
    %64 = vector.load %arg11[%c0_13, %c512] : memref<8x6144xbf16, #tpu.memory_space<vmem>>, vector<8x512xbf16>
    tpu.vector_store %arg11[%c0_13, %c512], %63 {strides = array<i32>} : memref<8x6144xbf16, #tpu.memory_space<vmem>>, vector<8x512xbf16>,
    %65 = vector.extract_strided_slice %28 {offsets = [0, 16, 0], sizes = [8, 1, 64], strides = [1, 1, 1]} : vector<8x96x64xbf16> to vector<8x1x64xbf16>
    %66 = vector.shape_cast %65 : vector<8x1x64xbf16> to vector<8x64xbf16>
    %67 = vector.extract_strided_slice %28 {offsets = [0, 17, 0], sizes = [8, 1, 64], strides = [1, 1, 1]} : vector<8x96x64xbf16> to vector<8x1x64xbf16>
    %68 = vector.shape_cast %67 : vector<8x1x64xbf16> to vector<8x64xbf16>
    %69 = vector.extract_strided_slice %28 {offsets = [0, 18, 0], sizes = [8, 1, 64], strides = [1, 1, 1]} : vector<8x96x64xbf16> to vector<8x1x64xbf16>
    %70 = vector.shape_cast %69 : vector<8x1x64xbf16> to vector<8x64xbf16>
    %71 = vector.extract_strided_slice %28 {offsets = [0, 19, 0], sizes = [8, 1, 64], strides = [1, 1, 1]} : vector<8x96x64xbf16> to vector<8x1x64xbf16>
    %72 = vector.shape_cast %71 : vector<8x1x64xbf16> to vector<8x64xbf16>
    %73 = vector.extract_strided_slice %28 {offsets = [0, 20, 0], sizes = [8, 1, 64], strides = [1, 1, 1]} : vector<8x96x64xbf16> to vector<8x1x64xbf16>
    %74 = vector.shape_cast %73 : vector<8x1x64xbf16> to vector<8x64xbf16>
    %75 = vector.extract_strided_slice %28 {offsets = [0, 21, 0], sizes = [8, 1, 64], strides = [1, 1, 1]} : vector<8x96x64xbf16> to vector<8x1x64xbf16>
    %76 = vector.shape_cast %75 : vector<8x1x64xbf16> to vector<8x64xbf16>
    %77 = vector.extract_strided_slice %28 {offsets = [0, 22, 0], sizes = [8, 1, 64], strides = [1, 1, 1]} : vector<8x96x64xbf16> to vector<8x1x64xbf16>
    %78 = vector.shape_cast %77 : vector<8x1x64xbf16> to vector<8x64xbf16>
    %79 = vector.extract_strided_slice %28 {offsets = [0, 23, 0], sizes = [8, 1, 64], strides = [1, 1, 1]} : vector<8x96x64xbf16> to vector<8x1x64xbf16>
    %80 = vector.shape_cast %79 : vector<8x1x64xbf16> to vector<8x64xbf16>
    %81 = tpu.concatenate %66, %68, %70, %72, %74, %76, %78, %80 in 1 : vector<8x64xbf16>, vector<8x64xbf16>, vector<8x64xbf16>, vector<8x64xbf16>, vector<8x64xbf16>, vector<8x64xbf16>, vector<8x64xbf16>, vector<8x64xbf16> -> vector<8x512xbf16>
    %c0_14 = arith.constant 0 : index
    %c1024 = arith.constant 1024 : index
    %82 = vector.load %arg11[%c0_14, %c1024] : memref<8x6144xbf16, #tpu.memory_space<vmem>>, vector<8x512xbf16>
    tpu.vector_store %arg11[%c0_14, %c1024], %81 {strides = array<i32>} : memref<8x6144xbf16, #tpu.memory_space<vmem>>, vector<8x512xbf16>,
    %83 = vector.extract_strided_slice %28 {offsets = [0, 24, 0], sizes = [8, 1, 64], strides = [1, 1, 1]} : vector<8x96x64xbf16> to vector<8x1x64xbf16>
    %84 = vector.shape_cast %83 : vector<8x1x64xbf16> to vector<8x64xbf16>
    %85 = vector.extract_strided_slice %28 {offsets = [0, 25, 0], sizes = [8, 1, 64], strides = [1, 1, 1]} : vector<8x96x64xbf16> to vector<8x1x64xbf16>
    %86 = vector.shape_cast %85 : vector<8x1x64xbf16> to vector<8x64xbf16>
    %87 = vector.extract_strided_slice %28 {offsets = [0, 26, 0], sizes = [8, 1, 64], strides = [1, 1, 1]} : vector<8x96x64xbf16> to vector<8x1x64xbf16>
    %88 = vector.shape_cast %87 : vector<8x1x64xbf16> to vector<8x64xbf16>
    %89 = vector.extract_strided_slice %28 {offsets = [0, 27, 0], sizes = [8, 1, 64], strides = [1, 1, 1]} : vector<8x96x64xbf16> to vector<8x1x64xbf16>
    %90 = vector.shape_cast %89 : vector<8x1x64xbf16> to vector<8x64xbf16>
    %91 = vector.extract_strided_slice %28 {offsets = [0, 28, 0], sizes = [8, 1, 64], strides = [1, 1, 1]} : vector<8x96x64xbf16> to vector<8x1x64xbf16>
    %92 = vector.shape_cast %91 : vector<8x1x64xbf16> to vector<8x64xbf16>
    %93 = vector.extract_strided_slice %28 {offsets = [0, 29, 0], sizes = [8, 1, 64], strides = [1, 1, 1]} : vector<8x96x64xbf16> to vector<8x1x64xbf16>
    %94 = vector.shape_cast %93 : vector<8x1x64xbf16> to vector<8x64xbf16>
    %95 = vector.extract_strided_slice %28 {offsets = [0, 30, 0], sizes = [8, 1, 64], strides = [1, 1, 1]} : vector<8x96x64xbf16> to vector<8x1x64xbf16>
    %96 = vector.shape_cast %95 : vector<8x1x64xbf16> to vector<8x64xbf16>
    %97 = vector.extract_strided_slice %28 {offsets = [0, 31, 0], sizes = [8, 1, 64], strides = [1, 1, 1]} : vector<8x96x64xbf16> to vector<8x1x64xbf16>
    %98 = vector.shape_cast %97 : vector<8x1x64xbf16> to vector<8x64xbf16>
    %99 = tpu.concatenate %84, %86, %88, %90, %92, %94, %96, %98 in 1 : vector<8x64xbf16>, vector<8x64xbf16>, vector<8x64xbf16>, vector<8x64xbf16>, vector<8x64xbf16>, vector<8x64xbf16>, vector<8x64xbf16>, vector<8x64xbf16> -> vector<8x512xbf16>
    %c0_15 = arith.constant 0 : index
    %c1536 = arith.constant 1536 : index
    %100 = vector.load %arg11[%c0_15, %c1536] : memref<8x6144xbf16, #tpu.memory_space<vmem>>, vector<8x512xbf16>
    tpu.vector_store %arg11[%c0_15, %c1536], %99 {strides = array<i32>} : memref<8x6144xbf16, #tpu.memory_space<vmem>>, vector<8x512xbf16>,
    %101 = vector.extract_strided_slice %28 {offsets = [0, 32, 0], sizes = [8, 1, 64], strides = [1, 1, 1]} : vector<8x96x64xbf16> to vector<8x1x64xbf16>
    %102 = vector.shape_cast %101 : vector<8x1x64xbf16> to vector<8x64xbf16>
    %103 = vector.extract_strided_slice %28 {offsets = [0, 33, 0], sizes = [8, 1, 64], strides = [1, 1, 1]} : vector<8x96x64xbf16> to vector<8x1x64xbf16>
    %104 = vector.shape_cast %103 : vector<8x1x64xbf16> to vector<8x64xbf16>
    %105 = vector.extract_strided_slice %28 {offsets = [0, 34, 0], sizes = [8, 1, 64], strides = [1, 1, 1]} : vector<8x96x64xbf16> to vector<8x1x64xbf16>
    %106 = vector.shape_cast %105 : vector<8x1x64xbf16> to vector<8x64xbf16>
    %107 = vector.extract_strided_slice %28 {offsets = [0, 35, 0], sizes = [8, 1, 64], strides = [1, 1, 1]} : vector<8x96x64xbf16> to vector<8x1x64xbf16>
    %108 = vector.shape_cast %107 : vector<8x1x64xbf16> to vector<8x64xbf16>
    %109 = vector.extract_strided_slice %28 {offsets = [0, 36, 0], sizes = [8, 1, 64], strides = [1, 1, 1]} : vector<8x96x64xbf16> to vector<8x1x64xbf16>
    %110 = vector.shape_cast %109 : vector<8x1x64xbf16> to vector<8x64xbf16>
    %111 = vector.extract_strided_slice %28 {offsets = [0, 37, 0], sizes = [8, 1, 64], strides = [1, 1, 1]} : vector<8x96x64xbf16> to vector<8x1x64xbf16>
    %112 = vector.shape_cast %111 : vector<8x1x64xbf16> to vector<8x64xbf16>
    %113 = vector.extract_strided_slice %28 {offsets = [0, 38, 0], sizes = [8, 1, 64], strides = [1, 1, 1]} : vector<8x96x64xbf16> to vector<8x1x64xbf16>
    %114 = vector.shape_cast %113 : vector<8x1x64xbf16> to vector<8x64xbf16>
    %115 = vector.extract_strided_slice %28 {offsets = [0, 39, 0], sizes = [8, 1, 64], strides = [1, 1, 1]} : vector<8x96x64xbf16> to vector<8x1x64xbf16>
    %116 = vector.shape_cast %115 : vector<8x1x64xbf16> to vector<8x64xbf16>
    %117 = tpu.concatenate %102, %104, %106, %108, %110, %112, %114, %116 in 1 : vector<8x64xbf16>, vector<8x64xbf16>, vector<8x64xbf16>, vector<8x64xbf16>, vector<8x64xbf16>, vector<8x64xbf16>, vector<8x64xbf16>, vector<8x64xbf16> -> vector<8x512xbf16>
    %c0_16 = arith.constant 0 : index
    %c2048 = arith.constant 2048 : index
    %118 = vector.load %arg11[%c0_16, %c2048] : memref<8x6144xbf16, #tpu.memory_space<vmem>>, vector<8x512xbf16>
    tpu.vector_store %arg11[%c0_16, %c2048], %117 {strides = array<i32>} : memref<8x6144xbf16, #tpu.memory_space<vmem>>, vector<8x512xbf16>,
    %119 = vector.extract_strided_slice %28 {offsets = [0, 40, 0], sizes = [8, 1, 64], strides = [1, 1, 1]} : vector<8x96x64xbf16> to vector<8x1x64xbf16>
    %120 = vector.shape_cast %119 : vector<8x1x64xbf16> to vector<8x64xbf16>
    %121 = vector.extract_strided_slice %28 {offsets = [0, 41, 0], sizes = [8, 1, 64], strides = [1, 1, 1]} : vector<8x96x64xbf16> to vector<8x1x64xbf16>
    %122 = vector.shape_cast %121 : vector<8x1x64xbf16> to vector<8x64xbf16>
    %123 = vector.extract_strided_slice %28 {offsets = [0, 42, 0], sizes = [8, 1, 64], strides = [1, 1, 1]} : vector<8x96x64xbf16> to vector<8x1x64xbf16>
    %124 = vector.shape_cast %123 : vector<8x1x64xbf16> to vector<8x64xbf16>
    %125 = vector.extract_strided_slice %28 {offsets = [0, 43, 0], sizes = [8, 1, 64], strides = [1, 1, 1]} : vector<8x96x64xbf16> to vector<8x1x64xbf16>
    %126 = vector.shape_cast %125 : vector<8x1x64xbf16> to vector<8x64xbf16>
    %127 = vector.extract_strided_slice %28 {offsets = [0, 44, 0], sizes = [8, 1, 64], strides = [1, 1, 1]} : vector<8x96x64xbf16> to vector<8x1x64xbf16>
    %128 = vector.shape_cast %127 : vector<8x1x64xbf16> to vector<8x64xbf16>
    %129 = vector.extract_strided_slice %28 {offsets = [0, 45, 0], sizes = [8, 1, 64], strides = [1, 1, 1]} : vector<8x96x64xbf16> to vector<8x1x64xbf16>
    %130 = vector.shape_cast %129 : vector<8x1x64xbf16> to vector<8x64xbf16>
    %131 = vector.extract_strided_slice %28 {offsets = [0, 46, 0], sizes = [8, 1, 64], strides = [1, 1, 1]} : vector<8x96x64xbf16> to vector<8x1x64xbf16>
    %132 = vector.shape_cast %131 : vector<8x1x64xbf16> to vector<8x64xbf16>
    %133 = vector.extract_strided_slice %28 {offsets = [0, 47, 0], sizes = [8, 1, 64], strides = [1, 1, 1]} : vector<8x96x64xbf16> to vector<8x1x64xbf16>
    %134 = vector.shape_cast %133 : vector<8x1x64xbf16> to vector<8x64xbf16>
    %135 = tpu.concatenate %120, %122, %124, %126, %128, %130, %132, %134 in 1 : vector<8x64xbf16>, vector<8x64xbf16>, vector<8x64xbf16>, vector<8x64xbf16>, vector<8x64xbf16>, vector<8x64xbf16>, vector<8x64xbf16>, vector<8x64xbf16> -> vector<8x512xbf16>
    %c0_17 = arith.constant 0 : index
    %c2560 = arith.constant 2560 : index
    %136 = vector.load %arg11[%c0_17, %c2560] : memref<8x6144xbf16, #tpu.memory_space<vmem>>, vector<8x512xbf16>
    tpu.vector_store %arg11[%c0_17, %c2560], %135 {strides = array<i32>} : memref<8x6144xbf16, #tpu.memory_space<vmem>>, vector<8x512xbf16>,
    %137 = vector.extract_strided_slice %28 {offsets = [0, 48, 0], sizes = [8, 1, 64], strides = [1, 1, 1]} : vector<8x96x64xbf16> to vector<8x1x64xbf16>
    %138 = vector.shape_cast %137 : vector<8x1x64xbf16> to vector<8x64xbf16>
    %139 = vector.extract_strided_slice %28 {offsets = [0, 49, 0], sizes = [8, 1, 64], strides = [1, 1, 1]} : vector<8x96x64xbf16> to vector<8x1x64xbf16>
    %140 = vector.shape_cast %139 : vector<8x1x64xbf16> to vector<8x64xbf16>
    %141 = vector.extract_strided_slice %28 {offsets = [0, 50, 0], sizes = [8, 1, 64], strides = [1, 1, 1]} : vector<8x96x64xbf16> to vector<8x1x64xbf16>
    %142 = vector.shape_cast %141 : vector<8x1x64xbf16> to vector<8x64xbf16>
    %143 = vector.extract_strided_slice %28 {offsets = [0, 51, 0], sizes = [8, 1, 64], strides = [1, 1, 1]} : vector<8x96x64xbf16> to vector<8x1x64xbf16>
    %144 = vector.shape_cast %143 : vector<8x1x64xbf16> to vector<8x64xbf16>
    %145 = vector.extract_strided_slice %28 {offsets = [0, 52, 0], sizes = [8, 1, 64], strides = [1, 1, 1]} : vector<8x96x64xbf16> to vector<8x1x64xbf16>
    %146 = vector.shape_cast %145 : vector<8x1x64xbf16> to vector<8x64xbf16>
    %147 = vector.extract_strided_slice %28 {offsets = [0, 53, 0], sizes = [8, 1, 64], strides = [1, 1, 1]} : vector<8x96x64xbf16> to vector<8x1x64xbf16>
    %148 = vector.shape_cast %147 : vector<8x1x64xbf16> to vector<8x64xbf16>
    %149 = vector.extract_strided_slice %28 {offsets = [0, 54, 0], sizes = [8, 1, 64], strides = [1, 1, 1]} : vector<8x96x64xbf16> to vector<8x1x64xbf16>
    %150 = vector.shape_cast %149 : vector<8x1x64xbf16> to vector<8x64xbf16>
    %151 = vector.extract_strided_slice %28 {offsets = [0, 55, 0], sizes = [8, 1, 64], strides = [1, 1, 1]} : vector<8x96x64xbf16> to vector<8x1x64xbf16>
    %152 = vector.shape_cast %151 : vector<8x1x64xbf16> to vector<8x64xbf16>
    %153 = tpu.concatenate %138, %140, %142, %144, %146, %148, %150, %152 in 1 : vector<8x64xbf16>, vector<8x64xbf16>, vector<8x64xbf16>, vector<8x64xbf16>, vector<8x64xbf16>, vector<8x64xbf16>, vector<8x64xbf16>, vector<8x64xbf16> -> vector<8x512xbf16>
    %c0_18 = arith.constant 0 : index
    %c3072 = arith.constant 3072 : index
    %154 = vector.load %arg11[%c0_18, %c3072] : memref<8x6144xbf16, #tpu.memory_space<vmem>>, vector<8x512xbf16>
    tpu.vector_store %arg11[%c0_18, %c3072], %153 {strides = array<i32>} : memref<8x6144xbf16, #tpu.memory_space<vmem>>, vector<8x512xbf16>,
    %155 = vector.extract_strided_slice %28 {offsets = [0, 56, 0], sizes = [8, 1, 64], strides = [1, 1, 1]} : vector<8x96x64xbf16> to vector<8x1x64xbf16>
    %156 = vector.shape_cast %155 : vector<8x1x64xbf16> to vector<8x64xbf16>
    %157 = vector.extract_strided_slice %28 {offsets = [0, 57, 0], sizes = [8, 1, 64], strides = [1, 1, 1]} : vector<8x96x64xbf16> to vector<8x1x64xbf16>
    %158 = vector.shape_cast %157 : vector<8x1x64xbf16> to vector<8x64xbf16>
    %159 = vector.extract_strided_slice %28 {offsets = [0, 58, 0], sizes = [8, 1, 64], strides = [1, 1, 1]} : vector<8x96x64xbf16> to vector<8x1x64xbf16>
    %160 = vector.shape_cast %159 : vector<8x1x64xbf16> to vector<8x64xbf16>
    %161 = vector.extract_strided_slice %28 {offsets = [0, 59, 0], sizes = [8, 1, 64], strides = [1, 1, 1]} : vector<8x96x64xbf16> to vector<8x1x64xbf16>
    %162 = vector.shape_cast %161 : vector<8x1x64xbf16> to vector<8x64xbf16>
    %163 = vector.extract_strided_slice %28 {offsets = [0, 60, 0], sizes = [8, 1, 64], strides = [1, 1, 1]} : vector<8x96x64xbf16> to vector<8x1x64xbf16>
    %164 = vector.shape_cast %163 : vector<8x1x64xbf16> to vector<8x64xbf16>
    %165 = vector.extract_strided_slice %28 {offsets = [0, 61, 0], sizes = [8, 1, 64], strides = [1, 1, 1]} : vector<8x96x64xbf16> to vector<8x1x64xbf16>
    %166 = vector.shape_cast %165 : vector<8x1x64xbf16> to vector<8x64xbf16>
    %167 = vector.extract_strided_slice %28 {offsets = [0, 62, 0], sizes = [8, 1, 64], strides = [1, 1, 1]} : vector<8x96x64xbf16> to vector<8x1x64xbf16>
    %168 = vector.shape_cast %167 : vector<8x1x64xbf16> to vector<8x64xbf16>
    %169 = vector.extract_strided_slice %28 {offsets = [0, 63, 0], sizes = [8, 1, 64], strides = [1, 1, 1]} : vector<8x96x64xbf16> to vector<8x1x64xbf16>
    %170 = vector.shape_cast %169 : vector<8x1x64xbf16> to vector<8x64xbf16>
    %171 = tpu.concatenate %156, %158, %160, %162, %164, %166, %168, %170 in 1 : vector<8x64xbf16>, vector<8x64xbf16>, vector<8x64xbf16>, vector<8x64xbf16>, vector<8x64xbf16>, vector<8x64xbf16>, vector<8x64xbf16>, vector<8x64xbf16> -> vector<8x512xbf16>
    %c0_19 = arith.constant 0 : index
    %c3584 = arith.constant 3584 : index
    %172 = vector.load %arg11[%c0_19, %c3584] : memref<8x6144xbf16, #tpu.memory_space<vmem>>, vector<8x512xbf16>
    tpu.vector_store %arg11[%c0_19, %c3584], %171 {strides = array<i32>} : memref<8x6144xbf16, #tpu.memory_space<vmem>>, vector<8x512xbf16>,
    %173 = vector.extract_strided_slice %28 {offsets = [0, 64, 0], sizes = [8, 1, 64], strides = [1, 1, 1]} : vector<8x96x64xbf16> to vector<8x1x64xbf16>
    %174 = vector.shape_cast %173 : vector<8x1x64xbf16> to vector<8x64xbf16>
    %175 = vector.extract_strided_slice %28 {offsets = [0, 65, 0], sizes = [8, 1, 64], strides = [1, 1, 1]} : vector<8x96x64xbf16> to vector<8x1x64xbf16>
    %176 = vector.shape_cast %175 : vector<8x1x64xbf16> to vector<8x64xbf16>
    %177 = vector.extract_strided_slice %28 {offsets = [0, 66, 0], sizes = [8, 1, 64], strides = [1, 1, 1]} : vector<8x96x64xbf16> to vector<8x1x64xbf16>
    %178 = vector.shape_cast %177 : vector<8x1x64xbf16> to vector<8x64xbf16>
    %179 = vector.extract_strided_slice %28 {offsets = [0, 67, 0], sizes = [8, 1, 64], strides = [1, 1, 1]} : vector<8x96x64xbf16> to vector<8x1x64xbf16>
    %180 = vector.shape_cast %179 : vector<8x1x64xbf16> to vector<8x64xbf16>
    %181 = vector.extract_strided_slice %28 {offsets = [0, 68, 0], sizes = [8, 1, 64], strides = [1, 1, 1]} : vector<8x96x64xbf16> to vector<8x1x64xbf16>
    %182 = vector.shape_cast %181 : vector<8x1x64xbf16> to vector<8x64xbf16>
    %183 = vector.extract_strided_slice %28 {offsets = [0, 69, 0], sizes = [8, 1, 64], strides = [1, 1, 1]} : vector<8x96x64xbf16> to vector<8x1x64xbf16>
    %184 = vector.shape_cast %183 : vector<8x1x64xbf16> to vector<8x64xbf16>
    %185 = vector.extract_strided_slice %28 {offsets = [0, 70, 0], sizes = [8, 1, 64], strides = [1, 1, 1]} : vector<8x96x64xbf16> to vector<8x1x64xbf16>
    %186 = vector.shape_cast %185 : vector<8x1x64xbf16> to vector<8x64xbf16>
    %187 = vector.extract_strided_slice %28 {offsets = [0, 71, 0], sizes = [8, 1, 64], strides = [1, 1, 1]} : vector<8x96x64xbf16> to vector<8x1x64xbf16>
    %188 = vector.shape_cast %187 : vector<8x1x64xbf16> to vector<8x64xbf16>
    %189 = tpu.concatenate %174, %176, %178, %180, %182, %184, %186, %188 in 1 : vector<8x64xbf16>, vector<8x64xbf16>, vector<8x64xbf16>, vector<8x64xbf16>, vector<8x64xbf16>, vector<8x64xbf16>, vector<8x64xbf16>, vector<8x64xbf16> -> vector<8x512xbf16>
    %c0_20 = arith.constant 0 : index
    %c4096 = arith.constant 4096 : index
    %190 = vector.load %arg11[%c0_20, %c4096] : memref<8x6144xbf16, #tpu.memory_space<vmem>>, vector<8x512xbf16>
    tpu.vector_store %arg11[%c0_20, %c4096], %189 {strides = array<i32>} : memref<8x6144xbf16, #tpu.memory_space<vmem>>, vector<8x512xbf16>,
    %191 = vector.extract_strided_slice %28 {offsets = [0, 72, 0], sizes = [8, 1, 64], strides = [1, 1, 1]} : vector<8x96x64xbf16> to vector<8x1x64xbf16>
    %192 = vector.shape_cast %191 : vector<8x1x64xbf16> to vector<8x64xbf16>
    %193 = vector.extract_strided_slice %28 {offsets = [0, 73, 0], sizes = [8, 1, 64], strides = [1, 1, 1]} : vector<8x96x64xbf16> to vector<8x1x64xbf16>
    %194 = vector.shape_cast %193 : vector<8x1x64xbf16> to vector<8x64xbf16>
    %195 = vector.extract_strided_slice %28 {offsets = [0, 74, 0], sizes = [8, 1, 64], strides = [1, 1, 1]} : vector<8x96x64xbf16> to vector<8x1x64xbf16>
    %196 = vector.shape_cast %195 : vector<8x1x64xbf16> to vector<8x64xbf16>
    %197 = vector.extract_strided_slice %28 {offsets = [0, 75, 0], sizes = [8, 1, 64], strides = [1, 1, 1]} : vector<8x96x64xbf16> to vector<8x1x64xbf16>
    %198 = vector.shape_cast %197 : vector<8x1x64xbf16> to vector<8x64xbf16>
    %199 = vector.extract_strided_slice %28 {offsets = [0, 76, 0], sizes = [8, 1, 64], strides = [1, 1, 1]} : vector<8x96x64xbf16> to vector<8x1x64xbf16>
    %200 = vector.shape_cast %199 : vector<8x1x64xbf16> to vector<8x64xbf16>
    %201 = vector.extract_strided_slice %28 {offsets = [0, 77, 0], sizes = [8, 1, 64], strides = [1, 1, 1]} : vector<8x96x64xbf16> to vector<8x1x64xbf16>
    %202 = vector.shape_cast %201 : vector<8x1x64xbf16> to vector<8x64xbf16>
    %203 = vector.extract_strided_slice %28 {offsets = [0, 78, 0], sizes = [8, 1, 64], strides = [1, 1, 1]} : vector<8x96x64xbf16> to vector<8x1x64xbf16>
    %204 = vector.shape_cast %203 : vector<8x1x64xbf16> to vector<8x64xbf16>
    %205 = vector.extract_strided_slice %28 {offsets = [0, 79, 0], sizes = [8, 1, 64], strides = [1, 1, 1]} : vector<8x96x64xbf16> to vector<8x1x64xbf16>
    %206 = vector.shape_cast %205 : vector<8x1x64xbf16> to vector<8x64xbf16>
    %207 = tpu.concatenate %192, %194, %196, %198, %200, %202, %204, %206 in 1 : vector<8x64xbf16>, vector<8x64xbf16>, vector<8x64xbf16>, vector<8x64xbf16>, vector<8x64xbf16>, vector<8x64xbf16>, vector<8x64xbf16>, vector<8x64xbf16> -> vector<8x512xbf16>
    %c0_21 = arith.constant 0 : index
    %c4608 = arith.constant 4608 : index
    %208 = vector.load %arg11[%c0_21, %c4608] : memref<8x6144xbf16, #tpu.memory_space<vmem>>, vector<8x512xbf16>
    tpu.vector_store %arg11[%c0_21, %c4608], %207 {strides = array<i32>} : memref<8x6144xbf16, #tpu.memory_space<vmem>>, vector<8x512xbf16>,
    %209 = vector.extract_strided_slice %28 {offsets = [0, 80, 0], sizes = [8, 1, 64], strides = [1, 1, 1]} : vector<8x96x64xbf16> to vector<8x1x64xbf16>
    %210 = vector.shape_cast %209 : vector<8x1x64xbf16> to vector<8x64xbf16>
    %211 = vector.extract_strided_slice %28 {offsets = [0, 81, 0], sizes = [8, 1, 64], strides = [1, 1, 1]} : vector<8x96x64xbf16> to vector<8x1x64xbf16>
    %212 = vector.shape_cast %211 : vector<8x1x64xbf16> to vector<8x64xbf16>
    %213 = vector.extract_strided_slice %28 {offsets = [0, 82, 0], sizes = [8, 1, 64], strides = [1, 1, 1]} : vector<8x96x64xbf16> to vector<8x1x64xbf16>
    %214 = vector.shape_cast %213 : vector<8x1x64xbf16> to vector<8x64xbf16>
    %215 = vector.extract_strided_slice %28 {offsets = [0, 83, 0], sizes = [8, 1, 64], strides = [1, 1, 1]} : vector<8x96x64xbf16> to vector<8x1x64xbf16>
    %216 = vector.shape_cast %215 : vector<8x1x64xbf16> to vector<8x64xbf16>
    %217 = vector.extract_strided_slice %28 {offsets = [0, 84, 0], sizes = [8, 1, 64], strides = [1, 1, 1]} : vector<8x96x64xbf16> to vector<8x1x64xbf16>
    %218 = vector.shape_cast %217 : vector<8x1x64xbf16> to vector<8x64xbf16>
    %219 = vector.extract_strided_slice %28 {offsets = [0, 85, 0], sizes = [8, 1, 64], strides = [1, 1, 1]} : vector<8x96x64xbf16> to vector<8x1x64xbf16>
    %220 = vector.shape_cast %219 : vector<8x1x64xbf16> to vector<8x64xbf16>
    %221 = vector.extract_strided_slice %28 {offsets = [0, 86, 0], sizes = [8, 1, 64], strides = [1, 1, 1]} : vector<8x96x64xbf16> to vector<8x1x64xbf16>
    %222 = vector.shape_cast %221 : vector<8x1x64xbf16> to vector<8x64xbf16>
    %223 = vector.extract_strided_slice %28 {offsets = [0, 87, 0], sizes = [8, 1, 64], strides = [1, 1, 1]} : vector<8x96x64xbf16> to vector<8x1x64xbf16>
    %224 = vector.shape_cast %223 : vector<8x1x64xbf16> to vector<8x64xbf16>
    %225 = tpu.concatenate %210, %212, %214, %216, %218, %220, %222, %224 in 1 : vector<8x64xbf16>, vector<8x64xbf16>, vector<8x64xbf16>, vector<8x64xbf16>, vector<8x64xbf16>, vector<8x64xbf16>, vector<8x64xbf16>, vector<8x64xbf16> -> vector<8x512xbf16>
    %c0_22 = arith.constant 0 : index
    %c5120 = arith.constant 5120 : index
    %226 = vector.load %arg11[%c0_22, %c5120] : memref<8x6144xbf16, #tpu.memory_space<vmem>>, vector<8x512xbf16>
    tpu.vector_store %arg11[%c0_22, %c5120], %225 {strides = array<i32>} : memref<8x6144xbf16, #tpu.memory_space<vmem>>, vector<8x512xbf16>,
    %227 = vector.extract_strided_slice %28 {offsets = [0, 88, 0], sizes = [8, 1, 64], strides = [1, 1, 1]} : vector<8x96x64xbf16> to vector<8x1x64xbf16>
    %228 = vector.shape_cast %227 : vector<8x1x64xbf16> to vector<8x64xbf16>
    %229 = vector.extract_strided_slice %28 {offsets = [0, 89, 0], sizes = [8, 1, 64], strides = [1, 1, 1]} : vector<8x96x64xbf16> to vector<8x1x64xbf16>
    %230 = vector.shape_cast %229 : vector<8x1x64xbf16> to vector<8x64xbf16>
    %231 = vector.extract_strided_slice %28 {offsets = [0, 90, 0], sizes = [8, 1, 64], strides = [1, 1, 1]} : vector<8x96x64xbf16> to vector<8x1x64xbf16>
    %232 = vector.shape_cast %231 : vector<8x1x64xbf16> to vector<8x64xbf16>
    %233 = vector.extract_strided_slice %28 {offsets = [0, 91, 0], sizes = [8, 1, 64], strides = [1, 1, 1]} : vector<8x96x64xbf16> to vector<8x1x64xbf16>
    %234 = vector.shape_cast %233 : vector<8x1x64xbf16> to vector<8x64xbf16>
    %235 = vector.extract_strided_slice %28 {offsets = [0, 92, 0], sizes = [8, 1, 64], strides = [1, 1, 1]} : vector<8x96x64xbf16> to vector<8x1x64xbf16>
    %236 = vector.shape_cast %235 : vector<8x1x64xbf16> to vector<8x64xbf16>
    %237 = vector.extract_strided_slice %28 {offsets = [0, 93, 0], sizes = [8, 1, 64], strides = [1, 1, 1]} : vector<8x96x64xbf16> to vector<8x1x64xbf16>
    %238 = vector.shape_cast %237 : vector<8x1x64xbf16> to vector<8x64xbf16>
    %239 = vector.extract_strided_slice %28 {offsets = [0, 94, 0], sizes = [8, 1, 64], strides = [1, 1, 1]} : vector<8x96x64xbf16> to vector<8x1x64xbf16>
    %240 = vector.shape_cast %239 : vector<8x1x64xbf16> to vector<8x64xbf16>
    %241 = vector.extract_strided_slice %28 {offsets = [0, 95, 0], sizes = [8, 1, 64], strides = [1, 1, 1]} : vector<8x96x64xbf16> to vector<8x1x64xbf16>
    %242 = vector.shape_cast %241 : vector<8x1x64xbf16> to vector<8x64xbf16>
    %243 = tpu.concatenate %228, %230, %232, %234, %236, %238, %240, %242 in 1 : vector<8x64xbf16>, vector<8x64xbf16>, vector<8x64xbf16>, vector<8x64xbf16>, vector<8x64xbf16>, vector<8x64xbf16>, vector<8x64xbf16>, vector<8x64xbf16> -> vector<8x512xbf16>
    %c0_23 = arith.constant 0 : index
    %c5632 = arith.constant 5632 : index
    %244 = vector.load %arg11[%c0_23, %c5632] : memref<8x6144xbf16, #tpu.memory_space<vmem>>, vector<8x512xbf16>
    tpu.vector_store %arg11[%c0_23, %c5632], %243 {strides = array<i32>} : memref<8x6144xbf16, #tpu.memory_space<vmem>>, vector<8x512xbf16>,
    %c0_24 = arith.constant 0 : index
    %c0_25 = arith.constant 0 : index
    %245 = vector.load %arg11[%c0_24, %c0_25] : memref<8x6144xbf16, #tpu.memory_space<vmem>>, vector<8x6144xbf16>
    %c0_26 = arith.constant 0 : index
    %c0_27 = arith.constant 0 : index
    %246 = vector.load %arg6[%c0_26, %c0_27] : memref<6144x128xbf16, #tpu.memory_space<vmem>>, vector<6144x128xbf16>
    %cst_28 = arith.constant dense<0.000000e+00> : vector<8x128xf32>
    %247 = tpu.matmul %245, %246, %cst_28 {dimension_numbers = #tpu.dot_dimension_numbers<[1], [0], [0], [1], [0, 0, 1, 1], [], []>} : vector<8x6144xbf16>, vector<6144x128xbf16>, vector<8x128xf32> -> vector<8x128xf32>
    %c0_29 = arith.constant 0 : index
    %c0_30 = arith.constant 0 : index
    %248 = vector.load %arg7[%c0_29, %c0_30] : memref<1x128xf32, #tpu.memory_space<vmem>>, vector<1x128xf32>
    %249 = vector.broadcast %248 : vector<1x128xf32> to vector<8x128xf32>
    %250 = arith.addf %247, %249 : vector<8x128xf32>
    %251 = arith.truncf %250 : vector<8x128xf32> to vector<8x128xbf16>
    %c0_31 = arith.constant 0 : index
    %c0_32 = arith.constant 0 : index
    %252 = vector.load %arg8[%c0_31, %c0_32] : memref<128x128xbf16, #tpu.memory_space<vmem>>, vector<128x128xbf16>
    %cst_33 = arith.constant dense<0.000000e+00> : vector<8x128xf32>
    %253 = tpu.matmul %251, %252, %cst_33 {dimension_numbers = #tpu.dot_dimension_numbers<[1], [0], [0], [1], [0, 0, 1, 1], [], []>} : vector<8x128xbf16>, vector<128x128xbf16>, vector<8x128xf32> -> vector<8x128xf32>
    %c0_34 = arith.constant 0 : index
    %c0_35 = arith.constant 0 : index
    %254 = vector.load %arg9[%c0_34, %c0_35] : memref<1x128xf32, #tpu.memory_space<vmem>>, vector<1x128xf32>
    %255 = vector.broadcast %254 : vector<1x128xf32> to vector<8x128xf32>
    %256 = arith.addf %253, %255 : vector<8x128xf32>
    %257 = arith.negf %256 : vector<8x128xf32>
    %258 = math.exp %257 : vector<8x128xf32>
    %cst_36 = arith.constant 1.000000e+00 : f32
    %259 = vector.broadcast %cst_36 : f32 to vector<8x128xf32>
    %260 = arith.addf %259, %258 : vector<8x128xf32>
    %261 = arith.divf %259, %260 : vector<8x128xf32>
    %c0_37 = arith.constant 0 : index
    %c0_38 = arith.constant 0 : index
    %262 = vector.load %arg10[%c0_37, %c0_38] : memref<8x128xf32, #tpu.memory_space<vmem>>, vector<8x128xf32>
    tpu.vector_store %arg10[%c0_37, %c0_38], %261 {strides = array<i32>} : memref<8x128xf32, #tpu.memory_space<vmem>>, vector<8x128xf32>,
    return
  }
  func.func @transform_0(%arg0: i32) -> (i32, i32, i32) {
    %c0_i32 = arith.constant 0 : i32
    %c0_i32_0 = arith.constant 0 : i32
    %c0_i32_1 = arith.constant 0 : i32
    return %arg0, %c0_i32, %c0_i32_0 : i32, i32, i32
  }
  func.func @transform_1(%arg0: i32) -> (i32, i32) {
    %c0_i32 = arith.constant 0 : i32
    %c0_i32_0 = arith.constant 0 : i32
    %c0_i32_1 = arith.constant 0 : i32
    return %c0_i32, %c0_i32_0 : i32, i32
  }
  func.func @transform_2(%arg0: i32) -> (i32, i32) {
    %c0_i32 = arith.constant 0 : i32
    %c0_i32_0 = arith.constant 0 : i32
    %c0_i32_1 = arith.constant 0 : i32
    return %c0_i32, %c0_i32_0 : i32, i32
  }
  func.func @transform_3(%arg0: i32) -> (i32, i32) {
    %c0_i32 = arith.constant 0 : i32
    %c0_i32_0 = arith.constant 0 : i32
    %c0_i32_1 = arith.constant 0 : i32
    return %c0_i32, %c0_i32_0 : i32, i32
  }
  func.func @transform_4(%arg0: i32) -> (i32, i32) {
    %c0_i32 = arith.constant 0 : i32
    %c0_i32_0 = arith.constant 0 : i32
    %c0_i32_1 = arith.constant 0 : i32
    return %c0_i32, %c0_i32_0 : i32, i32
  }
  func.func @transform_5(%arg0: i32) -> (i32, i32) {
    %c0_i32 = arith.constant 0 : i32
    %c0_i32_0 = arith.constant 0 : i32
    %c0_i32_1 = arith.constant 0 : i32
    return %c0_i32, %c0_i32_0 : i32, i32
  }
  func.func @transform_6(%arg0: i32) -> (i32, i32) {
    %c0_i32 = arith.constant 0 : i32
    %c0_i32_0 = arith.constant 0 : i32
    %c0_i32_1 = arith.constant 0 : i32
    return %c0_i32, %c0_i32_0 : i32, i32
  }
  func.func @transform_7(%arg0: i32) -> (i32, i32) {
    %c0_i32 = arith.constant 0 : i32
    %c0_i32_0 = arith.constant 0 : i32
    %c0_i32_1 = arith.constant 0 : i32
    return %c0_i32, %c0_i32_0 : i32, i32
  }
  func.func @transform_8(%arg0: i32) -> (i32, i32) {
    %c0_i32 = arith.constant 0 : i32
    %c0_i32_0 = arith.constant 0 : i32
    %c0_i32_1 = arith.constant 0 : i32
    return %c0_i32, %c0_i32_0 : i32, i32
  }
  func.func @transform_9(%arg0: i32) -> (i32, i32) {
    %c0_i32 = arith.constant 0 : i32
    %c0_i32_0 = arith.constant 0 : i32
    return %arg0, %c0_i32 : i32, i32
  }
}

</mosaic_0001>

<llo_original>
// kernel: tc_cnn_forward.1
$region0: #{tc_cnn_forward.1}
  #allocation0 [shape = 'u32[]', space=smem, size = 0x4, offset = 0x4, fixed_abs, tag = 'smem constant byte address 0x4 - core index']
  #allocation1 [shape = 'u32[72,128]{1,0:T(1,128)}', space=vmem, size = 0x9000, scoped, tag = 'internal scratch']
  #allocation2 [shape = 'bf16[8,6144]{1,0:T(8,128)(2,1)}', space=vmem, size = 0x18000, scoped, tag = 'scratch operand']
  %s0 = inlined_call_operand.vmem [shape: bf16[8,104,100], index: 0, kind: input, shape index: {}]
  %s1 = inlined_call_operand.vmem [shape: bf16[100,320], index: 1, kind: input, shape index: {}]
  %s2 = inlined_call_operand.vmem [shape: f32[1,64], index: 2, kind: input, shape index: {}]
  %s3 = inlined_call_operand.vmem [shape: f32[1,64], index: 3, kind: input, shape index: {}]
  %s4 = inlined_call_operand.vmem [shape: f32[1,64], index: 4, kind: input, shape index: {}]
  %s5 = inlined_call_operand.vmem [shape: bf16[6144,128], index: 5, kind: input, shape index: {}]
  %s6 = inlined_call_operand.vmem [shape: f32[1,128], index: 6, kind: input, shape index: {}]
  %s7 = inlined_call_operand.vmem [shape: bf16[128,128], index: 7, kind: input, shape index: {}]
  %s8 = inlined_call_operand.vmem [shape: f32[1,128], index: 8, kind: input, shape index: {}]
  %s9 = inlined_call_operand.hbm [shape: f32[8,128], index: 9, kind: output, shape index: {}]
  %s10 = sld [smem:[#allocation0]]
  $region46: #{tc_cnn_forward.1} parent=0
    _
  %s12 = ssub.s32 1, %s10
  %s13 = scalar_select 0, %s12, %s10
  $region1: #{tc_cnn_forward.1} parent=0
    #allocation3 [shape = 'u8[4096]{0}', space=vmem, size = 0x1000, scoped, tag = 'output window, operand 0, single buffered']
    #allocation4 [shape = 's32[1]{0}', space=sflag, size = 0x4, scoped, tag = 'scoped memory for tc_cnn_forward.1']
    %14 = vsyncpa [#allocation4], 0
    // Predicated region
    $region2: #{tc_cnn_forward.1} parent=1 // pred_check
      _
    $region3: #{tc_cnn_forward.1} parent=1 // pred_check_branch
      %16 = sbr.rel (0) target = $region5
    $region4: #{tc_cnn_forward.1} parent=1 // pred_region
      _
    $region5: #{tc_cnn_forward.1} parent=1 // pred_fallthru
      _
    // Predicated region
    $region6: #{tc_cnn_forward.1} parent=1 // pred_check
      _
    $region7: #{tc_cnn_forward.1} parent=1 // pred_check_branch
      %18 = sbr.rel (0) target = $region9
    $region8: #{tc_cnn_forward.1} parent=1 // pred_region
      _
    $region9: #{tc_cnn_forward.1} parent=1 // pred_fallthru
      _
    // Predicated region
    $region10: #{tc_cnn_forward.1} parent=1 // pred_check
      _
    $region11: #{tc_cnn_forward.1} parent=1 // pred_check_branch
      %20 = sbr.rel (0) target = $region13
    $region12: #{tc_cnn_forward.1} parent=1 // pred_region
      _
    $region13: #{tc_cnn_forward.1} parent=1 // pred_fallthru
      _
    // Predicated region
    $region14: #{tc_cnn_forward.1} parent=1 // pred_check
      _
    $region15: #{tc_cnn_forward.1} parent=1 // pred_check_branch
      %22 = sbr.rel (0) target = $region17
    $region16: #{tc_cnn_forward.1} parent=1 // pred_region
      _
    $region17: #{tc_cnn_forward.1} parent=1 // pred_fallthru
      _
    // Predicated region
    $region18: #{tc_cnn_forward.1} parent=1 // pred_check
      _
    $region19: #{tc_cnn_forward.1} parent=1 // pred_check_branch
      %24 = sbr.rel (0) target = $region21
    $region20: #{tc_cnn_forward.1} parent=1 // pred_region
      _
    $region21: #{tc_cnn_forward.1} parent=1 // pred_fallthru
      _
    // Predicated region
    $region22: #{tc_cnn_forward.1} parent=1 // pred_check
      _
    $region23: #{tc_cnn_forward.1} parent=1 // pred_check_branch
      %26 = sbr.rel (0) target = $region25
    $region24: #{tc_cnn_forward.1} parent=1 // pred_region
      _
    $region25: #{tc_cnn_forward.1} parent=1 // pred_fallthru
      _
    // Predicated region
    $region26: #{tc_cnn_forward.1} parent=1 // pred_check
      _
    $region27: #{tc_cnn_forward.1} parent=1 // pred_check_branch
      %28 = sbr.rel (0) target = $region29
    $region28: #{tc_cnn_forward.1} parent=1 // pred_region
      _
    $region29: #{tc_cnn_forward.1} parent=1 // pred_fallthru
      _
    // Predicated region
    $region30: #{tc_cnn_forward.1} parent=1 // pred_check
      _
    $region31: #{tc_cnn_forward.1} parent=1 // pred_check_branch
      %30 = sbr.rel (0) target = $region33
    $region32: #{tc_cnn_forward.1} parent=1 // pred_region
      _
    $region33: #{tc_cnn_forward.1} parent=1 // pred_fallthru
      _
    // Predicated region
    $region34: #{tc_cnn_forward.1} parent=1 // pred_check
      _
    $region35: #{tc_cnn_forward.1} parent=1 // pred_check_branch
      %32 = sbr.rel (0) target = $region37
    $region36: #{tc_cnn_forward.1} parent=1 // pred_region
      _
    $region37: #{tc_cnn_forward.1} parent=1 // pred_fallthru
      _
    %v34 = vld [vmem:[%s0] sm:$0xf]
    %v35 = vld [vmem:[%s0 + $0x4] sm:$0xf]
    %v36 = vld [vmem:[%s0 + $0x8] sm:$0xf]
    %v37 = vld [vmem:[%s0 + $0xc] sm:$0xf]
    %v38 = vld [vmem:[%s0 + $0x10] sm:$0xf]
    %v39 = vld [vmem:[%s0 + $0x14] sm:$0xf]
    %v40 = vld [vmem:[%s0 + $0x18] sm:$0xf]
    %v41 = vld [vmem:[%s0 + $0x1c] sm:$0xf]
    %v42 = vld [vmem:[%s0 + $0x20] sm:$0xf]
    %v43 = vld [vmem:[%s0 + $0x24] sm:$0xf]
    %v44 = vld [vmem:[%s0 + $0x28] sm:$0xf]
    %v45 = vld [vmem:[%s0 + $0x2c] sm:$0xf]
    %v46 = vld [vmem:[%s0 + $0x30] sm:$0xf]
    %v47 = vld [vmem:[%s0 + $0x34] sm:$0xf]
    %v48 = vld [vmem:[%s0 + $0x38] sm:$0xf]
    %v49 = vld [vmem:[%s0 + $0x3c] sm:$0xf]
    %v50 = vld [vmem:[%s0 + $0x40] sm:$0xf]
    %v51 = vld [vmem:[%s0 + $0x44] sm:$0xf]
    %v52 = vld [vmem:[%s0 + $0x48] sm:$0xf]
    %v53 = vld [vmem:[%s0 + $0x4c] sm:$0xf]
    %v54 = vld [vmem:[%s0 + $0x50] sm:$0xf]
    %v55 = vld [vmem:[%s0 + $0x54] sm:$0xf]
    %v56 = vld [vmem:[%s0 + $0x58] sm:$0xf]
    %v57 = vld [vmem:[%s0 + $0x5c] sm:$0xf]
    %v58 = vld [vmem:[%s0 + $0x60] sm:$0xf]
    %v59 = vld [vmem:[%s0 + $0x64] sm:$0xf]
    %v60 = vld [vmem:[%s0 + $0x68] sm:$0xf]
    %v61 = vld [vmem:[%s0 + $0x6c] sm:$0xf]
    %v62 = vld [vmem:[%s0 + $0x70] sm:$0xf]
    %v63 = vld [vmem:[%s0 + $0x74] sm:$0xf]
    %v64 = vld [vmem:[%s0 + $0x78] sm:$0xf]
    %v65 = vld [vmem:[%s0 + $0x7c] sm:$0xf]
    %v66 = vld [vmem:[%s0 + $0x80] sm:$0xf]
    %v67 = vld [vmem:[%s0 + $0x84] sm:$0xf]
    %v68 = vld [vmem:[%s0 + $0x88] sm:$0xf]
    %v69 = vld [vmem:[%s0 + $0x8c] sm:$0xf]
    %v70 = vld [vmem:[%s0 + $0x90] sm:$0xf]
    %v71 = vld [vmem:[%s0 + $0x94] sm:$0xf]
    %v72 = vld [vmem:[%s0 + $0x98] sm:$0xf]
    %v73 = vld [vmem:[%s0 + $0x9c] sm:$0xf]
    %v74 = vld [vmem:[%s0 + $0xa0] sm:$0xf]
    %v75 = vld [vmem:[%s0 + $0xa4] sm:$0xf]
    %v76 = vld [vmem:[%s0 + $0xa8] sm:$0xf]
    %v77 = vld [vmem:[%s0 + $0xac] sm:$0xf]
    %v78 = vld [vmem:[%s0 + $0xb0] sm:$0xf]
    %v79 = vld [vmem:[%s0 + $0xb4] sm:$0xf]
    %v80 = vld [vmem:[%s0 + $0xb8] sm:$0xf]
    %v81 = vld [vmem:[%s0 + $0xbc] sm:$0xf]
    %v82 = vld [vmem:[%s0 + $0xc0] sm:$0xf]
    %v83 = vld [vmem:[%s0 + $0xc4] sm:$0xf]
    %v84 = vld [vmem:[%s0 + $0xc8] sm:$0xf]
    %v85 = vld [vmem:[%s0 + $0xcc] sm:$0xf]
    %v86 = vld [vmem:[%s0 + $0xd0] sm:$0xf]
    %v87 = vld [vmem:[%s0 + $0xd4] sm:$0xf]
    %v88 = vld [vmem:[%s0 + $0xd8] sm:$0xf]
    %v89 = vld [vmem:[%s0 + $0xdc] sm:$0xf]
    %v90 = vld [vmem:[%s0 + $0xe0] sm:$0xf]
    %v91 = vld [vmem:[%s0 + $0xe4] sm:$0xf]
    %v92 = vld [vmem:[%s0 + $0xe8] sm:$0xf]
    %v93 = vld [vmem:[%s0 + $0xec] sm:$0xf]
    %v94 = vld [vmem:[%s0 + $0xf0] sm:$0xf]
    %v95 = vld [vmem:[%s0 + $0xf4] sm:$0xf]
    %v96 = vld [vmem:[%s0 + $0xf8] sm:$0xf]
    %v97 = vld [vmem:[%s0 + $0xfc] sm:$0xf]
    %v98 = vld [vmem:[%s0 + $0x100] sm:$0xf]
    %v99 = vld [vmem:[%s0 + $0x104] sm:$0xf]
    %v100 = vld [vmem:[%s0 + $0x108] sm:$0xf]
    %v101 = vld [vmem:[%s0 + $0x10c] sm:$0xf]
    %v102 = vld [vmem:[%s0 + $0x110] sm:$0xf]
    %v103 = vld [vmem:[%s0 + $0x114] sm:$0xf]
    %v104 = vld [vmem:[%s0 + $0x118] sm:$0xf]
    %v105 = vld [vmem:[%s0 + $0x11c] sm:$0xf]
    %v106 = vld [vmem:[%s0 + $0x120] sm:$0xf]
    %v107 = vld [vmem:[%s0 + $0x124] sm:$0xf]
    %v108 = vld [vmem:[%s0 + $0x128] sm:$0xf]
    %v109 = vld [vmem:[%s0 + $0x12c] sm:$0xf]
    %v110 = vld [vmem:[%s0 + $0x130] sm:$0xf]
    %v111 = vld [vmem:[%s0 + $0x134] sm:$0xf]
    %v112 = vld [vmem:[%s0 + $0x138] sm:$0xf]
    %v113 = vld [vmem:[%s0 + $0x13c] sm:$0xf]
    %v114 = vld [vmem:[%s0 + $0x140] sm:$0xf]
    %v115 = vld [vmem:[%s0 + $0x144] sm:$0xf]
    %v116 = vld [vmem:[%s0 + $0x148] sm:$0xf]
    %v117 = vld [vmem:[%s0 + $0x14c] sm:$0xf]
    %v118 = vld [vmem:[%s0 + $0x150] sm:$0xf]
    %v119 = vld [vmem:[%s0 + $0x154] sm:$0xf]
    %v120 = vld [vmem:[%s0 + $0x158] sm:$0xf]
    %v121 = vld [vmem:[%s0 + $0x15c] sm:$0xf]
    %v122 = vld [vmem:[%s0 + $0x160] sm:$0xf]
    %v123 = vld [vmem:[%s0 + $0x164] sm:$0xf]
    %v124 = vld [vmem:[%s0 + $0x168] sm:$0xf]
    %v125 = vld [vmem:[%s0 + $0x16c] sm:$0xf]
    %v126 = vld [vmem:[%s0 + $0x170] sm:$0xf]
    %v127 = vld [vmem:[%s0 + $0x174] sm:$0xf]
    %v128 = vld [vmem:[%s0 + $0x178] sm:$0xf]
    %v129 = vld [vmem:[%s0 + $0x17c] sm:$0xf]
    %v130 = vld [vmem:[%s0 + $0x180] sm:$0xf]
    %v131 = vld [vmem:[%s0 + $0x184] sm:$0xf]
    %v132 = vld [vmem:[%s0 + $0x188] sm:$0xf]
    %v133 = vld [vmem:[%s0 + $0x18c] sm:$0xf]
    %v134 = vld [vmem:[%s0 + $0x190] sm:$0xf]
    %v135 = vld [vmem:[%s0 + $0x194] sm:$0xf]
    %v136 = vld [vmem:[%s0 + $0x198] sm:$0xf]
    %v137 = vld [vmem:[%s0 + $0x19c] sm:$0xf]
    %v138 = vld [vmem:[%s1] sm:$0xff]
    %v139 = vld [vmem:[%s1 + $0x8] sm:$0xf]
    %v140 = vld [vmem:[%s1 + $0xc] sm:$0xff]
    %v141 = vld [vmem:[%s1 + $0x14] sm:$0xf]
    %v142 = vld [vmem:[%s1 + $0x18] sm:$0xff]
    %v143 = vld [vmem:[%s1 + $0x20] sm:$0xf]
    %v144 = vld [vmem:[%s1 + $0x24] sm:$0xff]
    %v145 = vld [vmem:[%s1 + $0x2c] sm:$0xf]
    %v146 = vld [vmem:[%s1 + $0x30] sm:$0xff]
    %v147 = vld [vmem:[%s1 + $0x38] sm:$0xf]
    %v148 = vld [vmem:[%s1 + $0x3c] sm:$0xff]
    %v149 = vld [vmem:[%s1 + $0x44] sm:$0xf]
    %v150 = vld [vmem:[%s1 + $0x48] sm:$0xff]
    %v151 = vld [vmem:[%s1 + $0x50] sm:$0xf]
    %v152 = vld [vmem:[%s1 + $0x54] sm:$0xff]
    %v153 = vld [vmem:[%s1 + $0x5c] sm:$0xf]
    %v154 = vld [vmem:[%s1 + $0x60] sm:$0xff]
    %v155 = vld [vmem:[%s1 + $0x68] sm:$0xf]
    %v156 = vld [vmem:[%s1 + $0x6c] sm:$0xff]
    %v157 = vld [vmem:[%s1 + $0x74] sm:$0xf]
    %v158 = vld [vmem:[%s1 + $0x78] sm:$0xff]
    %v159 = vld [vmem:[%s1 + $0x80] sm:$0xf]
    %v160 = vld [vmem:[%s1 + $0x84] sm:$0xff]
    %v161 = vld [vmem:[%s1 + $0x8c] sm:$0xf]
    %v162 = vld [vmem:[%s1 + $0x90] sm:$0x33]
    %v163 = vld [vmem:[%s1 + $0x98] sm:$0x3]
    %v268 = vunpack.c.l.b16 %v34
    %v269 = vunpack.c.l.b16 %v35
    %v270 = vunpack.c.l.b16 %v36
    %v271 = vunpack.c.l.b16 %v37
    %v272 = vunpack.c.l.b16 %v38
    %v273 = vunpack.c.l.b16 %v39
    %v274 = vunpack.c.l.b16 %v40
    %v275 = vunpack.c.l.b16 %v41
    %v276 = vunpack.c.l.b16 %v42
    %v277 = vunpack.c.l.b16 %v43
    %v278 = vunpack.c.l.b16 %v44
    %v279 = vunpack.c.l.b16 %v45
    %v280 = vunpack.c.l.b16 %v46
    %v281 = vunpack.c.l.b16 %v47
    %v282 = vunpack.c.l.b16 %v48
    %v283 = vunpack.c.l.b16 %v49
    %v284 = vunpack.c.l.b16 %v50
    %v285 = vunpack.c.l.b16 %v51
    %v286 = vunpack.c.l.b16 %v52
    %v287 = vunpack.c.l.b16 %v53
    %v288 = vunpack.c.l.b16 %v54
    %v289 = vunpack.c.l.b16 %v55
    %v290 = vunpack.c.l.b16 %v56
    %v291 = vunpack.c.l.b16 %v57
    %v292 = vunpack.c.l.b16 %v58
    %v293 = vunpack.c.l.b16 %v59
    %v294 = vunpack.c.l.b16 %v60
    %v295 = vunpack.c.l.b16 %v61
    %v296 = vunpack.c.l.b16 %v62
    %v297 = vunpack.c.l.b16 %v63
    %v298 = vunpack.c.l.b16 %v64
    %v299 = vunpack.c.l.b16 %v65
    %v300 = vunpack.c.l.b16 %v66
    %v301 = vunpack.c.l.b16 %v67
    %v302 = vunpack.c.l.b16 %v68
    %v303 = vunpack.c.l.b16 %v69
    %v304 = vunpack.c.l.b16 %v70
    %v305 = vunpack.c.l.b16 %v71
    %v306 = vunpack.c.l.b16 %v72
    %v307 = vunpack.c.l.b16 %v73
    %v308 = vunpack.c.l.b16 %v74
    %v309 = vunpack.c.l.b16 %v75
    %v310 = vunpack.c.l.b16 %v76
    %v311 = vunpack.c.l.b16 %v77
    %v312 = vunpack.c.l.b16 %v78
    %v313 = vunpack.c.l.b16 %v79
    %v314 = vunpack.c.l.b16 %v80
    %v315 = vunpack.c.l.b16 %v81
    %v316 = vunpack.c.l.b16 %v82
    %v317 = vunpack.c.l.b16 %v83
    %v318 = vunpack.c.l.b16 %v84
    %v319 = vunpack.c.l.b16 %v85
    %v320 = vunpack.c.l.b16 %v86
    %v321 = vunpack.c.l.b16 %v87
    %v322 = vunpack.c.l.b16 %v88
    %v323 = vunpack.c.l.b16 %v89
    %v324 = vunpack.c.l.b16 %v90
    %v325 = vunpack.c.l.b16 %v91
    %v326 = vunpack.c.l.b16 %v92
    %v327 = vunpack.c.l.b16 %v93
    %v328 = vunpack.c.l.b16 %v94
    %v329 = vunpack.c.l.b16 %v95
    %v330 = vunpack.c.l.b16 %v96
    %v331 = vunpack.c.l.b16 %v97
    %v332 = vunpack.c.l.b16 %v98
    %v333 = vunpack.c.l.b16 %v99
    %v334 = vunpack.c.l.b16 %v100
    %v335 = vunpack.c.l.b16 %v101
    %v336 = vunpack.c.l.b16 %v102
    %v337 = vunpack.c.l.b16 %v103
    %v338 = vunpack.c.l.b16 %v104
    %v339 = vunpack.c.l.b16 %v105
    %v340 = vunpack.c.l.b16 %v106
    %v341 = vunpack.c.l.b16 %v107
    %v342 = vunpack.c.l.b16 %v108
    %v343 = vunpack.c.l.b16 %v109
    %v344 = vunpack.c.l.b16 %v110
    %v345 = vunpack.c.l.b16 %v111
    %v346 = vunpack.c.l.b16 %v112
    %v347 = vunpack.c.l.b16 %v113
    %v348 = vunpack.c.l.b16 %v114
    %v349 = vunpack.c.l.b16 %v115
    %v350 = vunpack.c.l.b16 %v116
    %v351 = vunpack.c.l.b16 %v117
    %v352 = vunpack.c.l.b16 %v118
    %v353 = vunpack.c.l.b16 %v119
    %v354 = vunpack.c.l.b16 %v120
    %v355 = vunpack.c.l.b16 %v121
    %v356 = vunpack.c.l.b16 %v122
    %v357 = vunpack.c.l.b16 %v123
    %v358 = vunpack.c.l.b16 %v124
    %v359 = vunpack.c.l.b16 %v125
    %v360 = vunpack.c.l.b16 %v126
    %v361 = vunpack.c.l.b16 %v127
    %v362 = vunpack.c.l.b16 %v128
    %v363 = vunpack.c.l.b16 %v129
    %v364 = vunpack.c.l.b16 %v130
    %v365 = vunpack.c.l.b16 %v131
    %v366 = vunpack.c.l.b16 %v132
    %v367 = vunpack.c.l.b16 %v133
    %v368 = vunpack.c.l.b16 %v134
    %v369 = vunpack.c.l.b16 %v135
    %v370 = vunpack.c.l.b16 %v136
    %v371 = vunpack.c.l.b16 %v137
    %v372 = vpack.c.b16 %v269, %v268
    %v373 = vpack.c.b16 %v271, %v270
    %v374 = vpack.c.b16 %v273, %v272
    %v375 = vpack.c.b16 %v275, %v274
    %v376 = vpack.c.b16 %v277, %v276
    %v377 = vpack.c.b16 %v279, %v278
    %v378 = vpack.c.b16 %v281, %v280
    %v379 = vpack.c.b16 %v283, %v282
    %v380 = vpack.c.b16 %v285, %v284
    %v381 = vpack.c.b16 %v287, %v286
    %v382 = vpack.c.b16 %v289, %v288
    %v383 = vpack.c.b16 %v291, %v290
    %v384 = vpack.c.b16 %v293, %v292
    %v385 = vpack.c.b16 %v295, %v294
    %v386 = vpack.c.b16 %v297, %v296
    %v387 = vpack.c.b16 %v299, %v298
    %v388 = vpack.c.b16 %v301, %v300
    %v389 = vpack.c.b16 %v303, %v302
    %v390 = vpack.c.b16 %v305, %v304
    %v391 = vpack.c.b16 %v307, %v306
    %v392 = vpack.c.b16 %v309, %v308
    %v393 = vpack.c.b16 %v311, %v310
    %v394 = vpack.c.b16 %v313, %v312
    %v395 = vpack.c.b16 %v315, %v314
    %v396 = vpack.c.b16 %v317, %v316
    %v397 = vpack.c.b16 %v319, %v318
    %v398 = vpack.c.b16 %v321, %v320
    %v399 = vpack.c.b16 %v323, %v322
    %v400 = vpack.c.b16 %v325, %v324
    %v401 = vpack.c.b16 %v327, %v326
    %v402 = vpack.c.b16 %v329, %v328
    %v403 = vpack.c.b16 %v331, %v330
    %v404 = vpack.c.b16 %v333, %v332
    %v405 = vpack.c.b16 %v335, %v334
    %v406 = vpack.c.b16 %v337, %v336
    %v407 = vpack.c.b16 %v339, %v338
    %v408 = vpack.c.b16 %v341, %v340
    %v409 = vpack.c.b16 %v343, %v342
    %v410 = vpack.c.b16 %v345, %v344
    %v411 = vpack.c.b16 %v347, %v346
    %v412 = vpack.c.b16 %v349, %v348
    %v413 = vpack.c.b16 %v351, %v350
    %v414 = vpack.c.b16 %v353, %v352
    %v415 = vpack.c.b16 %v355, %v354
    %v416 = vpack.c.b16 %v357, %v356
    %v417 = vpack.c.b16 %v359, %v358
    %v418 = vpack.c.b16 %v361, %v360
    %v419 = vpack.c.b16 %v363, %v362
    %v420 = vpack.c.b16 %v365, %v364
    %v421 = vpack.c.b16 %v367, %v366
    %v422 = vpack.c.b16 %v369, %v368
    %v423 = vpack.c.b16 %v371, %v370
    %v450 = vunpack.c.l.b16 %v138
    %v451 = vunpack.c.h.b16 %v138
    %v452 = vunpack.c.l.b16 %v139
    %v453 = vunpack.c.l.b16 %v140
    %v454 = vunpack.c.h.b16 %v140
    %v455 = vunpack.c.l.b16 %v141
    %v456 = vunpack.c.l.b16 %v142
    %v457 = vunpack.c.h.b16 %v142
    %v458 = vunpack.c.l.b16 %v143
    %v459 = vunpack.c.l.b16 %v144
    %v460 = vunpack.c.h.b16 %v144
    %v461 = vunpack.c.l.b16 %v145
    %v462 = vunpack.c.l.b16 %v146
    %v463 = vunpack.c.h.b16 %v146
    %v464 = vunpack.c.l.b16 %v147
    %v465 = vunpack.c.l.b16 %v148
    %v466 = vunpack.c.h.b16 %v148
    %v467 = vunpack.c.l.b16 %v149
    %v468 = vunpack.c.l.b16 %v150
    %v469 = vunpack.c.h.b16 %v150
    %v470 = vunpack.c.l.b16 %v151
    %v471 = vunpack.c.l.b16 %v152
    %v472 = vunpack.c.h.b16 %v152
    %v473 = vunpack.c.l.b16 %v153
    %v474 = vunpack.c.l.b16 %v154
    %v475 = vunpack.c.h.b16 %v154
    %v476 = vunpack.c.l.b16 %v155
    %v477 = vunpack.c.l.b16 %v156
    %v478 = vunpack.c.h.b16 %v156
    %v479 = vunpack.c.l.b16 %v157
    %v480 = vunpack.c.l.b16 %v158
    %v481 = vunpack.c.h.b16 %v158
    %v482 = vunpack.c.l.b16 %v159
    %v483 = vunpack.c.l.b16 %v160
    %v484 = vunpack.c.h.b16 %v160
    %v485 = vunpack.c.l.b16 %v161
    %v486 = vunpack.c.l.b16 %v162
    %v487 = vunpack.c.h.b16 %v162
    %v488 = vunpack.c.l.b16 %v163
    %v489 = vpack.c.b16 %v453, %v450
    %v490 = vpack.c.b16 %v454, %v451
    %v491 = vpack.c.b16 %v455, %v452
    %v492 = vpack.c.b16 %v459, %v456
    %v493 = vpack.c.b16 %v460, %v457
    %v494 = vpack.c.b16 %v461, %v458
    %v495 = vpack.c.b16 %v465, %v462
    %v496 = vpack.c.b16 %v466, %v463
    %v497 = vpack.c.b16 %v467, %v464
    %v498 = vpack.c.b16 %v471, %v468
    %v499 = vpack.c.b16 %v472, %v469
    %v500 = vpack.c.b16 %v473, %v470
    %v501 = vpack.c.b16 %v477, %v474
    %v502 = vpack.c.b16 %v478, %v475
    %v503 = vpack.c.b16 %v479, %v476
    %v504 = vpack.c.b16 %v483, %v480
    %v505 = vpack.c.b16 %v484, %v481
    %v506 = vpack.c.b16 %v485, %v482
    %v507 = vpack.c.b16 %v486, %v486
    %v508 = vpack.c.b16 %v487, %v487
    %v509 = vpack.c.b16 %v488, %v488
    %vm528 = vcmask 818176
    %v530 = vsel %vm528, %v372, 0
    %v533 = vsel %vm528, %v373, 0
    %v536 = vsel %vm528, %v374, 0
    %v539 = vsel %vm528, %v375, 0
    %v542 = vsel %vm528, %v376, 0
    %v545 = vsel %vm528, %v377, 0
    %v548 = vsel %vm528, %v378, 0
    %v551 = vsel %vm528, %v379, 0
    %v554 = vsel %vm528, %v380, 0
    %v557 = vsel %vm528, %v381, 0
    %v560 = vsel %vm528, %v382, 0
    %v563 = vsel %vm528, %v383, 0
    %v566 = vsel %vm528, %v384, 0
    %v569 = vsel %vm528, %v385, 0
    %v572 = vsel %vm528, %v386, 0
    %v575 = vsel %vm528, %v387, 0
    %v578 = vsel %vm528, %v388, 0
    %v581 = vsel %vm528, %v389, 0
    %v584 = vsel %vm528, %v390, 0
    %v587 = vsel %vm528, %v391, 0
    %v590 = vsel %vm528, %v392, 0
    %v593 = vsel %vm528, %v393, 0
    %v596 = vsel %vm528, %v394, 0
    %v599 = vsel %vm528, %v395, 0
    %v602 = vsel %vm528, %v396, 0
    %v605 = vsel %vm528, %v397, 0
    %v608 = vsel %vm528, %v398, 0
    %v611 = vsel %vm528, %v399, 0
    %v614 = vsel %vm528, %v400, 0
    %v617 = vsel %vm528, %v401, 0
    %v620 = vsel %vm528, %v402, 0
    %v623 = vsel %vm528, %v403, 0
    %v626 = vsel %vm528, %v404, 0
    %v629 = vsel %vm528, %v405, 0
    %v632 = vsel %vm528, %v406, 0
    %v635 = vsel %vm528, %v407, 0
    %v638 = vsel %vm528, %v408, 0
    %v641 = vsel %vm528, %v409, 0
    %v644 = vsel %vm528, %v410, 0
    %v647 = vsel %vm528, %v411, 0
    %v650 = vsel %vm528, %v412, 0
    %v653 = vsel %vm528, %v413, 0
    %v656 = vsel %vm528, %v414, 0
    %v659 = vsel %vm528, %v415, 0
    %v662 = vsel %vm528, %v416, 0
    %v665 = vsel %vm528, %v417, 0
    %v668 = vsel %vm528, %v418, 0
    %v671 = vsel %vm528, %v419, 0
    %v674 = vsel %vm528, %v420, 0
    %v677 = vsel %vm528, %v421, 0
    %v680 = vsel %vm528, %v422, 0
    %v683 = vsel %vm528, %v423, 0
    %vm685 = vcmask 1041408
    %v687 = vsel %vm685, %v507, 0
    %v690 = vsel %vm685, %v508, 0
    %v693 = vsel %vm685, %v509, 0
    %695 = vmatpush.bf16.msra.mxu0 0
    %696 = vmatpush.bf16.msra.mxu0 %v687
    %697 = vmatpush.bf16.msra.mxu0 %v504
    %698 = vmatpush.bf16.msra.mxu0 %v501
    %699 = vmatpush.bf16.msra.mxu0 %v498
    %700 = vmatpush.bf16.msra.mxu0 %v495
    %701 = vmatpush.bf16.msra.mxu0 %v492
    %702 = vmatpush.bf16.msra.mxu0 %v489
    %703 = vmatmul.bf16.gmra.mxu0 %v530
    %v704 = vpop.f32.mrf.mxu0
    %v705 = vadd.f32 0.0, %v704
    %v706 = vpop.f32.mrf.mxu0
    %v707 = vadd.f32 0.0, %v706
    %708 = vmatmul.bf16.gmra.mxu0 %v533
    %v709 = vpop.f32.mrf.mxu0
    %v710 = vadd.f32 0.0, %v709
    %v711 = vpop.f32.mrf.mxu0
    %v712 = vadd.f32 0.0, %v711
    %713 = vmatmul.bf16.gmra.mxu0 %v536
    %v714 = vpop.f32.mrf.mxu0
    %v715 = vadd.f32 0.0, %v714
    %v716 = vpop.f32.mrf.mxu0
    %v717 = vadd.f32 0.0, %v716
    %718 = vmatmul.bf16.gmra.mxu0 %v539
    %v719 = vpop.f32.mrf.mxu0
    %v720 = vadd.f32 0.0, %v719
    %v721 = vpop.f32.mrf.mxu0
    %v722 = vadd.f32 0.0, %v721
    %723 = vmatmul.bf16.gmra.mxu0 %v542
    %v724 = vpop.f32.mrf.mxu0
    %v725 = vadd.f32 0.0, %v724
    %v726 = vpop.f32.mrf.mxu0
    %v727 = vadd.f32 0.0, %v726
    %728 = vmatmul.bf16.gmra.mxu0 %v545
    %v729 = vpop.f32.mrf.mxu0
    %v730 = vadd.f32 0.0, %v729
    %v731 = vpop.f32.mrf.mxu0
    %v732 = vadd.f32 0.0, %v731
    %733 = vmatmul.bf16.gmra.mxu0 %v548
    %v734 = vpop.f32.mrf.mxu0
    %v735 = vadd.f32 0.0, %v734
    %v736 = vpop.f32.mrf.mxu0
    %v737 = vadd.f32 0.0, %v736
    %738 = vmatmul.bf16.gmra.mxu0 %v551
    %v739 = vpop.f32.mrf.mxu0
    %v740 = vadd.f32 0.0, %v739
    %v741 = vpop.f32.mrf.mxu0
    %v742 = vadd.f32 0.0, %v741
    %743 = vmatmul.bf16.gmra.mxu0 %v554
    %v744 = vpop.f32.mrf.mxu0
    %v745 = vadd.f32 0.0, %v744
    %v746 = vpop.f32.mrf.mxu0
    %v747 = vadd.f32 0.0, %v746
    %748 = vmatmul.bf16.gmra.mxu0 %v557
    %v749 = vpop.f32.mrf.mxu0
    %v750 = vadd.f32 0.0, %v749
    %v751 = vpop.f32.mrf.mxu0
    %v752 = vadd.f32 0.0, %v751
    %753 = vmatmul.bf16.gmra.mxu0 %v560
    %v754 = vpop.f32.mrf.mxu0
    %v755 = vadd.f32 0.0, %v754
    %v756 = vpop.f32.mrf.mxu0
    %v757 = vadd.f32 0.0, %v756
    %758 = vmatmul.bf16.gmra.mxu0 %v563
    %v759 = vpop.f32.mrf.mxu0
    %v760 = vadd.f32 0.0, %v759
    %v761 = vpop.f32.mrf.mxu0
    %v762 = vadd.f32 0.0, %v761
    %763 = vmatmul.bf16.gmra.mxu0 %v566
    %v764 = vpop.f32.mrf.mxu0
    %v765 = vadd.f32 0.0, %v764
    %v766 = vpop.f32.mrf.mxu0
    %v767 = vadd.f32 0.0, %v766
    %768 = vmatmul.bf16.gmra.mxu0 %v569
    %v769 = vpop.f32.mrf.mxu0
    %v770 = vadd.f32 0.0, %v769
    %v771 = vpop.f32.mrf.mxu0
    %v772 = vadd.f32 0.0, %v771
    %773 = vmatmul.bf16.gmra.mxu0 %v572
    %v774 = vpop.f32.mrf.mxu0
    %v775 = vadd.f32 0.0, %v774
    %v776 = vpop.f32.mrf.mxu0
    %v777 = vadd.f32 0.0, %v776
    %778 = vmatmul.bf16.gmra.mxu0 %v575
    %v779 = vpop.f32.mrf.mxu0
    %v780 = vadd.f32 0.0, %v779
    %v781 = vpop.f32.mrf.mxu0
    %v782 = vadd.f32 0.0, %v781
    %783 = vmatmul.bf16.gmra.mxu0 %v578
    %v784 = vpop.f32.mrf.mxu0
    %v785 = vadd.f32 0.0, %v784
    %v786 = vpop.f32.mrf.mxu0
    %v787 = vadd.f32 0.0, %v786
    %788 = vmatmul.bf16.gmra.mxu0 %v581
    %v789 = vpop.f32.mrf.mxu0
    %v790 = vadd.f32 0.0, %v789
    %v791 = vpop.f32.mrf.mxu0
    %v792 = vadd.f32 0.0, %v791
    %793 = vmatmul.bf16.gmra.mxu0 %v584
    %v794 = vpop.f32.mrf.mxu0
    %v795 = vadd.f32 0.0, %v794
    %v796 = vpop.f32.mrf.mxu0
    %v797 = vadd.f32 0.0, %v796
    %798 = vmatmul.bf16.gmra.mxu0 %v587
    %v799 = vpop.f32.mrf.mxu0
    %v800 = vadd.f32 0.0, %v799
    %v801 = vpop.f32.mrf.mxu0
    %v802 = vadd.f32 0.0, %v801
    %803 = vmatmul.bf16.gmra.mxu0 %v590
    %v804 = vpop.f32.mrf.mxu0
    %v805 = vadd.f32 0.0, %v804
    %v806 = vpop.f32.mrf.mxu0
    %v807 = vadd.f32 0.0, %v806
    %808 = vmatmul.bf16.gmra.mxu0 %v593
    %v809 = vpop.f32.mrf.mxu0
    %v810 = vadd.f32 0.0, %v809
    %v811 = vpop.f32.mrf.mxu0
    %v812 = vadd.f32 0.0, %v811
    %813 = vmatmul.bf16.gmra.mxu0 %v596
    %v814 = vpop.f32.mrf.mxu0
    %v815 = vadd.f32 0.0, %v814
    %v816 = vpop.f32.mrf.mxu0
    %v817 = vadd.f32 0.0, %v816
    %818 = vmatmul.bf16.gmra.mxu0 %v599
    %v819 = vpop.f32.mrf.mxu0
    %v820 = vadd.f32 0.0, %v819
    %v821 = vpop.f32.mrf.mxu0
    %v822 = vadd.f32 0.0, %v821
    %823 = vmatmul.bf16.gmra.mxu0 %v602
    %v824 = vpop.f32.mrf.mxu0
    %v825 = vadd.f32 0.0, %v824
    %v826 = vpop.f32.mrf.mxu0
    %v827 = vadd.f32 0.0, %v826
    %828 = vmatmul.bf16.gmra.mxu0 %v605
    %v829 = vpop.f32.mrf.mxu0
    %v830 = vadd.f32 0.0, %v829
    %v831 = vpop.f32.mrf.mxu0
    %v832 = vadd.f32 0.0, %v831
    %833 = vmatmul.bf16.gmra.mxu0 %v608
    %v834 = vpop.f32.mrf.mxu0
    %v835 = vadd.f32 0.0, %v834
    %v836 = vpop.f32.mrf.mxu0
    %v837 = vadd.f32 0.0, %v836
    %838 = vmatmul.bf16.gmra.mxu0 %v611
    %v839 = vpop.f32.mrf.mxu0
    %v840 = vadd.f32 0.0, %v839
    %v841 = vpop.f32.mrf.mxu0
    %v842 = vadd.f32 0.0, %v841
    %843 = vmatmul.bf16.gmra.mxu0 %v614
    %v844 = vpop.f32.mrf.mxu0
    %v845 = vadd.f32 0.0, %v844
    %v846 = vpop.f32.mrf.mxu0
    %v847 = vadd.f32 0.0, %v846
    %848 = vmatmul.bf16.gmra.mxu0 %v617
    %v849 = vpop.f32.mrf.mxu0
    %v850 = vadd.f32 0.0, %v849
    %v851 = vpop.f32.mrf.mxu0
    %v852 = vadd.f32 0.0, %v851
    %853 = vmatmul.bf16.gmra.mxu0 %v620
    %v854 = vpop.f32.mrf.mxu0
    %v855 = vadd.f32 0.0, %v854
    %v856 = vpop.f32.mrf.mxu0
    %v857 = vadd.f32 0.0, %v856
    %858 = vmatmul.bf16.gmra.mxu0 %v623
    %v859 = vpop.f32.mrf.mxu0
    %v860 = vadd.f32 0.0, %v859
    %v861 = vpop.f32.mrf.mxu0
    %v862 = vadd.f32 0.0, %v861
    %863 = vmatmul.bf16.gmra.mxu0 %v626
    %v864 = vpop.f32.mrf.mxu0
    %v865 = vadd.f32 0.0, %v864
    %v866 = vpop.f32.mrf.mxu0
    %v867 = vadd.f32 0.0, %v866
    %868 = vmatmul.bf16.gmra.mxu0 %v629
    %v869 = vpop.f32.mrf.mxu0
    %v870 = vadd.f32 0.0, %v869
    %v871 = vpop.f32.mrf.mxu0
    %v872 = vadd.f32 0.0, %v871
    %873 = vmatmul.bf16.gmra.mxu0 %v632
    %v874 = vpop.f32.mrf.mxu0
    %v875 = vadd.f32 0.0, %v874
    %v876 = vpop.f32.mrf.mxu0
    %v877 = vadd.f32 0.0, %v876
    %878 = vmatmul.bf16.gmra.mxu0 %v635
    %v879 = vpop.f32.mrf.mxu0
    %v880 = vadd.f32 0.0, %v879
    %v881 = vpop.f32.mrf.mxu0
    %v882 = vadd.f32 0.0, %v881
    %883 = vmatmul.bf16.gmra.mxu0 %v638
    %v884 = vpop.f32.mrf.mxu0
    %v885 = vadd.f32 0.0, %v884
    %v886 = vpop.f32.mrf.mxu0
    %v887 = vadd.f32 0.0, %v886
    %888 = vmatmul.bf16.gmra.mxu0 %v641
    %v889 = vpop.f32.mrf.mxu0
    %v890 = vadd.f32 0.0, %v889
    %v891 = vpop.f32.mrf.mxu0
    %v892 = vadd.f32 0.0, %v891
    %893 = vmatmul.bf16.gmra.mxu0 %v644
    %v894 = vpop.f32.mrf.mxu0
    %v895 = vadd.f32 0.0, %v894
    %v896 = vpop.f32.mrf.mxu0
    %v897 = vadd.f32 0.0, %v896
    %898 = vmatmul.bf16.gmra.mxu0 %v647
    %v899 = vpop.f32.mrf.mxu0
    %v900 = vadd.f32 0.0, %v899
    %v901 = vpop.f32.mrf.mxu0
    %v902 = vadd.f32 0.0, %v901
    %903 = vmatmul.bf16.gmra.mxu0 %v650
    %v904 = vpop.f32.mrf.mxu0
    %v905 = vadd.f32 0.0, %v904
    %v906 = vpop.f32.mrf.mxu0
    %v907 = vadd.f32 0.0, %v906
    %908 = vmatmul.bf16.gmra.mxu0 %v653
    %v909 = vpop.f32.mrf.mxu0
    %v910 = vadd.f32 0.0, %v909
    %v911 = vpop.f32.mrf.mxu0
    %v912 = vadd.f32 0.0, %v911
    %913 = vmatmul.bf16.gmra.mxu0 %v656
    %v914 = vpop.f32.mrf.mxu0
    %v915 = vadd.f32 0.0, %v914
    %v916 = vpop.f32.mrf.mxu0
    %v917 = vadd.f32 0.0, %v916
    %918 = vmatmul.bf16.gmra.mxu0 %v659
    %v919 = vpop.f32.mrf.mxu0
    %v920 = vadd.f32 0.0, %v919
    %v921 = vpop.f32.mrf.mxu0
    %v922 = vadd.f32 0.0, %v921
    %923 = vmatmul.bf16.gmra.mxu0 %v662
    %v924 = vpop.f32.mrf.mxu0
    %v925 = vadd.f32 0.0, %v924
    %v926 = vpop.f32.mrf.mxu0
    %v927 = vadd.f32 0.0, %v926
    %928 = vmatmul.bf16.gmra.mxu0 %v665
    %v929 = vpop.f32.mrf.mxu0
    %v930 = vadd.f32 0.0, %v929
    %v931 = vpop.f32.mrf.mxu0
    %v932 = vadd.f32 0.0, %v931
    %933 = vmatmul.bf16.gmra.mxu0 %v668
    %v934 = vpop.f32.mrf.mxu0
    %v935 = vadd.f32 0.0, %v934
    %v936 = vpop.f32.mrf.mxu0
    %v937 = vadd.f32 0.0, %v936
    %938 = vmatmul.bf16.gmra.mxu0 %v671
    %v939 = vpop.f32.mrf.mxu0
    %v940 = vadd.f32 0.0, %v939
    %v941 = vpop.f32.mrf.mxu0
    %v942 = vadd.f32 0.0, %v941
    %943 = vmatmul.bf16.gmra.mxu0 %v674
    %v944 = vpop.f32.mrf.mxu0
    %v945 = vadd.f32 0.0, %v944
    %v946 = vpop.f32.mrf.mxu0
    %v947 = vadd.f32 0.0, %v946
    %948 = vmatmul.bf16.gmra.mxu0 %v677
    %v949 = vpop.f32.mrf.mxu0
    %v950 = vadd.f32 0.0, %v949
    %v951 = vpop.f32.mrf.mxu0
    %v952 = vadd.f32 0.0, %v951
    %953 = vmatmul.bf16.gmra.mxu0 %v680
    %v954 = vpop.f32.mrf.mxu0
    %v955 = vadd.f32 0.0, %v954
    %v956 = vpop.f32.mrf.mxu0
    %v957 = vadd.f32 0.0, %v956
    %958 = vmatmul.bf16.gmra.mxu0 %v683
    %v959 = vpop.f32.mrf.mxu0
    %v960 = vadd.f32 0.0, %v959
    %v961 = vpop.f32.mrf.mxu0
    %v962 = vadd.f32 0.0, %v961
    %963 = vdwg.mxu0
    %964 = vmatpush.bf16.msra.mxu0 0
    %965 = vmatpush.bf16.msra.mxu0 %v690
    %966 = vmatpush.bf16.msra.mxu0 %v505
    %967 = vmatpush.bf16.msra.mxu0 %v502
    %968 = vmatpush.bf16.msra.mxu0 %v499
    %969 = vmatpush.bf16.msra.mxu0 %v496
    %970 = vmatpush.bf16.msra.mxu0 %v493
    %971 = vmatpush.bf16.msra.mxu0 %v490
    %972 = vmatmul.bf16.gmra.mxu0 %v530
    %v973 = vpop.f32.mrf.mxu0
    %v974 = vadd.f32 0.0, %v973
    %v975 = vpop.f32.mrf.mxu0
    %v976 = vadd.f32 0.0, %v975
    %977 = vmatmul.bf16.gmra.mxu0 %v533
    %v978 = vpop.f32.mrf.mxu0
    %v979 = vadd.f32 0.0, %v978
    %v980 = vpop.f32.mrf.mxu0
    %v981 = vadd.f32 0.0, %v980
    %982 = vmatmul.bf16.gmra.mxu0 %v536
    %v983 = vpop.f32.mrf.mxu0
    %v984 = vadd.f32 0.0, %v983
    %v985 = vpop.f32.mrf.mxu0
    %v986 = vadd.f32 0.0, %v985
    %987 = vmatmul.bf16.gmra.mxu0 %v539
    %v988 = vpop.f32.mrf.mxu0
    %v989 = vadd.f32 0.0, %v988
    %v990 = vpop.f32.mrf.mxu0
    %v991 = vadd.f32 0.0, %v990
    %992 = vmatmul.bf16.gmra.mxu0 %v542
    %v993 = vpop.f32.mrf.mxu0
    %v994 = vadd.f32 0.0, %v993
    %v995 = vpop.f32.mrf.mxu0
    %v996 = vadd.f32 0.0, %v995
    %997 = vmatmul.bf16.gmra.mxu0 %v545
    %v998 = vpop.f32.mrf.mxu0
    %v999 = vadd.f32 0.0, %v998
    %v1000 = vpop.f32.mrf.mxu0
    %v1001 = vadd.f32 0.0, %v1000
    %1002 = vmatmul.bf16.gmra.mxu0 %v548
    %v1003 = vpop.f32.mrf.mxu0
    %v1004 = vadd.f32 0.0, %v1003
    %v1005 = vpop.f32.mrf.mxu0
    %v1006 = vadd.f32 0.0, %v1005
    %1007 = vmatmul.bf16.gmra.mxu0 %v551
    %v1008 = vpop.f32.mrf.mxu0
    %v1009 = vadd.f32 0.0, %v1008
    %v1010 = vpop.f32.mrf.mxu0
    %v1011 = vadd.f32 0.0, %v1010
    %1012 = vmatmul.bf16.gmra.mxu0 %v554
    %v1013 = vpop.f32.mrf.mxu0
    %v1014 = vadd.f32 0.0, %v1013
    %v1015 = vpop.f32.mrf.mxu0
    %v1016 = vadd.f32 0.0, %v1015
    %1017 = vmatmul.bf16.gmra.mxu0 %v557
    %v1018 = vpop.f32.mrf.mxu0
    %v1019 = vadd.f32 0.0, %v1018
    %v1020 = vpop.f32.mrf.mxu0
    %v1021 = vadd.f32 0.0, %v1020
    %1022 = vmatmul.bf16.gmra.mxu0 %v560
    %v1023 = vpop.f32.mrf.mxu0
    %v1024 = vadd.f32 0.0, %v1023
    %v1025 = vpop.f32.mrf.mxu0
    %v1026 = vadd.f32 0.0, %v1025
    %1027 = vmatmul.bf16.gmra.mxu0 %v563
    %v1028 = vpop.f32.mrf.mxu0
    %v1029 = vadd.f32 0.0, %v1028
    %v1030 = vpop.f32.mrf.mxu0
    %v1031 = vadd.f32 0.0, %v1030
    %1032 = vmatmul.bf16.gmra.mxu0 %v566
    %v1033 = vpop.f32.mrf.mxu0
    %v1034 = vadd.f32 0.0, %v1033
    %v1035 = vpop.f32.mrf.mxu0
    %v1036 = vadd.f32 0.0, %v1035
    %1037 = vmatmul.bf16.gmra.mxu0 %v569
    %v1038 = vpop.f32.mrf.mxu0
    %v1039 = vadd.f32 0.0, %v1038
    %v1040 = vpop.f32.mrf.mxu0
    %v1041 = vadd.f32 0.0, %v1040
    %1042 = vmatmul.bf16.gmra.mxu0 %v572
    %v1043 = vpop.f32.mrf.mxu0
    %v1044 = vadd.f32 0.0, %v1043
    %v1045 = vpop.f32.mrf.mxu0
    %v1046 = vadd.f32 0.0, %v1045
    %1047 = vmatmul.bf16.gmra.mxu0 %v575
    %v1048 = vpop.f32.mrf.mxu0
    %v1049 = vadd.f32 0.0, %v1048
    %v1050 = vpop.f32.mrf.mxu0
    %v1051 = vadd.f32 0.0, %v1050
    %1052 = vmatmul.bf16.gmra.mxu0 %v578
    %v1053 = vpop.f32.mrf.mxu0
    %v1054 = vadd.f32 0.0, %v1053
    %v1055 = vpop.f32.mrf.mxu0
    %v1056 = vadd.f32 0.0, %v1055
    %1057 = vmatmul.bf16.gmra.mxu0 %v581
    %v1058 = vpop.f32.mrf.mxu0
    %v1059 = vadd.f32 0.0, %v1058
    %v1060 = vpop.f32.mrf.mxu0
    %v1061 = vadd.f32 0.0, %v1060
    %1062 = vmatmul.bf16.gmra.mxu0 %v584
    %v1063 = vpop.f32.mrf.mxu0
    %v1064 = vadd.f32 0.0, %v1063
    %v1065 = vpop.f32.mrf.mxu0
    %v1066 = vadd.f32 0.0, %v1065
    %1067 = vmatmul.bf16.gmra.mxu0 %v587
    %v1068 = vpop.f32.mrf.mxu0
    %v1069 = vadd.f32 0.0, %v1068
    %v1070 = vpop.f32.mrf.mxu0
    %v1071 = vadd.f32 0.0, %v1070
    %1072 = vmatmul.bf16.gmra.mxu0 %v590
    %v1073 = vpop.f32.mrf.mxu0
    %v1074 = vadd.f32 0.0, %v1073
    %v1075 = vpop.f32.mrf.mxu0
    %v1076 = vadd.f32 0.0, %v1075
    %1077 = vmatmul.bf16.gmra.mxu0 %v593
    %v1078 = vpop.f32.mrf.mxu0
    %v1079 = vadd.f32 0.0, %v1078
    %v1080 = vpop.f32.mrf.mxu0
    %v1081 = vadd.f32 0.0, %v1080
    %1082 = vmatmul.bf16.gmra.mxu0 %v596
    %v1083 = vpop.f32.mrf.mxu0
    %v1084 = vadd.f32 0.0, %v1083
    %v1085 = vpop.f32.mrf.mxu0
    %v1086 = vadd.f32 0.0, %v1085
    %1087 = vmatmul.bf16.gmra.mxu0 %v599
    %v1088 = vpop.f32.mrf.mxu0
    %v1089 = vadd.f32 0.0, %v1088
    %v1090 = vpop.f32.mrf.mxu0
    %v1091 = vadd.f32 0.0, %v1090
    %1092 = vmatmul.bf16.gmra.mxu0 %v602
    %v1093 = vpop.f32.mrf.mxu0
    %v1094 = vadd.f32 0.0, %v1093
    %v1095 = vpop.f32.mrf.mxu0
    %v1096 = vadd.f32 0.0, %v1095
    %1097 = vmatmul.bf16.gmra.mxu0 %v605
    %v1098 = vpop.f32.mrf.mxu0
    %v1099 = vadd.f32 0.0, %v1098
    %v1100 = vpop.f32.mrf.mxu0
    %v1101 = vadd.f32 0.0, %v1100
    %1102 = vmatmul.bf16.gmra.mxu0 %v608
    %v1103 = vpop.f32.mrf.mxu0
    %v1104 = vadd.f32 0.0, %v1103
    %v1105 = vpop.f32.mrf.mxu0
    %v1106 = vadd.f32 0.0, %v1105
    %1107 = vmatmul.bf16.gmra.mxu0 %v611
    %v1108 = vpop.f32.mrf.mxu0
    %v1109 = vadd.f32 0.0, %v1108
    %v1110 = vpop.f32.mrf.mxu0
    %v1111 = vadd.f32 0.0, %v1110
    %1112 = vmatmul.bf16.gmra.mxu0 %v614
    %v1113 = vpop.f32.mrf.mxu0
    %v1114 = vadd.f32 0.0, %v1113
    %v1115 = vpop.f32.mrf.mxu0
    %v1116 = vadd.f32 0.0, %v1115
    %1117 = vmatmul.bf16.gmra.mxu0 %v617
    %v1118 = vpop.f32.mrf.mxu0
    %v1119 = vadd.f32 0.0, %v1118
    %v1120 = vpop.f32.mrf.mxu0
    %v1121 = vadd.f32 0.0, %v1120
    %1122 = vmatmul.bf16.gmra.mxu0 %v620
    %v1123 = vpop.f32.mrf.mxu0
    %v1124 = vadd.f32 0.0, %v1123
    %v1125 = vpop.f32.mrf.mxu0
    %v1126 = vadd.f32 0.0, %v1125
    %1127 = vmatmul.bf16.gmra.mxu0 %v623
    %v1128 = vpop.f32.mrf.mxu0
    %v1129 = vadd.f32 0.0, %v1128
    %v1130 = vpop.f32.mrf.mxu0
    %v1131 = vadd.f32 0.0, %v1130
    %1132 = vmatmul.bf16.gmra.mxu0 %v626
    %v1133 = vpop.f32.mrf.mxu0
    %v1134 = vadd.f32 0.0, %v1133
    %v1135 = vpop.f32.mrf.mxu0
    %v1136 = vadd.f32 0.0, %v1135
    %1137 = vmatmul.bf16.gmra.mxu0 %v629
    %v1138 = vpop.f32.mrf.mxu0
    %v1139 = vadd.f32 0.0, %v1138
    %v1140 = vpop.f32.mrf.mxu0
    %v1141 = vadd.f32 0.0, %v1140
    %1142 = vmatmul.bf16.gmra.mxu0 %v632
    %v1143 = vpop.f32.mrf.mxu0
    %v1144 = vadd.f32 0.0, %v1143
    %v1145 = vpop.f32.mrf.mxu0
    %v1146 = vadd.f32 0.0, %v1145
    %1147 = vmatmul.bf16.gmra.mxu0 %v635
    %v1148 = vpop.f32.mrf.mxu0
    %v1149 = vadd.f32 0.0, %v1148
    %v1150 = vpop.f32.mrf.mxu0
    %v1151 = vadd.f32 0.0, %v1150
    %1152 = vmatmul.bf16.gmra.mxu0 %v638
    %v1153 = vpop.f32.mrf.mxu0
    %v1154 = vadd.f32 0.0, %v1153
    %v1155 = vpop.f32.mrf.mxu0
    %v1156 = vadd.f32 0.0, %v1155
    %1157 = vmatmul.bf16.gmra.mxu0 %v641
    %v1158 = vpop.f32.mrf.mxu0
    %v1159 = vadd.f32 0.0, %v1158
    %v1160 = vpop.f32.mrf.mxu0
    %v1161 = vadd.f32 0.0, %v1160
    %1162 = vmatmul.bf16.gmra.mxu0 %v644
    %v1163 = vpop.f32.mrf.mxu0
    %v1164 = vadd.f32 0.0, %v1163
    %v1165 = vpop.f32.mrf.mxu0
    %v1166 = vadd.f32 0.0, %v1165
    %1167 = vmatmul.bf16.gmra.mxu0 %v647
    %v1168 = vpop.f32.mrf.mxu0
    %v1169 = vadd.f32 0.0, %v1168
    %v1170 = vpop.f32.mrf.mxu0
    %v1171 = vadd.f32 0.0, %v1170
    %1172 = vmatmul.bf16.gmra.mxu0 %v650
    %v1173 = vpop.f32.mrf.mxu0
    %v1174 = vadd.f32 0.0, %v1173
    %v1175 = vpop.f32.mrf.mxu0
    %v1176 = vadd.f32 0.0, %v1175
    %1177 = vmatmul.bf16.gmra.mxu0 %v653
    %v1178 = vpop.f32.mrf.mxu0
    %v1179 = vadd.f32 0.0, %v1178
    %v1180 = vpop.f32.mrf.mxu0
    %v1181 = vadd.f32 0.0, %v1180
    %1182 = vmatmul.bf16.gmra.mxu0 %v656
    %v1183 = vpop.f32.mrf.mxu0
    %v1184 = vadd.f32 0.0, %v1183
    %v1185 = vpop.f32.mrf.mxu0
    %v1186 = vadd.f32 0.0, %v1185
    %1187 = vmatmul.bf16.gmra.mxu0 %v659
    %v1188 = vpop.f32.mrf.mxu0
    %v1189 = vadd.f32 0.0, %v1188
    %v1190 = vpop.f32.mrf.mxu0
    %v1191 = vadd.f32 0.0, %v1190
    %1192 = vmatmul.bf16.gmra.mxu0 %v662
    %v1193 = vpop.f32.mrf.mxu0
    %v1194 = vadd.f32 0.0, %v1193
    %v1195 = vpop.f32.mrf.mxu0
    %v1196 = vadd.f32 0.0, %v1195
    %1197 = vmatmul.bf16.gmra.mxu0 %v665
    %v1198 = vpop.f32.mrf.mxu0
    %v1199 = vadd.f32 0.0, %v1198
    %v1200 = vpop.f32.mrf.mxu0
    %v1201 = vadd.f32 0.0, %v1200
    %1202 = vmatmul.bf16.gmra.mxu0 %v668
    %v1203 = vpop.f32.mrf.mxu0
    %v1204 = vadd.f32 0.0, %v1203
    %v1205 = vpop.f32.mrf.mxu0
    %v1206 = vadd.f32 0.0, %v1205
    %1207 = vmatmul.bf16.gmra.mxu0 %v671
    %v1208 = vpop.f32.mrf.mxu0
    %v1209 = vadd.f32 0.0, %v1208
    %v1210 = vpop.f32.mrf.mxu0
    %v1211 = vadd.f32 0.0, %v1210
    %1212 = vmatmul.bf16.gmra.mxu0 %v674
    %v1213 = vpop.f32.mrf.mxu0
    %v1214 = vadd.f32 0.0, %v1213
    %v1215 = vpop.f32.mrf.mxu0
    %v1216 = vadd.f32 0.0, %v1215
    %1217 = vmatmul.bf16.gmra.mxu0 %v677
    %v1218 = vpop.f32.mrf.mxu0
    %v1219 = vadd.f32 0.0, %v1218
    %v1220 = vpop.f32.mrf.mxu0
    %v1221 = vadd.f32 0.0, %v1220
    %1222 = vmatmul.bf16.gmra.mxu0 %v680
    %v1223 = vpop.f32.mrf.mxu0
    %v1224 = vadd.f32 0.0, %v1223
    %v1225 = vpop.f32.mrf.mxu0
    %v1226 = vadd.f32 0.0, %v1225
    %1227 = vmatmul.bf16.gmra.mxu0 %v683
    %v1228 = vpop.f32.mrf.mxu0
    %v1229 = vadd.f32 0.0, %v1228
    %v1230 = vpop.f32.mrf.mxu0
    %v1231 = vadd.f32 0.0, %v1230
    %1232 = vdwg.mxu0
    %1233 = vmatpush.bf16.msra.mxu0 0
    %1234 = vmatpush.bf16.msra.mxu0 %v693
    %1235 = vmatpush.bf16.msra.mxu0 %v506
    %1236 = vmatpush.bf16.msra.mxu0 %v503
    %1237 = vmatpush.bf16.msra.mxu0 %v500
    %1238 = vmatpush.bf16.msra.mxu0 %v497
    %1239 = vmatpush.bf16.msra.mxu0 %v494
    %1240 = vmatpush.bf16.msra.mxu0 %v491
    %1241 = vmatmul.bf16.gmra.mxu0 %v530
    %v1242 = vpop.f32.mrf.mxu0
    %v1243 = vadd.f32 0.0, %v1242
    %v1244 = vpop.f32.mrf.mxu0
    %v1245 = vadd.f32 0.0, %v1244
    %1246 = vmatmul.bf16.gmra.mxu0 %v533
    %v1247 = vpop.f32.mrf.mxu0
    %v1248 = vadd.f32 0.0, %v1247
    %v1249 = vpop.f32.mrf.mxu0
    %v1250 = vadd.f32 0.0, %v1249
    %1251 = vmatmul.bf16.gmra.mxu0 %v536
    %v1252 = vpop.f32.mrf.mxu0
    %v1253 = vadd.f32 0.0, %v1252
    %v1254 = vpop.f32.mrf.mxu0
    %v1255 = vadd.f32 0.0, %v1254
    %1256 = vmatmul.bf16.gmra.mxu0 %v539
    %v1257 = vpop.f32.mrf.mxu0
    %v1258 = vadd.f32 0.0, %v1257
    %v1259 = vpop.f32.mrf.mxu0
    %v1260 = vadd.f32 0.0, %v1259
    %1261 = vmatmul.bf16.gmra.mxu0 %v542
    %v1262 = vpop.f32.mrf.mxu0
    %v1263 = vadd.f32 0.0, %v1262
    %v1264 = vpop.f32.mrf.mxu0
    %v1265 = vadd.f32 0.0, %v1264
    %1266 = vmatmul.bf16.gmra.mxu0 %v545
    %v1267 = vpop.f32.mrf.mxu0
    %v1268 = vadd.f32 0.0, %v1267
    %v1269 = vpop.f32.mrf.mxu0
    %v1270 = vadd.f32 0.0, %v1269
    %1271 = vmatmul.bf16.gmra.mxu0 %v548
    %v1272 = vpop.f32.mrf.mxu0
    %v1273 = vadd.f32 0.0, %v1272
    %v1274 = vpop.f32.mrf.mxu0
    %v1275 = vadd.f32 0.0, %v1274
    %1276 = vmatmul.bf16.gmra.mxu0 %v551
    %v1277 = vpop.f32.mrf.mxu0
    %v1278 = vadd.f32 0.0, %v1277
    %v1279 = vpop.f32.mrf.mxu0
    %v1280 = vadd.f32 0.0, %v1279
    %1281 = vmatmul.bf16.gmra.mxu0 %v554
    %v1282 = vpop.f32.mrf.mxu0
    %v1283 = vadd.f32 0.0, %v1282
    %v1284 = vpop.f32.mrf.mxu0
    %v1285 = vadd.f32 0.0, %v1284
    %1286 = vmatmul.bf16.gmra.mxu0 %v557
    %v1287 = vpop.f32.mrf.mxu0
    %v1288 = vadd.f32 0.0, %v1287
    %v1289 = vpop.f32.mrf.mxu0
    %v1290 = vadd.f32 0.0, %v1289
    %1291 = vmatmul.bf16.gmra.mxu0 %v560
    %v1292 = vpop.f32.mrf.mxu0
    %v1293 = vadd.f32 0.0, %v1292
    %v1294 = vpop.f32.mrf.mxu0
    %v1295 = vadd.f32 0.0, %v1294
    %1296 = vmatmul.bf16.gmra.mxu0 %v563
    %v1297 = vpop.f32.mrf.mxu0
    %v1298 = vadd.f32 0.0, %v1297
    %v1299 = vpop.f32.mrf.mxu0
    %v1300 = vadd.f32 0.0, %v1299
    %1301 = vmatmul.bf16.gmra.mxu0 %v566
    %v1302 = vpop.f32.mrf.mxu0
    %v1303 = vadd.f32 0.0, %v1302
    %v1304 = vpop.f32.mrf.mxu0
    %v1305 = vadd.f32 0.0, %v1304
    %1306 = vmatmul.bf16.gmra.mxu0 %v569
    %v1307 = vpop.f32.mrf.mxu0
    %v1308 = vadd.f32 0.0, %v1307
    %v1309 = vpop.f32.mrf.mxu0
    %v1310 = vadd.f32 0.0, %v1309
    %1311 = vmatmul.bf16.gmra.mxu0 %v572
    %v1312 = vpop.f32.mrf.mxu0
    %v1313 = vadd.f32 0.0, %v1312
    %v1314 = vpop.f32.mrf.mxu0
    %v1315 = vadd.f32 0.0, %v1314
    %1316 = vmatmul.bf16.gmra.mxu0 %v575
    %v1317 = vpop.f32.mrf.mxu0
    %v1318 = vadd.f32 0.0, %v1317
    %v1319 = vpop.f32.mrf.mxu0
    %v1320 = vadd.f32 0.0, %v1319
    %1321 = vmatmul.bf16.gmra.mxu0 %v578
    %v1322 = vpop.f32.mrf.mxu0
    %v1323 = vadd.f32 0.0, %v1322
    %v1324 = vpop.f32.mrf.mxu0
    %v1325 = vadd.f32 0.0, %v1324
    %1326 = vmatmul.bf16.gmra.mxu0 %v581
    %v1327 = vpop.f32.mrf.mxu0
    %v1328 = vadd.f32 0.0, %v1327
    %v1329 = vpop.f32.mrf.mxu0
    %v1330 = vadd.f32 0.0, %v1329
    %1331 = vmatmul.bf16.gmra.mxu0 %v584
    %v1332 = vpop.f32.mrf.mxu0
    %v1333 = vadd.f32 0.0, %v1332
    %v1334 = vpop.f32.mrf.mxu0
    %v1335 = vadd.f32 0.0, %v1334
    %1336 = vmatmul.bf16.gmra.mxu0 %v587
    %v1337 = vpop.f32.mrf.mxu0
    %v1338 = vadd.f32 0.0, %v1337
    %v1339 = vpop.f32.mrf.mxu0
    %v1340 = vadd.f32 0.0, %v1339
    %1341 = vmatmul.bf16.gmra.mxu0 %v590
    %v1342 = vpop.f32.mrf.mxu0
    %v1343 = vadd.f32 0.0, %v1342
    %v1344 = vpop.f32.mrf.mxu0
    %v1345 = vadd.f32 0.0, %v1344
    %1346 = vmatmul.bf16.gmra.mxu0 %v593
    %v1347 = vpop.f32.mrf.mxu0
    %v1348 = vadd.f32 0.0, %v1347
    %v1349 = vpop.f32.mrf.mxu0
    %v1350 = vadd.f32 0.0, %v1349
    %1351 = vmatmul.bf16.gmra.mxu0 %v596
    %v1352 = vpop.f32.mrf.mxu0
    %v1353 = vadd.f32 0.0, %v1352
    %v1354 = vpop.f32.mrf.mxu0
    %v1355 = vadd.f32 0.0, %v1354
    %1356 = vmatmul.bf16.gmra.mxu0 %v599
    %v1357 = vpop.f32.mrf.mxu0
    %v1358 = vadd.f32 0.0, %v1357
    %v1359 = vpop.f32.mrf.mxu0
    %v1360 = vadd.f32 0.0, %v1359
    %1361 = vmatmul.bf16.gmra.mxu0 %v602
    %v1362 = vpop.f32.mrf.mxu0
    %v1363 = vadd.f32 0.0, %v1362
    %v1364 = vpop.f32.mrf.mxu0
    %v1365 = vadd.f32 0.0, %v1364
    %1366 = vmatmul.bf16.gmra.mxu0 %v605
    %v1367 = vpop.f32.mrf.mxu0
    %v1368 = vadd.f32 0.0, %v1367
    %v1369 = vpop.f32.mrf.mxu0
    %v1370 = vadd.f32 0.0, %v1369
    %1371 = vmatmul.bf16.gmra.mxu0 %v608
    %v1372 = vpop.f32.mrf.mxu0
    %v1373 = vadd.f32 0.0, %v1372
    %v1374 = vpop.f32.mrf.mxu0
    %v1375 = vadd.f32 0.0, %v1374
    %1376 = vmatmul.bf16.gmra.mxu0 %v611
    %v1377 = vpop.f32.mrf.mxu0
    %v1378 = vadd.f32 0.0, %v1377
    %v1379 = vpop.f32.mrf.mxu0
    %v1380 = vadd.f32 0.0, %v1379
    %1381 = vmatmul.bf16.gmra.mxu0 %v614
    %v1382 = vpop.f32.mrf.mxu0
    %v1383 = vadd.f32 0.0, %v1382
    %v1384 = vpop.f32.mrf.mxu0
    %v1385 = vadd.f32 0.0, %v1384
    %1386 = vmatmul.bf16.gmra.mxu0 %v617
    %v1387 = vpop.f32.mrf.mxu0
    %v1388 = vadd.f32 0.0, %v1387
    %v1389 = vpop.f32.mrf.mxu0
    %v1390 = vadd.f32 0.0, %v1389
    %1391 = vmatmul.bf16.gmra.mxu0 %v620
    %v1392 = vpop.f32.mrf.mxu0
    %v1393 = vadd.f32 0.0, %v1392
    %v1394 = vpop.f32.mrf.mxu0
    %v1395 = vadd.f32 0.0, %v1394
    %1396 = vmatmul.bf16.gmra.mxu0 %v623
    %v1397 = vpop.f32.mrf.mxu0
    %v1398 = vadd.f32 0.0, %v1397
    %v1399 = vpop.f32.mrf.mxu0
    %v1400 = vadd.f32 0.0, %v1399
    %1401 = vmatmul.bf16.gmra.mxu0 %v626
    %v1402 = vpop.f32.mrf.mxu0
    %v1403 = vadd.f32 0.0, %v1402
    %v1404 = vpop.f32.mrf.mxu0
    %v1405 = vadd.f32 0.0, %v1404
    %1406 = vmatmul.bf16.gmra.mxu0 %v629
    %v1407 = vpop.f32.mrf.mxu0
    %v1408 = vadd.f32 0.0, %v1407
    %v1409 = vpop.f32.mrf.mxu0
    %v1410 = vadd.f32 0.0, %v1409
    %1411 = vmatmul.bf16.gmra.mxu0 %v632
    %v1412 = vpop.f32.mrf.mxu0
    %v1413 = vadd.f32 0.0, %v1412
    %v1414 = vpop.f32.mrf.mxu0
    %v1415 = vadd.f32 0.0, %v1414
    %1416 = vmatmul.bf16.gmra.mxu0 %v635
    %v1417 = vpop.f32.mrf.mxu0
    %v1418 = vadd.f32 0.0, %v1417
    %v1419 = vpop.f32.mrf.mxu0
    %v1420 = vadd.f32 0.0, %v1419
    %1421 = vmatmul.bf16.gmra.mxu0 %v638
    %v1422 = vpop.f32.mrf.mxu0
    %v1423 = vadd.f32 0.0, %v1422
    %v1424 = vpop.f32.mrf.mxu0
    %v1425 = vadd.f32 0.0, %v1424
    %1426 = vmatmul.bf16.gmra.mxu0 %v641
    %v1427 = vpop.f32.mrf.mxu0
    %v1428 = vadd.f32 0.0, %v1427
    %v1429 = vpop.f32.mrf.mxu0
    %v1430 = vadd.f32 0.0, %v1429
    %1431 = vmatmul.bf16.gmra.mxu0 %v644
    %v1432 = vpop.f32.mrf.mxu0
    %v1433 = vadd.f32 0.0, %v1432
    %v1434 = vpop.f32.mrf.mxu0
    %v1435 = vadd.f32 0.0, %v1434
    %1436 = vmatmul.bf16.gmra.mxu0 %v647
    %v1437 = vpop.f32.mrf.mxu0
    %v1438 = vadd.f32 0.0, %v1437
    %v1439 = vpop.f32.mrf.mxu0
    %v1440 = vadd.f32 0.0, %v1439
    %1441 = vmatmul.bf16.gmra.mxu0 %v650
    %v1442 = vpop.f32.mrf.mxu0
    %v1443 = vadd.f32 0.0, %v1442
    %v1444 = vpop.f32.mrf.mxu0
    %v1445 = vadd.f32 0.0, %v1444
    %1446 = vmatmul.bf16.gmra.mxu0 %v653
    %v1447 = vpop.f32.mrf.mxu0
    %v1448 = vadd.f32 0.0, %v1447
    %v1449 = vpop.f32.mrf.mxu0
    %v1450 = vadd.f32 0.0, %v1449
    %1451 = vmatmul.bf16.gmra.mxu0 %v656
    %v1452 = vpop.f32.mrf.mxu0
    %v1453 = vadd.f32 0.0, %v1452
    %v1454 = vpop.f32.mrf.mxu0
    %v1455 = vadd.f32 0.0, %v1454
    %1456 = vmatmul.bf16.gmra.mxu0 %v659
    %v1457 = vpop.f32.mrf.mxu0
    %v1458 = vadd.f32 0.0, %v1457
    %v1459 = vpop.f32.mrf.mxu0
    %v1460 = vadd.f32 0.0, %v1459
    %1461 = vmatmul.bf16.gmra.mxu0 %v662
    %v1462 = vpop.f32.mrf.mxu0
    %v1463 = vadd.f32 0.0, %v1462
    %v1464 = vpop.f32.mrf.mxu0
    %v1465 = vadd.f32 0.0, %v1464
    %1466 = vmatmul.bf16.gmra.mxu0 %v665
    %v1467 = vpop.f32.mrf.mxu0
    %v1468 = vadd.f32 0.0, %v1467
    %v1469 = vpop.f32.mrf.mxu0
    %v1470 = vadd.f32 0.0, %v1469
    %1471 = vmatmul.bf16.gmra.mxu0 %v668
    %v1472 = vpop.f32.mrf.mxu0
    %v1473 = vadd.f32 0.0, %v1472
    %v1474 = vpop.f32.mrf.mxu0
    %v1475 = vadd.f32 0.0, %v1474
    %1476 = vmatmul.bf16.gmra.mxu0 %v671
    %v1477 = vpop.f32.mrf.mxu0
    %v1478 = vadd.f32 0.0, %v1477
    %v1479 = vpop.f32.mrf.mxu0
    %v1480 = vadd.f32 0.0, %v1479
    %1481 = vmatmul.bf16.gmra.mxu0 %v674
    %v1482 = vpop.f32.mrf.mxu0
    %v1483 = vadd.f32 0.0, %v1482
    %v1484 = vpop.f32.mrf.mxu0
    %v1485 = vadd.f32 0.0, %v1484
    %1486 = vmatmul.bf16.gmra.mxu0 %v677
    %v1487 = vpop.f32.mrf.mxu0
    %v1488 = vadd.f32 0.0, %v1487
    %v1489 = vpop.f32.mrf.mxu0
    %v1490 = vadd.f32 0.0, %v1489
    %1491 = vmatmul.bf16.gmra.mxu0 %v680
    %v1492 = vpop.f32.mrf.mxu0
    %v1493 = vadd.f32 0.0, %v1492
    %v1494 = vpop.f32.mrf.mxu0
    %v1495 = vadd.f32 0.0, %v1494
    %1496 = vmatmul.bf16.gmra.mxu0 %v683
    %v1497 = vpop.f32.mrf.mxu0
    %v1498 = vadd.f32 0.0, %v1497
    %v1499 = vpop.f32.mrf.mxu0
    %v1500 = vadd.f32 0.0, %v1499
    %1501 = vdwg.mxu0
    %vm1606 = vcmask 1046528
    %v1607 = vrot.slane %v705, 1
    %v1608 = vrot.slane %v707, 1
    %v1609 = vsel %vm1606, %v1607, %v1608
    %v1610 = vrot.slane %v710, 1
    %v1611 = vsel %vm1606, %v1608, %v1610
    %v1612 = vrot.slane %v712, 1
    %v1613 = vsel %vm1606, %v1610, %v1612
    %v1614 = vrot.slane %v715, 1
    %v1615 = vsel %vm1606, %v1612, %v1614
    %v1616 = vrot.slane %v717, 1
    %v1617 = vsel %vm1606, %v1614, %v1616
    %v1618 = vrot.slane %v720, 1
    %v1619 = vsel %vm1606, %v1616, %v1618
    %v1620 = vrot.slane %v722, 1
    %v1621 = vsel %vm1606, %v1618, %v1620
    %v1622 = vrot.slane %v725, 1
    %v1623 = vsel %vm1606, %v1620, %v1622
    %v1624 = vrot.slane %v727, 1
    %v1625 = vsel %vm1606, %v1622, %v1624
    %v1626 = vrot.slane %v730, 1
    %v1627 = vsel %vm1606, %v1624, %v1626
    %v1628 = vrot.slane %v732, 1
    %v1629 = vsel %vm1606, %v1626, %v1628
    %v1630 = vrot.slane %v735, 1
    %v1631 = vsel %vm1606, %v1628, %v1630
    %v1632 = vrot.slane %v737, 1
    %v1633 = vrot.slane %v740, 1
    %v1634 = vsel %vm1606, %v1632, %v1633
    %v1635 = vrot.slane %v742, 1
    %v1636 = vsel %vm1606, %v1633, %v1635
    %v1637 = vrot.slane %v745, 1
    %v1638 = vsel %vm1606, %v1635, %v1637
    %v1639 = vrot.slane %v747, 1
    %v1640 = vsel %vm1606, %v1637, %v1639
    %v1641 = vrot.slane %v750, 1
    %v1642 = vsel %vm1606, %v1639, %v1641
    %v1643 = vrot.slane %v752, 1
    %v1644 = vsel %vm1606, %v1641, %v1643
    %v1645 = vrot.slane %v755, 1
    %v1646 = vsel %vm1606, %v1643, %v1645
    %v1647 = vrot.slane %v757, 1
    %v1648 = vsel %vm1606, %v1645, %v1647
    %v1649 = vrot.slane %v760, 1
    %v1650 = vsel %vm1606, %v1647, %v1649
    %v1651 = vrot.slane %v762, 1
    %v1652 = vsel %vm1606, %v1649, %v1651
    %v1653 = vrot.slane %v765, 1
    %v1654 = vsel %vm1606, %v1651, %v1653
    %v1655 = vrot.slane %v767, 1
    %v1656 = vsel %vm1606, %v1653, %v1655
    %v1657 = vrot.slane %v770, 1
    %v1658 = vrot.slane %v772, 1
    %v1659 = vsel %vm1606, %v1657, %v1658
    %v1660 = vrot.slane %v775, 1
    %v1661 = vsel %vm1606, %v1658, %v1660
    %v1662 = vrot.slane %v777, 1
    %v1663 = vsel %vm1606, %v1660, %v1662
    %v1664 = vrot.slane %v780, 1
    %v1665 = vsel %vm1606, %v1662, %v1664
    %v1666 = vrot.slane %v782, 1
    %v1667 = vsel %vm1606, %v1664, %v1666
    %v1668 = vrot.slane %v785, 1
    %v1669 = vsel %vm1606, %v1666, %v1668
    %v1670 = vrot.slane %v787, 1
    %v1671 = vsel %vm1606, %v1668, %v1670
    %v1672 = vrot.slane %v790, 1
    %v1673 = vsel %vm1606, %v1670, %v1672
    %v1674 = vrot.slane %v792, 1
    %v1675 = vsel %vm1606, %v1672, %v1674
    %v1676 = vrot.slane %v795, 1
    %v1677 = vsel %vm1606, %v1674, %v1676
    %v1678 = vrot.slane %v797, 1
    %v1679 = vsel %vm1606, %v1676, %v1678
    %v1680 = vrot.slane %v800, 1
    %v1681 = vsel %vm1606, %v1678, %v1680
    %v1682 = vrot.slane %v802, 1
    %v1683 = vrot.slane %v805, 1
    %v1684 = vsel %vm1606, %v1682, %v1683
    %v1685 = vrot.slane %v807, 1
    %v1686 = vsel %vm1606, %v1683, %v1685
    %v1687 = vrot.slane %v810, 1
    %v1688 = vsel %vm1606, %v1685, %v1687
    %v1689 = vrot.slane %v812, 1
    %v1690 = vsel %vm1606, %v1687, %v1689
    %v1691 = vrot.slane %v815, 1
    %v1692 = vsel %vm1606, %v1689, %v1691
    %v1693 = vrot.slane %v817, 1
    %v1694 = vsel %vm1606, %v1691, %v1693
    %v1695 = vrot.slane %v820, 1
    %v1696 = vsel %vm1606, %v1693, %v1695
    %v1697 = vrot.slane %v822, 1
    %v1698 = vsel %vm1606, %v1695, %v1697
    %v1699 = vrot.slane %v825, 1
    %v1700 = vsel %vm1606, %v1697, %v1699
    %v1701 = vrot.slane %v827, 1
    %v1702 = vsel %vm1606, %v1699, %v1701
    %v1703 = vrot.slane %v830, 1
    %v1704 = vsel %vm1606, %v1701, %v1703
    %v1705 = vrot.slane %v832, 1
    %v1706 = vsel %vm1606, %v1703, %v1705
    %v1707 = vrot.slane %v835, 1
    %v1708 = vrot.slane %v837, 1
    %v1709 = vsel %vm1606, %v1707, %v1708
    %v1710 = vrot.slane %v840, 1
    %v1711 = vsel %vm1606, %v1708, %v1710
    %v1712 = vrot.slane %v842, 1
    %v1713 = vsel %vm1606, %v1710, %v1712
    %v1714 = vrot.slane %v845, 1
    %v1715 = vsel %vm1606, %v1712, %v1714
    %v1716 = vrot.slane %v847, 1
    %v1717 = vsel %vm1606, %v1714, %v1716
    %v1718 = vrot.slane %v850, 1
    %v1719 = vsel %vm1606, %v1716, %v1718
    %v1720 = vrot.slane %v852, 1
    %v1721 = vsel %vm1606, %v1718, %v1720
    %v1722 = vrot.slane %v855, 1
    %v1723 = vsel %vm1606, %v1720, %v1722
    %v1724 = vrot.slane %v857, 1
    %v1725 = vsel %vm1606, %v1722, %v1724
    %v1726 = vrot.slane %v860, 1
    %v1727 = vsel %vm1606, %v1724, %v1726
    %v1728 = vrot.slane %v862, 1
    %v1729 = vsel %vm1606, %v1726, %v1728
    %v1730 = vrot.slane %v865, 1
    %v1731 = vsel %vm1606, %v1728, %v1730
    %v1732 = vrot.slane %v867, 1
    %v1733 = vrot.slane %v870, 1
    %v1734 = vsel %vm1606, %v1732, %v1733
    %v1735 = vrot.slane %v872, 1
    %v1736 = vsel %vm1606, %v1733, %v1735
    %v1737 = vrot.slane %v875, 1
    %v1738 = vsel %vm1606, %v1735, %v1737
    %v1739 = vrot.slane %v877, 1
    %v1740 = vsel %vm1606, %v1737, %v1739
    %v1741 = vrot.slane %v880, 1
    %v1742 = vsel %vm1606, %v1739, %v1741
    %v1743 = vrot.slane %v882, 1
    %v1744 = vsel %vm1606, %v1741, %v1743
    %v1745 = vrot.slane %v885, 1
    %v1746 = vsel %vm1606, %v1743, %v1745
    %v1747 = vrot.slane %v887, 1
    %v1748 = vsel %vm1606, %v1745, %v1747
    %v1749 = vrot.slane %v890, 1
    %v1750 = vsel %vm1606, %v1747, %v1749
    %v1751 = vrot.slane %v892, 1
    %v1752 = vsel %vm1606, %v1749, %v1751
    %v1753 = vrot.slane %v895, 1
    %v1754 = vsel %vm1606, %v1751, %v1753
    %v1755 = vrot.slane %v897, 1
    %v1756 = vsel %vm1606, %v1753, %v1755
    %v1757 = vrot.slane %v900, 1
    %v1758 = vrot.slane %v902, 1
    %v1759 = vsel %vm1606, %v1757, %v1758
    %v1760 = vrot.slane %v905, 1
    %v1761 = vsel %vm1606, %v1758, %v1760
    %v1762 = vrot.slane %v907, 1
    %v1763 = vsel %vm1606, %v1760, %v1762
    %v1764 = vrot.slane %v910, 1
    %v1765 = vsel %vm1606, %v1762, %v1764
    %v1766 = vrot.slane %v912, 1
    %v1767 = vsel %vm1606, %v1764, %v1766
    %v1768 = vrot.slane %v915, 1
    %v1769 = vsel %vm1606, %v1766, %v1768
    %v1770 = vrot.slane %v917, 1
    %v1771 = vsel %vm1606, %v1768, %v1770
    %v1772 = vrot.slane %v920, 1
    %v1773 = vsel %vm1606, %v1770, %v1772
    %v1774 = vrot.slane %v922, 1
    %v1775 = vsel %vm1606, %v1772, %v1774
    %v1776 = vrot.slane %v925, 1
    %v1777 = vsel %vm1606, %v1774, %v1776
    %v1778 = vrot.slane %v927, 1
    %v1779 = vsel %vm1606, %v1776, %v1778
    %v1780 = vrot.slane %v930, 1
    %v1781 = vsel %vm1606, %v1778, %v1780
    %v1782 = vrot.slane %v932, 1
    %v1783 = vrot.slane %v935, 1
    %v1784 = vsel %vm1606, %v1782, %v1783
    %v1785 = vrot.slane %v937, 1
    %v1786 = vsel %vm1606, %v1783, %v1785
    %v1787 = vrot.slane %v940, 1
    %v1788 = vsel %vm1606, %v1785, %v1787
    %v1789 = vrot.slane %v942, 1
    %v1790 = vsel %vm1606, %v1787, %v1789
    %v1791 = vrot.slane %v945, 1
    %v1792 = vsel %vm1606, %v1789, %v1791
    %v1793 = vrot.slane %v947, 1
    %v1794 = vsel %vm1606, %v1791, %v1793
    %v1795 = vrot.slane %v950, 1
    %v1796 = vsel %vm1606, %v1793, %v1795
    %v1797 = vrot.slane %v952, 1
    %v1798 = vsel %vm1606, %v1795, %v1797
    %v1799 = vrot.slane %v955, 1
    %v1800 = vsel %vm1606, %v1797, %v1799
    %v1801 = vrot.slane %v957, 1
    %v1802 = vsel %vm1606, %v1799, %v1801
    %v1803 = vrot.slane %v960, 1
    %v1804 = vsel %vm1606, %v1801, %v1803
    %v1805 = vrot.slane %v962, 1
    %v1806 = vsel %vm1606, %v1803, %v1805
    %1807 = vrot.lane.b32.xlu0 %v1609, 64
    %v1808 = vpop.permute.xlu0 %1807
    %1809 = vrot.lane.b32.xlu0 %v1611, 64
    %v1810 = vpop.permute.xlu0 %1809
    %1811 = vrot.lane.b32.xlu0 %v1613, 64
    %v1812 = vpop.permute.xlu0 %1811
    %1813 = vrot.lane.b32.xlu0 %v1615, 64
    %v1814 = vpop.permute.xlu0 %1813
    %1815 = vrot.lane.b32.xlu0 %v1617, 64
    %v1816 = vpop.permute.xlu0 %1815
    %1817 = vrot.lane.b32.xlu0 %v1619, 64
    %v1818 = vpop.permute.xlu0 %1817
    %1819 = vrot.lane.b32.xlu0 %v1621, 64
    %v1820 = vpop.permute.xlu0 %1819
    %1821 = vrot.lane.b32.xlu0 %v1623, 64
    %v1822 = vpop.permute.xlu0 %1821
    %1823 = vrot.lane.b32.xlu0 %v1625, 64
    %v1824 = vpop.permute.xlu0 %1823
    %1825 = vrot.lane.b32.xlu0 %v1627, 64
    %v1826 = vpop.permute.xlu0 %1825
    %1827 = vrot.lane.b32.xlu0 %v1629, 64
    %v1828 = vpop.permute.xlu0 %1827
    %1829 = vrot.lane.b32.xlu0 %v1631, 64
    %v1830 = vpop.permute.xlu0 %1829
    %1831 = vrot.lane.b32.xlu0 %v1634, 64
    %v1832 = vpop.permute.xlu0 %1831
    %1833 = vrot.lane.b32.xlu0 %v1636, 64
    %v1834 = vpop.permute.xlu0 %1833
    %1835 = vrot.lane.b32.xlu0 %v1638, 64
    %v1836 = vpop.permute.xlu0 %1835
    %1837 = vrot.lane.b32.xlu0 %v1640, 64
    %v1838 = vpop.permute.xlu0 %1837
    %1839 = vrot.lane.b32.xlu0 %v1642, 64
    %v1840 = vpop.permute.xlu0 %1839
    %1841 = vrot.lane.b32.xlu0 %v1644, 64
    %v1842 = vpop.permute.xlu0 %1841
    %1843 = vrot.lane.b32.xlu0 %v1646, 64
    %v1844 = vpop.permute.xlu0 %1843
    %1845 = vrot.lane.b32.xlu0 %v1648, 64
    %v1846 = vpop.permute.xlu0 %1845
    %1847 = vrot.lane.b32.xlu0 %v1650, 64
    %v1848 = vpop.permute.xlu0 %1847
    %1849 = vrot.lane.b32.xlu0 %v1652, 64
    %v1850 = vpop.permute.xlu0 %1849
    %1851 = vrot.lane.b32.xlu0 %v1654, 64
    %v1852 = vpop.permute.xlu0 %1851
    %1853 = vrot.lane.b32.xlu0 %v1656, 64
    %v1854 = vpop.permute.xlu0 %1853
    %1855 = vrot.lane.b32.xlu0 %v1659, 64
    %v1856 = vpop.permute.xlu0 %1855
    %1857 = vrot.lane.b32.xlu0 %v1661, 64
    %v1858 = vpop.permute.xlu0 %1857
    %1859 = vrot.lane.b32.xlu0 %v1663, 64
    %v1860 = vpop.permute.xlu0 %1859
    %1861 = vrot.lane.b32.xlu0 %v1665, 64
    %v1862 = vpop.permute.xlu0 %1861
    %1863 = vrot.lane.b32.xlu0 %v1667, 64
    %v1864 = vpop.permute.xlu0 %1863
    %1865 = vrot.lane.b32.xlu0 %v1669, 64
    %v1866 = vpop.permute.xlu0 %1865
    %1867 = vrot.lane.b32.xlu0 %v1671, 64
    %v1868 = vpop.permute.xlu0 %1867
    %1869 = vrot.lane.b32.xlu0 %v1673, 64
    %v1870 = vpop.permute.xlu0 %1869
    %1871 = vrot.lane.b32.xlu0 %v1675, 64
    %v1872 = vpop.permute.xlu0 %1871
    %1873 = vrot.lane.b32.xlu0 %v1677, 64
    %v1874 = vpop.permute.xlu0 %1873
    %1875 = vrot.lane.b32.xlu0 %v1679, 64
    %v1876 = vpop.permute.xlu0 %1875
    %1877 = vrot.lane.b32.xlu0 %v1681, 64
    %v1878 = vpop.permute.xlu0 %1877
    %1879 = vrot.lane.b32.xlu0 %v1684, 64
    %v1880 = vpop.permute.xlu0 %1879
    %1881 = vrot.lane.b32.xlu0 %v1686, 64
    %v1882 = vpop.permute.xlu0 %1881
    %1883 = vrot.lane.b32.xlu0 %v1688, 64
    %v1884 = vpop.permute.xlu0 %1883
    %1885 = vrot.lane.b32.xlu0 %v1690, 64
    %v1886 = vpop.permute.xlu0 %1885
    %1887 = vrot.lane.b32.xlu0 %v1692, 64
    %v1888 = vpop.permute.xlu0 %1887
    %1889 = vrot.lane.b32.xlu0 %v1694, 64
    %v1890 = vpop.permute.xlu0 %1889
    %1891 = vrot.lane.b32.xlu0 %v1696, 64
    %v1892 = vpop.permute.xlu0 %1891
    %1893 = vrot.lane.b32.xlu0 %v1698, 64
    %v1894 = vpop.permute.xlu0 %1893
    %1895 = vrot.lane.b32.xlu0 %v1700, 64
    %v1896 = vpop.permute.xlu0 %1895
    %1897 = vrot.lane.b32.xlu0 %v1702, 64
    %v1898 = vpop.permute.xlu0 %1897
    %1899 = vrot.lane.b32.xlu0 %v1704, 64
    %v1900 = vpop.permute.xlu0 %1899
    %1901 = vrot.lane.b32.xlu0 %v1706, 64
    %v1902 = vpop.permute.xlu0 %1901
    %1903 = vrot.lane.b32.xlu0 %v1709, 64
    %v1904 = vpop.permute.xlu0 %1903
    %1905 = vrot.lane.b32.xlu0 %v1711, 64
    %v1906 = vpop.permute.xlu0 %1905
    %1907 = vrot.lane.b32.xlu0 %v1713, 64
    %v1908 = vpop.permute.xlu0 %1907
    %1909 = vrot.lane.b32.xlu0 %v1715, 64
    %v1910 = vpop.permute.xlu0 %1909
    %1911 = vrot.lane.b32.xlu0 %v1717, 64
    %v1912 = vpop.permute.xlu0 %1911
    %1913 = vrot.lane.b32.xlu0 %v1719, 64
    %v1914 = vpop.permute.xlu0 %1913
    %1915 = vrot.lane.b32.xlu0 %v1721, 64
    %v1916 = vpop.permute.xlu0 %1915
    %1917 = vrot.lane.b32.xlu0 %v1723, 64
    %v1918 = vpop.permute.xlu0 %1917
    %1919 = vrot.lane.b32.xlu0 %v1725, 64
    %v1920 = vpop.permute.xlu0 %1919
    %1921 = vrot.lane.b32.xlu0 %v1727, 64
    %v1922 = vpop.permute.xlu0 %1921
    %1923 = vrot.lane.b32.xlu0 %v1729, 64
    %v1924 = vpop.permute.xlu0 %1923
    %1925 = vrot.lane.b32.xlu0 %v1731, 64
    %v1926 = vpop.permute.xlu0 %1925
    %1927 = vrot.lane.b32.xlu0 %v1734, 64
    %v1928 = vpop.permute.xlu0 %1927
    %1929 = vrot.lane.b32.xlu0 %v1736, 64
    %v1930 = vpop.permute.xlu0 %1929
    %1931 = vrot.lane.b32.xlu0 %v1738, 64
    %v1932 = vpop.permute.xlu0 %1931
    %1933 = vrot.lane.b32.xlu0 %v1740, 64
    %v1934 = vpop.permute.xlu0 %1933
    %1935 = vrot.lane.b32.xlu0 %v1742, 64
    %v1936 = vpop.permute.xlu0 %1935
    %1937 = vrot.lane.b32.xlu0 %v1744, 64
    %v1938 = vpop.permute.xlu0 %1937
    %1939 = vrot.lane.b32.xlu0 %v1746, 64
    %v1940 = vpop.permute.xlu0 %1939
    %1941 = vrot.lane.b32.xlu0 %v1748, 64
    %v1942 = vpop.permute.xlu0 %1941
    %1943 = vrot.lane.b32.xlu0 %v1750, 64
    %v1944 = vpop.permute.xlu0 %1943
    %1945 = vrot.lane.b32.xlu0 %v1752, 64
    %v1946 = vpop.permute.xlu0 %1945
    %1947 = vrot.lane.b32.xlu0 %v1754, 64
    %v1948 = vpop.permute.xlu0 %1947
    %1949 = vrot.lane.b32.xlu0 %v1756, 64
    %v1950 = vpop.permute.xlu0 %1949
    %1951 = vrot.lane.b32.xlu0 %v1759, 64
    %v1952 = vpop.permute.xlu0 %1951
    %1953 = vrot.lane.b32.xlu0 %v1761, 64
    %v1954 = vpop.permute.xlu0 %1953
    %1955 = vrot.lane.b32.xlu0 %v1763, 64
    %v1956 = vpop.permute.xlu0 %1955
    %1957 = vrot.lane.b32.xlu0 %v1765, 64
    %v1958 = vpop.permute.xlu0 %1957
    %1959 = vrot.lane.b32.xlu0 %v1767, 64
    %v1960 = vpop.permute.xlu0 %1959
    %1961 = vrot.lane.b32.xlu0 %v1769, 64
    %v1962 = vpop.permute.xlu0 %1961
    %1963 = vrot.lane.b32.xlu0 %v1771, 64
    %v1964 = vpop.permute.xlu0 %1963
    %1965 = vrot.lane.b32.xlu0 %v1773, 64
    %v1966 = vpop.permute.xlu0 %1965
    %1967 = vrot.lane.b32.xlu0 %v1775, 64
    %v1968 = vpop.permute.xlu0 %1967
    %1969 = vrot.lane.b32.xlu0 %v1777, 64
    %v1970 = vpop.permute.xlu0 %1969
    %1971 = vrot.lane.b32.xlu0 %v1779, 64
    %v1972 = vpop.permute.xlu0 %1971
    %1973 = vrot.lane.b32.xlu0 %v1781, 64
    %v1974 = vpop.permute.xlu0 %1973
    %1975 = vrot.lane.b32.xlu0 %v1784, 64
    %v1976 = vpop.permute.xlu0 %1975
    %1977 = vrot.lane.b32.xlu0 %v1786, 64
    %v1978 = vpop.permute.xlu0 %1977
    %1979 = vrot.lane.b32.xlu0 %v1788, 64
    %v1980 = vpop.permute.xlu0 %1979
    %1981 = vrot.lane.b32.xlu0 %v1790, 64
    %v1982 = vpop.permute.xlu0 %1981
    %1983 = vrot.lane.b32.xlu0 %v1792, 64
    %v1984 = vpop.permute.xlu0 %1983
    %1985 = vrot.lane.b32.xlu0 %v1794, 64
    %v1986 = vpop.permute.xlu0 %1985
    %1987 = vrot.lane.b32.xlu0 %v1796, 64
    %v1988 = vpop.permute.xlu0 %1987
    %1989 = vrot.lane.b32.xlu0 %v1798, 64
    %v1990 = vpop.permute.xlu0 %1989
    %1991 = vrot.lane.b32.xlu0 %v1800, 64
    %v1992 = vpop.permute.xlu0 %1991
    %1993 = vrot.lane.b32.xlu0 %v1802, 64
    %v1994 = vpop.permute.xlu0 %1993
    %1995 = vrot.lane.b32.xlu0 %v1804, 64
    %v1996 = vpop.permute.xlu0 %1995
    %1997 = vrot.lane.b32.xlu0 %v1806, 64
    %v1998 = vpop.permute.xlu0 %1997
    %v2095 = vadd.f32 %v705, %v1808
    %v2096 = vadd.f32 %v707, %v1810
    %v2097 = vadd.f32 %v710, %v1812
    %v2098 = vadd.f32 %v712, %v1814
    %v2099 = vadd.f32 %v715, %v1816
    %v2100 = vadd.f32 %v717, %v1818
    %v2101 = vadd.f32 %v720, %v1820
    %v2102 = vadd.f32 %v722, %v1822
    %v2103 = vadd.f32 %v725, %v1824
    %v2104 = vadd.f32 %v727, %v1826
    %v2105 = vadd.f32 %v730, %v1828
    %v2106 = vadd.f32 %v732, %v1830
    %v2107 = vadd.f32 %v737, %v1832
    %v2108 = vadd.f32 %v740, %v1834
    %v2109 = vadd.f32 %v742, %v1836
    %v2110 = vadd.f32 %v745, %v1838
    %v2111 = vadd.f32 %v747, %v1840
    %v2112 = vadd.f32 %v750, %v1842
    %v2113 = vadd.f32 %v752, %v1844
    %v2114 = vadd.f32 %v755, %v1846
    %v2115 = vadd.f32 %v757, %v1848
    %v2116 = vadd.f32 %v760, %v1850
    %v2117 = vadd.f32 %v762, %v1852
    %v2118 = vadd.f32 %v765, %v1854
    %v2119 = vadd.f32 %v770, %v1856
    %v2120 = vadd.f32 %v772, %v1858
    %v2121 = vadd.f32 %v775, %v1860
    %v2122 = vadd.f32 %v777, %v1862
    %v2123 = vadd.f32 %v780, %v1864
    %v2124 = vadd.f32 %v782, %v1866
    %v2125 = vadd.f32 %v785, %v1868
    %v2126 = vadd.f32 %v787, %v1870
    %v2127 = vadd.f32 %v790, %v1872
    %v2128 = vadd.f32 %v792, %v1874
    %v2129 = vadd.f32 %v795, %v1876
    %v2130 = vadd.f32 %v797, %v1878
    %v2131 = vadd.f32 %v802, %v1880
    %v2132 = vadd.f32 %v805, %v1882
    %v2133 = vadd.f32 %v807, %v1884
    %v2134 = vadd.f32 %v810, %v1886
    %v2135 = vadd.f32 %v812, %v1888
    %v2136 = vadd.f32 %v815, %v1890
    %v2137 = vadd.f32 %v817, %v1892
    %v2138 = vadd.f32 %v820, %v1894
    %v2139 = vadd.f32 %v822, %v1896
    %v2140 = vadd.f32 %v825, %v1898
    %v2141 = vadd.f32 %v827, %v1900
    %v2142 = vadd.f32 %v830, %v1902
    %v2143 = vadd.f32 %v835, %v1904
    %v2144 = vadd.f32 %v837, %v1906
    %v2145 = vadd.f32 %v840, %v1908
    %v2146 = vadd.f32 %v842, %v1910
    %v2147 = vadd.f32 %v845, %v1912
    %v2148 = vadd.f32 %v847, %v1914
    %v2149 = vadd.f32 %v850, %v1916
    %v2150 = vadd.f32 %v852, %v1918
    %v2151 = vadd.f32 %v855, %v1920
    %v2152 = vadd.f32 %v857, %v1922
    %v2153 = vadd.f32 %v860, %v1924
    %v2154 = vadd.f32 %v862, %v1926
    %v2155 = vadd.f32 %v867, %v1928
    %v2156 = vadd.f32 %v870, %v1930
    %v2157 = vadd.f32 %v872, %v1932
    %v2158 = vadd.f32 %v875, %v1934
    %v2159 = vadd.f32 %v877, %v1936
    %v2160 = vadd.f32 %v880, %v1938
    %v2161 = vadd.f32 %v882, %v1940
    %v2162 = vadd.f32 %v885, %v1942
    %v2163 = vadd.f32 %v887, %v1944
    %v2164 = vadd.f32 %v890, %v1946
    %v2165 = vadd.f32 %v892, %v1948
    %v2166 = vadd.f32 %v895, %v1950
    %v2167 = vadd.f32 %v900, %v1952
    %v2168 = vadd.f32 %v902, %v1954
    %v2169 = vadd.f32 %v905, %v1956
    %v2170 = vadd.f32 %v907, %v1958
    %v2171 = vadd.f32 %v910, %v1960
    %v2172 = vadd.f32 %v912, %v1962
    %v2173 = vadd.f32 %v915, %v1964
    %v2174 = vadd.f32 %v917, %v1966
    %v2175 = vadd.f32 %v920, %v1968
    %v2176 = vadd.f32 %v922, %v1970
    %v2177 = vadd.f32 %v925, %v1972
    %v2178 = vadd.f32 %v927, %v1974
    %v2179 = vadd.f32 %v932, %v1976
    %v2180 = vadd.f32 %v935, %v1978
    %v2181 = vadd.f32 %v937, %v1980
    %v2182 = vadd.f32 %v940, %v1982
    %v2183 = vadd.f32 %v942, %v1984
    %v2184 = vadd.f32 %v945, %v1986
    %v2185 = vadd.f32 %v947, %v1988
    %v2186 = vadd.f32 %v950, %v1990
    %v2187 = vadd.f32 %v952, %v1992
    %v2188 = vadd.f32 %v955, %v1994
    %v2189 = vadd.f32 %v957, %v1996
    %v2190 = vadd.f32 %v960, %v1998
    %vm2295 = vcmask 1045504
    %v2296 = vrot.slane %v974, 2
    %v2297 = vrot.slane %v976, 2
    %v2298 = vsel %vm2295, %v2296, %v2297
    %v2299 = vrot.slane %v979, 2
    %v2300 = vsel %vm2295, %v2297, %v2299
    %v2301 = vrot.slane %v981, 2
    %v2302 = vsel %vm2295, %v2299, %v2301
    %v2303 = vrot.slane %v984, 2
    %v2304 = vsel %vm2295, %v2301, %v2303
    %v2305 = vrot.slane %v986, 2
    %v2306 = vsel %vm2295, %v2303, %v2305
    %v2307 = vrot.slane %v989, 2
    %v2308 = vsel %vm2295, %v2305, %v2307
    %v2309 = vrot.slane %v991, 2
    %v2310 = vsel %vm2295, %v2307, %v2309
    %v2311 = vrot.slane %v994, 2
    %v2312 = vsel %vm2295, %v2309, %v2311
    %v2313 = vrot.slane %v996, 2
    %v2314 = vsel %vm2295, %v2311, %v2313
    %v2315 = vrot.slane %v999, 2
    %v2316 = vsel %vm2295, %v2313, %v2315
    %v2317 = vrot.slane %v1001, 2
    %v2318 = vsel %vm2295, %v2315, %v2317
    %v2319 = vrot.slane %v1004, 2
    %v2320 = vsel %vm2295, %v2317, %v2319
    %v2321 = vrot.slane %v1006, 2
    %v2322 = vrot.slane %v1009, 2
    %v2323 = vsel %vm2295, %v2321, %v2322
    %v2324 = vrot.slane %v1011, 2
    %v2325 = vsel %vm2295, %v2322, %v2324
    %v2326 = vrot.slane %v1014, 2
    %v2327 = vsel %vm2295, %v2324, %v2326
    %v2328 = vrot.slane %v1016, 2
    %v2329 = vsel %vm2295, %v2326, %v2328
    %v2330 = vrot.slane %v1019, 2
    %v2331 = vsel %vm2295, %v2328, %v2330
    %v2332 = vrot.slane %v1021, 2
    %v2333 = vsel %vm2295, %v2330, %v2332
    %v2334 = vrot.slane %v1024, 2
    %v2335 = vsel %vm2295, %v2332, %v2334
    %v2336 = vrot.slane %v1026, 2
    %v2337 = vsel %vm2295, %v2334, %v2336
    %v2338 = vrot.slane %v1029, 2
    %v2339 = vsel %vm2295, %v2336, %v2338
    %v2340 = vrot.slane %v1031, 2
    %v2341 = vsel %vm2295, %v2338, %v2340
    %v2342 = vrot.slane %v1034, 2
    %v2343 = vsel %vm2295, %v2340, %v2342
    %v2344 = vrot.slane %v1036, 2
    %v2345 = vsel %vm2295, %v2342, %v2344
    %v2346 = vrot.slane %v1039, 2
    %v2347 = vrot.slane %v1041, 2
    %v2348 = vsel %vm2295, %v2346, %v2347
    %v2349 = vrot.slane %v1044, 2
    %v2350 = vsel %vm2295, %v2347, %v2349
    %v2351 = vrot.slane %v1046, 2
    %v2352 = vsel %vm2295, %v2349, %v2351
    %v2353 = vrot.slane %v1049, 2
    %v2354 = vsel %vm2295, %v2351, %v2353
    %v2355 = vrot.slane %v1051, 2
    %v2356 = vsel %vm2295, %v2353, %v2355
    %v2357 = vrot.slane %v1054, 2
    %v2358 = vsel %vm2295, %v2355, %v2357
    %v2359 = vrot.slane %v1056, 2
    %v2360 = vsel %vm2295, %v2357, %v2359
    %v2361 = vrot.slane %v1059, 2
    %v2362 = vsel %vm2295, %v2359, %v2361
    %v2363 = vrot.slane %v1061, 2
    %v2364 = vsel %vm2295, %v2361, %v2363
    %v2365 = vrot.slane %v1064, 2
    %v2366 = vsel %vm2295, %v2363, %v2365
    %v2367 = vrot.slane %v1066, 2
    %v2368 = vsel %vm2295, %v2365, %v2367
    %v2369 = vrot.slane %v1069, 2
    %v2370 = vsel %vm2295, %v2367, %v2369
    %v2371 = vrot.slane %v1071, 2
    %v2372 = vrot.slane %v1074, 2
    %v2373 = vsel %vm2295, %v2371, %v2372
    %v2374 = vrot.slane %v1076, 2
    %v2375 = vsel %vm2295, %v2372, %v2374
    %v2376 = vrot.slane %v1079, 2
    %v2377 = vsel %vm2295, %v2374, %v2376
    %v2378 = vrot.slane %v1081, 2
    %v2379 = vsel %vm2295, %v2376, %v2378
    %v2380 = vrot.slane %v1084, 2
    %v2381 = vsel %vm2295, %v2378, %v2380
    %v2382 = vrot.slane %v1086, 2
    %v2383 = vsel %vm2295, %v2380, %v2382
    %v2384 = vrot.slane %v1089, 2
    %v2385 = vsel %vm2295, %v2382, %v2384
    %v2386 = vrot.slane %v1091, 2
    %v2387 = vsel %vm2295, %v2384, %v2386
    %v2388 = vrot.slane %v1094, 2
    %v2389 = vsel %vm2295, %v2386, %v2388
    %v2390 = vrot.slane %v1096, 2
    %v2391 = vsel %vm2295, %v2388, %v2390
    %v2392 = vrot.slane %v1099, 2
    %v2393 = vsel %vm2295, %v2390, %v2392
    %v2394 = vrot.slane %v1101, 2
    %v2395 = vsel %vm2295, %v2392, %v2394
    %v2396 = vrot.slane %v1104, 2
    %v2397 = vrot.slane %v1106, 2
    %v2398 = vsel %vm2295, %v2396, %v2397
    %v2399 = vrot.slane %v1109, 2
    %v2400 = vsel %vm2295, %v2397, %v2399
    %v2401 = vrot.slane %v1111, 2
    %v2402 = vsel %vm2295, %v2399, %v2401
    %v2403 = vrot.slane %v1114, 2
    %v2404 = vsel %vm2295, %v2401, %v2403
    %v2405 = vrot.slane %v1116, 2
    %v2406 = vsel %vm2295, %v2403, %v2405
    %v2407 = vrot.slane %v1119, 2
    %v2408 = vsel %vm2295, %v2405, %v2407
    %v2409 = vrot.slane %v1121, 2
    %v2410 = vsel %vm2295, %v2407, %v2409
    %v2411 = vrot.slane %v1124, 2
    %v2412 = vsel %vm2295, %v2409, %v2411
    %v2413 = vrot.slane %v1126, 2
    %v2414 = vsel %vm2295, %v2411, %v2413
    %v2415 = vrot.slane %v1129, 2
    %v2416 = vsel %vm2295, %v2413, %v2415
    %v2417 = vrot.slane %v1131, 2
    %v2418 = vsel %vm2295, %v2415, %v2417
    %v2419 = vrot.slane %v1134, 2
    %v2420 = vsel %vm2295, %v2417, %v2419
    %v2421 = vrot.slane %v1136, 2
    %v2422 = vrot.slane %v1139, 2
    %v2423 = vsel %vm2295, %v2421, %v2422
    %v2424 = vrot.slane %v1141, 2
    %v2425 = vsel %vm2295, %v2422, %v2424
    %v2426 = vrot.slane %v1144, 2
    %v2427 = vsel %vm2295, %v2424, %v2426
    %v2428 = vrot.slane %v1146, 2
    %v2429 = vsel %vm2295, %v2426, %v2428
    %v2430 = vrot.slane %v1149, 2
    %v2431 = vsel %vm2295, %v2428, %v2430
    %v2432 = vrot.slane %v1151, 2
    %v2433 = vsel %vm2295, %v2430, %v2432
    %v2434 = vrot.slane %v1154, 2
    %v2435 = vsel %vm2295, %v2432, %v2434
    %v2436 = vrot.slane %v1156, 2
    %v2437 = vsel %vm2295, %v2434, %v2436
    %v2438 = vrot.slane %v1159, 2
    %v2439 = vsel %vm2295, %v2436, %v2438
    %v2440 = vrot.slane %v1161, 2
    %v2441 = vsel %vm2295, %v2438, %v2440
    %v2442 = vrot.slane %v1164, 2
    %v2443 = vsel %vm2295, %v2440, %v2442
    %v2444 = vrot.slane %v1166, 2
    %v2445 = vsel %vm2295, %v2442, %v2444
    %v2446 = vrot.slane %v1169, 2
    %v2447 = vrot.slane %v1171, 2
    %v2448 = vsel %vm2295, %v2446, %v2447
    %v2449 = vrot.slane %v1174, 2
    %v2450 = vsel %vm2295, %v2447, %v2449
    %v2451 = vrot.slane %v1176, 2
    %v2452 = vsel %vm2295, %v2449, %v2451
    %v2453 = vrot.slane %v1179, 2
    %v2454 = vsel %vm2295, %v2451, %v2453
    %v2455 = vrot.slane %v1181, 2
    %v2456 = vsel %vm2295, %v2453, %v2455
    %v2457 = vrot.slane %v1184, 2
    %v2458 = vsel %vm2295, %v2455, %v2457
    %v2459 = vrot.slane %v1186, 2
    %v2460 = vsel %vm2295, %v2457, %v2459
    %v2461 = vrot.slane %v1189, 2
    %v2462 = vsel %vm2295, %v2459, %v2461
    %v2463 = vrot.slane %v1191, 2
    %v2464 = vsel %vm2295, %v2461, %v2463
    %v2465 = vrot.slane %v1194, 2
    %v2466 = vsel %vm2295, %v2463, %v2465
    %v2467 = vrot.slane %v1196, 2
    %v2468 = vsel %vm2295, %v2465, %v2467
    %v2469 = vrot.slane %v1199, 2
    %v2470 = vsel %vm2295, %v2467, %v2469
    %v2471 = vrot.slane %v1201, 2
    %v2472 = vrot.slane %v1204, 2
    %v2473 = vsel %vm2295, %v2471, %v2472
    %v2474 = vrot.slane %v1206, 2
    %v2475 = vsel %vm2295, %v2472, %v2474
    %v2476 = vrot.slane %v1209, 2
    %v2477 = vsel %vm2295, %v2474, %v2476
    %v2478 = vrot.slane %v1211, 2
    %v2479 = vsel %vm2295, %v2476, %v2478
    %v2480 = vrot.slane %v1214, 2
    %v2481 = vsel %vm2295, %v2478, %v2480
    %v2482 = vrot.slane %v1216, 2
    %v2483 = vsel %vm2295, %v2480, %v2482
    %v2484 = vrot.slane %v1219, 2
    %v2485 = vsel %vm2295, %v2482, %v2484
    %v2486 = vrot.slane %v1221, 2
    %v2487 = vsel %vm2295, %v2484, %v2486
    %v2488 = vrot.slane %v1224, 2
    %v2489 = vsel %vm2295, %v2486, %v2488
    %v2490 = vrot.slane %v1226, 2
    %v2491 = vsel %vm2295, %v2488, %v2490
    %v2492 = vrot.slane %v1229, 2
    %v2493 = vsel %vm2295, %v2490, %v2492
    %v2494 = vrot.slane %v1231, 2
    %v2495 = vsel %vm2295, %v2492, %v2494
    %v2592 = vadd.f32 %v2095, %v2298
    %v2593 = vadd.f32 %v2096, %v2300
    %v2594 = vadd.f32 %v2097, %v2302
    %v2595 = vadd.f32 %v2098, %v2304
    %v2596 = vadd.f32 %v2099, %v2306
    %v2597 = vadd.f32 %v2100, %v2308
    %v2598 = vadd.f32 %v2101, %v2310
    %v2599 = vadd.f32 %v2102, %v2312
    %v2600 = vadd.f32 %v2103, %v2314
    %v2601 = vadd.f32 %v2104, %v2316
    %v2602 = vadd.f32 %v2105, %v2318
    %v2603 = vadd.f32 %v2106, %v2320
    %v2604 = vadd.f32 %v2107, %v2323
    %v2605 = vadd.f32 %v2108, %v2325
    %v2606 = vadd.f32 %v2109, %v2327
    %v2607 = vadd.f32 %v2110, %v2329
    %v2608 = vadd.f32 %v2111, %v2331
    %v2609 = vadd.f32 %v2112, %v2333
    %v2610 = vadd.f32 %v2113, %v2335
    %v2611 = vadd.f32 %v2114, %v2337
    %v2612 = vadd.f32 %v2115, %v2339
    %v2613 = vadd.f32 %v2116, %v2341
    %v2614 = vadd.f32 %v2117, %v2343
    %v2615 = vadd.f32 %v2118, %v2345
    %v2616 = vadd.f32 %v2119, %v2348
    %v2617 = vadd.f32 %v2120, %v2350
    %v2618 = vadd.f32 %v2121, %v2352
    %v2619 = vadd.f32 %v2122, %v2354
    %v2620 = vadd.f32 %v2123, %v2356
    %v2621 = vadd.f32 %v2124, %v2358
    %v2622 = vadd.f32 %v2125, %v2360
    %v2623 = vadd.f32 %v2126, %v2362
    %v2624 = vadd.f32 %v2127, %v2364
    %v2625 = vadd.f32 %v2128, %v2366
    %v2626 = vadd.f32 %v2129, %v2368
    %v2627 = vadd.f32 %v2130, %v2370
    %v2628 = vadd.f32 %v2131, %v2373
    %v2629 = vadd.f32 %v2132, %v2375
    %v2630 = vadd.f32 %v2133, %v2377
    %v2631 = vadd.f32 %v2134, %v2379
    %v2632 = vadd.f32 %v2135, %v2381
    %v2633 = vadd.f32 %v2136, %v2383
    %v2634 = vadd.f32 %v2137, %v2385
    %v2635 = vadd.f32 %v2138, %v2387
    %v2636 = vadd.f32 %v2139, %v2389
    %v2637 = vadd.f32 %v2140, %v2391
    %v2638 = vadd.f32 %v2141, %v2393
    %v2639 = vadd.f32 %v2142, %v2395
    %v2640 = vadd.f32 %v2143, %v2398
    %v2641 = vadd.f32 %v2144, %v2400
    %v2642 = vadd.f32 %v2145, %v2402
    %v2643 = vadd.f32 %v2146, %v2404
    %v2644 = vadd.f32 %v2147, %v2406
    %v2645 = vadd.f32 %v2148, %v2408
    %v2646 = vadd.f32 %v2149, %v2410
    %v2647 = vadd.f32 %v2150, %v2412
    %v2648 = vadd.f32 %v2151, %v2414
    %v2649 = vadd.f32 %v2152, %v2416
    %v2650 = vadd.f32 %v2153, %v2418
    %v2651 = vadd.f32 %v2154, %v2420
    %v2652 = vadd.f32 %v2155, %v2423
    %v2653 = vadd.f32 %v2156, %v2425
    %v2654 = vadd.f32 %v2157, %v2427
    %v2655 = vadd.f32 %v2158, %v2429
    %v2656 = vadd.f32 %v2159, %v2431
    %v2657 = vadd.f32 %v2160, %v2433
    %v2658 = vadd.f32 %v2161, %v2435
    %v2659 = vadd.f32 %v2162, %v2437
    %v2660 = vadd.f32 %v2163, %v2439
    %v2661 = vadd.f32 %v2164, %v2441
    %v2662 = vadd.f32 %v2165, %v2443
    %v2663 = vadd.f32 %v2166, %v2445
    %v2664 = vadd.f32 %v2167, %v2448
    %v2665 = vadd.f32 %v2168, %v2450
    %v2666 = vadd.f32 %v2169, %v2452
    %v2667 = vadd.f32 %v2170, %v2454
    %v2668 = vadd.f32 %v2171, %v2456
    %v2669 = vadd.f32 %v2172, %v2458
    %v2670 = vadd.f32 %v2173, %v2460
    %v2671 = vadd.f32 %v2174, %v2462
    %v2672 = vadd.f32 %v2175, %v2464
    %v2673 = vadd.f32 %v2176, %v2466
    %v2674 = vadd.f32 %v2177, %v2468
    %v2675 = vadd.f32 %v2178, %v2470
    %v2676 = vadd.f32 %v2179, %v2473
    %v2677 = vadd.f32 %v2180, %v2475
    %v2678 = vadd.f32 %v2181, %v2477
    %v2679 = vadd.f32 %v2182, %v2479
    %v2680 = vadd.f32 %v2183, %v2481
    %v2681 = vadd.f32 %v2184, %v2483
    %v2682 = vadd.f32 %v2185, %v2485
    %v2683 = vadd.f32 %v2186, %v2487
    %v2684 = vadd.f32 %v2187, %v2489
    %v2685 = vadd.f32 %v2188, %v2491
    %v2686 = vadd.f32 %v2189, %v2493
    %v2687 = vadd.f32 %v2190, %v2495
    %vm2688 = vcmask 1044480
    %v2689 = vrot.slane %v974, 3
    %v2690 = vrot.slane %v976, 3
    %v2691 = vsel %vm2688, %v2689, %v2690
    %v2692 = vrot.slane %v979, 3
    %v2693 = vsel %vm2688, %v2690, %v2692
    %v2694 = vrot.slane %v981, 3
    %v2695 = vsel %vm2688, %v2692, %v2694
    %v2696 = vrot.slane %v984, 3
    %v2697 = vsel %vm2688, %v2694, %v2696
    %v2698 = vrot.slane %v986, 3
    %v2699 = vsel %vm2688, %v2696, %v2698
    %v2700 = vrot.slane %v989, 3
    %v2701 = vsel %vm2688, %v2698, %v2700
    %v2702 = vrot.slane %v991, 3
    %v2703 = vsel %vm2688, %v2700, %v2702
    %v2704 = vrot.slane %v994, 3
    %v2705 = vsel %vm2688, %v2702, %v2704
    %v2706 = vrot.slane %v996, 3
    %v2707 = vsel %vm2688, %v2704, %v2706
    %v2708 = vrot.slane %v999, 3
    %v2709 = vsel %vm2688, %v2706, %v2708
    %v2710 = vrot.slane %v1001, 3
    %v2711 = vsel %vm2688, %v2708, %v2710
    %v2712 = vrot.slane %v1004, 3
    %v2713 = vsel %vm2688, %v2710, %v2712
    %v2714 = vrot.slane %v1006, 3
    %v2715 = vrot.slane %v1009, 3
    %v2716 = vsel %vm2688, %v2714, %v2715
    %v2717 = vrot.slane %v1011, 3
    %v2718 = vsel %vm2688, %v2715, %v2717
    %v2719 = vrot.slane %v1014, 3
    %v2720 = vsel %vm2688, %v2717, %v2719
    %v2721 = vrot.slane %v1016, 3
    %v2722 = vsel %vm2688, %v2719, %v2721
    %v2723 = vrot.slane %v1019, 3
    %v2724 = vsel %vm2688, %v2721, %v2723
    %v2725 = vrot.slane %v1021, 3
    %v2726 = vsel %vm2688, %v2723, %v2725
    %v2727 = vrot.slane %v1024, 3
    %v2728 = vsel %vm2688, %v2725, %v2727
    %v2729 = vrot.slane %v1026, 3
    %v2730 = vsel %vm2688, %v2727, %v2729
    %v2731 = vrot.slane %v1029, 3
    %v2732 = vsel %vm2688, %v2729, %v2731
    %v2733 = vrot.slane %v1031, 3
    %v2734 = vsel %vm2688, %v2731, %v2733
    %v2735 = vrot.slane %v1034, 3
    %v2736 = vsel %vm2688, %v2733, %v2735
    %v2737 = vrot.slane %v1036, 3
    %v2738 = vsel %vm2688, %v2735, %v2737
    %v2739 = vrot.slane %v1039, 3
    %v2740 = vrot.slane %v1041, 3
    %v2741 = vsel %vm2688, %v2739, %v2740
    %v2742 = vrot.slane %v1044, 3
    %v2743 = vsel %vm2688, %v2740, %v2742
    %v2744 = vrot.slane %v1046, 3
    %v2745 = vsel %vm2688, %v2742, %v2744
    %v2746 = vrot.slane %v1049, 3
    %v2747 = vsel %vm2688, %v2744, %v2746
    %v2748 = vrot.slane %v1051, 3
    %v2749 = vsel %vm2688, %v2746, %v2748
    %v2750 = vrot.slane %v1054, 3
    %v2751 = vsel %vm2688, %v2748, %v2750
    %v2752 = vrot.slane %v1056, 3
    %v2753 = vsel %vm2688, %v2750, %v2752
    %v2754 = vrot.slane %v1059, 3
    %v2755 = vsel %vm2688, %v2752, %v2754
    %v2756 = vrot.slane %v1061, 3
    %v2757 = vsel %vm2688, %v2754, %v2756
    %v2758 = vrot.slane %v1064, 3
    %v2759 = vsel %vm2688, %v2756, %v2758
    %v2760 = vrot.slane %v1066, 3
    %v2761 = vsel %vm2688, %v2758, %v2760
    %v2762 = vrot.slane %v1069, 3
    %v2763 = vsel %vm2688, %v2760, %v2762
    %v2764 = vrot.slane %v1071, 3
    %v2765 = vrot.slane %v1074, 3
    %v2766 = vsel %vm2688, %v2764, %v2765
    %v2767 = vrot.slane %v1076, 3
    %v2768 = vsel %vm2688, %v2765, %v2767
    %v2769 = vrot.slane %v1079, 3
    %v2770 = vsel %vm2688, %v2767, %v2769
    %v2771 = vrot.slane %v1081, 3
    %v2772 = vsel %vm2688, %v2769, %v2771
    %v2773 = vrot.slane %v1084, 3
    %v2774 = vsel %vm2688, %v2771, %v2773
    %v2775 = vrot.slane %v1086, 3
    %v2776 = vsel %vm2688, %v2773, %v2775
    %v2777 = vrot.slane %v1089, 3
    %v2778 = vsel %vm2688, %v2775, %v2777
    %v2779 = vrot.slane %v1091, 3
    %v2780 = vsel %vm2688, %v2777, %v2779
    %v2781 = vrot.slane %v1094, 3
    %v2782 = vsel %vm2688, %v2779, %v2781
    %v2783 = vrot.slane %v1096, 3
    %v2784 = vsel %vm2688, %v2781, %v2783
    %v2785 = vrot.slane %v1099, 3
    %v2786 = vsel %vm2688, %v2783, %v2785
    %v2787 = vrot.slane %v1101, 3
    %v2788 = vsel %vm2688, %v2785, %v2787
    %v2789 = vrot.slane %v1104, 3
    %v2790 = vrot.slane %v1106, 3
    %v2791 = vsel %vm2688, %v2789, %v2790
    %v2792 = vrot.slane %v1109, 3
    %v2793 = vsel %vm2688, %v2790, %v2792
    %v2794 = vrot.slane %v1111, 3
    %v2795 = vsel %vm2688, %v2792, %v2794
    %v2796 = vrot.slane %v1114, 3
    %v2797 = vsel %vm2688, %v2794, %v2796
    %v2798 = vrot.slane %v1116, 3
    %v2799 = vsel %vm2688, %v2796, %v2798
    %v2800 = vrot.slane %v1119, 3
    %v2801 = vsel %vm2688, %v2798, %v2800
    %v2802 = vrot.slane %v1121, 3
    %v2803 = vsel %vm2688, %v2800, %v2802
    %v2804 = vrot.slane %v1124, 3
    %v2805 = vsel %vm2688, %v2802, %v2804
    %v2806 = vrot.slane %v1126, 3
    %v2807 = vsel %vm2688, %v2804, %v2806
    %v2808 = vrot.slane %v1129, 3
    %v2809 = vsel %vm2688, %v2806, %v2808
    %v2810 = vrot.slane %v1131, 3
    %v2811 = vsel %vm2688, %v2808, %v2810
    %v2812 = vrot.slane %v1134, 3
    %v2813 = vsel %vm2688, %v2810, %v2812
    %v2814 = vrot.slane %v1136, 3
    %v2815 = vrot.slane %v1139, 3
    %v2816 = vsel %vm2688, %v2814, %v2815
    %v2817 = vrot.slane %v1141, 3
    %v2818 = vsel %vm2688, %v2815, %v2817
    %v2819 = vrot.slane %v1144, 3
    %v2820 = vsel %vm2688, %v2817, %v2819
    %v2821 = vrot.slane %v1146, 3
    %v2822 = vsel %vm2688, %v2819, %v2821
    %v2823 = vrot.slane %v1149, 3
    %v2824 = vsel %vm2688, %v2821, %v2823
    %v2825 = vrot.slane %v1151, 3
    %v2826 = vsel %vm2688, %v2823, %v2825
    %v2827 = vrot.slane %v1154, 3
    %v2828 = vsel %vm2688, %v2825, %v2827
    %v2829 = vrot.slane %v1156, 3
    %v2830 = vsel %vm2688, %v2827, %v2829
    %v2831 = vrot.slane %v1159, 3
    %v2832 = vsel %vm2688, %v2829, %v2831
    %v2833 = vrot.slane %v1161, 3
    %v2834 = vsel %vm2688, %v2831, %v2833
    %v2835 = vrot.slane %v1164, 3
    %v2836 = vsel %vm2688, %v2833, %v2835
    %v2837 = vrot.slane %v1166, 3
    %v2838 = vsel %vm2688, %v2835, %v2837
    %v2839 = vrot.slane %v1169, 3
    %v2840 = vrot.slane %v1171, 3
    %v2841 = vsel %vm2688, %v2839, %v2840
    %v2842 = vrot.slane %v1174, 3
    %v2843 = vsel %vm2688, %v2840, %v2842
    %v2844 = vrot.slane %v1176, 3
    %v2845 = vsel %vm2688, %v2842, %v2844
    %v2846 = vrot.slane %v1179, 3
    %v2847 = vsel %vm2688, %v2844, %v2846
    %v2848 = vrot.slane %v1181, 3
    %v2849 = vsel %vm2688, %v2846, %v2848
    %v2850 = vrot.slane %v1184, 3
    %v2851 = vsel %vm2688, %v2848, %v2850
    %v2852 = vrot.slane %v1186, 3
    %v2853 = vsel %vm2688, %v2850, %v2852
    %v2854 = vrot.slane %v1189, 3
    %v2855 = vsel %vm2688, %v2852, %v2854
    %v2856 = vrot.slane %v1191, 3
    %v2857 = vsel %vm2688, %v2854, %v2856
    %v2858 = vrot.slane %v1194, 3
    %v2859 = vsel %vm2688, %v2856, %v2858
    %v2860 = vrot.slane %v1196, 3
    %v2861 = vsel %vm2688, %v2858, %v2860
    %v2862 = vrot.slane %v1199, 3
    %v2863 = vsel %vm2688, %v2860, %v2862
    %v2864 = vrot.slane %v1201, 3
    %v2865 = vrot.slane %v1204, 3
    %v2866 = vsel %vm2688, %v2864, %v2865
    %v2867 = vrot.slane %v1206, 3
    %v2868 = vsel %vm2688, %v2865, %v2867
    %v2869 = vrot.slane %v1209, 3
    %v2870 = vsel %vm2688, %v2867, %v2869
    %v2871 = vrot.slane %v1211, 3
    %v2872 = vsel %vm2688, %v2869, %v2871
    %v2873 = vrot.slane %v1214, 3
    %v2874 = vsel %vm2688, %v2871, %v2873
    %v2875 = vrot.slane %v1216, 3
    %v2876 = vsel %vm2688, %v2873, %v2875
    %v2877 = vrot.slane %v1219, 3
    %v2878 = vsel %vm2688, %v2875, %v2877
    %v2879 = vrot.slane %v1221, 3
    %v2880 = vsel %vm2688, %v2877, %v2879
    %v2881 = vrot.slane %v1224, 3
    %v2882 = vsel %vm2688, %v2879, %v2881
    %v2883 = vrot.slane %v1226, 3
    %v2884 = vsel %vm2688, %v2881, %v2883
    %v2885 = vrot.slane %v1229, 3
    %v2886 = vsel %vm2688, %v2883, %v2885
    %v2887 = vrot.slane %v1231, 3
    %v2888 = vsel %vm2688, %v2885, %v2887
    %2889 = vrot.lane.b32.xlu0 %v2691, 64
    %v2890 = vpop.permute.xlu0 %2889
    %2891 = vrot.lane.b32.xlu0 %v2693, 64
    %v2892 = vpop.permute.xlu0 %2891
    %2893 = vrot.lane.b32.xlu0 %v2695, 64
    %v2894 = vpop.permute.xlu0 %2893
    %2895 = vrot.lane.b32.xlu0 %v2697, 64
    %v2896 = vpop.permute.xlu0 %2895
    %2897 = vrot.lane.b32.xlu0 %v2699, 64
    %v2898 = vpop.permute.xlu0 %2897
    %2899 = vrot.lane.b32.xlu0 %v2701, 64
    %v2900 = vpop.permute.xlu0 %2899
    %2901 = vrot.lane.b32.xlu0 %v2703, 64
    %v2902 = vpop.permute.xlu0 %2901
    %2903 = vrot.lane.b32.xlu0 %v2705, 64
    %v2904 = vpop.permute.xlu0 %2903
    %2905 = vrot.lane.b32.xlu0 %v2707, 64
    %v2906 = vpop.permute.xlu0 %2905
    %2907 = vrot.lane.b32.xlu0 %v2709, 64
    %v2908 = vpop.permute.xlu0 %2907
    %2909 = vrot.lane.b32.xlu0 %v2711, 64
    %v2910 = vpop.permute.xlu0 %2909
    %2911 = vrot.lane.b32.xlu0 %v2713, 64
    %v2912 = vpop.permute.xlu0 %2911
    %2913 = vrot.lane.b32.xlu0 %v2716, 64
    %v2914 = vpop.permute.xlu0 %2913
    %2915 = vrot.lane.b32.xlu0 %v2718, 64
    %v2916 = vpop.permute.xlu0 %2915
    %2917 = vrot.lane.b32.xlu0 %v2720, 64
    %v2918 = vpop.permute.xlu0 %2917
    %2919 = vrot.lane.b32.xlu0 %v2722, 64
    %v2920 = vpop.permute.xlu0 %2919
    %2921 = vrot.lane.b32.xlu0 %v2724, 64
    %v2922 = vpop.permute.xlu0 %2921
    %2923 = vrot.lane.b32.xlu0 %v2726, 64
    %v2924 = vpop.permute.xlu0 %2923
    %2925 = vrot.lane.b32.xlu0 %v2728, 64
    %v2926 = vpop.permute.xlu0 %2925
    %2927 = vrot.lane.b32.xlu0 %v2730, 64
    %v2928 = vpop.permute.xlu0 %2927
    %2929 = vrot.lane.b32.xlu0 %v2732, 64
    %v2930 = vpop.permute.xlu0 %2929
    %2931 = vrot.lane.b32.xlu0 %v2734, 64
    %v2932 = vpop.permute.xlu0 %2931
    %2933 = vrot.lane.b32.xlu0 %v2736, 64
    %v2934 = vpop.permute.xlu0 %2933
    %2935 = vrot.lane.b32.xlu0 %v2738, 64
    %v2936 = vpop.permute.xlu0 %2935
    %2937 = vrot.lane.b32.xlu0 %v2741, 64
    %v2938 = vpop.permute.xlu0 %2937
    %2939 = vrot.lane.b32.xlu0 %v2743, 64
    %v2940 = vpop.permute.xlu0 %2939
    %2941 = vrot.lane.b32.xlu0 %v2745, 64
    %v2942 = vpop.permute.xlu0 %2941
    %2943 = vrot.lane.b32.xlu0 %v2747, 64
    %v2944 = vpop.permute.xlu0 %2943
    %2945 = vrot.lane.b32.xlu0 %v2749, 64
    %v2946 = vpop.permute.xlu0 %2945
    %2947 = vrot.lane.b32.xlu0 %v2751, 64
    %v2948 = vpop.permute.xlu0 %2947
    %2949 = vrot.lane.b32.xlu0 %v2753, 64
    %v2950 = vpop.permute.xlu0 %2949
    %2951 = vrot.lane.b32.xlu0 %v2755, 64
    %v2952 = vpop.permute.xlu0 %2951
    %2953 = vrot.lane.b32.xlu0 %v2757, 64
    %v2954 = vpop.permute.xlu0 %2953
    %2955 = vrot.lane.b32.xlu0 %v2759, 64
    %v2956 = vpop.permute.xlu0 %2955
    %2957 = vrot.lane.b32.xlu0 %v2761, 64
    %v2958 = vpop.permute.xlu0 %2957
    %2959 = vrot.lane.b32.xlu0 %v2763, 64
    %v2960 = vpop.permute.xlu0 %2959
    %2961 = vrot.lane.b32.xlu0 %v2766, 64
    %v2962 = vpop.permute.xlu0 %2961
    %2963 = vrot.lane.b32.xlu0 %v2768, 64
    %v2964 = vpop.permute.xlu0 %2963
    %2965 = vrot.lane.b32.xlu0 %v2770, 64
    %v2966 = vpop.permute.xlu0 %2965
    %2967 = vrot.lane.b32.xlu0 %v2772, 64
    %v2968 = vpop.permute.xlu0 %2967
    %2969 = vrot.lane.b32.xlu0 %v2774, 64
    %v2970 = vpop.permute.xlu0 %2969
    %2971 = vrot.lane.b32.xlu0 %v2776, 64
    %v2972 = vpop.permute.xlu0 %2971
    %2973 = vrot.lane.b32.xlu0 %v2778, 64
    %v2974 = vpop.permute.xlu0 %2973
    %2975 = vrot.lane.b32.xlu0 %v2780, 64
    %v2976 = vpop.permute.xlu0 %2975
    %2977 = vrot.lane.b32.xlu0 %v2782, 64
    %v2978 = vpop.permute.xlu0 %2977
    %2979 = vrot.lane.b32.xlu0 %v2784, 64
    %v2980 = vpop.permute.xlu0 %2979
    %2981 = vrot.lane.b32.xlu0 %v2786, 64
    %v2982 = vpop.permute.xlu0 %2981
    %2983 = vrot.lane.b32.xlu0 %v2788, 64
    %v2984 = vpop.permute.xlu0 %2983
    %2985 = vrot.lane.b32.xlu0 %v2791, 64
    %v2986 = vpop.permute.xlu0 %2985
    %2987 = vrot.lane.b32.xlu0 %v2793, 64
    %v2988 = vpop.permute.xlu0 %2987
    %2989 = vrot.lane.b32.xlu0 %v2795, 64
    %v2990 = vpop.permute.xlu0 %2989
    %2991 = vrot.lane.b32.xlu0 %v2797, 64
    %v2992 = vpop.permute.xlu0 %2991
    %2993 = vrot.lane.b32.xlu0 %v2799, 64
    %v2994 = vpop.permute.xlu0 %2993
    %2995 = vrot.lane.b32.xlu0 %v2801, 64
    %v2996 = vpop.permute.xlu0 %2995
    %2997 = vrot.lane.b32.xlu0 %v2803, 64
    %v2998 = vpop.permute.xlu0 %2997
    %2999 = vrot.lane.b32.xlu0 %v2805, 64
    %v3000 = vpop.permute.xlu0 %2999
    %3001 = vrot.lane.b32.xlu0 %v2807, 64
    %v3002 = vpop.permute.xlu0 %3001
    %3003 = vrot.lane.b32.xlu0 %v2809, 64
    %v3004 = vpop.permute.xlu0 %3003
    %3005 = vrot.lane.b32.xlu0 %v2811, 64
    %v3006 = vpop.permute.xlu0 %3005
    %3007 = vrot.lane.b32.xlu0 %v2813, 64
    %v3008 = vpop.permute.xlu0 %3007
    %3009 = vrot.lane.b32.xlu0 %v2816, 64
    %v3010 = vpop.permute.xlu0 %3009
    %3011 = vrot.lane.b32.xlu0 %v2818, 64
    %v3012 = vpop.permute.xlu0 %3011
    %3013 = vrot.lane.b32.xlu0 %v2820, 64
    %v3014 = vpop.permute.xlu0 %3013
    %3015 = vrot.lane.b32.xlu0 %v2822, 64
    %v3016 = vpop.permute.xlu0 %3015
    %3017 = vrot.lane.b32.xlu0 %v2824, 64
    %v3018 = vpop.permute.xlu0 %3017
    %3019 = vrot.lane.b32.xlu0 %v2826, 64
    %v3020 = vpop.permute.xlu0 %3019
    %3021 = vrot.lane.b32.xlu0 %v2828, 64
    %v3022 = vpop.permute.xlu0 %3021
    %3023 = vrot.lane.b32.xlu0 %v2830, 64
    %v3024 = vpop.permute.xlu0 %3023
    %3025 = vrot.lane.b32.xlu0 %v2832, 64
    %v3026 = vpop.permute.xlu0 %3025
    %3027 = vrot.lane.b32.xlu0 %v2834, 64
    %v3028 = vpop.permute.xlu0 %3027
    %3029 = vrot.lane.b32.xlu0 %v2836, 64
    %v3030 = vpop.permute.xlu0 %3029
    %3031 = vrot.lane.b32.xlu0 %v2838, 64
    %v3032 = vpop.permute.xlu0 %3031
    %3033 = vrot.lane.b32.xlu0 %v2841, 64
    %v3034 = vpop.permute.xlu0 %3033
    %3035 = vrot.lane.b32.xlu0 %v2843, 64
    %v3036 = vpop.permute.xlu0 %3035
    %3037 = vrot.lane.b32.xlu0 %v2845, 64
    %v3038 = vpop.permute.xlu0 %3037
    %3039 = vrot.lane.b32.xlu0 %v2847, 64
    %v3040 = vpop.permute.xlu0 %3039
    %3041 = vrot.lane.b32.xlu0 %v2849, 64
    %v3042 = vpop.permute.xlu0 %3041
    %3043 = vrot.lane.b32.xlu0 %v2851, 64
    %v3044 = vpop.permute.xlu0 %3043
    %3045 = vrot.lane.b32.xlu0 %v2853, 64
    %v3046 = vpop.permute.xlu0 %3045
    %3047 = vrot.lane.b32.xlu0 %v2855, 64
    %v3048 = vpop.permute.xlu0 %3047
    %3049 = vrot.lane.b32.xlu0 %v2857, 64
    %v3050 = vpop.permute.xlu0 %3049
    %3051 = vrot.lane.b32.xlu0 %v2859, 64
    %v3052 = vpop.permute.xlu0 %3051
    %3053 = vrot.lane.b32.xlu0 %v2861, 64
    %v3054 = vpop.permute.xlu0 %3053
    %3055 = vrot.lane.b32.xlu0 %v2863, 64
    %v3056 = vpop.permute.xlu0 %3055
    %3057 = vrot.lane.b32.xlu0 %v2866, 64
    %v3058 = vpop.permute.xlu0 %3057
    %3059 = vrot.lane.b32.xlu0 %v2868, 64
    %v3060 = vpop.permute.xlu0 %3059
    %3061 = vrot.lane.b32.xlu0 %v2870, 64
    %v3062 = vpop.permute.xlu0 %3061
    %3063 = vrot.lane.b32.xlu0 %v2872, 64
    %v3064 = vpop.permute.xlu0 %3063
    %3065 = vrot.lane.b32.xlu0 %v2874, 64
    %v3066 = vpop.permute.xlu0 %3065
    %3067 = vrot.lane.b32.xlu0 %v2876, 64
    %v3068 = vpop.permute.xlu0 %3067
    %3069 = vrot.lane.b32.xlu0 %v2878, 64
    %v3070 = vpop.permute.xlu0 %3069
    %3071 = vrot.lane.b32.xlu0 %v2880, 64
    %v3072 = vpop.permute.xlu0 %3071
    %3073 = vrot.lane.b32.xlu0 %v2882, 64
    %v3074 = vpop.permute.xlu0 %3073
    %3075 = vrot.lane.b32.xlu0 %v2884, 64
    %v3076 = vpop.permute.xlu0 %3075
    %3077 = vrot.lane.b32.xlu0 %v2886, 64
    %v3078 = vpop.permute.xlu0 %3077
    %3079 = vrot.lane.b32.xlu0 %v2888, 64
    %v3080 = vpop.permute.xlu0 %3079
    %v3177 = vadd.f32 %v2592, %v2890
    %v3178 = vadd.f32 %v2593, %v2892
    %v3179 = vadd.f32 %v2594, %v2894
    %v3180 = vadd.f32 %v2595, %v2896
    %v3181 = vadd.f32 %v2596, %v2898
    %v3182 = vadd.f32 %v2597, %v2900
    %v3183 = vadd.f32 %v2598, %v2902
    %v3184 = vadd.f32 %v2599, %v2904
    %v3185 = vadd.f32 %v2600, %v2906
    %v3186 = vadd.f32 %v2601, %v2908
    %v3187 = vadd.f32 %v2602, %v2910
    %v3188 = vadd.f32 %v2603, %v2912
    %v3189 = vadd.f32 %v2604, %v2914
    %v3190 = vadd.f32 %v2605, %v2916
    %v3191 = vadd.f32 %v2606, %v2918
    %v3192 = vadd.f32 %v2607, %v2920
    %v3193 = vadd.f32 %v2608, %v2922
    %v3194 = vadd.f32 %v2609, %v2924
    %v3195 = vadd.f32 %v2610, %v2926
    %v3196 = vadd.f32 %v2611, %v2928
    %v3197 = vadd.f32 %v2612, %v2930
    %v3198 = vadd.f32 %v2613, %v2932
    %v3199 = vadd.f32 %v2614, %v2934
    %v3200 = vadd.f32 %v2615, %v2936
    %v3201 = vadd.f32 %v2616, %v2938
    %v3202 = vadd.f32 %v2617, %v2940
    %v3203 = vadd.f32 %v2618, %v2942
    %v3204 = vadd.f32 %v2619, %v2944
    %v3205 = vadd.f32 %v2620, %v2946
    %v3206 = vadd.f32 %v2621, %v2948
    %v3207 = vadd.f32 %v2622, %v2950
    %v3208 = vadd.f32 %v2623, %v2952
    %v3209 = vadd.f32 %v2624, %v2954
    %v3210 = vadd.f32 %v2625, %v2956
    %v3211 = vadd.f32 %v2626, %v2958
    %v3212 = vadd.f32 %v2627, %v2960
    %v3213 = vadd.f32 %v2628, %v2962
    %v3214 = vadd.f32 %v2629, %v2964
    %v3215 = vadd.f32 %v2630, %v2966
    %v3216 = vadd.f32 %v2631, %v2968
    %v3217 = vadd.f32 %v2632, %v2970
    %v3218 = vadd.f32 %v2633, %v2972
    %v3219 = vadd.f32 %v2634, %v2974
    %v3220 = vadd.f32 %v2635, %v2976
    %v3221 = vadd.f32 %v2636, %v2978
    %v3222 = vadd.f32 %v2637, %v2980
    %v3223 = vadd.f32 %v2638, %v2982
    %v3224 = vadd.f32 %v2639, %v2984
    %v3225 = vadd.f32 %v2640, %v2986
    %v3226 = vadd.f32 %v2641, %v2988
    %v3227 = vadd.f32 %v2642, %v2990
    %v3228 = vadd.f32 %v2643, %v2992
    %v3229 = vadd.f32 %v2644, %v2994
    %v3230 = vadd.f32 %v2645, %v2996
    %v3231 = vadd.f32 %v2646, %v2998
    %v3232 = vadd.f32 %v2647, %v3000
    %v3233 = vadd.f32 %v2648, %v3002
    %v3234 = vadd.f32 %v2649, %v3004
    %v3235 = vadd.f32 %v2650, %v3006
    %v3236 = vadd.f32 %v2651, %v3008
    %v3237 = vadd.f32 %v2652, %v3010
    %v3238 = vadd.f32 %v2653, %v3012
    %v3239 = vadd.f32 %v2654, %v3014
    %v3240 = vadd.f32 %v2655, %v3016
    %v3241 = vadd.f32 %v2656, %v3018
    %v3242 = vadd.f32 %v2657, %v3020
    %v3243 = vadd.f32 %v2658, %v3022
    %v3244 = vadd.f32 %v2659, %v3024
    %v3245 = vadd.f32 %v2660, %v3026
    %v3246 = vadd.f32 %v2661, %v3028
    %v3247 = vadd.f32 %v2662, %v3030
    %v3248 = vadd.f32 %v2663, %v3032
    %v3249 = vadd.f32 %v2664, %v3034
    %v3250 = vadd.f32 %v2665, %v3036
    %v3251 = vadd.f32 %v2666, %v3038
    %v3252 = vadd.f32 %v2667, %v3040
    %v3253 = vadd.f32 %v2668, %v3042
    %v3254 = vadd.f32 %v2669, %v3044
    %v3255 = vadd.f32 %v2670, %v3046
    %v3256 = vadd.f32 %v2671, %v3048
    %v3257 = vadd.f32 %v2672, %v3050
    %v3258 = vadd.f32 %v2673, %v3052
    %v3259 = vadd.f32 %v2674, %v3054
    %v3260 = vadd.f32 %v2675, %v3056
    %v3261 = vadd.f32 %v2676, %v3058
    %v3262 = vadd.f32 %v2677, %v3060
    %v3263 = vadd.f32 %v2678, %v3062
    %v3264 = vadd.f32 %v2679, %v3064
    %v3265 = vadd.f32 %v2680, %v3066
    %v3266 = vadd.f32 %v2681, %v3068
    %v3267 = vadd.f32 %v2682, %v3070
    %v3268 = vadd.f32 %v2683, %v3072
    %v3269 = vadd.f32 %v2684, %v3074
    %v3270 = vadd.f32 %v2685, %v3076
    %v3271 = vadd.f32 %v2686, %v3078
    %v3272 = vadd.f32 %v2687, %v3080
    %vm3377 = vcmask 1043456
    %v3378 = vrot.slane %v1243, 4
    %v3379 = vrot.slane %v1245, 4
    %v3380 = vsel %vm3377, %v3378, %v3379
    %v3381 = vrot.slane %v1248, 4
    %v3382 = vsel %vm3377, %v3379, %v3381
    %v3383 = vrot.slane %v1250, 4
    %v3384 = vsel %vm3377, %v3381, %v3383
    %v3385 = vrot.slane %v1253, 4
    %v3386 = vsel %vm3377, %v3383, %v3385
    %v3387 = vrot.slane %v1255, 4
    %v3388 = vsel %vm3377, %v3385, %v3387
    %v3389 = vrot.slane %v1258, 4
    %v3390 = vsel %vm3377, %v3387, %v3389
    %v3391 = vrot.slane %v1260, 4
    %v3392 = vsel %vm3377, %v3389, %v3391
    %v3393 = vrot.slane %v1263, 4
    %v3394 = vsel %vm3377, %v3391, %v3393
    %v3395 = vrot.slane %v1265, 4
    %v3396 = vsel %vm3377, %v3393, %v3395
    %v3397 = vrot.slane %v1268, 4
    %v3398 = vsel %vm3377, %v3395, %v3397
    %v3399 = vrot.slane %v1270, 4
    %v3400 = vsel %vm3377, %v3397, %v3399
    %v3401 = vrot.slane %v1273, 4
    %v3402 = vsel %vm3377, %v3399, %v3401
    %v3403 = vrot.slane %v1275, 4
    %v3404 = vrot.slane %v1278, 4
    %v3405 = vsel %vm3377, %v3403, %v3404
    %v3406 = vrot.slane %v1280, 4
    %v3407 = vsel %vm3377, %v3404, %v3406
    %v3408 = vrot.slane %v1283, 4
    %v3409 = vsel %vm3377, %v3406, %v3408
    %v3410 = vrot.slane %v1285, 4
    %v3411 = vsel %vm3377, %v3408, %v3410
    %v3412 = vrot.slane %v1288, 4
    %v3413 = vsel %vm3377, %v3410, %v3412
    %v3414 = vrot.slane %v1290, 4
    %v3415 = vsel %vm3377, %v3412, %v3414
    %v3416 = vrot.slane %v1293, 4
    %v3417 = vsel %vm3377, %v3414, %v3416
    %v3418 = vrot.slane %v1295, 4
    %v3419 = vsel %vm3377, %v3416, %v3418
    %v3420 = vrot.slane %v1298, 4
    %v3421 = vsel %vm3377, %v3418, %v3420
    %v3422 = vrot.slane %v1300, 4
    %v3423 = vsel %vm3377, %v3420, %v3422
    %v3424 = vrot.slane %v1303, 4
    %v3425 = vsel %vm3377, %v3422, %v3424
    %v3426 = vrot.slane %v1305, 4
    %v3427 = vsel %vm3377, %v3424, %v3426
    %v3428 = vrot.slane %v1308, 4
    %v3429 = vrot.slane %v1310, 4
    %v3430 = vsel %vm3377, %v3428, %v3429
    %v3431 = vrot.slane %v1313, 4
    %v3432 = vsel %vm3377, %v3429, %v3431
    %v3433 = vrot.slane %v1315, 4
    %v3434 = vsel %vm3377, %v3431, %v3433
    %v3435 = vrot.slane %v1318, 4
    %v3436 = vsel %vm3377, %v3433, %v3435
    %v3437 = vrot.slane %v1320, 4
    %v3438 = vsel %vm3377, %v3435, %v3437
    %v3439 = vrot.slane %v1323, 4
    %v3440 = vsel %vm3377, %v3437, %v3439
    %v3441 = vrot.slane %v1325, 4
    %v3442 = vsel %vm3377, %v3439, %v3441
    %v3443 = vrot.slane %v1328, 4
    %v3444 = vsel %vm3377, %v3441, %v3443
    %v3445 = vrot.slane %v1330, 4
    %v3446 = vsel %vm3377, %v3443, %v3445
    %v3447 = vrot.slane %v1333, 4
    %v3448 = vsel %vm3377, %v3445, %v3447
    %v3449 = vrot.slane %v1335, 4
    %v3450 = vsel %vm3377, %v3447, %v3449
    %v3451 = vrot.slane %v1338, 4
    %v3452 = vsel %vm3377, %v3449, %v3451
    %v3453 = vrot.slane %v1340, 4
    %v3454 = vrot.slane %v1343, 4
    %v3455 = vsel %vm3377, %v3453, %v3454
    %v3456 = vrot.slane %v1345, 4
    %v3457 = vsel %vm3377, %v3454, %v3456
    %v3458 = vrot.slane %v1348, 4
    %v3459 = vsel %vm3377, %v3456, %v3458
    %v3460 = vrot.slane %v1350, 4
    %v3461 = vsel %vm3377, %v3458, %v3460
    %v3462 = vrot.slane %v1353, 4
    %v3463 = vsel %vm3377, %v3460, %v3462
    %v3464 = vrot.slane %v1355, 4
    %v3465 = vsel %vm3377, %v3462, %v3464
    %v3466 = vrot.slane %v1358, 4
    %v3467 = vsel %vm3377, %v3464, %v3466
    %v3468 = vrot.slane %v1360, 4
    %v3469 = vsel %vm3377, %v3466, %v3468
    %v3470 = vrot.slane %v1363, 4
    %v3471 = vsel %vm3377, %v3468, %v3470
    %v3472 = vrot.slane %v1365, 4
    %v3473 = vsel %vm3377, %v3470, %v3472
    %v3474 = vrot.slane %v1368, 4
    %v3475 = vsel %vm3377, %v3472, %v3474
    %v3476 = vrot.slane %v1370, 4
    %v3477 = vsel %vm3377, %v3474, %v3476
    %v3478 = vrot.slane %v1373, 4
    %v3479 = vrot.slane %v1375, 4
    %v3480 = vsel %vm3377, %v3478, %v3479
    %v3481 = vrot.slane %v1378, 4
    %v3482 = vsel %vm3377, %v3479, %v3481
    %v3483 = vrot.slane %v1380, 4
    %v3484 = vsel %vm3377, %v3481, %v3483
    %v3485 = vrot.slane %v1383, 4
    %v3486 = vsel %vm3377, %v3483, %v3485
    %v3487 = vrot.slane %v1385, 4
    %v3488 = vsel %vm3377, %v3485, %v3487
    %v3489 = vrot.slane %v1388, 4
    %v3490 = vsel %vm3377, %v3487, %v3489
    %v3491 = vrot.slane %v1390, 4
    %v3492 = vsel %vm3377, %v3489, %v3491
    %v3493 = vrot.slane %v1393, 4
    %v3494 = vsel %vm3377, %v3491, %v3493
    %v3495 = vrot.slane %v1395, 4
    %v3496 = vsel %vm3377, %v3493, %v3495
    %v3497 = vrot.slane %v1398, 4
    %v3498 = vsel %vm3377, %v3495, %v3497
    %v3499 = vrot.slane %v1400, 4
    %v3500 = vsel %vm3377, %v3497, %v3499
    %v3501 = vrot.slane %v1403, 4
    %v3502 = vsel %vm3377, %v3499, %v3501
    %v3503 = vrot.slane %v1405, 4
    %v3504 = vrot.slane %v1408, 4
    %v3505 = vsel %vm3377, %v3503, %v3504
    %v3506 = vrot.slane %v1410, 4
    %v3507 = vsel %vm3377, %v3504, %v3506
    %v3508 = vrot.slane %v1413, 4
    %v3509 = vsel %vm3377, %v3506, %v3508
    %v3510 = vrot.slane %v1415, 4
    %v3511 = vsel %vm3377, %v3508, %v3510
    %v3512 = vrot.slane %v1418, 4
    %v3513 = vsel %vm3377, %v3510, %v3512
    %v3514 = vrot.slane %v1420, 4
    %v3515 = vsel %vm3377, %v3512, %v3514
    %v3516 = vrot.slane %v1423, 4
    %v3517 = vsel %vm3377, %v3514, %v3516
    %v3518 = vrot.slane %v1425, 4
    %v3519 = vsel %vm3377, %v3516, %v3518
    %v3520 = vrot.slane %v1428, 4
    %v3521 = vsel %vm3377, %v3518, %v3520
    %v3522 = vrot.slane %v1430, 4
    %v3523 = vsel %vm3377, %v3520, %v3522
    %v3524 = vrot.slane %v1433, 4
    %v3525 = vsel %vm3377, %v3522, %v3524
    %v3526 = vrot.slane %v1435, 4
    %v3527 = vsel %vm3377, %v3524, %v3526
    %v3528 = vrot.slane %v1438, 4
    %v3529 = vrot.slane %v1440, 4
    %v3530 = vsel %vm3377, %v3528, %v3529
    %v3531 = vrot.slane %v1443, 4
    %v3532 = vsel %vm3377, %v3529, %v3531
    %v3533 = vrot.slane %v1445, 4
    %v3534 = vsel %vm3377, %v3531, %v3533
    %v3535 = vrot.slane %v1448, 4
    %v3536 = vsel %vm3377, %v3533, %v3535
    %v3537 = vrot.slane %v1450, 4
    %v3538 = vsel %vm3377, %v3535, %v3537
    %v3539 = vrot.slane %v1453, 4
    %v3540 = vsel %vm3377, %v3537, %v3539
    %v3541 = vrot.slane %v1455, 4
    %v3542 = vsel %vm3377, %v3539, %v3541
    %v3543 = vrot.slane %v1458, 4
    %v3544 = vsel %vm3377, %v3541, %v3543
    %v3545 = vrot.slane %v1460, 4
    %v3546 = vsel %vm3377, %v3543, %v3545
    %v3547 = vrot.slane %v1463, 4
    %v3548 = vsel %vm3377, %v3545, %v3547
    %v3549 = vrot.slane %v1465, 4
    %v3550 = vsel %vm3377, %v3547, %v3549
    %v3551 = vrot.slane %v1468, 4
    %v3552 = vsel %vm3377, %v3549, %v3551
    %v3553 = vrot.slane %v1470, 4
    %v3554 = vrot.slane %v1473, 4
    %v3555 = vsel %vm3377, %v3553, %v3554
    %v3556 = vrot.slane %v1475, 4
    %v3557 = vsel %vm3377, %v3554, %v3556
    %v3558 = vrot.slane %v1478, 4
    %v3559 = vsel %vm3377, %v3556, %v3558
    %v3560 = vrot.slane %v1480, 4
    %v3561 = vsel %vm3377, %v3558, %v3560
    %v3562 = vrot.slane %v1483, 4
    %v3563 = vsel %vm3377, %v3560, %v3562
    %v3564 = vrot.slane %v1485, 4
    %v3565 = vsel %vm3377, %v3562, %v3564
    %v3566 = vrot.slane %v1488, 4
    %v3567 = vsel %vm3377, %v3564, %v3566
    %v3568 = vrot.slane %v1490, 4
    %v3569 = vsel %vm3377, %v3566, %v3568
    %v3570 = vrot.slane %v1493, 4
    %v3571 = vsel %vm3377, %v3568, %v3570
    %v3572 = vrot.slane %v1495, 4
    %v3573 = vsel %vm3377, %v3570, %v3572
    %v3574 = vrot.slane %v1498, 4
    %v3575 = vsel %vm3377, %v3572, %v3574
    %v3576 = vrot.slane %v1500, 4
    %v3577 = vsel %vm3377, %v3574, %v3576
    %v3674 = vadd.f32 %v3177, %v3380
    %v3675 = vadd.f32 %v3178, %v3382
    %v3676 = vadd.f32 %v3179, %v3384
    %v3677 = vadd.f32 %v3180, %v3386
    %v3678 = vadd.f32 %v3181, %v3388
    %v3679 = vadd.f32 %v3182, %v3390
    %v3680 = vadd.f32 %v3183, %v3392
    %v3681 = vadd.f32 %v3184, %v3394
    %v3682 = vadd.f32 %v3185, %v3396
    %v3683 = vadd.f32 %v3186, %v3398
    %v3684 = vadd.f32 %v3187, %v3400
    %v3685 = vadd.f32 %v3188, %v3402
    %v3686 = vadd.f32 %v3189, %v3405
    %v3687 = vadd.f32 %v3190, %v3407
    %v3688 = vadd.f32 %v3191, %v3409
    %v3689 = vadd.f32 %v3192, %v3411
    %v3690 = vadd.f32 %v3193, %v3413
    %v3691 = vadd.f32 %v3194, %v3415
    %v3692 = vadd.f32 %v3195, %v3417
    %v3693 = vadd.f32 %v3196, %v3419
    %v3694 = vadd.f32 %v3197, %v3421
    %v3695 = vadd.f32 %v3198, %v3423
    %v3696 = vadd.f32 %v3199, %v3425
    %v3697 = vadd.f32 %v3200, %v3427
    %v3698 = vadd.f32 %v3201, %v3430
    %v3699 = vadd.f32 %v3202, %v3432
    %v3700 = vadd.f32 %v3203, %v3434
    %v3701 = vadd.f32 %v3204, %v3436
    %v3702 = vadd.f32 %v3205, %v3438
    %v3703 = vadd.f32 %v3206, %v3440
    %v3704 = vadd.f32 %v3207, %v3442
    %v3705 = vadd.f32 %v3208, %v3444
    %v3706 = vadd.f32 %v3209, %v3446
    %v3707 = vadd.f32 %v3210, %v3448
    %v3708 = vadd.f32 %v3211, %v3450
    %v3709 = vadd.f32 %v3212, %v3452
    %v3710 = vadd.f32 %v3213, %v3455
    %v3711 = vadd.f32 %v3214, %v3457
    %v3712 = vadd.f32 %v3215, %v3459
    %v3713 = vadd.f32 %v3216, %v3461
    %v3714 = vadd.f32 %v3217, %v3463
    %v3715 = vadd.f32 %v3218, %v3465
    %v3716 = vadd.f32 %v3219, %v3467
    %v3717 = vadd.f32 %v3220, %v3469
    %v3718 = vadd.f32 %v3221, %v3471
    %v3719 = vadd.f32 %v3222, %v3473
    %v3720 = vadd.f32 %v3223, %v3475
    %v3721 = vadd.f32 %v3224, %v3477
    %v3722 = vadd.f32 %v3225, %v3480
    %v3723 = vadd.f32 %v3226, %v3482
    %v3724 = vadd.f32 %v3227, %v3484
    %v3725 = vadd.f32 %v3228, %v3486
    %v3726 = vadd.f32 %v3229, %v3488
    %v3727 = vadd.f32 %v3230, %v3490
    %v3728 = vadd.f32 %v3231, %v3492
    %v3729 = vadd.f32 %v3232, %v3494
    %v3730 = vadd.f32 %v3233, %v3496
    %v3731 = vadd.f32 %v3234, %v3498
    %v3732 = vadd.f32 %v3235, %v3500
    %v3733 = vadd.f32 %v3236, %v3502
    %v3734 = vadd.f32 %v3237, %v3505
    %v3735 = vadd.f32 %v3238, %v3507
    %v3736 = vadd.f32 %v3239, %v3509
    %v3737 = vadd.f32 %v3240, %v3511
    %v3738 = vadd.f32 %v3241, %v3513
    %v3739 = vadd.f32 %v3242, %v3515
    %v3740 = vadd.f32 %v3243, %v3517
    %v3741 = vadd.f32 %v3244, %v3519
    %v3742 = vadd.f32 %v3245, %v3521
    %v3743 = vadd.f32 %v3246, %v3523
    %v3744 = vadd.f32 %v3247, %v3525
    %v3745 = vadd.f32 %v3248, %v3527
    %v3746 = vadd.f32 %v3249, %v3530
    %v3747 = vadd.f32 %v3250, %v3532
    %v3748 = vadd.f32 %v3251, %v3534
    %v3749 = vadd.f32 %v3252, %v3536
    %v3750 = vadd.f32 %v3253, %v3538
    %v3751 = vadd.f32 %v3254, %v3540
    %v3752 = vadd.f32 %v3255, %v3542
    %v3753 = vadd.f32 %v3256, %v3544
    %v3754 = vadd.f32 %v3257, %v3546
    %v3755 = vadd.f32 %v3258, %v3548
    %v3756 = vadd.f32 %v3259, %v3550
    %v3757 = vadd.f32 %v3260, %v3552
    %v3758 = vadd.f32 %v3261, %v3555
    %v3759 = vadd.f32 %v3262, %v3557
    %v3760 = vadd.f32 %v3263, %v3559
    %v3761 = vadd.f32 %v3264, %v3561
    %v3762 = vadd.f32 %v3265, %v3563
    %v3763 = vadd.f32 %v3266, %v3565
    %v3764 = vadd.f32 %v3267, %v3567
    %v3765 = vadd.f32 %v3268, %v3569
    %v3766 = vadd.f32 %v3269, %v3571
    %v3767 = vadd.f32 %v3270, %v3573
    %v3768 = vadd.f32 %v3271, %v3575
    %v3769 = vadd.f32 %v3272, %v3577
    %v3770 = vld [vmem:[%s2] sm:$0x1]
    %v3772 = vperm.slane %v3770, 0
    %v3774 = vadd.f32 %v3674, %v3772
    %v3775 = vadd.f32 %v3675, %v3772
    %v3776 = vadd.f32 %v3676, %v3772
    %v3777 = vadd.f32 %v3677, %v3772
    %v3778 = vadd.f32 %v3678, %v3772
    %v3779 = vadd.f32 %v3679, %v3772
    %v3780 = vadd.f32 %v3680, %v3772
    %v3781 = vadd.f32 %v3681, %v3772
    %v3782 = vadd.f32 %v3682, %v3772
    %v3783 = vadd.f32 %v3683, %v3772
    %v3784 = vadd.f32 %v3684, %v3772
    %v3785 = vadd.f32 %v3685, %v3772
    %v3786 = vadd.f32 %v3686, %v3772
    %v3787 = vadd.f32 %v3687, %v3772
    %v3788 = vadd.f32 %v3688, %v3772
    %v3789 = vadd.f32 %v3689, %v3772
    %v3790 = vadd.f32 %v3690, %v3772
    %v3791 = vadd.f32 %v3691, %v3772
    %v3792 = vadd.f32 %v3692, %v3772
    %v3793 = vadd.f32 %v3693, %v3772
    %v3794 = vadd.f32 %v3694, %v3772
    %v3795 = vadd.f32 %v3695, %v3772
    %v3796 = vadd.f32 %v3696, %v3772
    %v3797 = vadd.f32 %v3697, %v3772
    %v3798 = vadd.f32 %v3698, %v3772
    %v3799 = vadd.f32 %v3699, %v3772
    %v3800 = vadd.f32 %v3700, %v3772
    %v3801 = vadd.f32 %v3701, %v3772
    %v3802 = vadd.f32 %v3702, %v3772
    %v3803 = vadd.f32 %v3703, %v3772
    %v3804 = vadd.f32 %v3704, %v3772
    %v3805 = vadd.f32 %v3705, %v3772
    %v3806 = vadd.f32 %v3706, %v3772
    %v3807 = vadd.f32 %v3707, %v3772
    %v3808 = vadd.f32 %v3708, %v3772
    %v3809 = vadd.f32 %v3709, %v3772
    %v3810 = vadd.f32 %v3710, %v3772
    %v3811 = vadd.f32 %v3711, %v3772
    %v3812 = vadd.f32 %v3712, %v3772
    %v3813 = vadd.f32 %v3713, %v3772
    %v3814 = vadd.f32 %v3714, %v3772
    %v3815 = vadd.f32 %v3715, %v3772
    %v3816 = vadd.f32 %v3716, %v3772
    %v3817 = vadd.f32 %v3717, %v3772
    %v3818 = vadd.f32 %v3718, %v3772
    %v3819 = vadd.f32 %v3719, %v3772
    %v3820 = vadd.f32 %v3720, %v3772
    %v3821 = vadd.f32 %v3721, %v3772
    %v3822 = vadd.f32 %v3722, %v3772
    %v3823 = vadd.f32 %v3723, %v3772
    %v3824 = vadd.f32 %v3724, %v3772
    %v3825 = vadd.f32 %v3725, %v3772
    %v3826 = vadd.f32 %v3726, %v3772
    %v3827 = vadd.f32 %v3727, %v3772
    %v3828 = vadd.f32 %v3728, %v3772
    %v3829 = vadd.f32 %v3729, %v3772
    %v3830 = vadd.f32 %v3730, %v3772
    %v3831 = vadd.f32 %v3731, %v3772
    %v3832 = vadd.f32 %v3732, %v3772
    %v3833 = vadd.f32 %v3733, %v3772
    %v3834 = vadd.f32 %v3734, %v3772
    %v3835 = vadd.f32 %v3735, %v3772
    %v3836 = vadd.f32 %v3736, %v3772
    %v3837 = vadd.f32 %v3737, %v3772
    %v3838 = vadd.f32 %v3738, %v3772
    %v3839 = vadd.f32 %v3739, %v3772
    %v3840 = vadd.f32 %v3740, %v3772
    %v3841 = vadd.f32 %v3741, %v3772
    %v3842 = vadd.f32 %v3742, %v3772
    %v3843 = vadd.f32 %v3743, %v3772
    %v3844 = vadd.f32 %v3744, %v3772
    %v3845 = vadd.f32 %v3745, %v3772
    %v3846 = vadd.f32 %v3746, %v3772
    %v3847 = vadd.f32 %v3747, %v3772
    %v3848 = vadd.f32 %v3748, %v3772
    %v3849 = vadd.f32 %v3749, %v3772
    %v3850 = vadd.f32 %v3750, %v3772
    %v3851 = vadd.f32 %v3751, %v3772
    %v3852 = vadd.f32 %v3752, %v3772
    %v3853 = vadd.f32 %v3753, %v3772
    %v3854 = vadd.f32 %v3754, %v3772
    %v3855 = vadd.f32 %v3755, %v3772
    %v3856 = vadd.f32 %v3756, %v3772
    %v3857 = vadd.f32 %v3757, %v3772
    %v3858 = vadd.f32 %v3758, %v3772
    %v3859 = vadd.f32 %v3759, %v3772
    %v3860 = vadd.f32 %v3760, %v3772
    %v3861 = vadd.f32 %v3761, %v3772
    %v3862 = vadd.f32 %v3762, %v3772
    %v3863 = vadd.f32 %v3763, %v3772
    %v3864 = vadd.f32 %v3764, %v3772
    %v3865 = vadd.f32 %v3765, %v3772
    %v3866 = vadd.f32 %v3766, %v3772
    %v3867 = vadd.f32 %v3767, %v3772
    %v3868 = vadd.f32 %v3768, %v3772
    %v3869 = vadd.f32 %v3769, %v3772
    %v3870 = vmax.f32 %v3774, 0.0
    %v3871 = vmax.f32 %v3775, 0.0
    %v3872 = vmax.f32 %v3776, 0.0
    %v3873 = vmax.f32 %v3777, 0.0
    %v3874 = vmax.f32 %v3778, 0.0
    %v3875 = vmax.f32 %v3779, 0.0
    %v3876 = vmax.f32 %v3780, 0.0
    %v3877 = vmax.f32 %v3781, 0.0
    %v3878 = vmax.f32 %v3782, 0.0
    %v3879 = vmax.f32 %v3783, 0.0
    %v3880 = vmax.f32 %v3784, 0.0
    %v3881 = vmax.f32 %v3785, 0.0
    %v3882 = vmax.f32 %v3786, 0.0
    %v3883 = vmax.f32 %v3787, 0.0
    %v3884 = vmax.f32 %v3788, 0.0
    %v3885 = vmax.f32 %v3789, 0.0
    %v3886 = vmax.f32 %v3790, 0.0
    %v3887 = vmax.f32 %v3791, 0.0
    %v3888 = vmax.f32 %v3792, 0.0
    %v3889 = vmax.f32 %v3793, 0.0
    %v3890 = vmax.f32 %v3794, 0.0
    %v3891 = vmax.f32 %v3795, 0.0
    %v3892 = vmax.f32 %v3796, 0.0
    %v3893 = vmax.f32 %v3797, 0.0
    %v3894 = vmax.f32 %v3798, 0.0
    %v3895 = vmax.f32 %v3799, 0.0
    %v3896 = vmax.f32 %v3800, 0.0
    %v3897 = vmax.f32 %v3801, 0.0
    %v3898 = vmax.f32 %v3802, 0.0
    %v3899 = vmax.f32 %v3803, 0.0
    %v3900 = vmax.f32 %v3804, 0.0
    %v3901 = vmax.f32 %v3805, 0.0
    %v3902 = vmax.f32 %v3806, 0.0
    %v3903 = vmax.f32 %v3807, 0.0
    %v3904 = vmax.f32 %v3808, 0.0
    %v3905 = vmax.f32 %v3809, 0.0
    %v3906 = vmax.f32 %v3810, 0.0
    %v3907 = vmax.f32 %v3811, 0.0
    %v3908 = vmax.f32 %v3812, 0.0
    %v3909 = vmax.f32 %v3813, 0.0
    %v3910 = vmax.f32 %v3814, 0.0
    %v3911 = vmax.f32 %v3815, 0.0
    %v3912 = vmax.f32 %v3816, 0.0
    %v3913 = vmax.f32 %v3817, 0.0
    %v3914 = vmax.f32 %v3818, 0.0
    %v3915 = vmax.f32 %v3819, 0.0
    %v3916 = vmax.f32 %v3820, 0.0
    %v3917 = vmax.f32 %v3821, 0.0
    %v3918 = vmax.f32 %v3822, 0.0
    %v3919 = vmax.f32 %v3823, 0.0
    %v3920 = vmax.f32 %v3824, 0.0
    %v3921 = vmax.f32 %v3825, 0.0
    %v3922 = vmax.f32 %v3826, 0.0
    %v3923 = vmax.f32 %v3827, 0.0
    %v3924 = vmax.f32 %v3828, 0.0
    %v3925 = vmax.f32 %v3829, 0.0
    %v3926 = vmax.f32 %v3830, 0.0
    %v3927 = vmax.f32 %v3831, 0.0
    %v3928 = vmax.f32 %v3832, 0.0
    %v3929 = vmax.f32 %v3833, 0.0
    %v3930 = vmax.f32 %v3834, 0.0
    %v3931 = vmax.f32 %v3835, 0.0
    %v3932 = vmax.f32 %v3836, 0.0
    %v3933 = vmax.f32 %v3837, 0.0
    %v3934 = vmax.f32 %v3838, 0.0
    %v3935 = vmax.f32 %v3839, 0.0
    %v3936 = vmax.f32 %v3840, 0.0
    %v3937 = vmax.f32 %v3841, 0.0
    %v3938 = vmax.f32 %v3842, 0.0
    %v3939 = vmax.f32 %v3843, 0.0
    %v3940 = vmax.f32 %v3844, 0.0
    %v3941 = vmax.f32 %v3845, 0.0
    %v3942 = vmax.f32 %v3846, 0.0
    %v3943 = vmax.f32 %v3847, 0.0
    %v3944 = vmax.f32 %v3848, 0.0
    %v3945 = vmax.f32 %v3849, 0.0
    %v3946 = vmax.f32 %v3850, 0.0
    %v3947 = vmax.f32 %v3851, 0.0
    %v3948 = vmax.f32 %v3852, 0.0
    %v3949 = vmax.f32 %v3853, 0.0
    %v3950 = vmax.f32 %v3854, 0.0
    %v3951 = vmax.f32 %v3855, 0.0
    %v3952 = vmax.f32 %v3856, 0.0
    %v3953 = vmax.f32 %v3857, 0.0
    %v3954 = vmax.f32 %v3858, 0.0
    %v3955 = vmax.f32 %v3859, 0.0
    %v3956 = vmax.f32 %v3860, 0.0
    %v3957 = vmax.f32 %v3861, 0.0
    %v3958 = vmax.f32 %v3862, 0.0
    %v3959 = vmax.f32 %v3863, 0.0
    %v3960 = vmax.f32 %v3864, 0.0
    %v3961 = vmax.f32 %v3865, 0.0
    %v3962 = vmax.f32 %v3866, 0.0
    %v3963 = vmax.f32 %v3867, 0.0
    %v3964 = vmax.f32 %v3868, 0.0
    %v3965 = vmax.f32 %v3869, 0.0
    %v3966 = vld [vmem:[%s3] sm:$0x1]
    %v3968 = vperm.slane %v3966, 0
    %v3970 = vmul.f32 %v3870, %v3968
    %v3971 = vmul.f32 %v3871, %v3968
    %v3972 = vmul.f32 %v3872, %v3968
    %v3973 = vmul.f32 %v3873, %v3968
    %v3974 = vmul.f32 %v3874, %v3968
    %v3975 = vmul.f32 %v3875, %v3968
    %v3976 = vmul.f32 %v3876, %v3968
    %v3977 = vmul.f32 %v3877, %v3968
    %v3978 = vmul.f32 %v3878, %v3968
    %v3979 = vmul.f32 %v3879, %v3968
    %v3980 = vmul.f32 %v3880, %v3968
    %v3981 = vmul.f32 %v3881, %v3968
    %v3982 = vmul.f32 %v3882, %v3968
    %v3983 = vmul.f32 %v3883, %v3968
    %v3984 = vmul.f32 %v3884, %v3968
    %v3985 = vmul.f32 %v3885, %v3968
    %v3986 = vmul.f32 %v3886, %v3968
    %v3987 = vmul.f32 %v3887, %v3968
    %v3988 = vmul.f32 %v3888, %v3968
    %v3989 = vmul.f32 %v3889, %v3968
    %v3990 = vmul.f32 %v3890, %v3968
    %v3991 = vmul.f32 %v3891, %v3968
    %v3992 = vmul.f32 %v3892, %v3968
    %v3993 = vmul.f32 %v3893, %v3968
    %v3994 = vmul.f32 %v3894, %v3968
    %v3995 = vmul.f32 %v3895, %v3968
    %v3996 = vmul.f32 %v3896, %v3968
    %v3997 = vmul.f32 %v3897, %v3968
    %v3998 = vmul.f32 %v3898, %v3968
    %v3999 = vmul.f32 %v3899, %v3968
    %v4000 = vmul.f32 %v3900, %v3968
    %v4001 = vmul.f32 %v3901, %v3968
    %v4002 = vmul.f32 %v3902, %v3968
    %v4003 = vmul.f32 %v3903, %v3968
    %v4004 = vmul.f32 %v3904, %v3968
    %v4005 = vmul.f32 %v3905, %v3968
    %v4006 = vmul.f32 %v3906, %v3968
    %v4007 = vmul.f32 %v3907, %v3968
    %v4008 = vmul.f32 %v3908, %v3968
    %v4009 = vmul.f32 %v3909, %v3968
    %v4010 = vmul.f32 %v3910, %v3968
    %v4011 = vmul.f32 %v3911, %v3968
    %v4012 = vmul.f32 %v3912, %v3968
    %v4013 = vmul.f32 %v3913, %v3968
    %v4014 = vmul.f32 %v3914, %v3968
    %v4015 = vmul.f32 %v3915, %v3968
    %v4016 = vmul.f32 %v3916, %v3968
    %v4017 = vmul.f32 %v3917, %v3968
    %v4018 = vmul.f32 %v3918, %v3968
    %v4019 = vmul.f32 %v3919, %v3968
    %v4020 = vmul.f32 %v3920, %v3968
    %v4021 = vmul.f32 %v3921, %v3968
    %v4022 = vmul.f32 %v3922, %v3968
    %v4023 = vmul.f32 %v3923, %v3968
    %v4024 = vmul.f32 %v3924, %v3968
    %v4025 = vmul.f32 %v3925, %v3968
    %v4026 = vmul.f32 %v3926, %v3968
    %v4027 = vmul.f32 %v3927, %v3968
    %v4028 = vmul.f32 %v3928, %v3968
    %v4029 = vmul.f32 %v3929, %v3968
    %v4030 = vmul.f32 %v3930, %v3968
    %v4031 = vmul.f32 %v3931, %v3968
    %v4032 = vmul.f32 %v3932, %v3968
    %v4033 = vmul.f32 %v3933, %v3968
    %v4034 = vmul.f32 %v3934, %v3968
    %v4035 = vmul.f32 %v3935, %v3968
    %v4036 = vmul.f32 %v3936, %v3968
    %v4037 = vmul.f32 %v3937, %v3968
    %v4038 = vmul.f32 %v3938, %v3968
    %v4039 = vmul.f32 %v3939, %v3968
    %v4040 = vmul.f32 %v3940, %v3968
    %v4041 = vmul.f32 %v3941, %v3968
    %v4042 = vmul.f32 %v3942, %v3968
    %v4043 = vmul.f32 %v3943, %v3968
    %v4044 = vmul.f32 %v3944, %v3968
    %v4045 = vmul.f32 %v3945, %v3968
    %v4046 = vmul.f32 %v3946, %v3968
    %v4047 = vmul.f32 %v3947, %v3968
    %v4048 = vmul.f32 %v3948, %v3968
    %v4049 = vmul.f32 %v3949, %v3968
    %v4050 = vmul.f32 %v3950, %v3968
    %v4051 = vmul.f32 %v3951, %v3968
    %v4052 = vmul.f32 %v3952, %v3968
    %v4053 = vmul.f32 %v3953, %v3968
    %v4054 = vmul.f32 %v3954, %v3968
    %v4055 = vmul.f32 %v3955, %v3968
    %v4056 = vmul.f32 %v3956, %v3968
    %v4057 = vmul.f32 %v3957, %v3968
    %v4058 = vmul.f32 %v3958, %v3968
    %v4059 = vmul.f32 %v3959, %v3968
    %v4060 = vmul.f32 %v3960, %v3968
    %v4061 = vmul.f32 %v3961, %v3968
    %v4062 = vmul.f32 %v3962, %v3968
    %v4063 = vmul.f32 %v3963, %v3968
    %v4064 = vmul.f32 %v3964, %v3968
    %v4065 = vmul.f32 %v3965, %v3968
    %v4066 = vld [vmem:[%s4] sm:$0x1]
    %v4068 = vperm.slane %v4066, 0
    %v4070 = vadd.f32 %v3970, %v4068
    %v4071 = vadd.f32 %v3971, %v4068
    %v4072 = vadd.f32 %v3972, %v4068
    %v4073 = vadd.f32 %v3973, %v4068
    %v4074 = vadd.f32 %v3974, %v4068
    %v4075 = vadd.f32 %v3975, %v4068
    %v4076 = vadd.f32 %v3976, %v4068
    %v4077 = vadd.f32 %v3977, %v4068
    %v4078 = vadd.f32 %v3978, %v4068
    %v4079 = vadd.f32 %v3979, %v4068
    %v4080 = vadd.f32 %v3980, %v4068
    %v4081 = vadd.f32 %v3981, %v4068
    %v4082 = vadd.f32 %v3982, %v4068
    %v4083 = vadd.f32 %v3983, %v4068
    %v4084 = vadd.f32 %v3984, %v4068
    %v4085 = vadd.f32 %v3985, %v4068
    %v4086 = vadd.f32 %v3986, %v4068
    %v4087 = vadd.f32 %v3987, %v4068
    %v4088 = vadd.f32 %v3988, %v4068
    %v4089 = vadd.f32 %v3989, %v4068
    %v4090 = vadd.f32 %v3990, %v4068
    %v4091 = vadd.f32 %v3991, %v4068
    %v4092 = vadd.f32 %v3992, %v4068
    %v4093 = vadd.f32 %v3993, %v4068
    %v4094 = vadd.f32 %v3994, %v4068
    %v4095 = vadd.f32 %v3995, %v4068
    %v4096 = vadd.f32 %v3996, %v4068
    %v4097 = vadd.f32 %v3997, %v4068
    %v4098 = vadd.f32 %v3998, %v4068
    %v4099 = vadd.f32 %v3999, %v4068
    %v4100 = vadd.f32 %v4000, %v4068
    %v4101 = vadd.f32 %v4001, %v4068
    %v4102 = vadd.f32 %v4002, %v4068
    %v4103 = vadd.f32 %v4003, %v4068
    %v4104 = vadd.f32 %v4004, %v4068
    %v4105 = vadd.f32 %v4005, %v4068
    %v4106 = vadd.f32 %v4006, %v4068
    %v4107 = vadd.f32 %v4007, %v4068
    %v4108 = vadd.f32 %v4008, %v4068
    %v4109 = vadd.f32 %v4009, %v4068
    %v4110 = vadd.f32 %v4010, %v4068
    %v4111 = vadd.f32 %v4011, %v4068
    %v4112 = vadd.f32 %v4012, %v4068
    %v4113 = vadd.f32 %v4013, %v4068
    %v4114 = vadd.f32 %v4014, %v4068
    %v4115 = vadd.f32 %v4015, %v4068
    %v4116 = vadd.f32 %v4016, %v4068
    %v4117 = vadd.f32 %v4017, %v4068
    %v4118 = vadd.f32 %v4018, %v4068
    %v4119 = vadd.f32 %v4019, %v4068
    %v4120 = vadd.f32 %v4020, %v4068
    %v4121 = vadd.f32 %v4021, %v4068
    %v4122 = vadd.f32 %v4022, %v4068
    %v4123 = vadd.f32 %v4023, %v4068
    %v4124 = vadd.f32 %v4024, %v4068
    %v4125 = vadd.f32 %v4025, %v4068
    %v4126 = vadd.f32 %v4026, %v4068
    %v4127 = vadd.f32 %v4027, %v4068
    %v4128 = vadd.f32 %v4028, %v4068
    %v4129 = vadd.f32 %v4029, %v4068
    %v4130 = vadd.f32 %v4030, %v4068
    %v4131 = vadd.f32 %v4031, %v4068
    %v4132 = vadd.f32 %v4032, %v4068
    %v4133 = vadd.f32 %v4033, %v4068
    %v4134 = vadd.f32 %v4034, %v4068
    %v4135 = vadd.f32 %v4035, %v4068
    %v4136 = vadd.f32 %v4036, %v4068
    %v4137 = vadd.f32 %v4037, %v4068
    %v4138 = vadd.f32 %v4038, %v4068
    %v4139 = vadd.f32 %v4039, %v4068
    %v4140 = vadd.f32 %v4040, %v4068
    %v4141 = vadd.f32 %v4041, %v4068
    %v4142 = vadd.f32 %v4042, %v4068
    %v4143 = vadd.f32 %v4043, %v4068
    %v4144 = vadd.f32 %v4044, %v4068
    %v4145 = vadd.f32 %v4045, %v4068
    %v4146 = vadd.f32 %v4046, %v4068
    %v4147 = vadd.f32 %v4047, %v4068
    %v4148 = vadd.f32 %v4048, %v4068
    %v4149 = vadd.f32 %v4049, %v4068
    %v4150 = vadd.f32 %v4050, %v4068
    %v4151 = vadd.f32 %v4051, %v4068
    %v4152 = vadd.f32 %v4052, %v4068
    %v4153 = vadd.f32 %v4053, %v4068
    %v4154 = vadd.f32 %v4054, %v4068
    %v4155 = vadd.f32 %v4055, %v4068
    %v4156 = vadd.f32 %v4056, %v4068
    %v4157 = vadd.f32 %v4057, %v4068
    %v4158 = vadd.f32 %v4058, %v4068
    %v4159 = vadd.f32 %v4059, %v4068
    %v4160 = vadd.f32 %v4060, %v4068
    %v4161 = vadd.f32 %v4061, %v4068
    %v4162 = vadd.f32 %v4062, %v4068
    %v4163 = vadd.f32 %v4063, %v4068
    %v4164 = vadd.f32 %v4064, %v4068
    %v4165 = vadd.f32 %v4065, %v4068
    %v4166 = vpack.c.bf16 %v4070, %v4070
    %v4167 = vpack.c.bf16 %v4071, %v4071
    %v4168 = vpack.c.bf16 %v4072, %v4072
    %v4169 = vpack.c.bf16 %v4073, %v4073
    %v4170 = vpack.c.bf16 %v4074, %v4074
    %v4171 = vpack.c.bf16 %v4075, %v4075
    %v4172 = vpack.c.bf16 %v4076, %v4076
    %v4173 = vpack.c.bf16 %v4077, %v4077
    %v4174 = vpack.c.bf16 %v4078, %v4078
    %v4175 = vpack.c.bf16 %v4079, %v4079
    %v4176 = vpack.c.bf16 %v4080, %v4080
    %v4177 = vpack.c.bf16 %v4081, %v4081
    %v4178 = vpack.c.bf16 %v4082, %v4082
    %v4179 = vpack.c.bf16 %v4083, %v4083
    %v4180 = vpack.c.bf16 %v4084, %v4084
    %v4181 = vpack.c.bf16 %v4085, %v4085
    %v4182 = vpack.c.bf16 %v4086, %v4086
    %v4183 = vpack.c.bf16 %v4087, %v4087
    %v4184 = vpack.c.bf16 %v4088, %v4088
    %v4185 = vpack.c.bf16 %v4089, %v4089
    %v4186 = vpack.c.bf16 %v4090, %v4090
    %v4187 = vpack.c.bf16 %v4091, %v4091
    %v4188 = vpack.c.bf16 %v4092, %v4092
    %v4189 = vpack.c.bf16 %v4093, %v4093
    %v4190 = vpack.c.bf16 %v4094, %v4094
    %v4191 = vpack.c.bf16 %v4095, %v4095
    %v4192 = vpack.c.bf16 %v4096, %v4096
    %v4193 = vpack.c.bf16 %v4097, %v4097
    %v4194 = vpack.c.bf16 %v4098, %v4098
    %v4195 = vpack.c.bf16 %v4099, %v4099
    %v4196 = vpack.c.bf16 %v4100, %v4100
    %v4197 = vpack.c.bf16 %v4101, %v4101
    %v4198 = vpack.c.bf16 %v4102, %v4102
    %v4199 = vpack.c.bf16 %v4103, %v4103
    %v4200 = vpack.c.bf16 %v4104, %v4104
    %v4201 = vpack.c.bf16 %v4105, %v4105
    %v4202 = vpack.c.bf16 %v4106, %v4106
    %v4203 = vpack.c.bf16 %v4107, %v4107
    %v4204 = vpack.c.bf16 %v4108, %v4108
    %v4205 = vpack.c.bf16 %v4109, %v4109
    %v4206 = vpack.c.bf16 %v4110, %v4110
    %v4207 = vpack.c.bf16 %v4111, %v4111
    %v4208 = vpack.c.bf16 %v4112, %v4112
    %v4209 = vpack.c.bf16 %v4113, %v4113
    %v4210 = vpack.c.bf16 %v4114, %v4114
    %v4211 = vpack.c.bf16 %v4115, %v4115
    %v4212 = vpack.c.bf16 %v4116, %v4116
    %v4213 = vpack.c.bf16 %v4117, %v4117
    %v4214 = vpack.c.bf16 %v4118, %v4118
    %v4215 = vpack.c.bf16 %v4119, %v4119
    %v4216 = vpack.c.bf16 %v4120, %v4120
    %v4217 = vpack.c.bf16 %v4121, %v4121
    %v4218 = vpack.c.bf16 %v4122, %v4122
    %v4219 = vpack.c.bf16 %v4123, %v4123
    %v4220 = vpack.c.bf16 %v4124, %v4124
    %v4221 = vpack.c.bf16 %v4125, %v4125
    %v4222 = vpack.c.bf16 %v4126, %v4126
    %v4223 = vpack.c.bf16 %v4127, %v4127
    %v4224 = vpack.c.bf16 %v4128, %v4128
    %v4225 = vpack.c.bf16 %v4129, %v4129
    %v4226 = vpack.c.bf16 %v4130, %v4130
    %v4227 = vpack.c.bf16 %v4131, %v4131
    %v4228 = vpack.c.bf16 %v4132, %v4132
    %v4229 = vpack.c.bf16 %v4133, %v4133
    %v4230 = vpack.c.bf16 %v4134, %v4134
    %v4231 = vpack.c.bf16 %v4135, %v4135
    %v4232 = vpack.c.bf16 %v4136, %v4136
    %v4233 = vpack.c.bf16 %v4137, %v4137
    %v4234 = vpack.c.bf16 %v4138, %v4138
    %v4235 = vpack.c.bf16 %v4139, %v4139
    %v4236 = vpack.c.bf16 %v4140, %v4140
    %v4237 = vpack.c.bf16 %v4141, %v4141
    %v4238 = vpack.c.bf16 %v4142, %v4142
    %v4239 = vpack.c.bf16 %v4143, %v4143
    %v4240 = vpack.c.bf16 %v4144, %v4144
    %v4241 = vpack.c.bf16 %v4145, %v4145
    %v4242 = vpack.c.bf16 %v4146, %v4146
    %v4243 = vpack.c.bf16 %v4147, %v4147
    %v4244 = vpack.c.bf16 %v4148, %v4148
    %v4245 = vpack.c.bf16 %v4149, %v4149
    %v4246 = vpack.c.bf16 %v4150, %v4150
    %v4247 = vpack.c.bf16 %v4151, %v4151
    %v4248 = vpack.c.bf16 %v4152, %v4152
    %v4249 = vpack.c.bf16 %v4153, %v4153
    %v4250 = vpack.c.bf16 %v4154, %v4154
    %v4251 = vpack.c.bf16 %v4155, %v4155
    %v4252 = vpack.c.bf16 %v4156, %v4156
    %v4253 = vpack.c.bf16 %v4157, %v4157
    %v4254 = vpack.c.bf16 %v4158, %v4158
    %v4255 = vpack.c.bf16 %v4159, %v4159
    %v4256 = vpack.c.bf16 %v4160, %v4160
    %v4257 = vpack.c.bf16 %v4161, %v4161
    %v4258 = vpack.c.bf16 %v4162, %v4162
    %v4259 = vpack.c.bf16 %v4163, %v4163
    %v4260 = vpack.c.bf16 %v4164, %v4164
    %v4261 = vpack.c.bf16 %v4165, %v4165
    %v4270 = vunpack.c.l.b16 %v4166
    %v4271 = vunpack.c.l.b16 %v4178
    %v4272 = vunpack.c.l.b16 %v4190
    %v4273 = vunpack.c.l.b16 %v4202
    %v4274 = vunpack.c.l.b16 %v4214
    %v4275 = vunpack.c.l.b16 %v4226
    %v4276 = vunpack.c.l.b16 %v4238
    %v4277 = vunpack.c.l.b16 %v4250
    %v4278 = vpack.c.b16 %v4270, %v4270
    %v4279 = vpack.c.b16 %v4271, %v4271
    %v4280 = vpack.c.b16 %v4272, %v4272
    %v4281 = vpack.c.b16 %v4273, %v4273
    %v4282 = vpack.c.b16 %v4274, %v4274
    %v4283 = vpack.c.b16 %v4275, %v4275
    %v4284 = vpack.c.b16 %v4276, %v4276
    %v4285 = vpack.c.b16 %v4277, %v4277
    %v4286 = vunpack.c.l.b16 %v4278
    %v4287 = vunpack.c.l.b16 %v4279
    %v4288 = vunpack.c.l.b16 %v4280
    %v4289 = vunpack.c.l.b16 %v4281
    %v4290 = vunpack.c.l.b16 %v4282
    %v4291 = vunpack.c.l.b16 %v4283
    %v4292 = vunpack.c.l.b16 %v4284
    %v4293 = vunpack.c.l.b16 %v4285
    %v4294 = vrot.slane %v4287, 7
    %vm4295 = vcmask 1041409
    %v4296 = vsel %vm4295, %v4294, %v4286
    %v4297 = vrot.slane %v4288, 6
    %vm4298 = vcmask 1042434
    %v4299 = vsel %vm4298, %v4297, %v4296
    %v4300 = vrot.slane %v4289, 5
    %vm4301 = vcmask 1043459
    %v4302 = vsel %vm4301, %v4300, %v4299
    %v4303 = vrot.slane %v4290, 4
    %vm4304 = vcmask 1044484
    %v4305 = vsel %vm4304, %v4303, %v4302
    %v4306 = vrot.slane %v4291, 3
    %vm4307 = vcmask 1045509
    %v4308 = vsel %vm4307, %v4306, %v4305
    %v4309 = vrot.slane %v4292, 2
    %vm4310 = vcmask 1046534
    %v4311 = vsel %vm4310, %v4309, %v4308
    %v4312 = vrot.slane %v4293, 1
    %vm4313 = vcmask 1047559
    %v4314 = vsel %vm4313, %v4312, %v4311
    %v4315 = vpack.c.b16 %v4314, %v4314
    %v4316 = vrot.slane %v4286, 1
    %v4317 = vsel %vm4295, %v4287, %v4316
    %v4318 = vrot.slane %v4288, 7
    %v4319 = vsel %vm4298, %v4318, %v4317
    %v4320 = vrot.slane %v4289, 6
    %v4321 = vsel %vm4301, %v4320, %v4319
    %v4322 = vrot.slane %v4290, 5
    %v4323 = vsel %vm4304, %v4322, %v4321
    %v4324 = vrot.slane %v4291, 4
    %v4325 = vsel %vm4307, %v4324, %v4323
    %v4326 = vrot.slane %v4292, 3
    %v4327 = vsel %vm4310, %v4326, %v4325
    %v4328 = vrot.slane %v4293, 2
    %v4329 = vsel %vm4313, %v4328, %v4327
    %v4330 = vpack.c.b16 %v4329, %v4329
    %4331 = vrot.lane.b32.xlu0 %v4330, 64
    %v4332 = vpop.permute.xlu0 %4331
    %v4333 = vrot.slane %v4286, 2
    %v4334 = vrot.slane %v4287, 1
    %v4335 = vsel %vm4295, %v4334, %v4333
    %v4336 = vsel %vm4298, %v4288, %v4335
    %v4337 = vrot.slane %v4289, 7
    %v4338 = vsel %vm4301, %v4337, %v4336
    %v4339 = vrot.slane %v4290, 6
    %v4340 = vsel %vm4304, %v4339, %v4338
    %v4341 = vrot.slane %v4291, 5
    %v4342 = vsel %vm4307, %v4341, %v4340
    %v4343 = vrot.slane %v4292, 4
    %v4344 = vsel %vm4310, %v4343, %v4342
    %v4345 = vrot.slane %v4293, 3
    %v4346 = vsel %vm4313, %v4345, %v4344
    %v4347 = vpack.c.b16 %v4346, %v4346
    %v4348 = vrot.slane %v4286, 3
    %v4349 = vrot.slane %v4287, 2
    %v4350 = vsel %vm4295, %v4349, %v4348
    %v4351 = vrot.slane %v4288, 1
    %v4352 = vsel %vm4298, %v4351, %v4350
    %v4353 = vsel %vm4301, %v4289, %v4352
    %v4354 = vrot.slane %v4290, 7
    %v4355 = vsel %vm4304, %v4354, %v4353
    %v4356 = vrot.slane %v4291, 6
    %v4357 = vsel %vm4307, %v4356, %v4355
    %v4358 = vrot.slane %v4292, 5
    %v4359 = vsel %vm4310, %v4358, %v4357
    %v4360 = vrot.slane %v4293, 4
    %v4361 = vsel %vm4313, %v4360, %v4359
    %v4362 = vpack.c.b16 %v4361, %v4361
    %4363 = vrot.lane.b32.xlu0 %v4362, 64
    %v4364 = vpop.permute.xlu0 %4363
    %v4365 = vrot.slane %v4286, 4
    %v4366 = vrot.slane %v4287, 3
    %v4367 = vsel %vm4295, %v4366, %v4365
    %v4368 = vrot.slane %v4288, 2
    %v4369 = vsel %vm4298, %v4368, %v4367
    %v4370 = vrot.slane %v4289, 1
    %v4371 = vsel %vm4301, %v4370, %v4369
    %v4372 = vsel %vm4304, %v4290, %v4371
    %v4373 = vrot.slane %v4291, 7
    %v4374 = vsel %vm4307, %v4373, %v4372
    %v4375 = vrot.slane %v4292, 6
    %v4376 = vsel %vm4310, %v4375, %v4374
    %v4377 = vrot.slane %v4293, 5
    %v4378 = vsel %vm4313, %v4377, %v4376
    %v4379 = vpack.c.b16 %v4378, %v4378
    %v4380 = vrot.slane %v4286, 5
    %v4381 = vrot.slane %v4287, 4
    %v4382 = vsel %vm4295, %v4381, %v4380
    %v4383 = vrot.slane %v4288, 3
    %v4384 = vsel %vm4298, %v4383, %v4382
    %v4385 = vrot.slane %v4289, 2
    %v4386 = vsel %vm4301, %v4385, %v4384
    %v4387 = vrot.slane %v4290, 1
    %v4388 = vsel %vm4304, %v4387, %v4386
    %v4389 = vsel %vm4307, %v4291, %v4388
    %v4390 = vrot.slane %v4292, 7
    %v4391 = vsel %vm4310, %v4390, %v4389
    %v4392 = vrot.slane %v4293, 6
    %v4393 = vsel %vm4313, %v4392, %v4391
    %v4394 = vpack.c.b16 %v4393, %v4393
    %4395 = vrot.lane.b32.xlu0 %v4394, 64
    %v4396 = vpop.permute.xlu0 %4395
    %v4397 = vrot.slane %v4286, 6
    %v4398 = vrot.slane %v4287, 5
    %v4399 = vsel %vm4295, %v4398, %v4397
    %v4400 = vrot.slane %v4288, 4
    %v4401 = vsel %vm4298, %v4400, %v4399
    %v4402 = vrot.slane %v4289, 3
    %v4403 = vsel %vm4301, %v4402, %v4401
    %v4404 = vrot.slane %v4290, 2
    %v4405 = vsel %vm4304, %v4404, %v4403
    %v4406 = vrot.slane %v4291, 1
    %v4407 = vsel %vm4307, %v4406, %v4405
    %v4408 = vsel %vm4310, %v4292, %v4407
    %v4409 = vrot.slane %v4293, 7
    %v4410 = vsel %vm4313, %v4409, %v4408
    %v4411 = vpack.c.b16 %v4410, %v4410
    %v4412 = vrot.slane %v4286, 7
    %v4413 = vrot.slane %v4287, 6
    %v4414 = vsel %vm4295, %v4413, %v4412
    %v4415 = vrot.slane %v4288, 5
    %v4416 = vsel %vm4298, %v4415, %v4414
    %v4417 = vrot.slane %v4289, 4
    %v4418 = vsel %vm4301, %v4417, %v4416
    %v4419 = vrot.slane %v4290, 3
    %v4420 = vsel %vm4304, %v4419, %v4418
    %v4421 = vrot.slane %v4291, 2
    %v4422 = vsel %vm4307, %v4421, %v4420
    %v4423 = vrot.slane %v4292, 1
    %v4424 = vsel %vm4310, %v4423, %v4422
    %v4425 = vsel %vm4313, %v4293, %v4424
    %v4426 = vpack.c.b16 %v4425, %v4425
    %4427 = vrot.lane.b32.xlu0 %v4426, 64
    %v4428 = vpop.permute.xlu0 %4427
    %vm4429 = vcmask 523264
    %v4432 = vsel %vm4429, %v4315, %v4332
    %v4435 = vsel %vm4429, %v4347, %v4364
    %v4438 = vsel %vm4429, %v4379, %v4396
    %v4441 = vsel %vm4429, %v4411, %v4428
    %v4446 = vunpack.c.l.b16 %v4432
    %v4447 = vunpack.c.l.b16 %v4435
    %v4448 = vunpack.c.l.b16 %v4438
    %v4449 = vunpack.c.l.b16 %v4441
    %v4450 = vpack.c.b16 %v4447, %v4446
    %v4451 = vpack.c.b16 %v4449, %v4448
    %4454 = vst [vmem:[#allocation2] sm:$0xff] %v4450
    %4455 = vst [vmem:[#allocation2 + $0x8] sm:$0xff] %v4451
    %v4464 = vunpack.c.l.b16 %v4167
    %v4465 = vunpack.c.l.b16 %v4179
    %v4466 = vunpack.c.l.b16 %v4191
    %v4467 = vunpack.c.l.b16 %v4203
    %v4468 = vunpack.c.l.b16 %v4215
    %v4469 = vunpack.c.l.b16 %v4227
    %v4470 = vunpack.c.l.b16 %v4239
    %v4471 = vunpack.c.l.b16 %v4251
    %v4472 = vpack.c.b16 %v4464, %v4464
    %v4473 = vpack.c.b16 %v4465, %v4465
    %v4474 = vpack.c.b16 %v4466, %v4466
    %v4475 = vpack.c.b16 %v4467, %v4467
    %v4476 = vpack.c.b16 %v4468, %v4468
    %v4477 = vpack.c.b16 %v4469, %v4469
    %v4478 = vpack.c.b16 %v4470, %v4470
    %v4479 = vpack.c.b16 %v4471, %v4471
    %v4480 = vunpack.c.l.b16 %v4472
    %v4481 = vunpack.c.l.b16 %v4473
    %v4482 = vunpack.c.l.b16 %v4474
    %v4483 = vunpack.c.l.b16 %v4475
    %v4484 = vunpack.c.l.b16 %v4476
    %v4485 = vunpack.c.l.b16 %v4477
    %v4486 = vunpack.c.l.b16 %v4478
    %v4487 = vunpack.c.l.b16 %v4479
    %v4488 = vrot.slane %v4481, 7
    %v4489 = vsel %vm4295, %v4488, %v4480
    %v4490 = vrot.slane %v4482, 6
    %v4491 = vsel %vm4298, %v4490, %v4489
    %v4492 = vrot.slane %v4483, 5
    %v4493 = vsel %vm4301, %v4492, %v4491
    %v4494 = vrot.slane %v4484, 4
    %v4495 = vsel %vm4304, %v4494, %v4493
    %v4496 = vrot.slane %v4485, 3
    %v4497 = vsel %vm4307, %v4496, %v4495
    %v4498 = vrot.slane %v4486, 2
    %v4499 = vsel %vm4310, %v4498, %v4497
    %v4500 = vrot.slane %v4487, 1
    %v4501 = vsel %vm4313, %v4500, %v4499
    %v4502 = vpack.c.b16 %v4501, %v4501
    %v4503 = vrot.slane %v4480, 1
    %v4504 = vsel %vm4295, %v4481, %v4503
    %v4505 = vrot.slane %v4482, 7
    %v4506 = vsel %vm4298, %v4505, %v4504
    %v4507 = vrot.slane %v4483, 6
    %v4508 = vsel %vm4301, %v4507, %v4506
    %v4509 = vrot.slane %v4484, 5
    %v4510 = vsel %vm4304, %v4509, %v4508
    %v4511 = vrot.slane %v4485, 4
    %v4512 = vsel %vm4307, %v4511, %v4510
    %v4513 = vrot.slane %v4486, 3
    %v4514 = vsel %vm4310, %v4513, %v4512
    %v4515 = vrot.slane %v4487, 2
    %v4516 = vsel %vm4313, %v4515, %v4514
    %v4517 = vpack.c.b16 %v4516, %v4516
    %4518 = vrot.lane.b32.xlu0 %v4517, 64
    %v4519 = vpop.permute.xlu0 %4518
    %v4520 = vrot.slane %v4480, 2
    %v4521 = vrot.slane %v4481, 1
    %v4522 = vsel %vm4295, %v4521, %v4520
    %v4523 = vsel %vm4298, %v4482, %v4522
    %v4524 = vrot.slane %v4483, 7
    %v4525 = vsel %vm4301, %v4524, %v4523
    %v4526 = vrot.slane %v4484, 6
    %v4527 = vsel %vm4304, %v4526, %v4525
    %v4528 = vrot.slane %v4485, 5
    %v4529 = vsel %vm4307, %v4528, %v4527
    %v4530 = vrot.slane %v4486, 4
    %v4531 = vsel %vm4310, %v4530, %v4529
    %v4532 = vrot.slane %v4487, 3
    %v4533 = vsel %vm4313, %v4532, %v4531
    %v4534 = vpack.c.b16 %v4533, %v4533
    %v4535 = vrot.slane %v4480, 3
    %v4536 = vrot.slane %v4481, 2
    %v4537 = vsel %vm4295, %v4536, %v4535
    %v4538 = vrot.slane %v4482, 1
    %v4539 = vsel %vm4298, %v4538, %v4537
    %v4540 = vsel %vm4301, %v4483, %v4539
    %v4541 = vrot.slane %v4484, 7
    %v4542 = vsel %vm4304, %v4541, %v4540
    %v4543 = vrot.slane %v4485, 6
    %v4544 = vsel %vm4307, %v4543, %v4542
    %v4545 = vrot.slane %v4486, 5
    %v4546 = vsel %vm4310, %v4545, %v4544
    %v4547 = vrot.slane %v4487, 4
    %v4548 = vsel %vm4313, %v4547, %v4546
    %v4549 = vpack.c.b16 %v4548, %v4548
    %4550 = vrot.lane.b32.xlu0 %v4549, 64
    %v4551 = vpop.permute.xlu0 %4550
    %v4552 = vrot.slane %v4480, 4
    %v4553 = vrot.slane %v4481, 3
    %v4554 = vsel %vm4295, %v4553, %v4552
    %v4555 = vrot.slane %v4482, 2
    %v4556 = vsel %vm4298, %v4555, %v4554
    %v4557 = vrot.slane %v4483, 1
    %v4558 = vsel %vm4301, %v4557, %v4556
    %v4559 = vsel %vm4304, %v4484, %v4558
    %v4560 = vrot.slane %v4485, 7
    %v4561 = vsel %vm4307, %v4560, %v4559
    %v4562 = vrot.slane %v4486, 6
    %v4563 = vsel %vm4310, %v4562, %v4561
    %v4564 = vrot.slane %v4487, 5
    %v4565 = vsel %vm4313, %v4564, %v4563
    %v4566 = vpack.c.b16 %v4565, %v4565
    %v4567 = vrot.slane %v4480, 5
    %v4568 = vrot.slane %v4481, 4
    %v4569 = vsel %vm4295, %v4568, %v4567
    %v4570 = vrot.slane %v4482, 3
    %v4571 = vsel %vm4298, %v4570, %v4569
    %v4572 = vrot.slane %v4483, 2
    %v4573 = vsel %vm4301, %v4572, %v4571
    %v4574 = vrot.slane %v4484, 1
    %v4575 = vsel %vm4304, %v4574, %v4573
    %v4576 = vsel %vm4307, %v4485, %v4575
    %v4577 = vrot.slane %v4486, 7
    %v4578 = vsel %vm4310, %v4577, %v4576
    %v4579 = vrot.slane %v4487, 6
    %v4580 = vsel %vm4313, %v4579, %v4578
    %v4581 = vpack.c.b16 %v4580, %v4580
    %4582 = vrot.lane.b32.xlu0 %v4581, 64
    %v4583 = vpop.permute.xlu0 %4582
    %v4584 = vrot.slane %v4480, 6
    %v4585 = vrot.slane %v4481, 5
    %v4586 = vsel %vm4295, %v4585, %v4584
    %v4587 = vrot.slane %v4482, 4
    %v4588 = vsel %vm4298, %v4587, %v4586
    %v4589 = vrot.slane %v4483, 3
    %v4590 = vsel %vm4301, %v4589, %v4588
    %v4591 = vrot.slane %v4484, 2
    %v4592 = vsel %vm4304, %v4591, %v4590
    %v4593 = vrot.slane %v4485, 1
    %v4594 = vsel %vm4307, %v4593, %v4592
    %v4595 = vsel %vm4310, %v4486, %v4594
    %v4596 = vrot.slane %v4487, 7
    %v4597 = vsel %vm4313, %v4596, %v4595
    %v4598 = vpack.c.b16 %v4597, %v4597
    %v4599 = vrot.slane %v4480, 7
    %v4600 = vrot.slane %v4481, 6
    %v4601 = vsel %vm4295, %v4600, %v4599
    %v4602 = vrot.slane %v4482, 5
    %v4603 = vsel %vm4298, %v4602, %v4601
    %v4604 = vrot.slane %v4483, 4
    %v4605 = vsel %vm4301, %v4604, %v4603
    %v4606 = vrot.slane %v4484, 3
    %v4607 = vsel %vm4304, %v4606, %v4605
    %v4608 = vrot.slane %v4485, 2
    %v4609 = vsel %vm4307, %v4608, %v4607
    %v4610 = vrot.slane %v4486, 1
    %v4611 = vsel %vm4310, %v4610, %v4609
    %v4612 = vsel %vm4313, %v4487, %v4611
    %v4613 = vpack.c.b16 %v4612, %v4612
    %4614 = vrot.lane.b32.xlu0 %v4613, 64
    %v4615 = vpop.permute.xlu0 %4614
    %v4618 = vsel %vm4429, %v4502, %v4519
    %v4621 = vsel %vm4429, %v4534, %v4551
    %v4624 = vsel %vm4429, %v4566, %v4583
    %v4627 = vsel %vm4429, %v4598, %v4615
    %v4632 = vunpack.c.l.b16 %v4618
    %v4633 = vunpack.c.l.b16 %v4621
    %v4634 = vunpack.c.l.b16 %v4624
    %v4635 = vunpack.c.l.b16 %v4627
    %v4636 = vpack.c.b16 %v4633, %v4632
    %v4637 = vpack.c.b16 %v4635, %v4634
    %4640 = vst [vmem:[#allocation2 + $0x10] sm:$0xff] %v4636
    %4641 = vst [vmem:[#allocation2 + $0x18] sm:$0xff] %v4637
    %v4650 = vunpack.c.l.b16 %v4168
    %v4651 = vunpack.c.l.b16 %v4180
    %v4652 = vunpack.c.l.b16 %v4192
    %v4653 = vunpack.c.l.b16 %v4204
    %v4654 = vunpack.c.l.b16 %v4216
    %v4655 = vunpack.c.l.b16 %v4228
    %v4656 = vunpack.c.l.b16 %v4240
    %v4657 = vunpack.c.l.b16 %v4252
    %v4658 = vpack.c.b16 %v4650, %v4650
    %v4659 = vpack.c.b16 %v4651, %v4651
    %v4660 = vpack.c.b16 %v4652, %v4652
    %v4661 = vpack.c.b16 %v4653, %v4653
    %v4662 = vpack.c.b16 %v4654, %v4654
    %v4663 = vpack.c.b16 %v4655, %v4655
    %v4664 = vpack.c.b16 %v4656, %v4656
    %v4665 = vpack.c.b16 %v4657, %v4657
    %v4666 = vunpack.c.l.b16 %v4658
    %v4667 = vunpack.c.l.b16 %v4659
    %v4668 = vunpack.c.l.b16 %v4660
    %v4669 = vunpack.c.l.b16 %v4661
    %v4670 = vunpack.c.l.b16 %v4662
    %v4671 = vunpack.c.l.b16 %v4663
    %v4672 = vunpack.c.l.b16 %v4664
    %v4673 = vunpack.c.l.b16 %v4665
    %v4674 = vrot.slane %v4667, 7
    %v4675 = vsel %vm4295, %v4674, %v4666
    %v4676 = vrot.slane %v4668, 6
    %v4677 = vsel %vm4298, %v4676, %v4675
    %v4678 = vrot.slane %v4669, 5
    %v4679 = vsel %vm4301, %v4678, %v4677
    %v4680 = vrot.slane %v4670, 4
    %v4681 = vsel %vm4304, %v4680, %v4679
    %v4682 = vrot.slane %v4671, 3
    %v4683 = vsel %vm4307, %v4682, %v4681
    %v4684 = vrot.slane %v4672, 2
    %v4685 = vsel %vm4310, %v4684, %v4683
    %v4686 = vrot.slane %v4673, 1
    %v4687 = vsel %vm4313, %v4686, %v4685
    %v4688 = vpack.c.b16 %v4687, %v4687
    %v4689 = vrot.slane %v4666, 1
    %v4690 = vsel %vm4295, %v4667, %v4689
    %v4691 = vrot.slane %v4668, 7
    %v4692 = vsel %vm4298, %v4691, %v4690
    %v4693 = vrot.slane %v4669, 6
    %v4694 = vsel %vm4301, %v4693, %v4692
    %v4695 = vrot.slane %v4670, 5
    %v4696 = vsel %vm4304, %v4695, %v4694
    %v4697 = vrot.slane %v4671, 4
    %v4698 = vsel %vm4307, %v4697, %v4696
    %v4699 = vrot.slane %v4672, 3
    %v4700 = vsel %vm4310, %v4699, %v4698
    %v4701 = vrot.slane %v4673, 2
    %v4702 = vsel %vm4313, %v4701, %v4700
    %v4703 = vpack.c.b16 %v4702, %v4702
    %4704 = vrot.lane.b32.xlu0 %v4703, 64
    %v4705 = vpop.permute.xlu0 %4704
    %v4706 = vrot.slane %v4666, 2
    %v4707 = vrot.slane %v4667, 1
    %v4708 = vsel %vm4295, %v4707, %v4706
    %v4709 = vsel %vm4298, %v4668, %v4708
    %v4710 = vrot.slane %v4669, 7
    %v4711 = vsel %vm4301, %v4710, %v4709
    %v4712 = vrot.slane %v4670, 6
    %v4713 = vsel %vm4304, %v4712, %v4711
    %v4714 = vrot.slane %v4671, 5
    %v4715 = vsel %vm4307, %v4714, %v4713
    %v4716 = vrot.slane %v4672, 4
    %v4717 = vsel %vm4310, %v4716, %v4715
    %v4718 = vrot.slane %v4673, 3
    %v4719 = vsel %vm4313, %v4718, %v4717
    %v4720 = vpack.c.b16 %v4719, %v4719
    %v4721 = vrot.slane %v4666, 3
    %v4722 = vrot.slane %v4667, 2
    %v4723 = vsel %vm4295, %v4722, %v4721
    %v4724 = vrot.slane %v4668, 1
    %v4725 = vsel %vm4298, %v4724, %v4723
    %v4726 = vsel %vm4301, %v4669, %v4725
    %v4727 = vrot.slane %v4670, 7
    %v4728 = vsel %vm4304, %v4727, %v4726
    %v4729 = vrot.slane %v4671, 6
    %v4730 = vsel %vm4307, %v4729, %v4728
    %v4731 = vrot.slane %v4672, 5
    %v4732 = vsel %vm4310, %v4731, %v4730
    %v4733 = vrot.slane %v4673, 4
    %v4734 = vsel %vm4313, %v4733, %v4732
    %v4735 = vpack.c.b16 %v4734, %v4734
    %4736 = vrot.lane.b32.xlu0 %v4735, 64
    %v4737 = vpop.permute.xlu0 %4736
    %v4738 = vrot.slane %v4666, 4
    %v4739 = vrot.slane %v4667, 3
    %v4740 = vsel %vm4295, %v4739, %v4738
    %v4741 = vrot.slane %v4668, 2
    %v4742 = vsel %vm4298, %v4741, %v4740
    %v4743 = vrot.slane %v4669, 1
    %v4744 = vsel %vm4301, %v4743, %v4742
    %v4745 = vsel %vm4304, %v4670, %v4744
    %v4746 = vrot.slane %v4671, 7
    %v4747 = vsel %vm4307, %v4746, %v4745
    %v4748 = vrot.slane %v4672, 6
    %v4749 = vsel %vm4310, %v4748, %v4747
    %v4750 = vrot.slane %v4673, 5
    %v4751 = vsel %vm4313, %v4750, %v4749
    %v4752 = vpack.c.b16 %v4751, %v4751
    %v4753 = vrot.slane %v4666, 5
    %v4754 = vrot.slane %v4667, 4
    %v4755 = vsel %vm4295, %v4754, %v4753
    %v4756 = vrot.slane %v4668, 3
    %v4757 = vsel %vm4298, %v4756, %v4755
    %v4758 = vrot.slane %v4669, 2
    %v4759 = vsel %vm4301, %v4758, %v4757
    %v4760 = vrot.slane %v4670, 1
    %v4761 = vsel %vm4304, %v4760, %v4759
    %v4762 = vsel %vm4307, %v4671, %v4761
    %v4763 = vrot.slane %v4672, 7
    %v4764 = vsel %vm4310, %v4763, %v4762
    %v4765 = vrot.slane %v4673, 6
    %v4766 = vsel %vm4313, %v4765, %v4764
    %v4767 = vpack.c.b16 %v4766, %v4766
    %4768 = vrot.lane.b32.xlu0 %v4767, 64
    %v4769 = vpop.permute.xlu0 %4768
    %v4770 = vrot.slane %v4666, 6
    %v4771 = vrot.slane %v4667, 5
    %v4772 = vsel %vm4295, %v4771, %v4770
    %v4773 = vrot.slane %v4668, 4
    %v4774 = vsel %vm4298, %v4773, %v4772
    %v4775 = vrot.slane %v4669, 3
    %v4776 = vsel %vm4301, %v4775, %v4774
    %v4777 = vrot.slane %v4670, 2
    %v4778 = vsel %vm4304, %v4777, %v4776
    %v4779 = vrot.slane %v4671, 1
    %v4780 = vsel %vm4307, %v4779, %v4778
    %v4781 = vsel %vm4310, %v4672, %v4780
    %v4782 = vrot.slane %v4673, 7
    %v4783 = vsel %vm4313, %v4782, %v4781
    %v4784 = vpack.c.b16 %v4783, %v4783
    %v4785 = vrot.slane %v4666, 7
    %v4786 = vrot.slane %v4667, 6
    %v4787 = vsel %vm4295, %v4786, %v4785
    %v4788 = vrot.slane %v4668, 5
    %v4789 = vsel %vm4298, %v4788, %v4787
    %v4790 = vrot.slane %v4669, 4
    %v4791 = vsel %vm4301, %v4790, %v4789
    %v4792 = vrot.slane %v4670, 3
    %v4793 = vsel %vm4304, %v4792, %v4791
    %v4794 = vrot.slane %v4671, 2
    %v4795 = vsel %vm4307, %v4794, %v4793
    %v4796 = vrot.slane %v4672, 1
    %v4797 = vsel %vm4310, %v4796, %v4795
    %v4798 = vsel %vm4313, %v4673, %v4797
    %v4799 = vpack.c.b16 %v4798, %v4798
    %4800 = vrot.lane.b32.xlu0 %v4799, 64
    %v4801 = vpop.permute.xlu0 %4800
    %v4804 = vsel %vm4429, %v4688, %v4705
    %v4807 = vsel %vm4429, %v4720, %v4737
    %v4810 = vsel %vm4429, %v4752, %v4769
    %v4813 = vsel %vm4429, %v4784, %v4801
    %v4818 = vunpack.c.l.b16 %v4804
    %v4819 = vunpack.c.l.b16 %v4807
    %v4820 = vunpack.c.l.b16 %v4810
    %v4821 = vunpack.c.l.b16 %v4813
    %v4822 = vpack.c.b16 %v4819, %v4818
    %v4823 = vpack.c.b16 %v4821, %v4820
    %4826 = vst [vmem:[#allocation2 + $0x20] sm:$0xff] %v4822
    %4827 = vst [vmem:[#allocation2 + $0x28] sm:$0xff] %v4823
    %v4836 = vunpack.c.l.b16 %v4169
    %v4837 = vunpack.c.l.b16 %v4181
    %v4838 = vunpack.c.l.b16 %v4193
    %v4839 = vunpack.c.l.b16 %v4205
    %v4840 = vunpack.c.l.b16 %v4217
    %v4841 = vunpack.c.l.b16 %v4229
    %v4842 = vunpack.c.l.b16 %v4241
    %v4843 = vunpack.c.l.b16 %v4253
    %v4844 = vpack.c.b16 %v4836, %v4836
    %v4845 = vpack.c.b16 %v4837, %v4837
    %v4846 = vpack.c.b16 %v4838, %v4838
    %v4847 = vpack.c.b16 %v4839, %v4839
    %v4848 = vpack.c.b16 %v4840, %v4840
    %v4849 = vpack.c.b16 %v4841, %v4841
    %v4850 = vpack.c.b16 %v4842, %v4842
    %v4851 = vpack.c.b16 %v4843, %v4843
    %v4852 = vunpack.c.l.b16 %v4844
    %v4853 = vunpack.c.l.b16 %v4845
    %v4854 = vunpack.c.l.b16 %v4846
    %v4855 = vunpack.c.l.b16 %v4847
    %v4856 = vunpack.c.l.b16 %v4848
    %v4857 = vunpack.c.l.b16 %v4849
    %v4858 = vunpack.c.l.b16 %v4850
    %v4859 = vunpack.c.l.b16 %v4851
    %v4860 = vrot.slane %v4853, 7
    %v4861 = vsel %vm4295, %v4860, %v4852
    %v4862 = vrot.slane %v4854, 6
    %v4863 = vsel %vm4298, %v4862, %v4861
    %v4864 = vrot.slane %v4855, 5
    %v4865 = vsel %vm4301, %v4864, %v4863
    %v4866 = vrot.slane %v4856, 4
    %v4867 = vsel %vm4304, %v4866, %v4865
    %v4868 = vrot.slane %v4857, 3
    %v4869 = vsel %vm4307, %v4868, %v4867
    %v4870 = vrot.slane %v4858, 2
    %v4871 = vsel %vm4310, %v4870, %v4869
    %v4872 = vrot.slane %v4859, 1
    %v4873 = vsel %vm4313, %v4872, %v4871
    %v4874 = vpack.c.b16 %v4873, %v4873
    %v4875 = vrot.slane %v4852, 1
    %v4876 = vsel %vm4295, %v4853, %v4875
    %v4877 = vrot.slane %v4854, 7
    %v4878 = vsel %vm4298, %v4877, %v4876
    %v4879 = vrot.slane %v4855, 6
    %v4880 = vsel %vm4301, %v4879, %v4878
    %v4881 = vrot.slane %v4856, 5
    %v4882 = vsel %vm4304, %v4881, %v4880
    %v4883 = vrot.slane %v4857, 4
    %v4884 = vsel %vm4307, %v4883, %v4882
    %v4885 = vrot.slane %v4858, 3
    %v4886 = vsel %vm4310, %v4885, %v4884
    %v4887 = vrot.slane %v4859, 2
    %v4888 = vsel %vm4313, %v4887, %v4886
    %v4889 = vpack.c.b16 %v4888, %v4888
    %4890 = vrot.lane.b32.xlu0 %v4889, 64
    %v4891 = vpop.permute.xlu0 %4890
    %v4892 = vrot.slane %v4852, 2
    %v4893 = vrot.slane %v4853, 1
    %v4894 = vsel %vm4295, %v4893, %v4892
    %v4895 = vsel %vm4298, %v4854, %v4894
    %v4896 = vrot.slane %v4855, 7
    %v4897 = vsel %vm4301, %v4896, %v4895
    %v4898 = vrot.slane %v4856, 6
    %v4899 = vsel %vm4304, %v4898, %v4897
    %v4900 = vrot.slane %v4857, 5
    %v4901 = vsel %vm4307, %v4900, %v4899
    %v4902 = vrot.slane %v4858, 4
    %v4903 = vsel %vm4310, %v4902, %v4901
    %v4904 = vrot.slane %v4859, 3
    %v4905 = vsel %vm4313, %v4904, %v4903
    %v4906 = vpack.c.b16 %v4905, %v4905
    %v4907 = vrot.slane %v4852, 3
    %v4908 = vrot.slane %v4853, 2
    %v4909 = vsel %vm4295, %v4908, %v4907
    %v4910 = vrot.slane %v4854, 1
    %v4911 = vsel %vm4298, %v4910, %v4909
    %v4912 = vsel %vm4301, %v4855, %v4911
    %v4913 = vrot.slane %v4856, 7
    %v4914 = vsel %vm4304, %v4913, %v4912
    %v4915 = vrot.slane %v4857, 6
    %v4916 = vsel %vm4307, %v4915, %v4914
    %v4917 = vrot.slane %v4858, 5
    %v4918 = vsel %vm4310, %v4917, %v4916
    %v4919 = vrot.slane %v4859, 4
    %v4920 = vsel %vm4313, %v4919, %v4918
    %v4921 = vpack.c.b16 %v4920, %v4920
    %4922 = vrot.lane.b32.xlu0 %v4921, 64
    %v4923 = vpop.permute.xlu0 %4922
    %v4924 = vrot.slane %v4852, 4
    %v4925 = vrot.slane %v4853, 3
    %v4926 = vsel %vm4295, %v4925, %v4924
    %v4927 = vrot.slane %v4854, 2
    %v4928 = vsel %vm4298, %v4927, %v4926
    %v4929 = vrot.slane %v4855, 1
    %v4930 = vsel %vm4301, %v4929, %v4928
    %v4931 = vsel %vm4304, %v4856, %v4930
    %v4932 = vrot.slane %v4857, 7
    %v4933 = vsel %vm4307, %v4932, %v4931
    %v4934 = vrot.slane %v4858, 6
    %v4935 = vsel %vm4310, %v4934, %v4933
    %v4936 = vrot.slane %v4859, 5
    %v4937 = vsel %vm4313, %v4936, %v4935
    %v4938 = vpack.c.b16 %v4937, %v4937
    %v4939 = vrot.slane %v4852, 5
    %v4940 = vrot.slane %v4853, 4
    %v4941 = vsel %vm4295, %v4940, %v4939
    %v4942 = vrot.slane %v4854, 3
    %v4943 = vsel %vm4298, %v4942, %v4941
    %v4944 = vrot.slane %v4855, 2
    %v4945 = vsel %vm4301, %v4944, %v4943
    %v4946 = vrot.slane %v4856, 1
    %v4947 = vsel %vm4304, %v4946, %v4945
    %v4948 = vsel %vm4307, %v4857, %v4947
    %v4949 = vrot.slane %v4858, 7
    %v4950 = vsel %vm4310, %v4949, %v4948
    %v4951 = vrot.slane %v4859, 6
    %v4952 = vsel %vm4313, %v4951, %v4950
    %v4953 = vpack.c.b16 %v4952, %v4952
    %4954 = vrot.lane.b32.xlu0 %v4953, 64
    %v4955 = vpop.permute.xlu0 %4954
    %v4956 = vrot.slane %v4852, 6
    %v4957 = vrot.slane %v4853, 5
    %v4958 = vsel %vm4295, %v4957, %v4956
    %v4959 = vrot.slane %v4854, 4
    %v4960 = vsel %vm4298, %v4959, %v4958
    %v4961 = vrot.slane %v4855, 3
    %v4962 = vsel %vm4301, %v4961, %v4960
    %v4963 = vrot.slane %v4856, 2
    %v4964 = vsel %vm4304, %v4963, %v4962
    %v4965 = vrot.slane %v4857, 1
    %v4966 = vsel %vm4307, %v4965, %v4964
    %v4967 = vsel %vm4310, %v4858, %v4966
    %v4968 = vrot.slane %v4859, 7
    %v4969 = vsel %vm4313, %v4968, %v4967
    %v4970 = vpack.c.b16 %v4969, %v4969
    %v4971 = vrot.slane %v4852, 7
    %v4972 = vrot.slane %v4853, 6
    %v4973 = vsel %vm4295, %v4972, %v4971
    %v4974 = vrot.slane %v4854, 5
    %v4975 = vsel %vm4298, %v4974, %v4973
    %v4976 = vrot.slane %v4855, 4
    %v4977 = vsel %vm4301, %v4976, %v4975
    %v4978 = vrot.slane %v4856, 3
    %v4979 = vsel %vm4304, %v4978, %v4977
    %v4980 = vrot.slane %v4857, 2
    %v4981 = vsel %vm4307, %v4980, %v4979
    %v4982 = vrot.slane %v4858, 1
    %v4983 = vsel %vm4310, %v4982, %v4981
    %v4984 = vsel %vm4313, %v4859, %v4983
    %v4985 = vpack.c.b16 %v4984, %v4984
    %4986 = vrot.lane.b32.xlu0 %v4985, 64
    %v4987 = vpop.permute.xlu0 %4986
    %v4990 = vsel %vm4429, %v4874, %v4891
    %v4993 = vsel %vm4429, %v4906, %v4923
    %v4996 = vsel %vm4429, %v4938, %v4955
    %v4999 = vsel %vm4429, %v4970, %v4987
    %v5004 = vunpack.c.l.b16 %v4990
    %v5005 = vunpack.c.l.b16 %v4993
    %v5006 = vunpack.c.l.b16 %v4996
    %v5007 = vunpack.c.l.b16 %v4999
    %v5008 = vpack.c.b16 %v5005, %v5004
    %v5009 = vpack.c.b16 %v5007, %v5006
    %5012 = vst [vmem:[#allocation2 + $0x30] sm:$0xff] %v5008
    %5013 = vst [vmem:[#allocation2 + $0x38] sm:$0xff] %v5009
    %v5022 = vunpack.c.l.b16 %v4170
    %v5023 = vunpack.c.l.b16 %v4182
    %v5024 = vunpack.c.l.b16 %v4194
    %v5025 = vunpack.c.l.b16 %v4206
    %v5026 = vunpack.c.l.b16 %v4218
    %v5027 = vunpack.c.l.b16 %v4230
    %v5028 = vunpack.c.l.b16 %v4242
    %v5029 = vunpack.c.l.b16 %v4254
    %v5030 = vpack.c.b16 %v5022, %v5022
    %v5031 = vpack.c.b16 %v5023, %v5023
    %v5032 = vpack.c.b16 %v5024, %v5024
    %v5033 = vpack.c.b16 %v5025, %v5025
    %v5034 = vpack.c.b16 %v5026, %v5026
    %v5035 = vpack.c.b16 %v5027, %v5027
    %v5036 = vpack.c.b16 %v5028, %v5028
    %v5037 = vpack.c.b16 %v5029, %v5029
    %v5038 = vunpack.c.l.b16 %v5030
    %v5039 = vunpack.c.l.b16 %v5031
    %v5040 = vunpack.c.l.b16 %v5032
    %v5041 = vunpack.c.l.b16 %v5033
    %v5042 = vunpack.c.l.b16 %v5034
    %v5043 = vunpack.c.l.b16 %v5035
    %v5044 = vunpack.c.l.b16 %v5036
    %v5045 = vunpack.c.l.b16 %v5037
    %v5046 = vrot.slane %v5039, 7
    %v5047 = vsel %vm4295, %v5046, %v5038
    %v5048 = vrot.slane %v5040, 6
    %v5049 = vsel %vm4298, %v5048, %v5047
    %v5050 = vrot.slane %v5041, 5
    %v5051 = vsel %vm4301, %v5050, %v5049
    %v5052 = vrot.slane %v5042, 4
    %v5053 = vsel %vm4304, %v5052, %v5051
    %v5054 = vrot.slane %v5043, 3
    %v5055 = vsel %vm4307, %v5054, %v5053
    %v5056 = vrot.slane %v5044, 2
    %v5057 = vsel %vm4310, %v5056, %v5055
    %v5058 = vrot.slane %v5045, 1
    %v5059 = vsel %vm4313, %v5058, %v5057
    %v5060 = vpack.c.b16 %v5059, %v5059
    %v5061 = vrot.slane %v5038, 1
    %v5062 = vsel %vm4295, %v5039, %v5061
    %v5063 = vrot.slane %v5040, 7
    %v5064 = vsel %vm4298, %v5063, %v5062
    %v5065 = vrot.slane %v5041, 6
    %v5066 = vsel %vm4301, %v5065, %v5064
    %v5067 = vrot.slane %v5042, 5
    %v5068 = vsel %vm4304, %v5067, %v5066
    %v5069 = vrot.slane %v5043, 4
    %v5070 = vsel %vm4307, %v5069, %v5068
    %v5071 = vrot.slane %v5044, 3
    %v5072 = vsel %vm4310, %v5071, %v5070
    %v5073 = vrot.slane %v5045, 2
    %v5074 = vsel %vm4313, %v5073, %v5072
    %v5075 = vpack.c.b16 %v5074, %v5074
    %5076 = vrot.lane.b32.xlu0 %v5075, 64
    %v5077 = vpop.permute.xlu0 %5076
    %v5078 = vrot.slane %v5038, 2
    %v5079 = vrot.slane %v5039, 1
    %v5080 = vsel %vm4295, %v5079, %v5078
    %v5081 = vsel %vm4298, %v5040, %v5080
    %v5082 = vrot.slane %v5041, 7
    %v5083 = vsel %vm4301, %v5082, %v5081
    %v5084 = vrot.slane %v5042, 6
    %v5085 = vsel %vm4304, %v5084, %v5083
    %v5086 = vrot.slane %v5043, 5
    %v5087 = vsel %vm4307, %v5086, %v5085
    %v5088 = vrot.slane %v5044, 4
    %v5089 = vsel %vm4310, %v5088, %v5087
    %v5090 = vrot.slane %v5045, 3
    %v5091 = vsel %vm4313, %v5090, %v5089
    %v5092 = vpack.c.b16 %v5091, %v5091
    %v5093 = vrot.slane %v5038, 3
    %v5094 = vrot.slane %v5039, 2
    %v5095 = vsel %vm4295, %v5094, %v5093
    %v5096 = vrot.slane %v5040, 1
    %v5097 = vsel %vm4298, %v5096, %v5095
    %v5098 = vsel %vm4301, %v5041, %v5097
    %v5099 = vrot.slane %v5042, 7
    %v5100 = vsel %vm4304, %v5099, %v5098
    %v5101 = vrot.slane %v5043, 6
    %v5102 = vsel %vm4307, %v5101, %v5100
    %v5103 = vrot.slane %v5044, 5
    %v5104 = vsel %vm4310, %v5103, %v5102
    %v5105 = vrot.slane %v5045, 4
    %v5106 = vsel %vm4313, %v5105, %v5104
    %v5107 = vpack.c.b16 %v5106, %v5106
    %5108 = vrot.lane.b32.xlu0 %v5107, 64
    %v5109 = vpop.permute.xlu0 %5108
    %v5110 = vrot.slane %v5038, 4
    %v5111 = vrot.slane %v5039, 3
    %v5112 = vsel %vm4295, %v5111, %v5110
    %v5113 = vrot.slane %v5040, 2
    %v5114 = vsel %vm4298, %v5113, %v5112
    %v5115 = vrot.slane %v5041, 1
    %v5116 = vsel %vm4301, %v5115, %v5114
    %v5117 = vsel %vm4304, %v5042, %v5116
    %v5118 = vrot.slane %v5043, 7
    %v5119 = vsel %vm4307, %v5118, %v5117
    %v5120 = vrot.slane %v5044, 6
    %v5121 = vsel %vm4310, %v5120, %v5119
    %v5122 = vrot.slane %v5045, 5
    %v5123 = vsel %vm4313, %v5122, %v5121
    %v5124 = vpack.c.b16 %v5123, %v5123
    %v5125 = vrot.slane %v5038, 5
    %v5126 = vrot.slane %v5039, 4
    %v5127 = vsel %vm4295, %v5126, %v5125
    %v5128 = vrot.slane %v5040, 3
    %v5129 = vsel %vm4298, %v5128, %v5127
    %v5130 = vrot.slane %v5041, 2
    %v5131 = vsel %vm4301, %v5130, %v5129
    %v5132 = vrot.slane %v5042, 1
    %v5133 = vsel %vm4304, %v5132, %v5131
    %v5134 = vsel %vm4307, %v5043, %v5133
    %v5135 = vrot.slane %v5044, 7
    %v5136 = vsel %vm4310, %v5135, %v5134
    %v5137 = vrot.slane %v5045, 6
    %v5138 = vsel %vm4313, %v5137, %v5136
    %v5139 = vpack.c.b16 %v5138, %v5138
    %5140 = vrot.lane.b32.xlu0 %v5139, 64
    %v5141 = vpop.permute.xlu0 %5140
    %v5142 = vrot.slane %v5038, 6
    %v5143 = vrot.slane %v5039, 5
    %v5144 = vsel %vm4295, %v5143, %v5142
    %v5145 = vrot.slane %v5040, 4
    %v5146 = vsel %vm4298, %v5145, %v5144
    %v5147 = vrot.slane %v5041, 3
    %v5148 = vsel %vm4301, %v5147, %v5146
    %v5149 = vrot.slane %v5042, 2
    %v5150 = vsel %vm4304, %v5149, %v5148
    %v5151 = vrot.slane %v5043, 1
    %v5152 = vsel %vm4307, %v5151, %v5150
    %v5153 = vsel %vm4310, %v5044, %v5152
    %v5154 = vrot.slane %v5045, 7
    %v5155 = vsel %vm4313, %v5154, %v5153
    %v5156 = vpack.c.b16 %v5155, %v5155
    %v5157 = vrot.slane %v5038, 7
    %v5158 = vrot.slane %v5039, 6
    %v5159 = vsel %vm4295, %v5158, %v5157
    %v5160 = vrot.slane %v5040, 5
    %v5161 = vsel %vm4298, %v5160, %v5159
    %v5162 = vrot.slane %v5041, 4
    %v5163 = vsel %vm4301, %v5162, %v5161
    %v5164 = vrot.slane %v5042, 3
    %v5165 = vsel %vm4304, %v5164, %v5163
    %v5166 = vrot.slane %v5043, 2
    %v5167 = vsel %vm4307, %v5166, %v5165
    %v5168 = vrot.slane %v5044, 1
    %v5169 = vsel %vm4310, %v5168, %v5167
    %v5170 = vsel %vm4313, %v5045, %v5169
    %v5171 = vpack.c.b16 %v5170, %v5170
    %5172 = vrot.lane.b32.xlu0 %v5171, 64
    %v5173 = vpop.permute.xlu0 %5172
    %v5176 = vsel %vm4429, %v5060, %v5077
    %v5179 = vsel %vm4429, %v5092, %v5109
    %v5182 = vsel %vm4429, %v5124, %v5141
    %v5185 = vsel %vm4429, %v5156, %v5173
    %v5190 = vunpack.c.l.b16 %v5176
    %v5191 = vunpack.c.l.b16 %v5179
    %v5192 = vunpack.c.l.b16 %v5182
    %v5193 = vunpack.c.l.b16 %v5185
    %v5194 = vpack.c.b16 %v5191, %v5190
    %v5195 = vpack.c.b16 %v5193, %v5192
    %5198 = vst [vmem:[#allocation2 + $0x40] sm:$0xff] %v5194
    %5199 = vst [vmem:[#allocation2 + $0x48] sm:$0xff] %v5195
    %v5208 = vunpack.c.l.b16 %v4171
    %v5209 = vunpack.c.l.b16 %v4183
    %v5210 = vunpack.c.l.b16 %v4195
    %v5211 = vunpack.c.l.b16 %v4207
    %v5212 = vunpack.c.l.b16 %v4219
    %v5213 = vunpack.c.l.b16 %v4231
    %v5214 = vunpack.c.l.b16 %v4243
    %v5215 = vunpack.c.l.b16 %v4255
    %v5216 = vpack.c.b16 %v5208, %v5208
    %v5217 = vpack.c.b16 %v5209, %v5209
    %v5218 = vpack.c.b16 %v5210, %v5210
    %v5219 = vpack.c.b16 %v5211, %v5211
    %v5220 = vpack.c.b16 %v5212, %v5212
    %v5221 = vpack.c.b16 %v5213, %v5213
    %v5222 = vpack.c.b16 %v5214, %v5214
    %v5223 = vpack.c.b16 %v5215, %v5215
    %v5224 = vunpack.c.l.b16 %v5216
    %v5225 = vunpack.c.l.b16 %v5217
    %v5226 = vunpack.c.l.b16 %v5218
    %v5227 = vunpack.c.l.b16 %v5219
    %v5228 = vunpack.c.l.b16 %v5220
    %v5229 = vunpack.c.l.b16 %v5221
    %v5230 = vunpack.c.l.b16 %v5222
    %v5231 = vunpack.c.l.b16 %v5223
    %v5232 = vrot.slane %v5225, 7
    %v5233 = vsel %vm4295, %v5232, %v5224
    %v5234 = vrot.slane %v5226, 6
    %v5235 = vsel %vm4298, %v5234, %v5233
    %v5236 = vrot.slane %v5227, 5
    %v5237 = vsel %vm4301, %v5236, %v5235
    %v5238 = vrot.slane %v5228, 4
    %v5239 = vsel %vm4304, %v5238, %v5237
    %v5240 = vrot.slane %v5229, 3
    %v5241 = vsel %vm4307, %v5240, %v5239
    %v5242 = vrot.slane %v5230, 2
    %v5243 = vsel %vm4310, %v5242, %v5241
    %v5244 = vrot.slane %v5231, 1
    %v5245 = vsel %vm4313, %v5244, %v5243
    %v5246 = vpack.c.b16 %v5245, %v5245
    %v5247 = vrot.slane %v5224, 1
    %v5248 = vsel %vm4295, %v5225, %v5247
    %v5249 = vrot.slane %v5226, 7
    %v5250 = vsel %vm4298, %v5249, %v5248
    %v5251 = vrot.slane %v5227, 6
    %v5252 = vsel %vm4301, %v5251, %v5250
    %v5253 = vrot.slane %v5228, 5
    %v5254 = vsel %vm4304, %v5253, %v5252
    %v5255 = vrot.slane %v5229, 4
    %v5256 = vsel %vm4307, %v5255, %v5254
    %v5257 = vrot.slane %v5230, 3
    %v5258 = vsel %vm4310, %v5257, %v5256
    %v5259 = vrot.slane %v5231, 2
    %v5260 = vsel %vm4313, %v5259, %v5258
    %v5261 = vpack.c.b16 %v5260, %v5260
    %5262 = vrot.lane.b32.xlu0 %v5261, 64
    %v5263 = vpop.permute.xlu0 %5262
    %v5264 = vrot.slane %v5224, 2
    %v5265 = vrot.slane %v5225, 1
    %v5266 = vsel %vm4295, %v5265, %v5264
    %v5267 = vsel %vm4298, %v5226, %v5266
    %v5268 = vrot.slane %v5227, 7
    %v5269 = vsel %vm4301, %v5268, %v5267
    %v5270 = vrot.slane %v5228, 6
    %v5271 = vsel %vm4304, %v5270, %v5269
    %v5272 = vrot.slane %v5229, 5
    %v5273 = vsel %vm4307, %v5272, %v5271
    %v5274 = vrot.slane %v5230, 4
    %v5275 = vsel %vm4310, %v5274, %v5273
    %v5276 = vrot.slane %v5231, 3
    %v5277 = vsel %vm4313, %v5276, %v5275
    %v5278 = vpack.c.b16 %v5277, %v5277
    %v5279 = vrot.slane %v5224, 3
    %v5280 = vrot.slane %v5225, 2
    %v5281 = vsel %vm4295, %v5280, %v5279
    %v5282 = vrot.slane %v5226, 1
    %v5283 = vsel %vm4298, %v5282, %v5281
    %v5284 = vsel %vm4301, %v5227, %v5283
    %v5285 = vrot.slane %v5228, 7
    %v5286 = vsel %vm4304, %v5285, %v5284
    %v5287 = vrot.slane %v5229, 6
    %v5288 = vsel %vm4307, %v5287, %v5286
    %v5289 = vrot.slane %v5230, 5
    %v5290 = vsel %vm4310, %v5289, %v5288
    %v5291 = vrot.slane %v5231, 4
    %v5292 = vsel %vm4313, %v5291, %v5290
    %v5293 = vpack.c.b16 %v5292, %v5292
    %5294 = vrot.lane.b32.xlu0 %v5293, 64
    %v5295 = vpop.permute.xlu0 %5294
    %v5296 = vrot.slane %v5224, 4
    %v5297 = vrot.slane %v5225, 3
    %v5298 = vsel %vm4295, %v5297, %v5296
    %v5299 = vrot.slane %v5226, 2
    %v5300 = vsel %vm4298, %v5299, %v5298
    %v5301 = vrot.slane %v5227, 1
    %v5302 = vsel %vm4301, %v5301, %v5300
    %v5303 = vsel %vm4304, %v5228, %v5302
    %v5304 = vrot.slane %v5229, 7
    %v5305 = vsel %vm4307, %v5304, %v5303
    %v5306 = vrot.slane %v5230, 6
    %v5307 = vsel %vm4310, %v5306, %v5305
    %v5308 = vrot.slane %v5231, 5
    %v5309 = vsel %vm4313, %v5308, %v5307
    %v5310 = vpack.c.b16 %v5309, %v5309
    %v5311 = vrot.slane %v5224, 5
    %v5312 = vrot.slane %v5225, 4
    %v5313 = vsel %vm4295, %v5312, %v5311
    %v5314 = vrot.slane %v5226, 3
    %v5315 = vsel %vm4298, %v5314, %v5313
    %v5316 = vrot.slane %v5227, 2
    %v5317 = vsel %vm4301, %v5316, %v5315
    %v5318 = vrot.slane %v5228, 1
    %v5319 = vsel %vm4304, %v5318, %v5317
    %v5320 = vsel %vm4307, %v5229, %v5319
    %v5321 = vrot.slane %v5230, 7
    %v5322 = vsel %vm4310, %v5321, %v5320
    %v5323 = vrot.slane %v5231, 6
    %v5324 = vsel %vm4313, %v5323, %v5322
    %v5325 = vpack.c.b16 %v5324, %v5324
    %5326 = vrot.lane.b32.xlu0 %v5325, 64
    %v5327 = vpop.permute.xlu0 %5326
    %v5328 = vrot.slane %v5224, 6
    %v5329 = vrot.slane %v5225, 5
    %v5330 = vsel %vm4295, %v5329, %v5328
    %v5331 = vrot.slane %v5226, 4
    %v5332 = vsel %vm4298, %v5331, %v5330
    %v5333 = vrot.slane %v5227, 3
    %v5334 = vsel %vm4301, %v5333, %v5332
    %v5335 = vrot.slane %v5228, 2
    %v5336 = vsel %vm4304, %v5335, %v5334
    %v5337 = vrot.slane %v5229, 1
    %v5338 = vsel %vm4307, %v5337, %v5336
    %v5339 = vsel %vm4310, %v5230, %v5338
    %v5340 = vrot.slane %v5231, 7
    %v5341 = vsel %vm4313, %v5340, %v5339
    %v5342 = vpack.c.b16 %v5341, %v5341
    %v5343 = vrot.slane %v5224, 7
    %v5344 = vrot.slane %v5225, 6
    %v5345 = vsel %vm4295, %v5344, %v5343
    %v5346 = vrot.slane %v5226, 5
    %v5347 = vsel %vm4298, %v5346, %v5345
    %v5348 = vrot.slane %v5227, 4
    %v5349 = vsel %vm4301, %v5348, %v5347
    %v5350 = vrot.slane %v5228, 3
    %v5351 = vsel %vm4304, %v5350, %v5349
    %v5352 = vrot.slane %v5229, 2
    %v5353 = vsel %vm4307, %v5352, %v5351
    %v5354 = vrot.slane %v5230, 1
    %v5355 = vsel %vm4310, %v5354, %v5353
    %v5356 = vsel %vm4313, %v5231, %v5355
    %v5357 = vpack.c.b16 %v5356, %v5356
    %5358 = vrot.lane.b32.xlu0 %v5357, 64
    %v5359 = vpop.permute.xlu0 %5358
    %v5362 = vsel %vm4429, %v5246, %v5263
    %v5365 = vsel %vm4429, %v5278, %v5295
    %v5368 = vsel %vm4429, %v5310, %v5327
    %v5371 = vsel %vm4429, %v5342, %v5359
    %v5376 = vunpack.c.l.b16 %v5362
    %v5377 = vunpack.c.l.b16 %v5365
    %v5378 = vunpack.c.l.b16 %v5368
    %v5379 = vunpack.c.l.b16 %v5371
    %v5380 = vpack.c.b16 %v5377, %v5376
    %v5381 = vpack.c.b16 %v5379, %v5378
    %5384 = vst [vmem:[#allocation2 + $0x50] sm:$0xff] %v5380
    %5385 = vst [vmem:[#allocation2 + $0x58] sm:$0xff] %v5381
    %v5394 = vunpack.c.l.b16 %v4172
    %v5395 = vunpack.c.l.b16 %v4184
    %v5396 = vunpack.c.l.b16 %v4196
    %v5397 = vunpack.c.l.b16 %v4208
    %v5398 = vunpack.c.l.b16 %v4220
    %v5399 = vunpack.c.l.b16 %v4232
    %v5400 = vunpack.c.l.b16 %v4244
    %v5401 = vunpack.c.l.b16 %v4256
    %v5402 = vpack.c.b16 %v5394, %v5394
    %v5403 = vpack.c.b16 %v5395, %v5395
    %v5404 = vpack.c.b16 %v5396, %v5396
    %v5405 = vpack.c.b16 %v5397, %v5397
    %v5406 = vpack.c.b16 %v5398, %v5398
    %v5407 = vpack.c.b16 %v5399, %v5399
    %v5408 = vpack.c.b16 %v5400, %v5400
    %v5409 = vpack.c.b16 %v5401, %v5401
    %v5410 = vunpack.c.l.b16 %v5402
    %v5411 = vunpack.c.l.b16 %v5403
    %v5412 = vunpack.c.l.b16 %v5404
    %v5413 = vunpack.c.l.b16 %v5405
    %v5414 = vunpack.c.l.b16 %v5406
    %v5415 = vunpack.c.l.b16 %v5407
    %v5416 = vunpack.c.l.b16 %v5408
    %v5417 = vunpack.c.l.b16 %v5409
    %v5418 = vrot.slane %v5411, 7
    %v5419 = vsel %vm4295, %v5418, %v5410
    %v5420 = vrot.slane %v5412, 6
    %v5421 = vsel %vm4298, %v5420, %v5419
    %v5422 = vrot.slane %v5413, 5
    %v5423 = vsel %vm4301, %v5422, %v5421
    %v5424 = vrot.slane %v5414, 4
    %v5425 = vsel %vm4304, %v5424, %v5423
    %v5426 = vrot.slane %v5415, 3
    %v5427 = vsel %vm4307, %v5426, %v5425
    %v5428 = vrot.slane %v5416, 2
    %v5429 = vsel %vm4310, %v5428, %v5427
    %v5430 = vrot.slane %v5417, 1
    %v5431 = vsel %vm4313, %v5430, %v5429
    %v5432 = vpack.c.b16 %v5431, %v5431
    %v5433 = vrot.slane %v5410, 1
    %v5434 = vsel %vm4295, %v5411, %v5433
    %v5435 = vrot.slane %v5412, 7
    %v5436 = vsel %vm4298, %v5435, %v5434
    %v5437 = vrot.slane %v5413, 6
    %v5438 = vsel %vm4301, %v5437, %v5436
    %v5439 = vrot.slane %v5414, 5
    %v5440 = vsel %vm4304, %v5439, %v5438
    %v5441 = vrot.slane %v5415, 4
    %v5442 = vsel %vm4307, %v5441, %v5440
    %v5443 = vrot.slane %v5416, 3
    %v5444 = vsel %vm4310, %v5443, %v5442
    %v5445 = vrot.slane %v5417, 2
    %v5446 = vsel %vm4313, %v5445, %v5444
    %v5447 = vpack.c.b16 %v5446, %v5446
    %5448 = vrot.lane.b32.xlu0 %v5447, 64
    %v5449 = vpop.permute.xlu0 %5448
    %v5450 = vrot.slane %v5410, 2
    %v5451 = vrot.slane %v5411, 1
    %v5452 = vsel %vm4295, %v5451, %v5450
    %v5453 = vsel %vm4298, %v5412, %v5452
    %v5454 = vrot.slane %v5413, 7
    %v5455 = vsel %vm4301, %v5454, %v5453
    %v5456 = vrot.slane %v5414, 6
    %v5457 = vsel %vm4304, %v5456, %v5455
    %v5458 = vrot.slane %v5415, 5
    %v5459 = vsel %vm4307, %v5458, %v5457
    %v5460 = vrot.slane %v5416, 4
    %v5461 = vsel %vm4310, %v5460, %v5459
    %v5462 = vrot.slane %v5417, 3
    %v5463 = vsel %vm4313, %v5462, %v5461
    %v5464 = vpack.c.b16 %v5463, %v5463
    %v5465 = vrot.slane %v5410, 3
    %v5466 = vrot.slane %v5411, 2
    %v5467 = vsel %vm4295, %v5466, %v5465
    %v5468 = vrot.slane %v5412, 1
    %v5469 = vsel %vm4298, %v5468, %v5467
    %v5470 = vsel %vm4301, %v5413, %v5469
    %v5471 = vrot.slane %v5414, 7
    %v5472 = vsel %vm4304, %v5471, %v5470
    %v5473 = vrot.slane %v5415, 6
    %v5474 = vsel %vm4307, %v5473, %v5472
    %v5475 = vrot.slane %v5416, 5
    %v5476 = vsel %vm4310, %v5475, %v5474
    %v5477 = vrot.slane %v5417, 4
    %v5478 = vsel %vm4313, %v5477, %v5476
    %v5479 = vpack.c.b16 %v5478, %v5478
    %5480 = vrot.lane.b32.xlu0 %v5479, 64
    %v5481 = vpop.permute.xlu0 %5480
    %v5482 = vrot.slane %v5410, 4
    %v5483 = vrot.slane %v5411, 3
    %v5484 = vsel %vm4295, %v5483, %v5482
    %v5485 = vrot.slane %v5412, 2
    %v5486 = vsel %vm4298, %v5485, %v5484
    %v5487 = vrot.slane %v5413, 1
    %v5488 = vsel %vm4301, %v5487, %v5486
    %v5489 = vsel %vm4304, %v5414, %v5488
    %v5490 = vrot.slane %v5415, 7
    %v5491 = vsel %vm4307, %v5490, %v5489
    %v5492 = vrot.slane %v5416, 6
    %v5493 = vsel %vm4310, %v5492, %v5491
    %v5494 = vrot.slane %v5417, 5
    %v5495 = vsel %vm4313, %v5494, %v5493
    %v5496 = vpack.c.b16 %v5495, %v5495
    %v5497 = vrot.slane %v5410, 5
    %v5498 = vrot.slane %v5411, 4
    %v5499 = vsel %vm4295, %v5498, %v5497
    %v5500 = vrot.slane %v5412, 3
    %v5501 = vsel %vm4298, %v5500, %v5499
    %v5502 = vrot.slane %v5413, 2
    %v5503 = vsel %vm4301, %v5502, %v5501
    %v5504 = vrot.slane %v5414, 1
    %v5505 = vsel %vm4304, %v5504, %v5503
    %v5506 = vsel %vm4307, %v5415, %v5505
    %v5507 = vrot.slane %v5416, 7
    %v5508 = vsel %vm4310, %v5507, %v5506
    %v5509 = vrot.slane %v5417, 6
    %v5510 = vsel %vm4313, %v5509, %v5508
    %v5511 = vpack.c.b16 %v5510, %v5510
    %5512 = vrot.lane.b32.xlu0 %v5511, 64
    %v5513 = vpop.permute.xlu0 %5512
    %v5514 = vrot.slane %v5410, 6
    %v5515 = vrot.slane %v5411, 5
    %v5516 = vsel %vm4295, %v5515, %v5514
    %v5517 = vrot.slane %v5412, 4
    %v5518 = vsel %vm4298, %v5517, %v5516
    %v5519 = vrot.slane %v5413, 3
    %v5520 = vsel %vm4301, %v5519, %v5518
    %v5521 = vrot.slane %v5414, 2
    %v5522 = vsel %vm4304, %v5521, %v5520
    %v5523 = vrot.slane %v5415, 1
    %v5524 = vsel %vm4307, %v5523, %v5522
    %v5525 = vsel %vm4310, %v5416, %v5524
    %v5526 = vrot.slane %v5417, 7
    %v5527 = vsel %vm4313, %v5526, %v5525
    %v5528 = vpack.c.b16 %v5527, %v5527
    %v5529 = vrot.slane %v5410, 7
    %v5530 = vrot.slane %v5411, 6
    %v5531 = vsel %vm4295, %v5530, %v5529
    %v5532 = vrot.slane %v5412, 5
    %v5533 = vsel %vm4298, %v5532, %v5531
    %v5534 = vrot.slane %v5413, 4
    %v5535 = vsel %vm4301, %v5534, %v5533
    %v5536 = vrot.slane %v5414, 3
    %v5537 = vsel %vm4304, %v5536, %v5535
    %v5538 = vrot.slane %v5415, 2
    %v5539 = vsel %vm4307, %v5538, %v5537
    %v5540 = vrot.slane %v5416, 1
    %v5541 = vsel %vm4310, %v5540, %v5539
    %v5542 = vsel %vm4313, %v5417, %v5541
    %v5543 = vpack.c.b16 %v5542, %v5542
    %5544 = vrot.lane.b32.xlu0 %v5543, 64
    %v5545 = vpop.permute.xlu0 %5544
    %v5548 = vsel %vm4429, %v5432, %v5449
    %v5551 = vsel %vm4429, %v5464, %v5481
    %v5554 = vsel %vm4429, %v5496, %v5513
    %v5557 = vsel %vm4429, %v5528, %v5545
    %v5562 = vunpack.c.l.b16 %v5548
    %v5563 = vunpack.c.l.b16 %v5551
    %v5564 = vunpack.c.l.b16 %v5554
    %v5565 = vunpack.c.l.b16 %v5557
    %v5566 = vpack.c.b16 %v5563, %v5562
    %v5567 = vpack.c.b16 %v5565, %v5564
    %5570 = vst [vmem:[#allocation2 + $0x60] sm:$0xff] %v5566
    %5571 = vst [vmem:[#allocation2 + $0x68] sm:$0xff] %v5567
    %v5580 = vunpack.c.l.b16 %v4173
    %v5581 = vunpack.c.l.b16 %v4185
    %v5582 = vunpack.c.l.b16 %v4197
    %v5583 = vunpack.c.l.b16 %v4209
    %v5584 = vunpack.c.l.b16 %v4221
    %v5585 = vunpack.c.l.b16 %v4233
    %v5586 = vunpack.c.l.b16 %v4245
    %v5587 = vunpack.c.l.b16 %v4257
    %v5588 = vpack.c.b16 %v5580, %v5580
    %v5589 = vpack.c.b16 %v5581, %v5581
    %v5590 = vpack.c.b16 %v5582, %v5582
    %v5591 = vpack.c.b16 %v5583, %v5583
    %v5592 = vpack.c.b16 %v5584, %v5584
    %v5593 = vpack.c.b16 %v5585, %v5585
    %v5594 = vpack.c.b16 %v5586, %v5586
    %v5595 = vpack.c.b16 %v5587, %v5587
    %v5596 = vunpack.c.l.b16 %v5588
    %v5597 = vunpack.c.l.b16 %v5589
    %v5598 = vunpack.c.l.b16 %v5590
    %v5599 = vunpack.c.l.b16 %v5591
    %v5600 = vunpack.c.l.b16 %v5592
    %v5601 = vunpack.c.l.b16 %v5593
    %v5602 = vunpack.c.l.b16 %v5594
    %v5603 = vunpack.c.l.b16 %v5595
    %v5604 = vrot.slane %v5597, 7
    %v5605 = vsel %vm4295, %v5604, %v5596
    %v5606 = vrot.slane %v5598, 6
    %v5607 = vsel %vm4298, %v5606, %v5605
    %v5608 = vrot.slane %v5599, 5
    %v5609 = vsel %vm4301, %v5608, %v5607
    %v5610 = vrot.slane %v5600, 4
    %v5611 = vsel %vm4304, %v5610, %v5609
    %v5612 = vrot.slane %v5601, 3
    %v5613 = vsel %vm4307, %v5612, %v5611
    %v5614 = vrot.slane %v5602, 2
    %v5615 = vsel %vm4310, %v5614, %v5613
    %v5616 = vrot.slane %v5603, 1
    %v5617 = vsel %vm4313, %v5616, %v5615
    %v5618 = vpack.c.b16 %v5617, %v5617
    %v5619 = vrot.slane %v5596, 1
    %v5620 = vsel %vm4295, %v5597, %v5619
    %v5621 = vrot.slane %v5598, 7
    %v5622 = vsel %vm4298, %v5621, %v5620
    %v5623 = vrot.slane %v5599, 6
    %v5624 = vsel %vm4301, %v5623, %v5622
    %v5625 = vrot.slane %v5600, 5
    %v5626 = vsel %vm4304, %v5625, %v5624
    %v5627 = vrot.slane %v5601, 4
    %v5628 = vsel %vm4307, %v5627, %v5626
    %v5629 = vrot.slane %v5602, 3
    %v5630 = vsel %vm4310, %v5629, %v5628
    %v5631 = vrot.slane %v5603, 2
    %v5632 = vsel %vm4313, %v5631, %v5630
    %v5633 = vpack.c.b16 %v5632, %v5632
    %5634 = vrot.lane.b32.xlu0 %v5633, 64
    %v5635 = vpop.permute.xlu0 %5634
    %v5636 = vrot.slane %v5596, 2
    %v5637 = vrot.slane %v5597, 1
    %v5638 = vsel %vm4295, %v5637, %v5636
    %v5639 = vsel %vm4298, %v5598, %v5638
    %v5640 = vrot.slane %v5599, 7
    %v5641 = vsel %vm4301, %v5640, %v5639
    %v5642 = vrot.slane %v5600, 6
    %v5643 = vsel %vm4304, %v5642, %v5641
    %v5644 = vrot.slane %v5601, 5
    %v5645 = vsel %vm4307, %v5644, %v5643
    %v5646 = vrot.slane %v5602, 4
    %v5647 = vsel %vm4310, %v5646, %v5645
    %v5648 = vrot.slane %v5603, 3
    %v5649 = vsel %vm4313, %v5648, %v5647
    %v5650 = vpack.c.b16 %v5649, %v5649
    %v5651 = vrot.slane %v5596, 3
    %v5652 = vrot.slane %v5597, 2
    %v5653 = vsel %vm4295, %v5652, %v5651
    %v5654 = vrot.slane %v5598, 1
    %v5655 = vsel %vm4298, %v5654, %v5653
    %v5656 = vsel %vm4301, %v5599, %v5655
    %v5657 = vrot.slane %v5600, 7
    %v5658 = vsel %vm4304, %v5657, %v5656
    %v5659 = vrot.slane %v5601, 6
    %v5660 = vsel %vm4307, %v5659, %v5658
    %v5661 = vrot.slane %v5602, 5
    %v5662 = vsel %vm4310, %v5661, %v5660
    %v5663 = vrot.slane %v5603, 4
    %v5664 = vsel %vm4313, %v5663, %v5662
    %v5665 = vpack.c.b16 %v5664, %v5664
    %5666 = vrot.lane.b32.xlu0 %v5665, 64
    %v5667 = vpop.permute.xlu0 %5666
    %v5668 = vrot.slane %v5596, 4
    %v5669 = vrot.slane %v5597, 3
    %v5670 = vsel %vm4295, %v5669, %v5668
    %v5671 = vrot.slane %v5598, 2
    %v5672 = vsel %vm4298, %v5671, %v5670
    %v5673 = vrot.slane %v5599, 1
    %v5674 = vsel %vm4301, %v5673, %v5672
    %v5675 = vsel %vm4304, %v5600, %v5674
    %v5676 = vrot.slane %v5601, 7
    %v5677 = vsel %vm4307, %v5676, %v5675
    %v5678 = vrot.slane %v5602, 6
    %v5679 = vsel %vm4310, %v5678, %v5677
    %v5680 = vrot.slane %v5603, 5
    %v5681 = vsel %vm4313, %v5680, %v5679
    %v5682 = vpack.c.b16 %v5681, %v5681
    %v5683 = vrot.slane %v5596, 5
    %v5684 = vrot.slane %v5597, 4
    %v5685 = vsel %vm4295, %v5684, %v5683
    %v5686 = vrot.slane %v5598, 3
    %v5687 = vsel %vm4298, %v5686, %v5685
    %v5688 = vrot.slane %v5599, 2
    %v5689 = vsel %vm4301, %v5688, %v5687
    %v5690 = vrot.slane %v5600, 1
    %v5691 = vsel %vm4304, %v5690, %v5689
    %v5692 = vsel %vm4307, %v5601, %v5691
    %v5693 = vrot.slane %v5602, 7
    %v5694 = vsel %vm4310, %v5693, %v5692
    %v5695 = vrot.slane %v5603, 6
    %v5696 = vsel %vm4313, %v5695, %v5694
    %v5697 = vpack.c.b16 %v5696, %v5696
    %5698 = vrot.lane.b32.xlu0 %v5697, 64
    %v5699 = vpop.permute.xlu0 %5698
    %v5700 = vrot.slane %v5596, 6
    %v5701 = vrot.slane %v5597, 5
    %v5702 = vsel %vm4295, %v5701, %v5700
    %v5703 = vrot.slane %v5598, 4
    %v5704 = vsel %vm4298, %v5703, %v5702
    %v5705 = vrot.slane %v5599, 3
    %v5706 = vsel %vm4301, %v5705, %v5704
    %v5707 = vrot.slane %v5600, 2
    %v5708 = vsel %vm4304, %v5707, %v5706
    %v5709 = vrot.slane %v5601, 1
    %v5710 = vsel %vm4307, %v5709, %v5708
    %v5711 = vsel %vm4310, %v5602, %v5710
    %v5712 = vrot.slane %v5603, 7
    %v5713 = vsel %vm4313, %v5712, %v5711
    %v5714 = vpack.c.b16 %v5713, %v5713
    %v5715 = vrot.slane %v5596, 7
    %v5716 = vrot.slane %v5597, 6
    %v5717 = vsel %vm4295, %v5716, %v5715
    %v5718 = vrot.slane %v5598, 5
    %v5719 = vsel %vm4298, %v5718, %v5717
    %v5720 = vrot.slane %v5599, 4
    %v5721 = vsel %vm4301, %v5720, %v5719
    %v5722 = vrot.slane %v5600, 3
    %v5723 = vsel %vm4304, %v5722, %v5721
    %v5724 = vrot.slane %v5601, 2
    %v5725 = vsel %vm4307, %v5724, %v5723
    %v5726 = vrot.slane %v5602, 1
    %v5727 = vsel %vm4310, %v5726, %v5725
    %v5728 = vsel %vm4313, %v5603, %v5727
    %v5729 = vpack.c.b16 %v5728, %v5728
    %5730 = vrot.lane.b32.xlu0 %v5729, 64
    %v5731 = vpop.permute.xlu0 %5730
    %v5734 = vsel %vm4429, %v5618, %v5635
    %v5737 = vsel %vm4429, %v5650, %v5667
    %v5740 = vsel %vm4429, %v5682, %v5699
    %v5743 = vsel %vm4429, %v5714, %v5731
    %v5748 = vunpack.c.l.b16 %v5734
    %v5749 = vunpack.c.l.b16 %v5737
    %v5750 = vunpack.c.l.b16 %v5740
    %v5751 = vunpack.c.l.b16 %v5743
    %v5752 = vpack.c.b16 %v5749, %v5748
    %v5753 = vpack.c.b16 %v5751, %v5750
    %5756 = vst [vmem:[#allocation2 + $0x70] sm:$0xff] %v5752
    %5757 = vst [vmem:[#allocation2 + $0x78] sm:$0xff] %v5753
    %v5766 = vunpack.c.l.b16 %v4174
    %v5767 = vunpack.c.l.b16 %v4186
    %v5768 = vunpack.c.l.b16 %v4198
    %v5769 = vunpack.c.l.b16 %v4210
    %v5770 = vunpack.c.l.b16 %v4222
    %v5771 = vunpack.c.l.b16 %v4234
    %v5772 = vunpack.c.l.b16 %v4246
    %v5773 = vunpack.c.l.b16 %v4258
    %v5774 = vpack.c.b16 %v5766, %v5766
    %v5775 = vpack.c.b16 %v5767, %v5767
    %v5776 = vpack.c.b16 %v5768, %v5768
    %v5777 = vpack.c.b16 %v5769, %v5769
    %v5778 = vpack.c.b16 %v5770, %v5770
    %v5779 = vpack.c.b16 %v5771, %v5771
    %v5780 = vpack.c.b16 %v5772, %v5772
    %v5781 = vpack.c.b16 %v5773, %v5773
    %v5782 = vunpack.c.l.b16 %v5774
    %v5783 = vunpack.c.l.b16 %v5775
    %v5784 = vunpack.c.l.b16 %v5776
    %v5785 = vunpack.c.l.b16 %v5777
    %v5786 = vunpack.c.l.b16 %v5778
    %v5787 = vunpack.c.l.b16 %v5779
    %v5788 = vunpack.c.l.b16 %v5780
    %v5789 = vunpack.c.l.b16 %v5781
    %v5790 = vrot.slane %v5783, 7
    %v5791 = vsel %vm4295, %v5790, %v5782
    %v5792 = vrot.slane %v5784, 6
    %v5793 = vsel %vm4298, %v5792, %v5791
    %v5794 = vrot.slane %v5785, 5
    %v5795 = vsel %vm4301, %v5794, %v5793
    %v5796 = vrot.slane %v5786, 4
    %v5797 = vsel %vm4304, %v5796, %v5795
    %v5798 = vrot.slane %v5787, 3
    %v5799 = vsel %vm4307, %v5798, %v5797
    %v5800 = vrot.slane %v5788, 2
    %v5801 = vsel %vm4310, %v5800, %v5799
    %v5802 = vrot.slane %v5789, 1
    %v5803 = vsel %vm4313, %v5802, %v5801
    %v5804 = vpack.c.b16 %v5803, %v5803
    %v5805 = vrot.slane %v5782, 1
    %v5806 = vsel %vm4295, %v5783, %v5805
    %v5807 = vrot.slane %v5784, 7
    %v5808 = vsel %vm4298, %v5807, %v5806
    %v5809 = vrot.slane %v5785, 6
    %v5810 = vsel %vm4301, %v5809, %v5808
    %v5811 = vrot.slane %v5786, 5
    %v5812 = vsel %vm4304, %v5811, %v5810
    %v5813 = vrot.slane %v5787, 4
    %v5814 = vsel %vm4307, %v5813, %v5812
    %v5815 = vrot.slane %v5788, 3
    %v5816 = vsel %vm4310, %v5815, %v5814
    %v5817 = vrot.slane %v5789, 2
    %v5818 = vsel %vm4313, %v5817, %v5816
    %v5819 = vpack.c.b16 %v5818, %v5818
    %5820 = vrot.lane.b32.xlu0 %v5819, 64
    %v5821 = vpop.permute.xlu0 %5820
    %v5822 = vrot.slane %v5782, 2
    %v5823 = vrot.slane %v5783, 1
    %v5824 = vsel %vm4295, %v5823, %v5822
    %v5825 = vsel %vm4298, %v5784, %v5824
    %v5826 = vrot.slane %v5785, 7
    %v5827 = vsel %vm4301, %v5826, %v5825
    %v5828 = vrot.slane %v5786, 6
    %v5829 = vsel %vm4304, %v5828, %v5827
    %v5830 = vrot.slane %v5787, 5
    %v5831 = vsel %vm4307, %v5830, %v5829
    %v5832 = vrot.slane %v5788, 4
    %v5833 = vsel %vm4310, %v5832, %v5831
    %v5834 = vrot.slane %v5789, 3
    %v5835 = vsel %vm4313, %v5834, %v5833
    %v5836 = vpack.c.b16 %v5835, %v5835
    %v5837 = vrot.slane %v5782, 3
    %v5838 = vrot.slane %v5783, 2
    %v5839 = vsel %vm4295, %v5838, %v5837
    %v5840 = vrot.slane %v5784, 1
    %v5841 = vsel %vm4298, %v5840, %v5839
    %v5842 = vsel %vm4301, %v5785, %v5841
    %v5843 = vrot.slane %v5786, 7
    %v5844 = vsel %vm4304, %v5843, %v5842
    %v5845 = vrot.slane %v5787, 6
    %v5846 = vsel %vm4307, %v5845, %v5844
    %v5847 = vrot.slane %v5788, 5
    %v5848 = vsel %vm4310, %v5847, %v5846
    %v5849 = vrot.slane %v5789, 4
    %v5850 = vsel %vm4313, %v5849, %v5848
    %v5851 = vpack.c.b16 %v5850, %v5850
    %5852 = vrot.lane.b32.xlu0 %v5851, 64
    %v5853 = vpop.permute.xlu0 %5852
    %v5854 = vrot.slane %v5782, 4
    %v5855 = vrot.slane %v5783, 3
    %v5856 = vsel %vm4295, %v5855, %v5854
    %v5857 = vrot.slane %v5784, 2
    %v5858 = vsel %vm4298, %v5857, %v5856
    %v5859 = vrot.slane %v5785, 1
    %v5860 = vsel %vm4301, %v5859, %v5858
    %v5861 = vsel %vm4304, %v5786, %v5860
    %v5862 = vrot.slane %v5787, 7
    %v5863 = vsel %vm4307, %v5862, %v5861
    %v5864 = vrot.slane %v5788, 6
    %v5865 = vsel %vm4310, %v5864, %v5863
    %v5866 = vrot.slane %v5789, 5
    %v5867 = vsel %vm4313, %v5866, %v5865
    %v5868 = vpack.c.b16 %v5867, %v5867
    %v5869 = vrot.slane %v5782, 5
    %v5870 = vrot.slane %v5783, 4
    %v5871 = vsel %vm4295, %v5870, %v5869
    %v5872 = vrot.slane %v5784, 3
    %v5873 = vsel %vm4298, %v5872, %v5871
    %v5874 = vrot.slane %v5785, 2
    %v5875 = vsel %vm4301, %v5874, %v5873
    %v5876 = vrot.slane %v5786, 1
    %v5877 = vsel %vm4304, %v5876, %v5875
    %v5878 = vsel %vm4307, %v5787, %v5877
    %v5879 = vrot.slane %v5788, 7
    %v5880 = vsel %vm4310, %v5879, %v5878
    %v5881 = vrot.slane %v5789, 6
    %v5882 = vsel %vm4313, %v5881, %v5880
    %v5883 = vpack.c.b16 %v5882, %v5882
    %5884 = vrot.lane.b32.xlu0 %v5883, 64
    %v5885 = vpop.permute.xlu0 %5884
    %v5886 = vrot.slane %v5782, 6
    %v5887 = vrot.slane %v5783, 5
    %v5888 = vsel %vm4295, %v5887, %v5886
    %v5889 = vrot.slane %v5784, 4
    %v5890 = vsel %vm4298, %v5889, %v5888
    %v5891 = vrot.slane %v5785, 3
    %v5892 = vsel %vm4301, %v5891, %v5890
    %v5893 = vrot.slane %v5786, 2
    %v5894 = vsel %vm4304, %v5893, %v5892
    %v5895 = vrot.slane %v5787, 1
    %v5896 = vsel %vm4307, %v5895, %v5894
    %v5897 = vsel %vm4310, %v5788, %v5896
    %v5898 = vrot.slane %v5789, 7
    %v5899 = vsel %vm4313, %v5898, %v5897
    %v5900 = vpack.c.b16 %v5899, %v5899
    %v5901 = vrot.slane %v5782, 7
    %v5902 = vrot.slane %v5783, 6
    %v5903 = vsel %vm4295, %v5902, %v5901
    %v5904 = vrot.slane %v5784, 5
    %v5905 = vsel %vm4298, %v5904, %v5903
    %v5906 = vrot.slane %v5785, 4
    %v5907 = vsel %vm4301, %v5906, %v5905
    %v5908 = vrot.slane %v5786, 3
    %v5909 = vsel %vm4304, %v5908, %v5907
    %v5910 = vrot.slane %v5787, 2
    %v5911 = vsel %vm4307, %v5910, %v5909
    %v5912 = vrot.slane %v5788, 1
    %v5913 = vsel %vm4310, %v5912, %v5911
    %v5914 = vsel %vm4313, %v5789, %v5913
    %v5915 = vpack.c.b16 %v5914, %v5914
    %5916 = vrot.lane.b32.xlu0 %v5915, 64
    %v5917 = vpop.permute.xlu0 %5916
    %v5920 = vsel %vm4429, %v5804, %v5821
    %v5923 = vsel %vm4429, %v5836, %v5853
    %v5926 = vsel %vm4429, %v5868, %v5885
    %v5929 = vsel %vm4429, %v5900, %v5917
    %v5934 = vunpack.c.l.b16 %v5920
    %v5935 = vunpack.c.l.b16 %v5923
    %v5936 = vunpack.c.l.b16 %v5926
    %v5937 = vunpack.c.l.b16 %v5929
    %v5938 = vpack.c.b16 %v5935, %v5934
    %v5939 = vpack.c.b16 %v5937, %v5936
    %5942 = vst [vmem:[#allocation2 + $0x80] sm:$0xff] %v5938
    %5943 = vst [vmem:[#allocation2 + $0x88] sm:$0xff] %v5939
    %v5952 = vunpack.c.l.b16 %v4175
    %v5953 = vunpack.c.l.b16 %v4187
    %v5954 = vunpack.c.l.b16 %v4199
    %v5955 = vunpack.c.l.b16 %v4211
    %v5956 = vunpack.c.l.b16 %v4223
    %v5957 = vunpack.c.l.b16 %v4235
    %v5958 = vunpack.c.l.b16 %v4247
    %v5959 = vunpack.c.l.b16 %v4259
    %v5960 = vpack.c.b16 %v5952, %v5952
    %v5961 = vpack.c.b16 %v5953, %v5953
    %v5962 = vpack.c.b16 %v5954, %v5954
    %v5963 = vpack.c.b16 %v5955, %v5955
    %v5964 = vpack.c.b16 %v5956, %v5956
    %v5965 = vpack.c.b16 %v5957, %v5957
    %v5966 = vpack.c.b16 %v5958, %v5958
    %v5967 = vpack.c.b16 %v5959, %v5959
    %v5968 = vunpack.c.l.b16 %v5960
    %v5969 = vunpack.c.l.b16 %v5961
    %v5970 = vunpack.c.l.b16 %v5962
    %v5971 = vunpack.c.l.b16 %v5963
    %v5972 = vunpack.c.l.b16 %v5964
    %v5973 = vunpack.c.l.b16 %v5965
    %v5974 = vunpack.c.l.b16 %v5966
    %v5975 = vunpack.c.l.b16 %v5967
    %v5976 = vrot.slane %v5969, 7
    %v5977 = vsel %vm4295, %v5976, %v5968
    %v5978 = vrot.slane %v5970, 6
    %v5979 = vsel %vm4298, %v5978, %v5977
    %v5980 = vrot.slane %v5971, 5
    %v5981 = vsel %vm4301, %v5980, %v5979
    %v5982 = vrot.slane %v5972, 4
    %v5983 = vsel %vm4304, %v5982, %v5981
    %v5984 = vrot.slane %v5973, 3
    %v5985 = vsel %vm4307, %v5984, %v5983
    %v5986 = vrot.slane %v5974, 2
    %v5987 = vsel %vm4310, %v5986, %v5985
    %v5988 = vrot.slane %v5975, 1
    %v5989 = vsel %vm4313, %v5988, %v5987
    %v5990 = vpack.c.b16 %v5989, %v5989
    %v5991 = vrot.slane %v5968, 1
    %v5992 = vsel %vm4295, %v5969, %v5991
    %v5993 = vrot.slane %v5970, 7
    %v5994 = vsel %vm4298, %v5993, %v5992
    %v5995 = vrot.slane %v5971, 6
    %v5996 = vsel %vm4301, %v5995, %v5994
    %v5997 = vrot.slane %v5972, 5
    %v5998 = vsel %vm4304, %v5997, %v5996
    %v5999 = vrot.slane %v5973, 4
    %v6000 = vsel %vm4307, %v5999, %v5998
    %v6001 = vrot.slane %v5974, 3
    %v6002 = vsel %vm4310, %v6001, %v6000
    %v6003 = vrot.slane %v5975, 2
    %v6004 = vsel %vm4313, %v6003, %v6002
    %v6005 = vpack.c.b16 %v6004, %v6004
    %6006 = vrot.lane.b32.xlu0 %v6005, 64
    %v6007 = vpop.permute.xlu0 %6006
    %v6008 = vrot.slane %v5968, 2
    %v6009 = vrot.slane %v5969, 1
    %v6010 = vsel %vm4295, %v6009, %v6008
    %v6011 = vsel %vm4298, %v5970, %v6010
    %v6012 = vrot.slane %v5971, 7
    %v6013 = vsel %vm4301, %v6012, %v6011
    %v6014 = vrot.slane %v5972, 6
    %v6015 = vsel %vm4304, %v6014, %v6013
    %v6016 = vrot.slane %v5973, 5
    %v6017 = vsel %vm4307, %v6016, %v6015
    %v6018 = vrot.slane %v5974, 4
    %v6019 = vsel %vm4310, %v6018, %v6017
    %v6020 = vrot.slane %v5975, 3
    %v6021 = vsel %vm4313, %v6020, %v6019
    %v6022 = vpack.c.b16 %v6021, %v6021
    %v6023 = vrot.slane %v5968, 3
    %v6024 = vrot.slane %v5969, 2
    %v6025 = vsel %vm4295, %v6024, %v6023
    %v6026 = vrot.slane %v5970, 1
    %v6027 = vsel %vm4298, %v6026, %v6025
    %v6028 = vsel %vm4301, %v5971, %v6027
    %v6029 = vrot.slane %v5972, 7
    %v6030 = vsel %vm4304, %v6029, %v6028
    %v6031 = vrot.slane %v5973, 6
    %v6032 = vsel %vm4307, %v6031, %v6030
    %v6033 = vrot.slane %v5974, 5
    %v6034 = vsel %vm4310, %v6033, %v6032
    %v6035 = vrot.slane %v5975, 4
    %v6036 = vsel %vm4313, %v6035, %v6034
    %v6037 = vpack.c.b16 %v6036, %v6036
    %6038 = vrot.lane.b32.xlu0 %v6037, 64
    %v6039 = vpop.permute.xlu0 %6038
    %v6040 = vrot.slane %v5968, 4
    %v6041 = vrot.slane %v5969, 3
    %v6042 = vsel %vm4295, %v6041, %v6040
    %v6043 = vrot.slane %v5970, 2
    %v6044 = vsel %vm4298, %v6043, %v6042
    %v6045 = vrot.slane %v5971, 1
    %v6046 = vsel %vm4301, %v6045, %v6044
    %v6047 = vsel %vm4304, %v5972, %v6046
    %v6048 = vrot.slane %v5973, 7
    %v6049 = vsel %vm4307, %v6048, %v6047
    %v6050 = vrot.slane %v5974, 6
    %v6051 = vsel %vm4310, %v6050, %v6049
    %v6052 = vrot.slane %v5975, 5
    %v6053 = vsel %vm4313, %v6052, %v6051
    %v6054 = vpack.c.b16 %v6053, %v6053
    %v6055 = vrot.slane %v5968, 5
    %v6056 = vrot.slane %v5969, 4
    %v6057 = vsel %vm4295, %v6056, %v6055
    %v6058 = vrot.slane %v5970, 3
    %v6059 = vsel %vm4298, %v6058, %v6057
    %v6060 = vrot.slane %v5971, 2
    %v6061 = vsel %vm4301, %v6060, %v6059
    %v6062 = vrot.slane %v5972, 1
    %v6063 = vsel %vm4304, %v6062, %v6061
    %v6064 = vsel %vm4307, %v5973, %v6063
    %v6065 = vrot.slane %v5974, 7
    %v6066 = vsel %vm4310, %v6065, %v6064
    %v6067 = vrot.slane %v5975, 6
    %v6068 = vsel %vm4313, %v6067, %v6066
    %v6069 = vpack.c.b16 %v6068, %v6068
    %6070 = vrot.lane.b32.xlu0 %v6069, 64
    %v6071 = vpop.permute.xlu0 %6070
    %v6072 = vrot.slane %v5968, 6
    %v6073 = vrot.slane %v5969, 5
    %v6074 = vsel %vm4295, %v6073, %v6072
    %v6075 = vrot.slane %v5970, 4
    %v6076 = vsel %vm4298, %v6075, %v6074
    %v6077 = vrot.slane %v5971, 3
    %v6078 = vsel %vm4301, %v6077, %v6076
    %v6079 = vrot.slane %v5972, 2
    %v6080 = vsel %vm4304, %v6079, %v6078
    %v6081 = vrot.slane %v5973, 1
    %v6082 = vsel %vm4307, %v6081, %v6080
    %v6083 = vsel %vm4310, %v5974, %v6082
    %v6084 = vrot.slane %v5975, 7
    %v6085 = vsel %vm4313, %v6084, %v6083
    %v6086 = vpack.c.b16 %v6085, %v6085
    %v6087 = vrot.slane %v5968, 7
    %v6088 = vrot.slane %v5969, 6
    %v6089 = vsel %vm4295, %v6088, %v6087
    %v6090 = vrot.slane %v5970, 5
    %v6091 = vsel %vm4298, %v6090, %v6089
    %v6092 = vrot.slane %v5971, 4
    %v6093 = vsel %vm4301, %v6092, %v6091
    %v6094 = vrot.slane %v5972, 3
    %v6095 = vsel %vm4304, %v6094, %v6093
    %v6096 = vrot.slane %v5973, 2
    %v6097 = vsel %vm4307, %v6096, %v6095
    %v6098 = vrot.slane %v5974, 1
    %v6099 = vsel %vm4310, %v6098, %v6097
    %v6100 = vsel %vm4313, %v5975, %v6099
    %v6101 = vpack.c.b16 %v6100, %v6100
    %6102 = vrot.lane.b32.xlu0 %v6101, 64
    %v6103 = vpop.permute.xlu0 %6102
    %v6106 = vsel %vm4429, %v5990, %v6007
    %v6109 = vsel %vm4429, %v6022, %v6039
    %v6112 = vsel %vm4429, %v6054, %v6071
    %v6115 = vsel %vm4429, %v6086, %v6103
    %v6120 = vunpack.c.l.b16 %v6106
    %v6121 = vunpack.c.l.b16 %v6109
    %v6122 = vunpack.c.l.b16 %v6112
    %v6123 = vunpack.c.l.b16 %v6115
    %v6124 = vpack.c.b16 %v6121, %v6120
    %v6125 = vpack.c.b16 %v6123, %v6122
    %6128 = vst [vmem:[#allocation2 + $0x90] sm:$0xff] %v6124
    %6129 = vst [vmem:[#allocation2 + $0x98] sm:$0xff] %v6125
    %v6138 = vunpack.c.l.b16 %v4176
    %v6139 = vunpack.c.l.b16 %v4188
    %v6140 = vunpack.c.l.b16 %v4200
    %v6141 = vunpack.c.l.b16 %v4212
    %v6142 = vunpack.c.l.b16 %v4224
    %v6143 = vunpack.c.l.b16 %v4236
    %v6144 = vunpack.c.l.b16 %v4248
    %v6145 = vunpack.c.l.b16 %v4260
    %v6146 = vpack.c.b16 %v6138, %v6138
    %v6147 = vpack.c.b16 %v6139, %v6139
    %v6148 = vpack.c.b16 %v6140, %v6140
    %v6149 = vpack.c.b16 %v6141, %v6141
    %v6150 = vpack.c.b16 %v6142, %v6142
    %v6151 = vpack.c.b16 %v6143, %v6143
    %v6152 = vpack.c.b16 %v6144, %v6144
    %v6153 = vpack.c.b16 %v6145, %v6145
    %v6154 = vunpack.c.l.b16 %v6146
    %v6155 = vunpack.c.l.b16 %v6147
    %v6156 = vunpack.c.l.b16 %v6148
    %v6157 = vunpack.c.l.b16 %v6149
    %v6158 = vunpack.c.l.b16 %v6150
    %v6159 = vunpack.c.l.b16 %v6151
    %v6160 = vunpack.c.l.b16 %v6152
    %v6161 = vunpack.c.l.b16 %v6153
    %v6162 = vrot.slane %v6155, 7
    %v6163 = vsel %vm4295, %v6162, %v6154
    %v6164 = vrot.slane %v6156, 6
    %v6165 = vsel %vm4298, %v6164, %v6163
    %v6166 = vrot.slane %v6157, 5
    %v6167 = vsel %vm4301, %v6166, %v6165
    %v6168 = vrot.slane %v6158, 4
    %v6169 = vsel %vm4304, %v6168, %v6167
    %v6170 = vrot.slane %v6159, 3
    %v6171 = vsel %vm4307, %v6170, %v6169
    %v6172 = vrot.slane %v6160, 2
    %v6173 = vsel %vm4310, %v6172, %v6171
    %v6174 = vrot.slane %v6161, 1
    %v6175 = vsel %vm4313, %v6174, %v6173
    %v6176 = vpack.c.b16 %v6175, %v6175
    %v6177 = vrot.slane %v6154, 1
    %v6178 = vsel %vm4295, %v6155, %v6177
    %v6179 = vrot.slane %v6156, 7
    %v6180 = vsel %vm4298, %v6179, %v6178
    %v6181 = vrot.slane %v6157, 6
    %v6182 = vsel %vm4301, %v6181, %v6180
    %v6183 = vrot.slane %v6158, 5
    %v6184 = vsel %vm4304, %v6183, %v6182
    %v6185 = vrot.slane %v6159, 4
    %v6186 = vsel %vm4307, %v6185, %v6184
    %v6187 = vrot.slane %v6160, 3
    %v6188 = vsel %vm4310, %v6187, %v6186
    %v6189 = vrot.slane %v6161, 2
    %v6190 = vsel %vm4313, %v6189, %v6188
    %v6191 = vpack.c.b16 %v6190, %v6190
    %6192 = vrot.lane.b32.xlu0 %v6191, 64
    %v6193 = vpop.permute.xlu0 %6192
    %v6194 = vrot.slane %v6154, 2
    %v6195 = vrot.slane %v6155, 1
    %v6196 = vsel %vm4295, %v6195, %v6194
    %v6197 = vsel %vm4298, %v6156, %v6196
    %v6198 = vrot.slane %v6157, 7
    %v6199 = vsel %vm4301, %v6198, %v6197
    %v6200 = vrot.slane %v6158, 6
    %v6201 = vsel %vm4304, %v6200, %v6199
    %v6202 = vrot.slane %v6159, 5
    %v6203 = vsel %vm4307, %v6202, %v6201
    %v6204 = vrot.slane %v6160, 4
    %v6205 = vsel %vm4310, %v6204, %v6203
    %v6206 = vrot.slane %v6161, 3
    %v6207 = vsel %vm4313, %v6206, %v6205
    %v6208 = vpack.c.b16 %v6207, %v6207
    %v6209 = vrot.slane %v6154, 3
    %v6210 = vrot.slane %v6155, 2
    %v6211 = vsel %vm4295, %v6210, %v6209
    %v6212 = vrot.slane %v6156, 1
    %v6213 = vsel %vm4298, %v6212, %v6211
    %v6214 = vsel %vm4301, %v6157, %v6213
    %v6215 = vrot.slane %v6158, 7
    %v6216 = vsel %vm4304, %v6215, %v6214
    %v6217 = vrot.slane %v6159, 6
    %v6218 = vsel %vm4307, %v6217, %v6216
    %v6219 = vrot.slane %v6160, 5
    %v6220 = vsel %vm4310, %v6219, %v6218
    %v6221 = vrot.slane %v6161, 4
    %v6222 = vsel %vm4313, %v6221, %v6220
    %v6223 = vpack.c.b16 %v6222, %v6222
    %6224 = vrot.lane.b32.xlu0 %v6223, 64
    %v6225 = vpop.permute.xlu0 %6224
    %v6226 = vrot.slane %v6154, 4
    %v6227 = vrot.slane %v6155, 3
    %v6228 = vsel %vm4295, %v6227, %v6226
    %v6229 = vrot.slane %v6156, 2
    %v6230 = vsel %vm4298, %v6229, %v6228
    %v6231 = vrot.slane %v6157, 1
    %v6232 = vsel %vm4301, %v6231, %v6230
    %v6233 = vsel %vm4304, %v6158, %v6232
    %v6234 = vrot.slane %v6159, 7
    %v6235 = vsel %vm4307, %v6234, %v6233
    %v6236 = vrot.slane %v6160, 6
    %v6237 = vsel %vm4310, %v6236, %v6235
    %v6238 = vrot.slane %v6161, 5
    %v6239 = vsel %vm4313, %v6238, %v6237
    %v6240 = vpack.c.b16 %v6239, %v6239
    %v6241 = vrot.slane %v6154, 5
    %v6242 = vrot.slane %v6155, 4
    %v6243 = vsel %vm4295, %v6242, %v6241
    %v6244 = vrot.slane %v6156, 3
    %v6245 = vsel %vm4298, %v6244, %v6243
    %v6246 = vrot.slane %v6157, 2
    %v6247 = vsel %vm4301, %v6246, %v6245
    %v6248 = vrot.slane %v6158, 1
    %v6249 = vsel %vm4304, %v6248, %v6247
    %v6250 = vsel %vm4307, %v6159, %v6249
    %v6251 = vrot.slane %v6160, 7
    %v6252 = vsel %vm4310, %v6251, %v6250
    %v6253 = vrot.slane %v6161, 6
    %v6254 = vsel %vm4313, %v6253, %v6252
    %v6255 = vpack.c.b16 %v6254, %v6254
    %6256 = vrot.lane.b32.xlu0 %v6255, 64
    %v6257 = vpop.permute.xlu0 %6256
    %v6258 = vrot.slane %v6154, 6
    %v6259 = vrot.slane %v6155, 5
    %v6260 = vsel %vm4295, %v6259, %v6258
    %v6261 = vrot.slane %v6156, 4
    %v6262 = vsel %vm4298, %v6261, %v6260
    %v6263 = vrot.slane %v6157, 3
    %v6264 = vsel %vm4301, %v6263, %v6262
    %v6265 = vrot.slane %v6158, 2
    %v6266 = vsel %vm4304, %v6265, %v6264
    %v6267 = vrot.slane %v6159, 1
    %v6268 = vsel %vm4307, %v6267, %v6266
    %v6269 = vsel %vm4310, %v6160, %v6268
    %v6270 = vrot.slane %v6161, 7
    %v6271 = vsel %vm4313, %v6270, %v6269
    %v6272 = vpack.c.b16 %v6271, %v6271
    %v6273 = vrot.slane %v6154, 7
    %v6274 = vrot.slane %v6155, 6
    %v6275 = vsel %vm4295, %v6274, %v6273
    %v6276 = vrot.slane %v6156, 5
    %v6277 = vsel %vm4298, %v6276, %v6275
    %v6278 = vrot.slane %v6157, 4
    %v6279 = vsel %vm4301, %v6278, %v6277
    %v6280 = vrot.slane %v6158, 3
    %v6281 = vsel %vm4304, %v6280, %v6279
    %v6282 = vrot.slane %v6159, 2
    %v6283 = vsel %vm4307, %v6282, %v6281
    %v6284 = vrot.slane %v6160, 1
    %v6285 = vsel %vm4310, %v6284, %v6283
    %v6286 = vsel %vm4313, %v6161, %v6285
    %v6287 = vpack.c.b16 %v6286, %v6286
    %6288 = vrot.lane.b32.xlu0 %v6287, 64
    %v6289 = vpop.permute.xlu0 %6288
    %v6292 = vsel %vm4429, %v6176, %v6193
    %v6295 = vsel %vm4429, %v6208, %v6225
    %v6298 = vsel %vm4429, %v6240, %v6257
    %v6301 = vsel %vm4429, %v6272, %v6289
    %v6306 = vunpack.c.l.b16 %v6292
    %v6307 = vunpack.c.l.b16 %v6295
    %v6308 = vunpack.c.l.b16 %v6298
    %v6309 = vunpack.c.l.b16 %v6301
    %v6310 = vpack.c.b16 %v6307, %v6306
    %v6311 = vpack.c.b16 %v6309, %v6308
    %6314 = vst [vmem:[#allocation2 + $0xa0] sm:$0xff] %v6310
    %6315 = vst [vmem:[#allocation2 + $0xa8] sm:$0xff] %v6311
    %v6324 = vunpack.c.l.b16 %v4177
    %v6325 = vunpack.c.l.b16 %v4189
    %v6326 = vunpack.c.l.b16 %v4201
    %v6327 = vunpack.c.l.b16 %v4213
    %v6328 = vunpack.c.l.b16 %v4225
    %v6329 = vunpack.c.l.b16 %v4237
    %v6330 = vunpack.c.l.b16 %v4249
    %v6331 = vunpack.c.l.b16 %v4261
    %v6332 = vpack.c.b16 %v6324, %v6324
    %v6333 = vpack.c.b16 %v6325, %v6325
    %v6334 = vpack.c.b16 %v6326, %v6326
    %v6335 = vpack.c.b16 %v6327, %v6327
    %v6336 = vpack.c.b16 %v6328, %v6328
    %v6337 = vpack.c.b16 %v6329, %v6329
    %v6338 = vpack.c.b16 %v6330, %v6330
    %v6339 = vpack.c.b16 %v6331, %v6331
    %v6340 = vunpack.c.l.b16 %v6332
    %v6341 = vunpack.c.l.b16 %v6333
    %v6342 = vunpack.c.l.b16 %v6334
    %v6343 = vunpack.c.l.b16 %v6335
    %v6344 = vunpack.c.l.b16 %v6336
    %v6345 = vunpack.c.l.b16 %v6337
    %v6346 = vunpack.c.l.b16 %v6338
    %v6347 = vunpack.c.l.b16 %v6339
    %v6348 = vrot.slane %v6341, 7
    %v6349 = vsel %vm4295, %v6348, %v6340
    %v6350 = vrot.slane %v6342, 6
    %v6351 = vsel %vm4298, %v6350, %v6349
    %v6352 = vrot.slane %v6343, 5
    %v6353 = vsel %vm4301, %v6352, %v6351
    %v6354 = vrot.slane %v6344, 4
    %v6355 = vsel %vm4304, %v6354, %v6353
    %v6356 = vrot.slane %v6345, 3
    %v6357 = vsel %vm4307, %v6356, %v6355
    %v6358 = vrot.slane %v6346, 2
    %v6359 = vsel %vm4310, %v6358, %v6357
    %v6360 = vrot.slane %v6347, 1
    %v6361 = vsel %vm4313, %v6360, %v6359
    %v6362 = vpack.c.b16 %v6361, %v6361
    %v6363 = vrot.slane %v6340, 1
    %v6364 = vsel %vm4295, %v6341, %v6363
    %v6365 = vrot.slane %v6342, 7
    %v6366 = vsel %vm4298, %v6365, %v6364
    %v6367 = vrot.slane %v6343, 6
    %v6368 = vsel %vm4301, %v6367, %v6366
    %v6369 = vrot.slane %v6344, 5
    %v6370 = vsel %vm4304, %v6369, %v6368
    %v6371 = vrot.slane %v6345, 4
    %v6372 = vsel %vm4307, %v6371, %v6370
    %v6373 = vrot.slane %v6346, 3
    %v6374 = vsel %vm4310, %v6373, %v6372
    %v6375 = vrot.slane %v6347, 2
    %v6376 = vsel %vm4313, %v6375, %v6374
    %v6377 = vpack.c.b16 %v6376, %v6376
    %6378 = vrot.lane.b32.xlu0 %v6377, 64
    %v6379 = vpop.permute.xlu0 %6378
    %v6380 = vrot.slane %v6340, 2
    %v6381 = vrot.slane %v6341, 1
    %v6382 = vsel %vm4295, %v6381, %v6380
    %v6383 = vsel %vm4298, %v6342, %v6382
    %v6384 = vrot.slane %v6343, 7
    %v6385 = vsel %vm4301, %v6384, %v6383
    %v6386 = vrot.slane %v6344, 6
    %v6387 = vsel %vm4304, %v6386, %v6385
    %v6388 = vrot.slane %v6345, 5
    %v6389 = vsel %vm4307, %v6388, %v6387
    %v6390 = vrot.slane %v6346, 4
    %v6391 = vsel %vm4310, %v6390, %v6389
    %v6392 = vrot.slane %v6347, 3
    %v6393 = vsel %vm4313, %v6392, %v6391
    %v6394 = vpack.c.b16 %v6393, %v6393
    %v6395 = vrot.slane %v6340, 3
    %v6396 = vrot.slane %v6341, 2
    %v6397 = vsel %vm4295, %v6396, %v6395
    %v6398 = vrot.slane %v6342, 1
    %v6399 = vsel %vm4298, %v6398, %v6397
    %v6400 = vsel %vm4301, %v6343, %v6399
    %v6401 = vrot.slane %v6344, 7
    %v6402 = vsel %vm4304, %v6401, %v6400
    %v6403 = vrot.slane %v6345, 6
    %v6404 = vsel %vm4307, %v6403, %v6402
    %v6405 = vrot.slane %v6346, 5
    %v6406 = vsel %vm4310, %v6405, %v6404
    %v6407 = vrot.slane %v6347, 4
    %v6408 = vsel %vm4313, %v6407, %v6406
    %v6409 = vpack.c.b16 %v6408, %v6408
    %6410 = vrot.lane.b32.xlu0 %v6409, 64
    %v6411 = vpop.permute.xlu0 %6410
    %v6412 = vrot.slane %v6340, 4
    %v6413 = vrot.slane %v6341, 3
    %v6414 = vsel %vm4295, %v6413, %v6412
    %v6415 = vrot.slane %v6342, 2
    %v6416 = vsel %vm4298, %v6415, %v6414
    %v6417 = vrot.slane %v6343, 1
    %v6418 = vsel %vm4301, %v6417, %v6416
    %v6419 = vsel %vm4304, %v6344, %v6418
    %v6420 = vrot.slane %v6345, 7
    %v6421 = vsel %vm4307, %v6420, %v6419
    %v6422 = vrot.slane %v6346, 6
    %v6423 = vsel %vm4310, %v6422, %v6421
    %v6424 = vrot.slane %v6347, 5
    %v6425 = vsel %vm4313, %v6424, %v6423
    %v6426 = vpack.c.b16 %v6425, %v6425
    %v6427 = vrot.slane %v6340, 5
    %v6428 = vrot.slane %v6341, 4
    %v6429 = vsel %vm4295, %v6428, %v6427
    %v6430 = vrot.slane %v6342, 3
    %v6431 = vsel %vm4298, %v6430, %v6429
    %v6432 = vrot.slane %v6343, 2
    %v6433 = vsel %vm4301, %v6432, %v6431
    %v6434 = vrot.slane %v6344, 1
    %v6435 = vsel %vm4304, %v6434, %v6433
    %v6436 = vsel %vm4307, %v6345, %v6435
    %v6437 = vrot.slane %v6346, 7
    %v6438 = vsel %vm4310, %v6437, %v6436
    %v6439 = vrot.slane %v6347, 6
    %v6440 = vsel %vm4313, %v6439, %v6438
    %v6441 = vpack.c.b16 %v6440, %v6440
    %6442 = vrot.lane.b32.xlu0 %v6441, 64
    %v6443 = vpop.permute.xlu0 %6442
    %v6444 = vrot.slane %v6340, 6
    %v6445 = vrot.slane %v6341, 5
    %v6446 = vsel %vm4295, %v6445, %v6444
    %v6447 = vrot.slane %v6342, 4
    %v6448 = vsel %vm4298, %v6447, %v6446
    %v6449 = vrot.slane %v6343, 3
    %v6450 = vsel %vm4301, %v6449, %v6448
    %v6451 = vrot.slane %v6344, 2
    %v6452 = vsel %vm4304, %v6451, %v6450
    %v6453 = vrot.slane %v6345, 1
    %v6454 = vsel %vm4307, %v6453, %v6452
    %v6455 = vsel %vm4310, %v6346, %v6454
    %v6456 = vrot.slane %v6347, 7
    %v6457 = vsel %vm4313, %v6456, %v6455
    %v6458 = vpack.c.b16 %v6457, %v6457
    %v6459 = vrot.slane %v6340, 7
    %v6460 = vrot.slane %v6341, 6
    %v6461 = vsel %vm4295, %v6460, %v6459
    %v6462 = vrot.slane %v6342, 5
    %v6463 = vsel %vm4298, %v6462, %v6461
    %v6464 = vrot.slane %v6343, 4
    %v6465 = vsel %vm4301, %v6464, %v6463
    %v6466 = vrot.slane %v6344, 3
    %v6467 = vsel %vm4304, %v6466, %v6465
    %v6468 = vrot.slane %v6345, 2
    %v6469 = vsel %vm4307, %v6468, %v6467
    %v6470 = vrot.slane %v6346, 1
    %v6471 = vsel %vm4310, %v6470, %v6469
    %v6472 = vsel %vm4313, %v6347, %v6471
    %v6473 = vpack.c.b16 %v6472, %v6472
    %6474 = vrot.lane.b32.xlu0 %v6473, 64
    %v6475 = vpop.permute.xlu0 %6474
    %v6478 = vsel %vm4429, %v6362, %v6379
    %v6481 = vsel %vm4429, %v6394, %v6411
    %v6484 = vsel %vm4429, %v6426, %v6443
    %v6487 = vsel %vm4429, %v6458, %v6475
    %v6492 = vunpack.c.l.b16 %v6478
    %v6493 = vunpack.c.l.b16 %v6481
    %v6494 = vunpack.c.l.b16 %v6484
    %v6495 = vunpack.c.l.b16 %v6487
    %v6496 = vpack.c.b16 %v6493, %v6492
    %v6497 = vpack.c.b16 %v6495, %v6494
    %6500 = vst [vmem:[#allocation2 + $0xb0] sm:$0xff] %v6496
    %6501 = vst [vmem:[#allocation2 + $0xb8] sm:$0xff] %v6497
    %v6502 = vld [vmem:[#allocation2] sm:$0xff]
    %v6503 = vld [vmem:[#allocation2 + $0x8] sm:$0xff]
    %v6504 = vld [vmem:[#allocation2 + $0x10] sm:$0xff]
    %v6505 = vld [vmem:[#allocation2 + $0x18] sm:$0xff]
    %v6506 = vld [vmem:[#allocation2 + $0x20] sm:$0xff]
    %v6507 = vld [vmem:[#allocation2 + $0x28] sm:$0xff]
    %v6508 = vld [vmem:[#allocation2 + $0x30] sm:$0xff]
    %v6509 = vld [vmem:[#allocation2 + $0x38] sm:$0xff]
    %v6510 = vld [vmem:[#allocation2 + $0x40] sm:$0xff]
    %v6511 = vld [vmem:[#allocation2 + $0x48] sm:$0xff]
    %v6512 = vld [vmem:[#allocation2 + $0x50] sm:$0xff]
    %v6513 = vld [vmem:[#allocation2 + $0x58] sm:$0xff]
    %v6514 = vld [vmem:[#allocation2 + $0x60] sm:$0xff]
    %v6515 = vld [vmem:[#allocation2 + $0x68] sm:$0xff]
    %v6516 = vld [vmem:[#allocation2 + $0x70] sm:$0xff]
    %v6517 = vld [vmem:[#allocation2 + $0x78] sm:$0xff]
    %v6518 = vld [vmem:[#allocation2 + $0x80] sm:$0xff]
    %v6519 = vld [vmem:[#allocation2 + $0x88] sm:$0xff]
    %v6520 = vld [vmem:[#allocation2 + $0x90] sm:$0xff]
    %v6521 = vld [vmem:[#allocation2 + $0x98] sm:$0xff]
    %v6522 = vld [vmem:[#allocation2 + $0xa0] sm:$0xff]
    %v6523 = vld [vmem:[#allocation2 + $0xa8] sm:$0xff]
    %v6524 = vld [vmem:[#allocation2 + $0xb0] sm:$0xff]
    %v6525 = vld [vmem:[#allocation2 + $0xb8] sm:$0xff]
    %v6526 = vld [vmem:[%s5] sm:$0xf]
    %v6527 = vld [vmem:[%s5 + $0x4] sm:$0xf]
    %v6528 = vld [vmem:[%s5 + $0x8] sm:$0xf]
    %v6529 = vld [vmem:[%s5 + $0xc] sm:$0xf]
    %v6530 = vld [vmem:[%s5 + $0x10] sm:$0xf]
    %v6531 = vld [vmem:[%s5 + $0x14] sm:$0xf]
    %v6532 = vld [vmem:[%s5 + $0x18] sm:$0xf]
    %v6533 = vld [vmem:[%s5 + $0x1c] sm:$0xf]
    %v6534 = vld [vmem:[%s5 + $0x20] sm:$0xf]
    %v6535 = vld [vmem:[%s5 + $0x24] sm:$0xf]
    %v6536 = vld [vmem:[%s5 + $0x28] sm:$0xf]
    %v6537 = vld [vmem:[%s5 + $0x2c] sm:$0xf]
    %v6538 = vld [vmem:[%s5 + $0x30] sm:$0xf]
    %v6539 = vld [vmem:[%s5 + $0x34] sm:$0xf]
    %v6540 = vld [vmem:[%s5 + $0x38] sm:$0xf]
    %v6541 = vld [vmem:[%s5 + $0x3c] sm:$0xf]
    %v6542 = vld [vmem:[%s5 + $0x40] sm:$0xf]
    %v6543 = vld [vmem:[%s5 + $0x44] sm:$0xf]
    %v6544 = vld [vmem:[%s5 + $0x48] sm:$0xf]
    %v6545 = vld [vmem:[%s5 + $0x4c] sm:$0xf]
    %v6546 = vld [vmem:[%s5 + $0x50] sm:$0xf]
    %v6547 = vld [vmem:[%s5 + $0x54] sm:$0xf]
    %v6548 = vld [vmem:[%s5 + $0x58] sm:$0xf]
    %v6549 = vld [vmem:[%s5 + $0x5c] sm:$0xf]
    %v6550 = vld [vmem:[%s5 + $0x60] sm:$0xf]
    %v6551 = vld [vmem:[%s5 + $0x64] sm:$0xf]
    %v6552 = vld [vmem:[%s5 + $0x68] sm:$0xf]
    %v6553 = vld [vmem:[%s5 + $0x6c] sm:$0xf]
    %v6554 = vld [vmem:[%s5 + $0x70] sm:$0xf]
    %v6555 = vld [vmem:[%s5 + $0x74] sm:$0xf]
    %v6556 = vld [vmem:[%s5 + $0x78] sm:$0xf]
    %v6557 = vld [vmem:[%s5 + $0x7c] sm:$0xf]
    %v6558 = vld [vmem:[%s5 + $0x80] sm:$0xf]
    %v6559 = vld [vmem:[%s5 + $0x84] sm:$0xf]
    %v6560 = vld [vmem:[%s5 + $0x88] sm:$0xf]
    %v6561 = vld [vmem:[%s5 + $0x8c] sm:$0xf]
    %v6562 = vld [vmem:[%s5 + $0x90] sm:$0xf]
    %v6563 = vld [vmem:[%s5 + $0x94] sm:$0xf]
    %v6564 = vld [vmem:[%s5 + $0x98] sm:$0xf]
    %v6565 = vld [vmem:[%s5 + $0x9c] sm:$0xf]
    %v6566 = vld [vmem:[%s5 + $0xa0] sm:$0xf]
    %v6567 = vld [vmem:[%s5 + $0xa4] sm:$0xf]
    %v6568 = vld [vmem:[%s5 + $0xa8] sm:$0xf]
    %v6569 = vld [vmem:[%s5 + $0xac] sm:$0xf]
    %v6570 = vld [vmem:[%s5 + $0xb0] sm:$0xf]
    %v6571 = vld [vmem:[%s5 + $0xb4] sm:$0xf]
    %v6572 = vld [vmem:[%s5 + $0xb8] sm:$0xf]
    %v6573 = vld [vmem:[%s5 + $0xbc] sm:$0xf]
    %v6574 = vld [vmem:[%s5 + $0xc0] sm:$0xf]
    %v6575 = vld [vmem:[%s5 + $0xc4] sm:$0xf]
    %v6576 = vld [vmem:[%s5 + $0xc8] sm:$0xf]
    %v6577 = vld [vmem:[%s5 + $0xcc] sm:$0xf]
    %v6578 = vld [vmem:[%s5 + $0xd0] sm:$0xf]
    %v6579 = vld [vmem:[%s5 + $0xd4] sm:$0xf]
    %v6580 = vld [vmem:[%s5 + $0xd8] sm:$0xf]
    %v6581 = vld [vmem:[%s5 + $0xdc] sm:$0xf]
    %v6582 = vld [vmem:[%s5 + $0xe0] sm:$0xf]
    %v6583 = vld [vmem:[%s5 + $0xe4] sm:$0xf]
    %v6584 = vld [vmem:[%s5 + $0xe8] sm:$0xf]
    %v6585 = vld [vmem:[%s5 + $0xec] sm:$0xf]
    %v6586 = vld [vmem:[%s5 + $0xf0] sm:$0xf]
    %v6587 = vld [vmem:[%s5 + $0xf4] sm:$0xf]
    %v6588 = vld [vmem:[%s5 + $0xf8] sm:$0xf]
    %v6589 = vld [vmem:[%s5 + $0xfc] sm:$0xf]
    %v6590 = vld [vmem:[%s5 + $0x100] sm:$0xf]
    %v6591 = vld [vmem:[%s5 + $0x104] sm:$0xf]
    %v6592 = vld [vmem:[%s5 + $0x108] sm:$0xf]
    %v6593 = vld [vmem:[%s5 + $0x10c] sm:$0xf]
    %v6594 = vld [vmem:[%s5 + $0x110] sm:$0xf]
    %v6595 = vld [vmem:[%s5 + $0x114] sm:$0xf]
    %v6596 = vld [vmem:[%s5 + $0x118] sm:$0xf]
    %v6597 = vld [vmem:[%s5 + $0x11c] sm:$0xf]
    %v6598 = vld [vmem:[%s5 + $0x120] sm:$0xf]
    %v6599 = vld [vmem:[%s5 + $0x124] sm:$0xf]
    %v6600 = vld [vmem:[%s5 + $0x128] sm:$0xf]
    %v6601 = vld [vmem:[%s5 + $0x12c] sm:$0xf]
    %v6602 = vld [vmem:[%s5 + $0x130] sm:$0xf]
    %v6603 = vld [vmem:[%s5 + $0x134] sm:$0xf]
    %v6604 = vld [vmem:[%s5 + $0x138] sm:$0xf]
    %v6605 = vld [vmem:[%s5 + $0x13c] sm:$0xf]
    %v6606 = vld [vmem:[%s5 + $0x140] sm:$0xf]
    %v6607 = vld [vmem:[%s5 + $0x144] sm:$0xf]
    %v6608 = vld [vmem:[%s5 + $0x148] sm:$0xf]
    %v6609 = vld [vmem:[%s5 + $0x14c] sm:$0xf]
    %v6610 = vld [vmem:[%s5 + $0x150] sm:$0xf]
    %v6611 = vld [vmem:[%s5 + $0x154] sm:$0xf]
    %v6612 = vld [vmem:[%s5 + $0x158] sm:$0xf]
    %v6613 = vld [vmem:[%s5 + $0x15c] sm:$0xf]
    %v6614 = vld [vmem:[%s5 + $0x160] sm:$0xf]
    %v6615 = vld [vmem:[%s5 + $0x164] sm:$0xf]
    %v6616 = vld [vmem:[%s5 + $0x168] sm:$0xf]
    %v6617 = vld [vmem:[%s5 + $0x16c] sm:$0xf]
    %v6618 = vld [vmem:[%s5 + $0x170] sm:$0xf]
    %v6619 = vld [vmem:[%s5 + $0x174] sm:$0xf]
    %v6620 = vld [vmem:[%s5 + $0x178] sm:$0xf]
    %v6621 = vld [vmem:[%s5 + $0x17c] sm:$0xf]
    %v6622 = vld [vmem:[%s5 + $0x180] sm:$0xf]
    %v6623 = vld [vmem:[%s5 + $0x184] sm:$0xf]
    %v6624 = vld [vmem:[%s5 + $0x188] sm:$0xf]
    %v6625 = vld [vmem:[%s5 + $0x18c] sm:$0xf]
    %v6626 = vld [vmem:[%s5 + $0x190] sm:$0xf]
    %v6627 = vld [vmem:[%s5 + $0x194] sm:$0xf]
    %v6628 = vld [vmem:[%s5 + $0x198] sm:$0xf]
    %v6629 = vld [vmem:[%s5 + $0x19c] sm:$0xf]
    %v6630 = vld [vmem:[%s5 + $0x1a0] sm:$0xf]
    %v6631 = vld [vmem:[%s5 + $0x1a4] sm:$0xf]
    %v6632 = vld [vmem:[%s5 + $0x1a8] sm:$0xf]
    %v6633 = vld [vmem:[%s5 + $0x1ac] sm:$0xf]
    %v6634 = vld [vmem:[%s5 + $0x1b0] sm:$0xf]
    %v6635 = vld [vmem:[%s5 + $0x1b4] sm:$0xf]
    %v6636 = vld [vmem:[%s5 + $0x1b8] sm:$0xf]
    %v6637 = vld [vmem:[%s5 + $0x1bc] sm:$0xf]
    %v6638 = vld [vmem:[%s5 + $0x1c0] sm:$0xf]
    %v6639 = vld [vmem:[%s5 + $0x1c4] sm:$0xf]
    %v6640 = vld [vmem:[%s5 + $0x1c8] sm:$0xf]
    %v6641 = vld [vmem:[%s5 + $0x1cc] sm:$0xf]
    %v6642 = vld [vmem:[%s5 + $0x1d0] sm:$0xf]
    %v6643 = vld [vmem:[%s5 + $0x1d4] sm:$0xf]
    %v6644 = vld [vmem:[%s5 + $0x1d8] sm:$0xf]
    %v6645 = vld [vmem:[%s5 + $0x1dc] sm:$0xf]
    %v6646 = vld [vmem:[%s5 + $0x1e0] sm:$0xf]
    %v6647 = vld [vmem:[%s5 + $0x1e4] sm:$0xf]
    %v6648 = vld [vmem:[%s5 + $0x1e8] sm:$0xf]
    %v6649 = vld [vmem:[%s5 + $0x1ec] sm:$0xf]
    %v6650 = vld [vmem:[%s5 + $0x1f0] sm:$0xf]
    %v6651 = vld [vmem:[%s5 + $0x1f4] sm:$0xf]
    %v6652 = vld [vmem:[%s5 + $0x1f8] sm:$0xf]
    %v6653 = vld [vmem:[%s5 + $0x1fc] sm:$0xf]
    %v6654 = vld [vmem:[%s5 + $0x200] sm:$0xf]
    %v6655 = vld [vmem:[%s5 + $0x204] sm:$0xf]
    %v6656 = vld [vmem:[%s5 + $0x208] sm:$0xf]
    %v6657 = vld [vmem:[%s5 + $0x20c] sm:$0xf]
    %v6658 = vld [vmem:[%s5 + $0x210] sm:$0xf]
    %v6659 = vld [vmem:[%s5 + $0x214] sm:$0xf]
    %v6660 = vld [vmem:[%s5 + $0x218] sm:$0xf]
    %v6661 = vld [vmem:[%s5 + $0x21c] sm:$0xf]
    %v6662 = vld [vmem:[%s5 + $0x220] sm:$0xf]
    %v6663 = vld [vmem:[%s5 + $0x224] sm:$0xf]
    %v6664 = vld [vmem:[%s5 + $0x228] sm:$0xf]
    %v6665 = vld [vmem:[%s5 + $0x22c] sm:$0xf]
    %v6666 = vld [vmem:[%s5 + $0x230] sm:$0xf]
    %v6667 = vld [vmem:[%s5 + $0x234] sm:$0xf]
    %v6668 = vld [vmem:[%s5 + $0x238] sm:$0xf]
    %v6669 = vld [vmem:[%s5 + $0x23c] sm:$0xf]
    %v6670 = vld [vmem:[%s5 + $0x240] sm:$0xf]
    %v6671 = vld [vmem:[%s5 + $0x244] sm:$0xf]
    %v6672 = vld [vmem:[%s5 + $0x248] sm:$0xf]
    %v6673 = vld [vmem:[%s5 + $0x24c] sm:$0xf]
    %v6674 = vld [vmem:[%s5 + $0x250] sm:$0xf]
    %v6675 = vld [vmem:[%s5 + $0x254] sm:$0xf]
    %v6676 = vld [vmem:[%s5 + $0x258] sm:$0xf]
    %v6677 = vld [vmem:[%s5 + $0x25c] sm:$0xf]
    %v6678 = vld [vmem:[%s5 + $0x260] sm:$0xf]
    %v6679 = vld [vmem:[%s5 + $0x264] sm:$0xf]
    %v6680 = vld [vmem:[%s5 + $0x268] sm:$0xf]
    %v6681 = vld [vmem:[%s5 + $0x26c] sm:$0xf]
    %v6682 = vld [vmem:[%s5 + $0x270] sm:$0xf]
    %v6683 = vld [vmem:[%s5 + $0x274] sm:$0xf]
    %v6684 = vld [vmem:[%s5 + $0x278] sm:$0xf]
    %v6685 = vld [vmem:[%s5 + $0x27c] sm:$0xf]
    %v6686 = vld [vmem:[%s5 + $0x280] sm:$0xf]
    %v6687 = vld [vmem:[%s5 + $0x284] sm:$0xf]
    %v6688 = vld [vmem:[%s5 + $0x288] sm:$0xf]
    %v6689 = vld [vmem:[%s5 + $0x28c] sm:$0xf]
    %v6690 = vld [vmem:[%s5 + $0x290] sm:$0xf]
    %v6691 = vld [vmem:[%s5 + $0x294] sm:$0xf]
    %v6692 = vld [vmem:[%s5 + $0x298] sm:$0xf]
    %v6693 = vld [vmem:[%s5 + $0x29c] sm:$0xf]
    %v6694 = vld [vmem:[%s5 + $0x2a0] sm:$0xf]
    %v6695 = vld [vmem:[%s5 + $0x2a4] sm:$0xf]
    %v6696 = vld [vmem:[%s5 + $0x2a8] sm:$0xf]
    %v6697 = vld [vmem:[%s5 + $0x2ac] sm:$0xf]
    %v6698 = vld [vmem:[%s5 + $0x2b0] sm:$0xf]
    %v6699 = vld [vmem:[%s5 + $0x2b4] sm:$0xf]
    %v6700 = vld [vmem:[%s5 + $0x2b8] sm:$0xf]
    %v6701 = vld [vmem:[%s5 + $0x2bc] sm:$0xf]
    %v6702 = vld [vmem:[%s5 + $0x2c0] sm:$0xf]
    %v6703 = vld [vmem:[%s5 + $0x2c4] sm:$0xf]
    %v6704 = vld [vmem:[%s5 + $0x2c8] sm:$0xf]
    %v6705 = vld [vmem:[%s5 + $0x2cc] sm:$0xf]
    %v6706 = vld [vmem:[%s5 + $0x2d0] sm:$0xf]
    %v6707 = vld [vmem:[%s5 + $0x2d4] sm:$0xf]
    %v6708 = vld [vmem:[%s5 + $0x2d8] sm:$0xf]
    %v6709 = vld [vmem:[%s5 + $0x2dc] sm:$0xf]
    %v6710 = vld [vmem:[%s5 + $0x2e0] sm:$0xf]
    %v6711 = vld [vmem:[%s5 + $0x2e4] sm:$0xf]
    %v6712 = vld [vmem:[%s5 + $0x2e8] sm:$0xf]
    %v6713 = vld [vmem:[%s5 + $0x2ec] sm:$0xf]
    %v6714 = vld [vmem:[%s5 + $0x2f0] sm:$0xf]
    %v6715 = vld [vmem:[%s5 + $0x2f4] sm:$0xf]
    %v6716 = vld [vmem:[%s5 + $0x2f8] sm:$0xf]
    %v6717 = vld [vmem:[%s5 + $0x2fc] sm:$0xf]
    %v6718 = vld [vmem:[%s5 + $0x300] sm:$0xf]
    %v6719 = vld [vmem:[%s5 + $0x304] sm:$0xf]
    %v6720 = vld [vmem:[%s5 + $0x308] sm:$0xf]
    %v6721 = vld [vmem:[%s5 + $0x30c] sm:$0xf]
    %v6722 = vld [vmem:[%s5 + $0x310] sm:$0xf]
    %v6723 = vld [vmem:[%s5 + $0x314] sm:$0xf]
    %v6724 = vld [vmem:[%s5 + $0x318] sm:$0xf]
    %v6725 = vld [vmem:[%s5 + $0x31c] sm:$0xf]
    %v6726 = vld [vmem:[%s5 + $0x320] sm:$0xf]
    %v6727 = vld [vmem:[%s5 + $0x324] sm:$0xf]
    %v6728 = vld [vmem:[%s5 + $0x328] sm:$0xf]
    %v6729 = vld [vmem:[%s5 + $0x32c] sm:$0xf]
    %v6730 = vld [vmem:[%s5 + $0x330] sm:$0xf]
    %v6731 = vld [vmem:[%s5 + $0x334] sm:$0xf]
    %v6732 = vld [vmem:[%s5 + $0x338] sm:$0xf]
    %v6733 = vld [vmem:[%s5 + $0x33c] sm:$0xf]
    %v6734 = vld [vmem:[%s5 + $0x340] sm:$0xf]
    %v6735 = vld [vmem:[%s5 + $0x344] sm:$0xf]
    %v6736 = vld [vmem:[%s5 + $0x348] sm:$0xf]
    %v6737 = vld [vmem:[%s5 + $0x34c] sm:$0xf]
    %v6738 = vld [vmem:[%s5 + $0x350] sm:$0xf]
    %v6739 = vld [vmem:[%s5 + $0x354] sm:$0xf]
    %v6740 = vld [vmem:[%s5 + $0x358] sm:$0xf]
    %v6741 = vld [vmem:[%s5 + $0x35c] sm:$0xf]
    %v6742 = vld [vmem:[%s5 + $0x360] sm:$0xf]
    %v6743 = vld [vmem:[%s5 + $0x364] sm:$0xf]
    %v6744 = vld [vmem:[%s5 + $0x368] sm:$0xf]
    %v6745 = vld [vmem:[%s5 + $0x36c] sm:$0xf]
    %v6746 = vld [vmem:[%s5 + $0x370] sm:$0xf]
    %v6747 = vld [vmem:[%s5 + $0x374] sm:$0xf]
    %v6748 = vld [vmem:[%s5 + $0x378] sm:$0xf]
    %v6749 = vld [vmem:[%s5 + $0x37c] sm:$0xf]
    %v6750 = vld [vmem:[%s5 + $0x380] sm:$0xf]
    %v6751 = vld [vmem:[%s5 + $0x384] sm:$0xf]
    %v6752 = vld [vmem:[%s5 + $0x388] sm:$0xf]
    %v6753 = vld [vmem:[%s5 + $0x38c] sm:$0xf]
    %v6754 = vld [vmem:[%s5 + $0x390] sm:$0xf]
    %v6755 = vld [vmem:[%s5 + $0x394] sm:$0xf]
    %v6756 = vld [vmem:[%s5 + $0x398] sm:$0xf]
    %v6757 = vld [vmem:[%s5 + $0x39c] sm:$0xf]
    %v6758 = vld [vmem:[%s5 + $0x3a0] sm:$0xf]
    %v6759 = vld [vmem:[%s5 + $0x3a4] sm:$0xf]
    %v6760 = vld [vmem:[%s5 + $0x3a8] sm:$0xf]
    %v6761 = vld [vmem:[%s5 + $0x3ac] sm:$0xf]
    %v6762 = vld [vmem:[%s5 + $0x3b0] sm:$0xf]
    %v6763 = vld [vmem:[%s5 + $0x3b4] sm:$0xf]
    %v6764 = vld [vmem:[%s5 + $0x3b8] sm:$0xf]
    %v6765 = vld [vmem:[%s5 + $0x3bc] sm:$0xf]
    %v6766 = vld [vmem:[%s5 + $0x3c0] sm:$0xf]
    %v6767 = vld [vmem:[%s5 + $0x3c4] sm:$0xf]
    %v6768 = vld [vmem:[%s5 + $0x3c8] sm:$0xf]
    %v6769 = vld [vmem:[%s5 + $0x3cc] sm:$0xf]
    %v6770 = vld [vmem:[%s5 + $0x3d0] sm:$0xf]
    %v6771 = vld [vmem:[%s5 + $0x3d4] sm:$0xf]
    %v6772 = vld [vmem:[%s5 + $0x3d8] sm:$0xf]
    %v6773 = vld [vmem:[%s5 + $0x3dc] sm:$0xf]
    %v6774 = vld [vmem:[%s5 + $0x3e0] sm:$0xf]
    %v6775 = vld [vmem:[%s5 + $0x3e4] sm:$0xf]
    %v6776 = vld [vmem:[%s5 + $0x3e8] sm:$0xf]
    %v6777 = vld [vmem:[%s5 + $0x3ec] sm:$0xf]
    %v6778 = vld [vmem:[%s5 + $0x3f0] sm:$0xf]
    %v6779 = vld [vmem:[%s5 + $0x3f4] sm:$0xf]
    %v6780 = vld [vmem:[%s5 + $0x3f8] sm:$0xf]
    %v6781 = vld [vmem:[%s5 + $0x3fc] sm:$0xf]
    %v6782 = vld [vmem:[%s5 + $0x400] sm:$0xf]
    %v6783 = vld [vmem:[%s5 + $0x404] sm:$0xf]
    %v6784 = vld [vmem:[%s5 + $0x408] sm:$0xf]
    %v6785 = vld [vmem:[%s5 + $0x40c] sm:$0xf]
    %v6786 = vld [vmem:[%s5 + $0x410] sm:$0xf]
    %v6787 = vld [vmem:[%s5 + $0x414] sm:$0xf]
    %v6788 = vld [vmem:[%s5 + $0x418] sm:$0xf]
    %v6789 = vld [vmem:[%s5 + $0x41c] sm:$0xf]
    %v6790 = vld [vmem:[%s5 + $0x420] sm:$0xf]
    %v6791 = vld [vmem:[%s5 + $0x424] sm:$0xf]
    %v6792 = vld [vmem:[%s5 + $0x428] sm:$0xf]
    %v6793 = vld [vmem:[%s5 + $0x42c] sm:$0xf]
    %v6794 = vld [vmem:[%s5 + $0x430] sm:$0xf]
    %v6795 = vld [vmem:[%s5 + $0x434] sm:$0xf]
    %v6796 = vld [vmem:[%s5 + $0x438] sm:$0xf]
    %v6797 = vld [vmem:[%s5 + $0x43c] sm:$0xf]
    %v6798 = vld [vmem:[%s5 + $0x440] sm:$0xf]
    %v6799 = vld [vmem:[%s5 + $0x444] sm:$0xf]
    %v6800 = vld [vmem:[%s5 + $0x448] sm:$0xf]
    %v6801 = vld [vmem:[%s5 + $0x44c] sm:$0xf]
    %v6802 = vld [vmem:[%s5 + $0x450] sm:$0xf]
    %v6803 = vld [vmem:[%s5 + $0x454] sm:$0xf]
    %v6804 = vld [vmem:[%s5 + $0x458] sm:$0xf]
    %v6805 = vld [vmem:[%s5 + $0x45c] sm:$0xf]
    %v6806 = vld [vmem:[%s5 + $0x460] sm:$0xf]
    %v6807 = vld [vmem:[%s5 + $0x464] sm:$0xf]
    %v6808 = vld [vmem:[%s5 + $0x468] sm:$0xf]
    %v6809 = vld [vmem:[%s5 + $0x46c] sm:$0xf]
    %v6810 = vld [vmem:[%s5 + $0x470] sm:$0xf]
    %v6811 = vld [vmem:[%s5 + $0x474] sm:$0xf]
    %v6812 = vld [vmem:[%s5 + $0x478] sm:$0xf]
    %v6813 = vld [vmem:[%s5 + $0x47c] sm:$0xf]
    %v6814 = vld [vmem:[%s5 + $0x480] sm:$0xf]
    %v6815 = vld [vmem:[%s5 + $0x484] sm:$0xf]
    %v6816 = vld [vmem:[%s5 + $0x488] sm:$0xf]
    %v6817 = vld [vmem:[%s5 + $0x48c] sm:$0xf]
    %v6818 = vld [vmem:[%s5 + $0x490] sm:$0xf]
    %v6819 = vld [vmem:[%s5 + $0x494] sm:$0xf]
    %v6820 = vld [vmem:[%s5 + $0x498] sm:$0xf]
    %v6821 = vld [vmem:[%s5 + $0x49c] sm:$0xf]
    %v6822 = vld [vmem:[%s5 + $0x4a0] sm:$0xf]
    %v6823 = vld [vmem:[%s5 + $0x4a4] sm:$0xf]
    %v6824 = vld [vmem:[%s5 + $0x4a8] sm:$0xf]
    %v6825 = vld [vmem:[%s5 + $0x4ac] sm:$0xf]
    %v6826 = vld [vmem:[%s5 + $0x4b0] sm:$0xf]
    %v6827 = vld [vmem:[%s5 + $0x4b4] sm:$0xf]
    %v6828 = vld [vmem:[%s5 + $0x4b8] sm:$0xf]
    %v6829 = vld [vmem:[%s5 + $0x4bc] sm:$0xf]
    %v6830 = vld [vmem:[%s5 + $0x4c0] sm:$0xf]
    %v6831 = vld [vmem:[%s5 + $0x4c4] sm:$0xf]
    %v6832 = vld [vmem:[%s5 + $0x4c8] sm:$0xf]
    %v6833 = vld [vmem:[%s5 + $0x4cc] sm:$0xf]
    %v6834 = vld [vmem:[%s5 + $0x4d0] sm:$0xf]
    %v6835 = vld [vmem:[%s5 + $0x4d4] sm:$0xf]
    %v6836 = vld [vmem:[%s5 + $0x4d8] sm:$0xf]
    %v6837 = vld [vmem:[%s5 + $0x4dc] sm:$0xf]
    %v6838 = vld [vmem:[%s5 + $0x4e0] sm:$0xf]
    %v6839 = vld [vmem:[%s5 + $0x4e4] sm:$0xf]
    %v6840 = vld [vmem:[%s5 + $0x4e8] sm:$0xf]
    %v6841 = vld [vmem:[%s5 + $0x4ec] sm:$0xf]
    %v6842 = vld [vmem:[%s5 + $0x4f0] sm:$0xf]
    %v6843 = vld [vmem:[%s5 + $0x4f4] sm:$0xf]
    %v6844 = vld [vmem:[%s5 + $0x4f8] sm:$0xf]
    %v6845 = vld [vmem:[%s5 + $0x4fc] sm:$0xf]
    %v6846 = vld [vmem:[%s5 + $0x500] sm:$0xf]
    %v6847 = vld [vmem:[%s5 + $0x504] sm:$0xf]
    %v6848 = vld [vmem:[%s5 + $0x508] sm:$0xf]
    %v6849 = vld [vmem:[%s5 + $0x50c] sm:$0xf]
    %v6850 = vld [vmem:[%s5 + $0x510] sm:$0xf]
    %v6851 = vld [vmem:[%s5 + $0x514] sm:$0xf]
    %v6852 = vld [vmem:[%s5 + $0x518] sm:$0xf]
    %v6853 = vld [vmem:[%s5 + $0x51c] sm:$0xf]
    %v6854 = vld [vmem:[%s5 + $0x520] sm:$0xf]
    %v6855 = vld [vmem:[%s5 + $0x524] sm:$0xf]
    %v6856 = vld [vmem:[%s5 + $0x528] sm:$0xf]
    %v6857 = vld [vmem:[%s5 + $0x52c] sm:$0xf]
    %v6858 = vld [vmem:[%s5 + $0x530] sm:$0xf]
    %v6859 = vld [vmem:[%s5 + $0x534] sm:$0xf]
    %v6860 = vld [vmem:[%s5 + $0x538] sm:$0xf]
    %v6861 = vld [vmem:[%s5 + $0x53c] sm:$0xf]
    %v6862 = vld [vmem:[%s5 + $0x540] sm:$0xf]
    %v6863 = vld [vmem:[%s5 + $0x544] sm:$0xf]
    %v6864 = vld [vmem:[%s5 + $0x548] sm:$0xf]
    %v6865 = vld [vmem:[%s5 + $0x54c] sm:$0xf]
    %v6866 = vld [vmem:[%s5 + $0x550] sm:$0xf]
    %v6867 = vld [vmem:[%s5 + $0x554] sm:$0xf]
    %v6868 = vld [vmem:[%s5 + $0x558] sm:$0xf]
    %v6869 = vld [vmem:[%s5 + $0x55c] sm:$0xf]
    %v6870 = vld [vmem:[%s5 + $0x560] sm:$0xf]
    %v6871 = vld [vmem:[%s5 + $0x564] sm:$0xf]
    %v6872 = vld [vmem:[%s5 + $0x568] sm:$0xf]
    %v6873 = vld [vmem:[%s5 + $0x56c] sm:$0xf]
    %v6874 = vld [vmem:[%s5 + $0x570] sm:$0xf]
    %v6875 = vld [vmem:[%s5 + $0x574] sm:$0xf]
    %v6876 = vld [vmem:[%s5 + $0x578] sm:$0xf]
    %v6877 = vld [vmem:[%s5 + $0x57c] sm:$0xf]
    %v6878 = vld [vmem:[%s5 + $0x580] sm:$0xf]
    %v6879 = vld [vmem:[%s5 + $0x584] sm:$0xf]
    %v6880 = vld [vmem:[%s5 + $0x588] sm:$0xf]
    %v6881 = vld [vmem:[%s5 + $0x58c] sm:$0xf]
    %v6882 = vld [vmem:[%s5 + $0x590] sm:$0xf]
    %v6883 = vld [vmem:[%s5 + $0x594] sm:$0xf]
    %v6884 = vld [vmem:[%s5 + $0x598] sm:$0xf]
    %v6885 = vld [vmem:[%s5 + $0x59c] sm:$0xf]
    %v6886 = vld [vmem:[%s5 + $0x5a0] sm:$0xf]
    %v6887 = vld [vmem:[%s5 + $0x5a4] sm:$0xf]
    %v6888 = vld [vmem:[%s5 + $0x5a8] sm:$0xf]
    %v6889 = vld [vmem:[%s5 + $0x5ac] sm:$0xf]
    %v6890 = vld [vmem:[%s5 + $0x5b0] sm:$0xf]
    %v6891 = vld [vmem:[%s5 + $0x5b4] sm:$0xf]
    %v6892 = vld [vmem:[%s5 + $0x5b8] sm:$0xf]
    %v6893 = vld [vmem:[%s5 + $0x5bc] sm:$0xf]
    %v6894 = vld [vmem:[%s5 + $0x5c0] sm:$0xf]
    %v6895 = vld [vmem:[%s5 + $0x5c4] sm:$0xf]
    %v6896 = vld [vmem:[%s5 + $0x5c8] sm:$0xf]
    %v6897 = vld [vmem:[%s5 + $0x5cc] sm:$0xf]
    %v6898 = vld [vmem:[%s5 + $0x5d0] sm:$0xf]
    %v6899 = vld [vmem:[%s5 + $0x5d4] sm:$0xf]
    %v6900 = vld [vmem:[%s5 + $0x5d8] sm:$0xf]
    %v6901 = vld [vmem:[%s5 + $0x5dc] sm:$0xf]
    %v6902 = vld [vmem:[%s5 + $0x5e0] sm:$0xf]
    %v6903 = vld [vmem:[%s5 + $0x5e4] sm:$0xf]
    %v6904 = vld [vmem:[%s5 + $0x5e8] sm:$0xf]
    %v6905 = vld [vmem:[%s5 + $0x5ec] sm:$0xf]
    %v6906 = vld [vmem:[%s5 + $0x5f0] sm:$0xf]
    %v6907 = vld [vmem:[%s5 + $0x5f4] sm:$0xf]
    %v6908 = vld [vmem:[%s5 + $0x5f8] sm:$0xf]
    %v6909 = vld [vmem:[%s5 + $0x5fc] sm:$0xf]
    %v6910 = vld [vmem:[%s5 + $0x600] sm:$0xf]
    %v6911 = vld [vmem:[%s5 + $0x604] sm:$0xf]
    %v6912 = vld [vmem:[%s5 + $0x608] sm:$0xf]
    %v6913 = vld [vmem:[%s5 + $0x60c] sm:$0xf]
    %v6914 = vld [vmem:[%s5 + $0x610] sm:$0xf]
    %v6915 = vld [vmem:[%s5 + $0x614] sm:$0xf]
    %v6916 = vld [vmem:[%s5 + $0x618] sm:$0xf]
    %v6917 = vld [vmem:[%s5 + $0x61c] sm:$0xf]
    %v6918 = vld [vmem:[%s5 + $0x620] sm:$0xf]
    %v6919 = vld [vmem:[%s5 + $0x624] sm:$0xf]
    %v6920 = vld [vmem:[%s5 + $0x628] sm:$0xf]
    %v6921 = vld [vmem:[%s5 + $0x62c] sm:$0xf]
    %v6922 = vld [vmem:[%s5 + $0x630] sm:$0xf]
    %v6923 = vld [vmem:[%s5 + $0x634] sm:$0xf]
    %v6924 = vld [vmem:[%s5 + $0x638] sm:$0xf]
    %v6925 = vld [vmem:[%s5 + $0x63c] sm:$0xf]
    %v6926 = vld [vmem:[%s5 + $0x640] sm:$0xf]
    %v6927 = vld [vmem:[%s5 + $0x644] sm:$0xf]
    %v6928 = vld [vmem:[%s5 + $0x648] sm:$0xf]
    %v6929 = vld [vmem:[%s5 + $0x64c] sm:$0xf]
    %v6930 = vld [vmem:[%s5 + $0x650] sm:$0xf]
    %v6931 = vld [vmem:[%s5 + $0x654] sm:$0xf]
    %v6932 = vld [vmem:[%s5 + $0x658] sm:$0xf]
    %v6933 = vld [vmem:[%s5 + $0x65c] sm:$0xf]
    %v6934 = vld [vmem:[%s5 + $0x660] sm:$0xf]
    %v6935 = vld [vmem:[%s5 + $0x664] sm:$0xf]
    %v6936 = vld [vmem:[%s5 + $0x668] sm:$0xf]
    %v6937 = vld [vmem:[%s5 + $0x66c] sm:$0xf]
    %v6938 = vld [vmem:[%s5 + $0x670] sm:$0xf]
    %v6939 = vld [vmem:[%s5 + $0x674] sm:$0xf]
    %v6940 = vld [vmem:[%s5 + $0x678] sm:$0xf]
    %v6941 = vld [vmem:[%s5 + $0x67c] sm:$0xf]
    %v6942 = vld [vmem:[%s5 + $0x680] sm:$0xf]
    %v6943 = vld [vmem:[%s5 + $0x684] sm:$0xf]
    %v6944 = vld [vmem:[%s5 + $0x688] sm:$0xf]
    %v6945 = vld [vmem:[%s5 + $0x68c] sm:$0xf]
    %v6946 = vld [vmem:[%s5 + $0x690] sm:$0xf]
    %v6947 = vld [vmem:[%s5 + $0x694] sm:$0xf]
    %v6948 = vld [vmem:[%s5 + $0x698] sm:$0xf]
    %v6949 = vld [vmem:[%s5 + $0x69c] sm:$0xf]
    %v6950 = vld [vmem:[%s5 + $0x6a0] sm:$0xf]
    %v6951 = vld [vmem:[%s5 + $0x6a4] sm:$0xf]
    %v6952 = vld [vmem:[%s5 + $0x6a8] sm:$0xf]
    %v6953 = vld [vmem:[%s5 + $0x6ac] sm:$0xf]
    %v6954 = vld [vmem:[%s5 + $0x6b0] sm:$0xf]
    %v6955 = vld [vmem:[%s5 + $0x6b4] sm:$0xf]
    %v6956 = vld [vmem:[%s5 + $0x6b8] sm:$0xf]
    %v6957 = vld [vmem:[%s5 + $0x6bc] sm:$0xf]
    %v6958 = vld [vmem:[%s5 + $0x6c0] sm:$0xf]
    %v6959 = vld [vmem:[%s5 + $0x6c4] sm:$0xf]
    %v6960 = vld [vmem:[%s5 + $0x6c8] sm:$0xf]
    %v6961 = vld [vmem:[%s5 + $0x6cc] sm:$0xf]
    %v6962 = vld [vmem:[%s5 + $0x6d0] sm:$0xf]
    %v6963 = vld [vmem:[%s5 + $0x6d4] sm:$0xf]
    %v6964 = vld [vmem:[%s5 + $0x6d8] sm:$0xf]
    %v6965 = vld [vmem:[%s5 + $0x6dc] sm:$0xf]
    %v6966 = vld [vmem:[%s5 + $0x6e0] sm:$0xf]
    %v6967 = vld [vmem:[%s5 + $0x6e4] sm:$0xf]
    %v6968 = vld [vmem:[%s5 + $0x6e8] sm:$0xf]
    %v6969 = vld [vmem:[%s5 + $0x6ec] sm:$0xf]
    %v6970 = vld [vmem:[%s5 + $0x6f0] sm:$0xf]
    %v6971 = vld [vmem:[%s5 + $0x6f4] sm:$0xf]
    %v6972 = vld [vmem:[%s5 + $0x6f8] sm:$0xf]
    %v6973 = vld [vmem:[%s5 + $0x6fc] sm:$0xf]
    %v6974 = vld [vmem:[%s5 + $0x700] sm:$0xf]
    %v6975 = vld [vmem:[%s5 + $0x704] sm:$0xf]
    %v6976 = vld [vmem:[%s5 + $0x708] sm:$0xf]
    %v6977 = vld [vmem:[%s5 + $0x70c] sm:$0xf]
    %v6978 = vld [vmem:[%s5 + $0x710] sm:$0xf]
    %v6979 = vld [vmem:[%s5 + $0x714] sm:$0xf]
    %v6980 = vld [vmem:[%s5 + $0x718] sm:$0xf]
    %v6981 = vld [vmem:[%s5 + $0x71c] sm:$0xf]
    %v6982 = vld [vmem:[%s5 + $0x720] sm:$0xf]
    %v6983 = vld [vmem:[%s5 + $0x724] sm:$0xf]
    %v6984 = vld [vmem:[%s5 + $0x728] sm:$0xf]
    %v6985 = vld [vmem:[%s5 + $0x72c] sm:$0xf]
    %v6986 = vld [vmem:[%s5 + $0x730] sm:$0xf]
    %v6987 = vld [vmem:[%s5 + $0x734] sm:$0xf]
    %v6988 = vld [vmem:[%s5 + $0x738] sm:$0xf]
    %v6989 = vld [vmem:[%s5 + $0x73c] sm:$0xf]
    %v6990 = vld [vmem:[%s5 + $0x740] sm:$0xf]
    %v6991 = vld [vmem:[%s5 + $0x744] sm:$0xf]
    %v6992 = vld [vmem:[%s5 + $0x748] sm:$0xf]
    %v6993 = vld [vmem:[%s5 + $0x74c] sm:$0xf]
    %v6994 = vld [vmem:[%s5 + $0x750] sm:$0xf]
    %v6995 = vld [vmem:[%s5 + $0x754] sm:$0xf]
    %v6996 = vld [vmem:[%s5 + $0x758] sm:$0xf]
    %v6997 = vld [vmem:[%s5 + $0x75c] sm:$0xf]
    %v6998 = vld [vmem:[%s5 + $0x760] sm:$0xf]
    %v6999 = vld [vmem:[%s5 + $0x764] sm:$0xf]
    %v7000 = vld [vmem:[%s5 + $0x768] sm:$0xf]
    %v7001 = vld [vmem:[%s5 + $0x76c] sm:$0xf]
    %v7002 = vld [vmem:[%s5 + $0x770] sm:$0xf]
    %v7003 = vld [vmem:[%s5 + $0x774] sm:$0xf]
    %v7004 = vld [vmem:[%s5 + $0x778] sm:$0xf]
    %v7005 = vld [vmem:[%s5 + $0x77c] sm:$0xf]
    %v7006 = vld [vmem:[%s5 + $0x780] sm:$0xf]
    %v7007 = vld [vmem:[%s5 + $0x784] sm:$0xf]
    %v7008 = vld [vmem:[%s5 + $0x788] sm:$0xf]
    %v7009 = vld [vmem:[%s5 + $0x78c] sm:$0xf]
    %v7010 = vld [vmem:[%s5 + $0x790] sm:$0xf]
    %v7011 = vld [vmem:[%s5 + $0x794] sm:$0xf]
    %v7012 = vld [vmem:[%s5 + $0x798] sm:$0xf]
    %v7013 = vld [vmem:[%s5 + $0x79c] sm:$0xf]
    %v7014 = vld [vmem:[%s5 + $0x7a0] sm:$0xf]
    %v7015 = vld [vmem:[%s5 + $0x7a4] sm:$0xf]
    %v7016 = vld [vmem:[%s5 + $0x7a8] sm:$0xf]
    %v7017 = vld [vmem:[%s5 + $0x7ac] sm:$0xf]
    %v7018 = vld [vmem:[%s5 + $0x7b0] sm:$0xf]
    %v7019 = vld [vmem:[%s5 + $0x7b4] sm:$0xf]
    %v7020 = vld [vmem:[%s5 + $0x7b8] sm:$0xf]
    %v7021 = vld [vmem:[%s5 + $0x7bc] sm:$0xf]
    %v7022 = vld [vmem:[%s5 + $0x7c0] sm:$0xf]
    %v7023 = vld [vmem:[%s5 + $0x7c4] sm:$0xf]
    %v7024 = vld [vmem:[%s5 + $0x7c8] sm:$0xf]
    %v7025 = vld [vmem:[%s5 + $0x7cc] sm:$0xf]
    %v7026 = vld [vmem:[%s5 + $0x7d0] sm:$0xf]
    %v7027 = vld [vmem:[%s5 + $0x7d4] sm:$0xf]
    %v7028 = vld [vmem:[%s5 + $0x7d8] sm:$0xf]
    %v7029 = vld [vmem:[%s5 + $0x7dc] sm:$0xf]
    %v7030 = vld [vmem:[%s5 + $0x7e0] sm:$0xf]
    %v7031 = vld [vmem:[%s5 + $0x7e4] sm:$0xf]
    %v7032 = vld [vmem:[%s5 + $0x7e8] sm:$0xf]
    %v7033 = vld [vmem:[%s5 + $0x7ec] sm:$0xf]
    %v7034 = vld [vmem:[%s5 + $0x7f0] sm:$0xf]
    %v7035 = vld [vmem:[%s5 + $0x7f4] sm:$0xf]
    %v7036 = vld [vmem:[%s5 + $0x7f8] sm:$0xf]
    %v7037 = vld [vmem:[%s5 + $0x7fc] sm:$0xf]
    %v7038 = vld [vmem:[%s5 + $0x800] sm:$0xf]
    %v7039 = vld [vmem:[%s5 + $0x804] sm:$0xf]
    %v7040 = vld [vmem:[%s5 + $0x808] sm:$0xf]
    %v7041 = vld [vmem:[%s5 + $0x80c] sm:$0xf]
    %v7042 = vld [vmem:[%s5 + $0x810] sm:$0xf]
    %v7043 = vld [vmem:[%s5 + $0x814] sm:$0xf]
    %v7044 = vld [vmem:[%s5 + $0x818] sm:$0xf]
    %v7045 = vld [vmem:[%s5 + $0x81c] sm:$0xf]
    %v7046 = vld [vmem:[%s5 + $0x820] sm:$0xf]
    %v7047 = vld [vmem:[%s5 + $0x824] sm:$0xf]
    %v7048 = vld [vmem:[%s5 + $0x828] sm:$0xf]
    %v7049 = vld [vmem:[%s5 + $0x82c] sm:$0xf]
    %v7050 = vld [vmem:[%s5 + $0x830] sm:$0xf]
    %v7051 = vld [vmem:[%s5 + $0x834] sm:$0xf]
    %v7052 = vld [vmem:[%s5 + $0x838] sm:$0xf]
    %v7053 = vld [vmem:[%s5 + $0x83c] sm:$0xf]
    %v7054 = vld [vmem:[%s5 + $0x840] sm:$0xf]
    %v7055 = vld [vmem:[%s5 + $0x844] sm:$0xf]
    %v7056 = vld [vmem:[%s5 + $0x848] sm:$0xf]
    %v7057 = vld [vmem:[%s5 + $0x84c] sm:$0xf]
    %v7058 = vld [vmem:[%s5 + $0x850] sm:$0xf]
    %v7059 = vld [vmem:[%s5 + $0x854] sm:$0xf]
    %v7060 = vld [vmem:[%s5 + $0x858] sm:$0xf]
    %v7061 = vld [vmem:[%s5 + $0x85c] sm:$0xf]
    %v7062 = vld [vmem:[%s5 + $0x860] sm:$0xf]
    %v7063 = vld [vmem:[%s5 + $0x864] sm:$0xf]
    %v7064 = vld [vmem:[%s5 + $0x868] sm:$0xf]
    %v7065 = vld [vmem:[%s5 + $0x86c] sm:$0xf]
    %v7066 = vld [vmem:[%s5 + $0x870] sm:$0xf]
    %v7067 = vld [vmem:[%s5 + $0x874] sm:$0xf]
    %v7068 = vld [vmem:[%s5 + $0x878] sm:$0xf]
    %v7069 = vld [vmem:[%s5 + $0x87c] sm:$0xf]
    %v7070 = vld [vmem:[%s5 + $0x880] sm:$0xf]
    %v7071 = vld [vmem:[%s5 + $0x884] sm:$0xf]
    %v7072 = vld [vmem:[%s5 + $0x888] sm:$0xf]
    %v7073 = vld [vmem:[%s5 + $0x88c] sm:$0xf]
    %v7074 = vld [vmem:[%s5 + $0x890] sm:$0xf]
    %v7075 = vld [vmem:[%s5 + $0x894] sm:$0xf]
    %v7076 = vld [vmem:[%s5 + $0x898] sm:$0xf]
    %v7077 = vld [vmem:[%s5 + $0x89c] sm:$0xf]
    %v7078 = vld [vmem:[%s5 + $0x8a0] sm:$0xf]
    %v7079 = vld [vmem:[%s5 + $0x8a4] sm:$0xf]
    %v7080 = vld [vmem:[%s5 + $0x8a8] sm:$0xf]
    %v7081 = vld [vmem:[%s5 + $0x8ac] sm:$0xf]
    %v7082 = vld [vmem:[%s5 + $0x8b0] sm:$0xf]
    %v7083 = vld [vmem:[%s5 + $0x8b4] sm:$0xf]
    %v7084 = vld [vmem:[%s5 + $0x8b8] sm:$0xf]
    %v7085 = vld [vmem:[%s5 + $0x8bc] sm:$0xf]
    %v7086 = vld [vmem:[%s5 + $0x8c0] sm:$0xf]
    %v7087 = vld [vmem:[%s5 + $0x8c4] sm:$0xf]
    %v7088 = vld [vmem:[%s5 + $0x8c8] sm:$0xf]
    %v7089 = vld [vmem:[%s5 + $0x8cc] sm:$0xf]
    %v7090 = vld [vmem:[%s5 + $0x8d0] sm:$0xf]
    %v7091 = vld [vmem:[%s5 + $0x8d4] sm:$0xf]
    %v7092 = vld [vmem:[%s5 + $0x8d8] sm:$0xf]
    %v7093 = vld [vmem:[%s5 + $0x8dc] sm:$0xf]
    %v7094 = vld [vmem:[%s5 + $0x8e0] sm:$0xf]
    %v7095 = vld [vmem:[%s5 + $0x8e4] sm:$0xf]
    %v7096 = vld [vmem:[%s5 + $0x8e8] sm:$0xf]
    %v7097 = vld [vmem:[%s5 + $0x8ec] sm:$0xf]
    %v7098 = vld [vmem:[%s5 + $0x8f0] sm:$0xf]
    %v7099 = vld [vmem:[%s5 + $0x8f4] sm:$0xf]
    %v7100 = vld [vmem:[%s5 + $0x8f8] sm:$0xf]
    %v7101 = vld [vmem:[%s5 + $0x8fc] sm:$0xf]
    %v7102 = vld [vmem:[%s5 + $0x900] sm:$0xf]
    %v7103 = vld [vmem:[%s5 + $0x904] sm:$0xf]
    %v7104 = vld [vmem:[%s5 + $0x908] sm:$0xf]
    %v7105 = vld [vmem:[%s5 + $0x90c] sm:$0xf]
    %v7106 = vld [vmem:[%s5 + $0x910] sm:$0xf]
    %v7107 = vld [vmem:[%s5 + $0x914] sm:$0xf]
    %v7108 = vld [vmem:[%s5 + $0x918] sm:$0xf]
    %v7109 = vld [vmem:[%s5 + $0x91c] sm:$0xf]
    %v7110 = vld [vmem:[%s5 + $0x920] sm:$0xf]
    %v7111 = vld [vmem:[%s5 + $0x924] sm:$0xf]
    %v7112 = vld [vmem:[%s5 + $0x928] sm:$0xf]
    %v7113 = vld [vmem:[%s5 + $0x92c] sm:$0xf]
    %v7114 = vld [vmem:[%s5 + $0x930] sm:$0xf]
    %v7115 = vld [vmem:[%s5 + $0x934] sm:$0xf]
    %v7116 = vld [vmem:[%s5 + $0x938] sm:$0xf]
    %v7117 = vld [vmem:[%s5 + $0x93c] sm:$0xf]
    %v7118 = vld [vmem:[%s5 + $0x940] sm:$0xf]
    %v7119 = vld [vmem:[%s5 + $0x944] sm:$0xf]
    %v7120 = vld [vmem:[%s5 + $0x948] sm:$0xf]
    %v7121 = vld [vmem:[%s5 + $0x94c] sm:$0xf]
    %v7122 = vld [vmem:[%s5 + $0x950] sm:$0xf]
    %v7123 = vld [vmem:[%s5 + $0x954] sm:$0xf]
    %v7124 = vld [vmem:[%s5 + $0x958] sm:$0xf]
    %v7125 = vld [vmem:[%s5 + $0x95c] sm:$0xf]
    %v7126 = vld [vmem:[%s5 + $0x960] sm:$0xf]
    %v7127 = vld [vmem:[%s5 + $0x964] sm:$0xf]
    %v7128 = vld [vmem:[%s5 + $0x968] sm:$0xf]
    %v7129 = vld [vmem:[%s5 + $0x96c] sm:$0xf]
    %v7130 = vld [vmem:[%s5 + $0x970] sm:$0xf]
    %v7131 = vld [vmem:[%s5 + $0x974] sm:$0xf]
    %v7132 = vld [vmem:[%s5 + $0x978] sm:$0xf]
    %v7133 = vld [vmem:[%s5 + $0x97c] sm:$0xf]
    %v7134 = vld [vmem:[%s5 + $0x980] sm:$0xf]
    %v7135 = vld [vmem:[%s5 + $0x984] sm:$0xf]
    %v7136 = vld [vmem:[%s5 + $0x988] sm:$0xf]
    %v7137 = vld [vmem:[%s5 + $0x98c] sm:$0xf]
    %v7138 = vld [vmem:[%s5 + $0x990] sm:$0xf]
    %v7139 = vld [vmem:[%s5 + $0x994] sm:$0xf]
    %v7140 = vld [vmem:[%s5 + $0x998] sm:$0xf]
    %v7141 = vld [vmem:[%s5 + $0x99c] sm:$0xf]
    %v7142 = vld [vmem:[%s5 + $0x9a0] sm:$0xf]
    %v7143 = vld [vmem:[%s5 + $0x9a4] sm:$0xf]
    %v7144 = vld [vmem:[%s5 + $0x9a8] sm:$0xf]
    %v7145 = vld [vmem:[%s5 + $0x9ac] sm:$0xf]
    %v7146 = vld [vmem:[%s5 + $0x9b0] sm:$0xf]
    %v7147 = vld [vmem:[%s5 + $0x9b4] sm:$0xf]
    %v7148 = vld [vmem:[%s5 + $0x9b8] sm:$0xf]
    %v7149 = vld [vmem:[%s5 + $0x9bc] sm:$0xf]
    %v7150 = vld [vmem:[%s5 + $0x9c0] sm:$0xf]
    %v7151 = vld [vmem:[%s5 + $0x9c4] sm:$0xf]
    %v7152 = vld [vmem:[%s5 + $0x9c8] sm:$0xf]
    %v7153 = vld [vmem:[%s5 + $0x9cc] sm:$0xf]
    %v7154 = vld [vmem:[%s5 + $0x9d0] sm:$0xf]
    %v7155 = vld [vmem:[%s5 + $0x9d4] sm:$0xf]
    %v7156 = vld [vmem:[%s5 + $0x9d8] sm:$0xf]
    %v7157 = vld [vmem:[%s5 + $0x9dc] sm:$0xf]
    %v7158 = vld [vmem:[%s5 + $0x9e0] sm:$0xf]
    %v7159 = vld [vmem:[%s5 + $0x9e4] sm:$0xf]
    %v7160 = vld [vmem:[%s5 + $0x9e8] sm:$0xf]
    %v7161 = vld [vmem:[%s5 + $0x9ec] sm:$0xf]
    %v7162 = vld [vmem:[%s5 + $0x9f0] sm:$0xf]
    %v7163 = vld [vmem:[%s5 + $0x9f4] sm:$0xf]
    %v7164 = vld [vmem:[%s5 + $0x9f8] sm:$0xf]
    %v7165 = vld [vmem:[%s5 + $0x9fc] sm:$0xf]
    %v7166 = vld [vmem:[%s5 + $0xa00] sm:$0xf]
    %v7167 = vld [vmem:[%s5 + $0xa04] sm:$0xf]
    %v7168 = vld [vmem:[%s5 + $0xa08] sm:$0xf]
    %v7169 = vld [vmem:[%s5 + $0xa0c] sm:$0xf]
    %v7170 = vld [vmem:[%s5 + $0xa10] sm:$0xf]
    %v7171 = vld [vmem:[%s5 + $0xa14] sm:$0xf]
    %v7172 = vld [vmem:[%s5 + $0xa18] sm:$0xf]
    %v7173 = vld [vmem:[%s5 + $0xa1c] sm:$0xf]
    %v7174 = vld [vmem:[%s5 + $0xa20] sm:$0xf]
    %v7175 = vld [vmem:[%s5 + $0xa24] sm:$0xf]
    %v7176 = vld [vmem:[%s5 + $0xa28] sm:$0xf]
    %v7177 = vld [vmem:[%s5 + $0xa2c] sm:$0xf]
    %v7178 = vld [vmem:[%s5 + $0xa30] sm:$0xf]
    %v7179 = vld [vmem:[%s5 + $0xa34] sm:$0xf]
    %v7180 = vld [vmem:[%s5 + $0xa38] sm:$0xf]
    %v7181 = vld [vmem:[%s5 + $0xa3c] sm:$0xf]
    %v7182 = vld [vmem:[%s5 + $0xa40] sm:$0xf]
    %v7183 = vld [vmem:[%s5 + $0xa44] sm:$0xf]
    %v7184 = vld [vmem:[%s5 + $0xa48] sm:$0xf]
    %v7185 = vld [vmem:[%s5 + $0xa4c] sm:$0xf]
    %v7186 = vld [vmem:[%s5 + $0xa50] sm:$0xf]
    %v7187 = vld [vmem:[%s5 + $0xa54] sm:$0xf]
    %v7188 = vld [vmem:[%s5 + $0xa58] sm:$0xf]
    %v7189 = vld [vmem:[%s5 + $0xa5c] sm:$0xf]
    %v7190 = vld [vmem:[%s5 + $0xa60] sm:$0xf]
    %v7191 = vld [vmem:[%s5 + $0xa64] sm:$0xf]
    %v7192 = vld [vmem:[%s5 + $0xa68] sm:$0xf]
    %v7193 = vld [vmem:[%s5 + $0xa6c] sm:$0xf]
    %v7194 = vld [vmem:[%s5 + $0xa70] sm:$0xf]
    %v7195 = vld [vmem:[%s5 + $0xa74] sm:$0xf]
    %v7196 = vld [vmem:[%s5 + $0xa78] sm:$0xf]
    %v7197 = vld [vmem:[%s5 + $0xa7c] sm:$0xf]
    %v7198 = vld [vmem:[%s5 + $0xa80] sm:$0xf]
    %v7199 = vld [vmem:[%s5 + $0xa84] sm:$0xf]
    %v7200 = vld [vmem:[%s5 + $0xa88] sm:$0xf]
    %v7201 = vld [vmem:[%s5 + $0xa8c] sm:$0xf]
    %v7202 = vld [vmem:[%s5 + $0xa90] sm:$0xf]
    %v7203 = vld [vmem:[%s5 + $0xa94] sm:$0xf]
    %v7204 = vld [vmem:[%s5 + $0xa98] sm:$0xf]
    %v7205 = vld [vmem:[%s5 + $0xa9c] sm:$0xf]
    %v7206 = vld [vmem:[%s5 + $0xaa0] sm:$0xf]
    %v7207 = vld [vmem:[%s5 + $0xaa4] sm:$0xf]
    %v7208 = vld [vmem:[%s5 + $0xaa8] sm:$0xf]
    %v7209 = vld [vmem:[%s5 + $0xaac] sm:$0xf]
    %v7210 = vld [vmem:[%s5 + $0xab0] sm:$0xf]
    %v7211 = vld [vmem:[%s5 + $0xab4] sm:$0xf]
    %v7212 = vld [vmem:[%s5 + $0xab8] sm:$0xf]
    %v7213 = vld [vmem:[%s5 + $0xabc] sm:$0xf]
    %v7214 = vld [vmem:[%s5 + $0xac0] sm:$0xf]
    %v7215 = vld [vmem:[%s5 + $0xac4] sm:$0xf]
    %v7216 = vld [vmem:[%s5 + $0xac8] sm:$0xf]
    %v7217 = vld [vmem:[%s5 + $0xacc] sm:$0xf]
    %v7218 = vld [vmem:[%s5 + $0xad0] sm:$0xf]
    %v7219 = vld [vmem:[%s5 + $0xad4] sm:$0xf]
    %v7220 = vld [vmem:[%s5 + $0xad8] sm:$0xf]
    %v7221 = vld [vmem:[%s5 + $0xadc] sm:$0xf]
    %v7222 = vld [vmem:[%s5 + $0xae0] sm:$0xf]
    %v7223 = vld [vmem:[%s5 + $0xae4] sm:$0xf]
    %v7224 = vld [vmem:[%s5 + $0xae8] sm:$0xf]
    %v7225 = vld [vmem:[%s5 + $0xaec] sm:$0xf]
    %v7226 = vld [vmem:[%s5 + $0xaf0] sm:$0xf]
    %v7227 = vld [vmem:[%s5 + $0xaf4] sm:$0xf]
    %v7228 = vld [vmem:[%s5 + $0xaf8] sm:$0xf]
    %v7229 = vld [vmem:[%s5 + $0xafc] sm:$0xf]
    %v7230 = vld [vmem:[%s5 + $0xb00] sm:$0xf]
    %v7231 = vld [vmem:[%s5 + $0xb04] sm:$0xf]
    %v7232 = vld [vmem:[%s5 + $0xb08] sm:$0xf]
    %v7233 = vld [vmem:[%s5 + $0xb0c] sm:$0xf]
    %v7234 = vld [vmem:[%s5 + $0xb10] sm:$0xf]
    %v7235 = vld [vmem:[%s5 + $0xb14] sm:$0xf]
    %v7236 = vld [vmem:[%s5 + $0xb18] sm:$0xf]
    %v7237 = vld [vmem:[%s5 + $0xb1c] sm:$0xf]
    %v7238 = vld [vmem:[%s5 + $0xb20] sm:$0xf]
    %v7239 = vld [vmem:[%s5 + $0xb24] sm:$0xf]
    %v7240 = vld [vmem:[%s5 + $0xb28] sm:$0xf]
    %v7241 = vld [vmem:[%s5 + $0xb2c] sm:$0xf]
    %v7242 = vld [vmem:[%s5 + $0xb30] sm:$0xf]
    %v7243 = vld [vmem:[%s5 + $0xb34] sm:$0xf]
    %v7244 = vld [vmem:[%s5 + $0xb38] sm:$0xf]
    %v7245 = vld [vmem:[%s5 + $0xb3c] sm:$0xf]
    %v7246 = vld [vmem:[%s5 + $0xb40] sm:$0xf]
    %v7247 = vld [vmem:[%s5 + $0xb44] sm:$0xf]
    %v7248 = vld [vmem:[%s5 + $0xb48] sm:$0xf]
    %v7249 = vld [vmem:[%s5 + $0xb4c] sm:$0xf]
    %v7250 = vld [vmem:[%s5 + $0xb50] sm:$0xf]
    %v7251 = vld [vmem:[%s5 + $0xb54] sm:$0xf]
    %v7252 = vld [vmem:[%s5 + $0xb58] sm:$0xf]
    %v7253 = vld [vmem:[%s5 + $0xb5c] sm:$0xf]
    %v7254 = vld [vmem:[%s5 + $0xb60] sm:$0xf]
    %v7255 = vld [vmem:[%s5 + $0xb64] sm:$0xf]
    %v7256 = vld [vmem:[%s5 + $0xb68] sm:$0xf]
    %v7257 = vld [vmem:[%s5 + $0xb6c] sm:$0xf]
    %v7258 = vld [vmem:[%s5 + $0xb70] sm:$0xf]
    %v7259 = vld [vmem:[%s5 + $0xb74] sm:$0xf]
    %v7260 = vld [vmem:[%s5 + $0xb78] sm:$0xf]
    %v7261 = vld [vmem:[%s5 + $0xb7c] sm:$0xf]
    %v7262 = vld [vmem:[%s5 + $0xb80] sm:$0xf]
    %v7263 = vld [vmem:[%s5 + $0xb84] sm:$0xf]
    %v7264 = vld [vmem:[%s5 + $0xb88] sm:$0xf]
    %v7265 = vld [vmem:[%s5 + $0xb8c] sm:$0xf]
    %v7266 = vld [vmem:[%s5 + $0xb90] sm:$0xf]
    %v7267 = vld [vmem:[%s5 + $0xb94] sm:$0xf]
    %v7268 = vld [vmem:[%s5 + $0xb98] sm:$0xf]
    %v7269 = vld [vmem:[%s5 + $0xb9c] sm:$0xf]
    %v7270 = vld [vmem:[%s5 + $0xba0] sm:$0xf]
    %v7271 = vld [vmem:[%s5 + $0xba4] sm:$0xf]
    %v7272 = vld [vmem:[%s5 + $0xba8] sm:$0xf]
    %v7273 = vld [vmem:[%s5 + $0xbac] sm:$0xf]
    %v7274 = vld [vmem:[%s5 + $0xbb0] sm:$0xf]
    %v7275 = vld [vmem:[%s5 + $0xbb4] sm:$0xf]
    %v7276 = vld [vmem:[%s5 + $0xbb8] sm:$0xf]
    %v7277 = vld [vmem:[%s5 + $0xbbc] sm:$0xf]
    %v7278 = vld [vmem:[%s5 + $0xbc0] sm:$0xf]
    %v7279 = vld [vmem:[%s5 + $0xbc4] sm:$0xf]
    %v7280 = vld [vmem:[%s5 + $0xbc8] sm:$0xf]
    %v7281 = vld [vmem:[%s5 + $0xbcc] sm:$0xf]
    %v7282 = vld [vmem:[%s5 + $0xbd0] sm:$0xf]
    %v7283 = vld [vmem:[%s5 + $0xbd4] sm:$0xf]
    %v7284 = vld [vmem:[%s5 + $0xbd8] sm:$0xf]
    %v7285 = vld [vmem:[%s5 + $0xbdc] sm:$0xf]
    %v7286 = vld [vmem:[%s5 + $0xbe0] sm:$0xf]
    %v7287 = vld [vmem:[%s5 + $0xbe4] sm:$0xf]
    %v7288 = vld [vmem:[%s5 + $0xbe8] sm:$0xf]
    %v7289 = vld [vmem:[%s5 + $0xbec] sm:$0xf]
    %v7290 = vld [vmem:[%s5 + $0xbf0] sm:$0xf]
    %v7291 = vld [vmem:[%s5 + $0xbf4] sm:$0xf]
    %v7292 = vld [vmem:[%s5 + $0xbf8] sm:$0xf]
    %v7293 = vld [vmem:[%s5 + $0xbfc] sm:$0xf]
    %v7294 = vld [vmem:[%s6] sm:$0x1]
    %v7296 = vperm.slane %v7294, 0
    %v7322 = vunpack.c.l.b16 %v6502
    %v7323 = vunpack.c.h.b16 %v6502
    %v7324 = vunpack.c.l.b16 %v6503
    %v7325 = vunpack.c.h.b16 %v6503
    %v7326 = vunpack.c.l.b16 %v6504
    %v7327 = vunpack.c.h.b16 %v6504
    %v7328 = vunpack.c.l.b16 %v6505
    %v7329 = vunpack.c.h.b16 %v6505
    %v7330 = vunpack.c.l.b16 %v6506
    %v7331 = vunpack.c.h.b16 %v6506
    %v7332 = vunpack.c.l.b16 %v6507
    %v7333 = vunpack.c.h.b16 %v6507
    %v7334 = vunpack.c.l.b16 %v6508
    %v7335 = vunpack.c.h.b16 %v6508
    %v7336 = vunpack.c.l.b16 %v6509
    %v7337 = vunpack.c.h.b16 %v6509
    %v7338 = vunpack.c.l.b16 %v6510
    %v7339 = vunpack.c.h.b16 %v6510
    %v7340 = vunpack.c.l.b16 %v6511
    %v7341 = vunpack.c.h.b16 %v6511
    %v7342 = vunpack.c.l.b16 %v6512
    %v7343 = vunpack.c.h.b16 %v6512
    %v7344 = vunpack.c.l.b16 %v6513
    %v7345 = vunpack.c.h.b16 %v6513
    %v7346 = vunpack.c.l.b16 %v6514
    %v7347 = vunpack.c.h.b16 %v6514
    %v7348 = vunpack.c.l.b16 %v6515
    %v7349 = vunpack.c.h.b16 %v6515
    %v7350 = vunpack.c.l.b16 %v6516
    %v7351 = vunpack.c.h.b16 %v6516
    %v7352 = vunpack.c.l.b16 %v6517
    %v7353 = vunpack.c.h.b16 %v6517
    %v7354 = vunpack.c.l.b16 %v6518
    %v7355 = vunpack.c.h.b16 %v6518
    %v7356 = vunpack.c.l.b16 %v6519
    %v7357 = vunpack.c.h.b16 %v6519
    %v7358 = vunpack.c.l.b16 %v6520
    %v7359 = vunpack.c.h.b16 %v6520
    %v7360 = vunpack.c.l.b16 %v6521
    %v7361 = vunpack.c.h.b16 %v6521
    %v7362 = vunpack.c.l.b16 %v6522
    %v7363 = vunpack.c.h.b16 %v6522
    %v7364 = vunpack.c.l.b16 %v6523
    %v7365 = vunpack.c.h.b16 %v6523
    %v7366 = vunpack.c.l.b16 %v6524
    %v7367 = vunpack.c.h.b16 %v6524
    %v7368 = vunpack.c.l.b16 %v6525
    %v7369 = vunpack.c.h.b16 %v6525
    %v7370 = vpack.c.b16 %v7322, %v7322
    %v7371 = vpack.c.b16 %v7323, %v7323
    %v7372 = vpack.c.b16 %v7324, %v7324
    %v7373 = vpack.c.b16 %v7325, %v7325
    %v7374 = vpack.c.b16 %v7326, %v7326
    %v7375 = vpack.c.b16 %v7327, %v7327
    %v7376 = vpack.c.b16 %v7328, %v7328
    %v7377 = vpack.c.b16 %v7329, %v7329
    %v7378 = vpack.c.b16 %v7330, %v7330
    %v7379 = vpack.c.b16 %v7331, %v7331
    %v7380 = vpack.c.b16 %v7332, %v7332
    %v7381 = vpack.c.b16 %v7333, %v7333
    %v7382 = vpack.c.b16 %v7334, %v7334
    %v7383 = vpack.c.b16 %v7335, %v7335
    %v7384 = vpack.c.b16 %v7336, %v7336
    %v7385 = vpack.c.b16 %v7337, %v7337
    %v7386 = vpack.c.b16 %v7338, %v7338
    %v7387 = vpack.c.b16 %v7339, %v7339
    %v7388 = vpack.c.b16 %v7340, %v7340
    %v7389 = vpack.c.b16 %v7341, %v7341
    %v7390 = vpack.c.b16 %v7342, %v7342
    %v7391 = vpack.c.b16 %v7343, %v7343
    %v7392 = vpack.c.b16 %v7344, %v7344
    %v7393 = vpack.c.b16 %v7345, %v7345
    %v7394 = vpack.c.b16 %v7346, %v7346
    %v7395 = vpack.c.b16 %v7347, %v7347
    %v7396 = vpack.c.b16 %v7348, %v7348
    %v7397 = vpack.c.b16 %v7349, %v7349
    %v7398 = vpack.c.b16 %v7350, %v7350
    %v7399 = vpack.c.b16 %v7351, %v7351
    %v7400 = vpack.c.b16 %v7352, %v7352
    %v7401 = vpack.c.b16 %v7353, %v7353
    %v7402 = vpack.c.b16 %v7354, %v7354
    %v7403 = vpack.c.b16 %v7355, %v7355
    %v7404 = vpack.c.b16 %v7356, %v7356
    %v7405 = vpack.c.b16 %v7357, %v7357
    %v7406 = vpack.c.b16 %v7358, %v7358
    %v7407 = vpack.c.b16 %v7359, %v7359
    %v7408 = vpack.c.b16 %v7360, %v7360
    %v7409 = vpack.c.b16 %v7361, %v7361
    %v7410 = vpack.c.b16 %v7362, %v7362
    %v7411 = vpack.c.b16 %v7363, %v7363
    %v7412 = vpack.c.b16 %v7364, %v7364
    %v7413 = vpack.c.b16 %v7365, %v7365
    %v7414 = vpack.c.b16 %v7366, %v7366
    %v7415 = vpack.c.b16 %v7367, %v7367
    %v7416 = vpack.c.b16 %v7368, %v7368
    %v7417 = vpack.c.b16 %v7369, %v7369
    %v8234 = vunpack.c.l.b16 %v6526
    %v8235 = vunpack.c.l.b16 %v6527
    %v8236 = vunpack.c.l.b16 %v6528
    %v8237 = vunpack.c.l.b16 %v6529
    %v8238 = vunpack.c.l.b16 %v6530
    %v8239 = vunpack.c.l.b16 %v6531
    %v8240 = vunpack.c.l.b16 %v6532
    %v8241 = vunpack.c.l.b16 %v6533
    %v8242 = vunpack.c.l.b16 %v6534
    %v8243 = vunpack.c.l.b16 %v6535
    %v8244 = vunpack.c.l.b16 %v6536
    %v8245 = vunpack.c.l.b16 %v6537
    %v8246 = vunpack.c.l.b16 %v6538
    %v8247 = vunpack.c.l.b16 %v6539
    %v8248 = vunpack.c.l.b16 %v6540
    %v8249 = vunpack.c.l.b16 %v6541
    %v8250 = vunpack.c.l.b16 %v6542
    %v8251 = vunpack.c.l.b16 %v6543
    %v8252 = vunpack.c.l.b16 %v6544
    %v8253 = vunpack.c.l.b16 %v6545
    %v8254 = vunpack.c.l.b16 %v6546
    %v8255 = vunpack.c.l.b16 %v6547
    %v8256 = vunpack.c.l.b16 %v6548
    %v8257 = vunpack.c.l.b16 %v6549
    %v8258 = vunpack.c.l.b16 %v6550
    %v8259 = vunpack.c.l.b16 %v6551
    %v8260 = vunpack.c.l.b16 %v6552
    %v8261 = vunpack.c.l.b16 %v6553
    %v8262 = vunpack.c.l.b16 %v6554
    %v8263 = vunpack.c.l.b16 %v6555
    %v8264 = vunpack.c.l.b16 %v6556
    %v8265 = vunpack.c.l.b16 %v6557
    %v8266 = vunpack.c.l.b16 %v6558
    %v8267 = vunpack.c.l.b16 %v6559
    %v8268 = vunpack.c.l.b16 %v6560
    %v8269 = vunpack.c.l.b16 %v6561
    %v8270 = vunpack.c.l.b16 %v6562
    %v8271 = vunpack.c.l.b16 %v6563
    %v8272 = vunpack.c.l.b16 %v6564
    %v8273 = vunpack.c.l.b16 %v6565
    %v8274 = vunpack.c.l.b16 %v6566
    %v8275 = vunpack.c.l.b16 %v6567
    %v8276 = vunpack.c.l.b16 %v6568
    %v8277 = vunpack.c.l.b16 %v6569
    %v8278 = vunpack.c.l.b16 %v6570
    %v8279 = vunpack.c.l.b16 %v6571
    %v8280 = vunpack.c.l.b16 %v6572
    %v8281 = vunpack.c.l.b16 %v6573
    %v8282 = vunpack.c.l.b16 %v6574
    %v8283 = vunpack.c.l.b16 %v6575
    %v8284 = vunpack.c.l.b16 %v6576
    %v8285 = vunpack.c.l.b16 %v6577
    %v8286 = vunpack.c.l.b16 %v6578
    %v8287 = vunpack.c.l.b16 %v6579
    %v8288 = vunpack.c.l.b16 %v6580
    %v8289 = vunpack.c.l.b16 %v6581
    %v8290 = vunpack.c.l.b16 %v6582
    %v8291 = vunpack.c.l.b16 %v6583
    %v8292 = vunpack.c.l.b16 %v6584
    %v8293 = vunpack.c.l.b16 %v6585
    %v8294 = vunpack.c.l.b16 %v6586
    %v8295 = vunpack.c.l.b16 %v6587
    %v8296 = vunpack.c.l.b16 %v6588
    %v8297 = vunpack.c.l.b16 %v6589
    %v8298 = vunpack.c.l.b16 %v6590
    %v8299 = vunpack.c.l.b16 %v6591
    %v8300 = vunpack.c.l.b16 %v6592
    %v8301 = vunpack.c.l.b16 %v6593
    %v8302 = vunpack.c.l.b16 %v6594
    %v8303 = vunpack.c.l.b16 %v6595
    %v8304 = vunpack.c.l.b16 %v6596
    %v8305 = vunpack.c.l.b16 %v6597
    %v8306 = vunpack.c.l.b16 %v6598
    %v8307 = vunpack.c.l.b16 %v6599
    %v8308 = vunpack.c.l.b16 %v6600
    %v8309 = vunpack.c.l.b16 %v6601
    %v8310 = vunpack.c.l.b16 %v6602
    %v8311 = vunpack.c.l.b16 %v6603
    %v8312 = vunpack.c.l.b16 %v6604
    %v8313 = vunpack.c.l.b16 %v6605
    %v8314 = vunpack.c.l.b16 %v6606
    %v8315 = vunpack.c.l.b16 %v6607
    %v8316 = vunpack.c.l.b16 %v6608
    %v8317 = vunpack.c.l.b16 %v6609
    %v8318 = vunpack.c.l.b16 %v6610
    %v8319 = vunpack.c.l.b16 %v6611
    %v8320 = vunpack.c.l.b16 %v6612
    %v8321 = vunpack.c.l.b16 %v6613
    %v8322 = vunpack.c.l.b16 %v6614
    %v8323 = vunpack.c.l.b16 %v6615
    %v8324 = vunpack.c.l.b16 %v6616
    %v8325 = vunpack.c.l.b16 %v6617
    %v8326 = vunpack.c.l.b16 %v6618
    %v8327 = vunpack.c.l.b16 %v6619
    %v8328 = vunpack.c.l.b16 %v6620
    %v8329 = vunpack.c.l.b16 %v6621
    %v8330 = vunpack.c.l.b16 %v6622
    %v8331 = vunpack.c.l.b16 %v6623
    %v8332 = vunpack.c.l.b16 %v6624
    %v8333 = vunpack.c.l.b16 %v6625
    %v8334 = vunpack.c.l.b16 %v6626
    %v8335 = vunpack.c.l.b16 %v6627
    %v8336 = vunpack.c.l.b16 %v6628
    %v8337 = vunpack.c.l.b16 %v6629
    %v8338 = vunpack.c.l.b16 %v6630
    %v8339 = vunpack.c.l.b16 %v6631
    %v8340 = vunpack.c.l.b16 %v6632
    %v8341 = vunpack.c.l.b16 %v6633
    %v8342 = vunpack.c.l.b16 %v6634
    %v8343 = vunpack.c.l.b16 %v6635
    %v8344 = vunpack.c.l.b16 %v6636
    %v8345 = vunpack.c.l.b16 %v6637
    %v8346 = vunpack.c.l.b16 %v6638
    %v8347 = vunpack.c.l.b16 %v6639
    %v8348 = vunpack.c.l.b16 %v6640
    %v8349 = vunpack.c.l.b16 %v6641
    %v8350 = vunpack.c.l.b16 %v6642
    %v8351 = vunpack.c.l.b16 %v6643
    %v8352 = vunpack.c.l.b16 %v6644
    %v8353 = vunpack.c.l.b16 %v6645
    %v8354 = vunpack.c.l.b16 %v6646
    %v8355 = vunpack.c.l.b16 %v6647
    %v8356 = vunpack.c.l.b16 %v6648
    %v8357 = vunpack.c.l.b16 %v6649
    %v8358 = vunpack.c.l.b16 %v6650
    %v8359 = vunpack.c.l.b16 %v6651
    %v8360 = vunpack.c.l.b16 %v6652
    %v8361 = vunpack.c.l.b16 %v6653
    %v8362 = vunpack.c.l.b16 %v6654
    %v8363 = vunpack.c.l.b16 %v6655
    %v8364 = vunpack.c.l.b16 %v6656
    %v8365 = vunpack.c.l.b16 %v6657
    %v8366 = vunpack.c.l.b16 %v6658
    %v8367 = vunpack.c.l.b16 %v6659
    %v8368 = vunpack.c.l.b16 %v6660
    %v8369 = vunpack.c.l.b16 %v6661
    %v8370 = vunpack.c.l.b16 %v6662
    %v8371 = vunpack.c.l.b16 %v6663
    %v8372 = vunpack.c.l.b16 %v6664
    %v8373 = vunpack.c.l.b16 %v6665
    %v8374 = vunpack.c.l.b16 %v6666
    %v8375 = vunpack.c.l.b16 %v6667
    %v8376 = vunpack.c.l.b16 %v6668
    %v8377 = vunpack.c.l.b16 %v6669
    %v8378 = vunpack.c.l.b16 %v6670
    %v8379 = vunpack.c.l.b16 %v6671
    %v8380 = vunpack.c.l.b16 %v6672
    %v8381 = vunpack.c.l.b16 %v6673
    %v8382 = vunpack.c.l.b16 %v6674
    %v8383 = vunpack.c.l.b16 %v6675
    %v8384 = vunpack.c.l.b16 %v6676
    %v8385 = vunpack.c.l.b16 %v6677
    %v8386 = vunpack.c.l.b16 %v6678
    %v8387 = vunpack.c.l.b16 %v6679
    %v8388 = vunpack.c.l.b16 %v6680
    %v8389 = vunpack.c.l.b16 %v6681
    %v8390 = vunpack.c.l.b16 %v6682
    %v8391 = vunpack.c.l.b16 %v6683
    %v8392 = vunpack.c.l.b16 %v6684
    %v8393 = vunpack.c.l.b16 %v6685
    %v8394 = vunpack.c.l.b16 %v6686
    %v8395 = vunpack.c.l.b16 %v6687
    %v8396 = vunpack.c.l.b16 %v6688
    %v8397 = vunpack.c.l.b16 %v6689
    %v8398 = vunpack.c.l.b16 %v6690
    %v8399 = vunpack.c.l.b16 %v6691
    %v8400 = vunpack.c.l.b16 %v6692
    %v8401 = vunpack.c.l.b16 %v6693
    %v8402 = vunpack.c.l.b16 %v6694
    %v8403 = vunpack.c.l.b16 %v6695
    %v8404 = vunpack.c.l.b16 %v6696
    %v8405 = vunpack.c.l.b16 %v6697
    %v8406 = vunpack.c.l.b16 %v6698
    %v8407 = vunpack.c.l.b16 %v6699
    %v8408 = vunpack.c.l.b16 %v6700
    %v8409 = vunpack.c.l.b16 %v6701
    %v8410 = vunpack.c.l.b16 %v6702
    %v8411 = vunpack.c.l.b16 %v6703
    %v8412 = vunpack.c.l.b16 %v6704
    %v8413 = vunpack.c.l.b16 %v6705
    %v8414 = vunpack.c.l.b16 %v6706
    %v8415 = vunpack.c.l.b16 %v6707
    %v8416 = vunpack.c.l.b16 %v6708
    %v8417 = vunpack.c.l.b16 %v6709
    %v8418 = vunpack.c.l.b16 %v6710
    %v8419 = vunpack.c.l.b16 %v6711
    %v8420 = vunpack.c.l.b16 %v6712
    %v8421 = vunpack.c.l.b16 %v6713
    %v8422 = vunpack.c.l.b16 %v6714
    %v8423 = vunpack.c.l.b16 %v6715
    %v8424 = vunpack.c.l.b16 %v6716
    %v8425 = vunpack.c.l.b16 %v6717
    %v8426 = vunpack.c.l.b16 %v6718
    %v8427 = vunpack.c.l.b16 %v6719
    %v8428 = vunpack.c.l.b16 %v6720
    %v8429 = vunpack.c.l.b16 %v6721
    %v8430 = vunpack.c.l.b16 %v6722
    %v8431 = vunpack.c.l.b16 %v6723
    %v8432 = vunpack.c.l.b16 %v6724
    %v8433 = vunpack.c.l.b16 %v6725
    %v8434 = vunpack.c.l.b16 %v6726
    %v8435 = vunpack.c.l.b16 %v6727
    %v8436 = vunpack.c.l.b16 %v6728
    %v8437 = vunpack.c.l.b16 %v6729
    %v8438 = vunpack.c.l.b16 %v6730
    %v8439 = vunpack.c.l.b16 %v6731
    %v8440 = vunpack.c.l.b16 %v6732
    %v8441 = vunpack.c.l.b16 %v6733
    %v8442 = vunpack.c.l.b16 %v6734
    %v8443 = vunpack.c.l.b16 %v6735
    %v8444 = vunpack.c.l.b16 %v6736
    %v8445 = vunpack.c.l.b16 %v6737
    %v8446 = vunpack.c.l.b16 %v6738
    %v8447 = vunpack.c.l.b16 %v6739
    %v8448 = vunpack.c.l.b16 %v6740
    %v8449 = vunpack.c.l.b16 %v6741
    %v8450 = vunpack.c.l.b16 %v6742
    %v8451 = vunpack.c.l.b16 %v6743
    %v8452 = vunpack.c.l.b16 %v6744
    %v8453 = vunpack.c.l.b16 %v6745
    %v8454 = vunpack.c.l.b16 %v6746
    %v8455 = vunpack.c.l.b16 %v6747
    %v8456 = vunpack.c.l.b16 %v6748
    %v8457 = vunpack.c.l.b16 %v6749
    %v8458 = vunpack.c.l.b16 %v6750
    %v8459 = vunpack.c.l.b16 %v6751
    %v8460 = vunpack.c.l.b16 %v6752
    %v8461 = vunpack.c.l.b16 %v6753
    %v8462 = vunpack.c.l.b16 %v6754
    %v8463 = vunpack.c.l.b16 %v6755
    %v8464 = vunpack.c.l.b16 %v6756
    %v8465 = vunpack.c.l.b16 %v6757
    %v8466 = vunpack.c.l.b16 %v6758
    %v8467 = vunpack.c.l.b16 %v6759
    %v8468 = vunpack.c.l.b16 %v6760
    %v8469 = vunpack.c.l.b16 %v6761
    %v8470 = vunpack.c.l.b16 %v6762
    %v8471 = vunpack.c.l.b16 %v6763
    %v8472 = vunpack.c.l.b16 %v6764
    %v8473 = vunpack.c.l.b16 %v6765
    %v8474 = vunpack.c.l.b16 %v6766
    %v8475 = vunpack.c.l.b16 %v6767
    %v8476 = vunpack.c.l.b16 %v6768
    %v8477 = vunpack.c.l.b16 %v6769
    %v8478 = vunpack.c.l.b16 %v6770
    %v8479 = vunpack.c.l.b16 %v6771
    %v8480 = vunpack.c.l.b16 %v6772
    %v8481 = vunpack.c.l.b16 %v6773
    %v8482 = vunpack.c.l.b16 %v6774
    %v8483 = vunpack.c.l.b16 %v6775
    %v8484 = vunpack.c.l.b16 %v6776
    %v8485 = vunpack.c.l.b16 %v6777
    %v8486 = vunpack.c.l.b16 %v6778
    %v8487 = vunpack.c.l.b16 %v6779
    %v8488 = vunpack.c.l.b16 %v6780
    %v8489 = vunpack.c.l.b16 %v6781
    %v8490 = vunpack.c.l.b16 %v6782
    %v8491 = vunpack.c.l.b16 %v6783
    %v8492 = vunpack.c.l.b16 %v6784
    %v8493 = vunpack.c.l.b16 %v6785
    %v8494 = vunpack.c.l.b16 %v6786
    %v8495 = vunpack.c.l.b16 %v6787
    %v8496 = vunpack.c.l.b16 %v6788
    %v8497 = vunpack.c.l.b16 %v6789
    %v8498 = vunpack.c.l.b16 %v6790
    %v8499 = vunpack.c.l.b16 %v6791
    %v8500 = vunpack.c.l.b16 %v6792
    %v8501 = vunpack.c.l.b16 %v6793
    %v8502 = vunpack.c.l.b16 %v6794
    %v8503 = vunpack.c.l.b16 %v6795
    %v8504 = vunpack.c.l.b16 %v6796
    %v8505 = vunpack.c.l.b16 %v6797
    %v8506 = vunpack.c.l.b16 %v6798
    %v8507 = vunpack.c.l.b16 %v6799
    %v8508 = vunpack.c.l.b16 %v6800
    %v8509 = vunpack.c.l.b16 %v6801
    %v8510 = vunpack.c.l.b16 %v6802
    %v8511 = vunpack.c.l.b16 %v6803
    %v8512 = vunpack.c.l.b16 %v6804
    %v8513 = vunpack.c.l.b16 %v6805
    %v8514 = vunpack.c.l.b16 %v6806
    %v8515 = vunpack.c.l.b16 %v6807
    %v8516 = vunpack.c.l.b16 %v6808
    %v8517 = vunpack.c.l.b16 %v6809
    %v8518 = vunpack.c.l.b16 %v6810
    %v8519 = vunpack.c.l.b16 %v6811
    %v8520 = vunpack.c.l.b16 %v6812
    %v8521 = vunpack.c.l.b16 %v6813
    %v8522 = vunpack.c.l.b16 %v6814
    %v8523 = vunpack.c.l.b16 %v6815
    %v8524 = vunpack.c.l.b16 %v6816
    %v8525 = vunpack.c.l.b16 %v6817
    %v8526 = vunpack.c.l.b16 %v6818
    %v8527 = vunpack.c.l.b16 %v6819
    %v8528 = vunpack.c.l.b16 %v6820
    %v8529 = vunpack.c.l.b16 %v6821
    %v8530 = vunpack.c.l.b16 %v6822
    %v8531 = vunpack.c.l.b16 %v6823
    %v8532 = vunpack.c.l.b16 %v6824
    %v8533 = vunpack.c.l.b16 %v6825
    %v8534 = vunpack.c.l.b16 %v6826
    %v8535 = vunpack.c.l.b16 %v6827
    %v8536 = vunpack.c.l.b16 %v6828
    %v8537 = vunpack.c.l.b16 %v6829
    %v8538 = vunpack.c.l.b16 %v6830
    %v8539 = vunpack.c.l.b16 %v6831
    %v8540 = vunpack.c.l.b16 %v6832
    %v8541 = vunpack.c.l.b16 %v6833
    %v8542 = vunpack.c.l.b16 %v6834
    %v8543 = vunpack.c.l.b16 %v6835
    %v8544 = vunpack.c.l.b16 %v6836
    %v8545 = vunpack.c.l.b16 %v6837
    %v8546 = vunpack.c.l.b16 %v6838
    %v8547 = vunpack.c.l.b16 %v6839
    %v8548 = vunpack.c.l.b16 %v6840
    %v8549 = vunpack.c.l.b16 %v6841
    %v8550 = vunpack.c.l.b16 %v6842
    %v8551 = vunpack.c.l.b16 %v6843
    %v8552 = vunpack.c.l.b16 %v6844
    %v8553 = vunpack.c.l.b16 %v6845
    %v8554 = vunpack.c.l.b16 %v6846
    %v8555 = vunpack.c.l.b16 %v6847
    %v8556 = vunpack.c.l.b16 %v6848
    %v8557 = vunpack.c.l.b16 %v6849
    %v8558 = vunpack.c.l.b16 %v6850
    %v8559 = vunpack.c.l.b16 %v6851
    %v8560 = vunpack.c.l.b16 %v6852
    %v8561 = vunpack.c.l.b16 %v6853
    %v8562 = vunpack.c.l.b16 %v6854
    %v8563 = vunpack.c.l.b16 %v6855
    %v8564 = vunpack.c.l.b16 %v6856
    %v8565 = vunpack.c.l.b16 %v6857
    %v8566 = vunpack.c.l.b16 %v6858
    %v8567 = vunpack.c.l.b16 %v6859
    %v8568 = vunpack.c.l.b16 %v6860
    %v8569 = vunpack.c.l.b16 %v6861
    %v8570 = vunpack.c.l.b16 %v6862
    %v8571 = vunpack.c.l.b16 %v6863
    %v8572 = vunpack.c.l.b16 %v6864
    %v8573 = vunpack.c.l.b16 %v6865
    %v8574 = vunpack.c.l.b16 %v6866
    %v8575 = vunpack.c.l.b16 %v6867
    %v8576 = vunpack.c.l.b16 %v6868
    %v8577 = vunpack.c.l.b16 %v6869
    %v8578 = vunpack.c.l.b16 %v6870
    %v8579 = vunpack.c.l.b16 %v6871
    %v8580 = vunpack.c.l.b16 %v6872
    %v8581 = vunpack.c.l.b16 %v6873
    %v8582 = vunpack.c.l.b16 %v6874
    %v8583 = vunpack.c.l.b16 %v6875
    %v8584 = vunpack.c.l.b16 %v6876
    %v8585 = vunpack.c.l.b16 %v6877
    %v8586 = vunpack.c.l.b16 %v6878
    %v8587 = vunpack.c.l.b16 %v6879
    %v8588 = vunpack.c.l.b16 %v6880
    %v8589 = vunpack.c.l.b16 %v6881
    %v8590 = vunpack.c.l.b16 %v6882
    %v8591 = vunpack.c.l.b16 %v6883
    %v8592 = vunpack.c.l.b16 %v6884
    %v8593 = vunpack.c.l.b16 %v6885
    %v8594 = vunpack.c.l.b16 %v6886
    %v8595 = vunpack.c.l.b16 %v6887
    %v8596 = vunpack.c.l.b16 %v6888
    %v8597 = vunpack.c.l.b16 %v6889
    %v8598 = vunpack.c.l.b16 %v6890
    %v8599 = vunpack.c.l.b16 %v6891
    %v8600 = vunpack.c.l.b16 %v6892
    %v8601 = vunpack.c.l.b16 %v6893
    %v8602 = vunpack.c.l.b16 %v6894
    %v8603 = vunpack.c.l.b16 %v6895
    %v8604 = vunpack.c.l.b16 %v6896
    %v8605 = vunpack.c.l.b16 %v6897
    %v8606 = vunpack.c.l.b16 %v6898
    %v8607 = vunpack.c.l.b16 %v6899
    %v8608 = vunpack.c.l.b16 %v6900
    %v8609 = vunpack.c.l.b16 %v6901
    %v8610 = vunpack.c.l.b16 %v6902
    %v8611 = vunpack.c.l.b16 %v6903
    %v8612 = vunpack.c.l.b16 %v6904
    %v8613 = vunpack.c.l.b16 %v6905
    %v8614 = vunpack.c.l.b16 %v6906
    %v8615 = vunpack.c.l.b16 %v6907
    %v8616 = vunpack.c.l.b16 %v6908
    %v8617 = vunpack.c.l.b16 %v6909
    %v8618 = vunpack.c.l.b16 %v6910
    %v8619 = vunpack.c.l.b16 %v6911
    %v8620 = vunpack.c.l.b16 %v6912
    %v8621 = vunpack.c.l.b16 %v6913
    %v8622 = vunpack.c.l.b16 %v6914
    %v8623 = vunpack.c.l.b16 %v6915
    %v8624 = vunpack.c.l.b16 %v6916
    %v8625 = vunpack.c.l.b16 %v6917
    %v8626 = vunpack.c.l.b16 %v6918
    %v8627 = vunpack.c.l.b16 %v6919
    %v8628 = vunpack.c.l.b16 %v6920
    %v8629 = vunpack.c.l.b16 %v6921
    %v8630 = vunpack.c.l.b16 %v6922
    %v8631 = vunpack.c.l.b16 %v6923
    %v8632 = vunpack.c.l.b16 %v6924
    %v8633 = vunpack.c.l.b16 %v6925
    %v8634 = vunpack.c.l.b16 %v6926
    %v8635 = vunpack.c.l.b16 %v6927
    %v8636 = vunpack.c.l.b16 %v6928
    %v8637 = vunpack.c.l.b16 %v6929
    %v8638 = vunpack.c.l.b16 %v6930
    %v8639 = vunpack.c.l.b16 %v6931
    %v8640 = vunpack.c.l.b16 %v6932
    %v8641 = vunpack.c.l.b16 %v6933
    %v8642 = vunpack.c.l.b16 %v6934
    %v8643 = vunpack.c.l.b16 %v6935
    %v8644 = vunpack.c.l.b16 %v6936
    %v8645 = vunpack.c.l.b16 %v6937
    %v8646 = vunpack.c.l.b16 %v6938
    %v8647 = vunpack.c.l.b16 %v6939
    %v8648 = vunpack.c.l.b16 %v6940
    %v8649 = vunpack.c.l.b16 %v6941
    %v8650 = vunpack.c.l.b16 %v6942
    %v8651 = vunpack.c.l.b16 %v6943
    %v8652 = vunpack.c.l.b16 %v6944
    %v8653 = vunpack.c.l.b16 %v6945
    %v8654 = vunpack.c.l.b16 %v6946
    %v8655 = vunpack.c.l.b16 %v6947
    %v8656 = vunpack.c.l.b16 %v6948
    %v8657 = vunpack.c.l.b16 %v6949
    %v8658 = vunpack.c.l.b16 %v6950
    %v8659 = vunpack.c.l.b16 %v6951
    %v8660 = vunpack.c.l.b16 %v6952
    %v8661 = vunpack.c.l.b16 %v6953
    %v8662 = vunpack.c.l.b16 %v6954
    %v8663 = vunpack.c.l.b16 %v6955
    %v8664 = vunpack.c.l.b16 %v6956
    %v8665 = vunpack.c.l.b16 %v6957
    %v8666 = vunpack.c.l.b16 %v6958
    %v8667 = vunpack.c.l.b16 %v6959
    %v8668 = vunpack.c.l.b16 %v6960
    %v8669 = vunpack.c.l.b16 %v6961
    %v8670 = vunpack.c.l.b16 %v6962
    %v8671 = vunpack.c.l.b16 %v6963
    %v8672 = vunpack.c.l.b16 %v6964
    %v8673 = vunpack.c.l.b16 %v6965
    %v8674 = vunpack.c.l.b16 %v6966
    %v8675 = vunpack.c.l.b16 %v6967
    %v8676 = vunpack.c.l.b16 %v6968
    %v8677 = vunpack.c.l.b16 %v6969
    %v8678 = vunpack.c.l.b16 %v6970
    %v8679 = vunpack.c.l.b16 %v6971
    %v8680 = vunpack.c.l.b16 %v6972
    %v8681 = vunpack.c.l.b16 %v6973
    %v8682 = vunpack.c.l.b16 %v6974
    %v8683 = vunpack.c.l.b16 %v6975
    %v8684 = vunpack.c.l.b16 %v6976
    %v8685 = vunpack.c.l.b16 %v6977
    %v8686 = vunpack.c.l.b16 %v6978
    %v8687 = vunpack.c.l.b16 %v6979
    %v8688 = vunpack.c.l.b16 %v6980
    %v8689 = vunpack.c.l.b16 %v6981
    %v8690 = vunpack.c.l.b16 %v6982
    %v8691 = vunpack.c.l.b16 %v6983
    %v8692 = vunpack.c.l.b16 %v6984
    %v8693 = vunpack.c.l.b16 %v6985
    %v8694 = vunpack.c.l.b16 %v6986
    %v8695 = vunpack.c.l.b16 %v6987
    %v8696 = vunpack.c.l.b16 %v6988
    %v8697 = vunpack.c.l.b16 %v6989
    %v8698 = vunpack.c.l.b16 %v6990
    %v8699 = vunpack.c.l.b16 %v6991
    %v8700 = vunpack.c.l.b16 %v6992
    %v8701 = vunpack.c.l.b16 %v6993
    %v8702 = vunpack.c.l.b16 %v6994
    %v8703 = vunpack.c.l.b16 %v6995
    %v8704 = vunpack.c.l.b16 %v6996
    %v8705 = vunpack.c.l.b16 %v6997
    %v8706 = vunpack.c.l.b16 %v6998
    %v8707 = vunpack.c.l.b16 %v6999
    %v8708 = vunpack.c.l.b16 %v7000
    %v8709 = vunpack.c.l.b16 %v7001
    %v8710 = vunpack.c.l.b16 %v7002
    %v8711 = vunpack.c.l.b16 %v7003
    %v8712 = vunpack.c.l.b16 %v7004
    %v8713 = vunpack.c.l.b16 %v7005
    %v8714 = vunpack.c.l.b16 %v7006
    %v8715 = vunpack.c.l.b16 %v7007
    %v8716 = vunpack.c.l.b16 %v7008
    %v8717 = vunpack.c.l.b16 %v7009
    %v8718 = vunpack.c.l.b16 %v7010
    %v8719 = vunpack.c.l.b16 %v7011
    %v8720 = vunpack.c.l.b16 %v7012
    %v8721 = vunpack.c.l.b16 %v7013
    %v8722 = vunpack.c.l.b16 %v7014
    %v8723 = vunpack.c.l.b16 %v7015
    %v8724 = vunpack.c.l.b16 %v7016
    %v8725 = vunpack.c.l.b16 %v7017
    %v8726 = vunpack.c.l.b16 %v7018
    %v8727 = vunpack.c.l.b16 %v7019
    %v8728 = vunpack.c.l.b16 %v7020
    %v8729 = vunpack.c.l.b16 %v7021
    %v8730 = vunpack.c.l.b16 %v7022
    %v8731 = vunpack.c.l.b16 %v7023
    %v8732 = vunpack.c.l.b16 %v7024
    %v8733 = vunpack.c.l.b16 %v7025
    %v8734 = vunpack.c.l.b16 %v7026
    %v8735 = vunpack.c.l.b16 %v7027
    %v8736 = vunpack.c.l.b16 %v7028
    %v8737 = vunpack.c.l.b16 %v7029
    %v8738 = vunpack.c.l.b16 %v7030
    %v8739 = vunpack.c.l.b16 %v7031
    %v8740 = vunpack.c.l.b16 %v7032
    %v8741 = vunpack.c.l.b16 %v7033
    %v8742 = vunpack.c.l.b16 %v7034
    %v8743 = vunpack.c.l.b16 %v7035
    %v8744 = vunpack.c.l.b16 %v7036
    %v8745 = vunpack.c.l.b16 %v7037
    %v8746 = vunpack.c.l.b16 %v7038
    %v8747 = vunpack.c.l.b16 %v7039
    %v8748 = vunpack.c.l.b16 %v7040
    %v8749 = vunpack.c.l.b16 %v7041
    %v8750 = vunpack.c.l.b16 %v7042
    %v8751 = vunpack.c.l.b16 %v7043
    %v8752 = vunpack.c.l.b16 %v7044
    %v8753 = vunpack.c.l.b16 %v7045
    %v8754 = vunpack.c.l.b16 %v7046
    %v8755 = vunpack.c.l.b16 %v7047
    %v8756 = vunpack.c.l.b16 %v7048
    %v8757 = vunpack.c.l.b16 %v7049
    %v8758 = vunpack.c.l.b16 %v7050
    %v8759 = vunpack.c.l.b16 %v7051
    %v8760 = vunpack.c.l.b16 %v7052
    %v8761 = vunpack.c.l.b16 %v7053
    %v8762 = vunpack.c.l.b16 %v7054
    %v8763 = vunpack.c.l.b16 %v7055
    %v8764 = vunpack.c.l.b16 %v7056
    %v8765 = vunpack.c.l.b16 %v7057
    %v8766 = vunpack.c.l.b16 %v7058
    %v8767 = vunpack.c.l.b16 %v7059
    %v8768 = vunpack.c.l.b16 %v7060
    %v8769 = vunpack.c.l.b16 %v7061
    %v8770 = vunpack.c.l.b16 %v7062
    %v8771 = vunpack.c.l.b16 %v7063
    %v8772 = vunpack.c.l.b16 %v7064
    %v8773 = vunpack.c.l.b16 %v7065
    %v8774 = vunpack.c.l.b16 %v7066
    %v8775 = vunpack.c.l.b16 %v7067
    %v8776 = vunpack.c.l.b16 %v7068
    %v8777 = vunpack.c.l.b16 %v7069
    %v8778 = vunpack.c.l.b16 %v7070
    %v8779 = vunpack.c.l.b16 %v7071
    %v8780 = vunpack.c.l.b16 %v7072
    %v8781 = vunpack.c.l.b16 %v7073
    %v8782 = vunpack.c.l.b16 %v7074
    %v8783 = vunpack.c.l.b16 %v7075
    %v8784 = vunpack.c.l.b16 %v7076
    %v8785 = vunpack.c.l.b16 %v7077
    %v8786 = vunpack.c.l.b16 %v7078
    %v8787 = vunpack.c.l.b16 %v7079
    %v8788 = vunpack.c.l.b16 %v7080
    %v8789 = vunpack.c.l.b16 %v7081
    %v8790 = vunpack.c.l.b16 %v7082
    %v8791 = vunpack.c.l.b16 %v7083
    %v8792 = vunpack.c.l.b16 %v7084
    %v8793 = vunpack.c.l.b16 %v7085
    %v8794 = vunpack.c.l.b16 %v7086
    %v8795 = vunpack.c.l.b16 %v7087
    %v8796 = vunpack.c.l.b16 %v7088
    %v8797 = vunpack.c.l.b16 %v7089
    %v8798 = vunpack.c.l.b16 %v7090
    %v8799 = vunpack.c.l.b16 %v7091
    %v8800 = vunpack.c.l.b16 %v7092
    %v8801 = vunpack.c.l.b16 %v7093
    %v8802 = vunpack.c.l.b16 %v7094
    %v8803 = vunpack.c.l.b16 %v7095
    %v8804 = vunpack.c.l.b16 %v7096
    %v8805 = vunpack.c.l.b16 %v7097
    %v8806 = vunpack.c.l.b16 %v7098
    %v8807 = vunpack.c.l.b16 %v7099
    %v8808 = vunpack.c.l.b16 %v7100
    %v8809 = vunpack.c.l.b16 %v7101
    %v8810 = vunpack.c.l.b16 %v7102
    %v8811 = vunpack.c.l.b16 %v7103
    %v8812 = vunpack.c.l.b16 %v7104
    %v8813 = vunpack.c.l.b16 %v7105
    %v8814 = vunpack.c.l.b16 %v7106
    %v8815 = vunpack.c.l.b16 %v7107
    %v8816 = vunpack.c.l.b16 %v7108
    %v8817 = vunpack.c.l.b16 %v7109
    %v8818 = vunpack.c.l.b16 %v7110
    %v8819 = vunpack.c.l.b16 %v7111
    %v8820 = vunpack.c.l.b16 %v7112
    %v8821 = vunpack.c.l.b16 %v7113
    %v8822 = vunpack.c.l.b16 %v7114
    %v8823 = vunpack.c.l.b16 %v7115
    %v8824 = vunpack.c.l.b16 %v7116
    %v8825 = vunpack.c.l.b16 %v7117
    %v8826 = vunpack.c.l.b16 %v7118
    %v8827 = vunpack.c.l.b16 %v7119
    %v8828 = vunpack.c.l.b16 %v7120
    %v8829 = vunpack.c.l.b16 %v7121
    %v8830 = vunpack.c.l.b16 %v7122
    %v8831 = vunpack.c.l.b16 %v7123
    %v8832 = vunpack.c.l.b16 %v7124
    %v8833 = vunpack.c.l.b16 %v7125
    %v8834 = vunpack.c.l.b16 %v7126
    %v8835 = vunpack.c.l.b16 %v7127
    %v8836 = vunpack.c.l.b16 %v7128
    %v8837 = vunpack.c.l.b16 %v7129
    %v8838 = vunpack.c.l.b16 %v7130
    %v8839 = vunpack.c.l.b16 %v7131
    %v8840 = vunpack.c.l.b16 %v7132
    %v8841 = vunpack.c.l.b16 %v7133
    %v8842 = vunpack.c.l.b16 %v7134
    %v8843 = vunpack.c.l.b16 %v7135
    %v8844 = vunpack.c.l.b16 %v7136
    %v8845 = vunpack.c.l.b16 %v7137
    %v8846 = vunpack.c.l.b16 %v7138
    %v8847 = vunpack.c.l.b16 %v7139
    %v8848 = vunpack.c.l.b16 %v7140
    %v8849 = vunpack.c.l.b16 %v7141
    %v8850 = vunpack.c.l.b16 %v7142
    %v8851 = vunpack.c.l.b16 %v7143
    %v8852 = vunpack.c.l.b16 %v7144
    %v8853 = vunpack.c.l.b16 %v7145
    %v8854 = vunpack.c.l.b16 %v7146
    %v8855 = vunpack.c.l.b16 %v7147
    %v8856 = vunpack.c.l.b16 %v7148
    %v8857 = vunpack.c.l.b16 %v7149
    %v8858 = vunpack.c.l.b16 %v7150
    %v8859 = vunpack.c.l.b16 %v7151
    %v8860 = vunpack.c.l.b16 %v7152
    %v8861 = vunpack.c.l.b16 %v7153
    %v8862 = vunpack.c.l.b16 %v7154
    %v8863 = vunpack.c.l.b16 %v7155
    %v8864 = vunpack.c.l.b16 %v7156
    %v8865 = vunpack.c.l.b16 %v7157
    %v8866 = vunpack.c.l.b16 %v7158
    %v8867 = vunpack.c.l.b16 %v7159
    %v8868 = vunpack.c.l.b16 %v7160
    %v8869 = vunpack.c.l.b16 %v7161
    %v8870 = vunpack.c.l.b16 %v7162
    %v8871 = vunpack.c.l.b16 %v7163
    %v8872 = vunpack.c.l.b16 %v7164
    %v8873 = vunpack.c.l.b16 %v7165
    %v8874 = vunpack.c.l.b16 %v7166
    %v8875 = vunpack.c.l.b16 %v7167
    %v8876 = vunpack.c.l.b16 %v7168
    %v8877 = vunpack.c.l.b16 %v7169
    %v8878 = vunpack.c.l.b16 %v7170
    %v8879 = vunpack.c.l.b16 %v7171
    %v8880 = vunpack.c.l.b16 %v7172
    %v8881 = vunpack.c.l.b16 %v7173
    %v8882 = vunpack.c.l.b16 %v7174
    %v8883 = vunpack.c.l.b16 %v7175
    %v8884 = vunpack.c.l.b16 %v7176
    %v8885 = vunpack.c.l.b16 %v7177
    %v8886 = vunpack.c.l.b16 %v7178
    %v8887 = vunpack.c.l.b16 %v7179
    %v8888 = vunpack.c.l.b16 %v7180
    %v8889 = vunpack.c.l.b16 %v7181
    %v8890 = vunpack.c.l.b16 %v7182
    %v8891 = vunpack.c.l.b16 %v7183
    %v8892 = vunpack.c.l.b16 %v7184
    %v8893 = vunpack.c.l.b16 %v7185
    %v8894 = vunpack.c.l.b16 %v7186
    %v8895 = vunpack.c.l.b16 %v7187
    %v8896 = vunpack.c.l.b16 %v7188
    %v8897 = vunpack.c.l.b16 %v7189
    %v8898 = vunpack.c.l.b16 %v7190
    %v8899 = vunpack.c.l.b16 %v7191
    %v8900 = vunpack.c.l.b16 %v7192
    %v8901 = vunpack.c.l.b16 %v7193
    %v8902 = vunpack.c.l.b16 %v7194
    %v8903 = vunpack.c.l.b16 %v7195
    %v8904 = vunpack.c.l.b16 %v7196
    %v8905 = vunpack.c.l.b16 %v7197
    %v8906 = vunpack.c.l.b16 %v7198
    %v8907 = vunpack.c.l.b16 %v7199
    %v8908 = vunpack.c.l.b16 %v7200
    %v8909 = vunpack.c.l.b16 %v7201
    %v8910 = vunpack.c.l.b16 %v7202
    %v8911 = vunpack.c.l.b16 %v7203
    %v8912 = vunpack.c.l.b16 %v7204
    %v8913 = vunpack.c.l.b16 %v7205
    %v8914 = vunpack.c.l.b16 %v7206
    %v8915 = vunpack.c.l.b16 %v7207
    %v8916 = vunpack.c.l.b16 %v7208
    %v8917 = vunpack.c.l.b16 %v7209
    %v8918 = vunpack.c.l.b16 %v7210
    %v8919 = vunpack.c.l.b16 %v7211
    %v8920 = vunpack.c.l.b16 %v7212
    %v8921 = vunpack.c.l.b16 %v7213
    %v8922 = vunpack.c.l.b16 %v7214
    %v8923 = vunpack.c.l.b16 %v7215
    %v8924 = vunpack.c.l.b16 %v7216
    %v8925 = vunpack.c.l.b16 %v7217
    %v8926 = vunpack.c.l.b16 %v7218
    %v8927 = vunpack.c.l.b16 %v7219
    %v8928 = vunpack.c.l.b16 %v7220
    %v8929 = vunpack.c.l.b16 %v7221
    %v8930 = vunpack.c.l.b16 %v7222
    %v8931 = vunpack.c.l.b16 %v7223
    %v8932 = vunpack.c.l.b16 %v7224
    %v8933 = vunpack.c.l.b16 %v7225
    %v8934 = vunpack.c.l.b16 %v7226
    %v8935 = vunpack.c.l.b16 %v7227
    %v8936 = vunpack.c.l.b16 %v7228
    %v8937 = vunpack.c.l.b16 %v7229
    %v8938 = vunpack.c.l.b16 %v7230
    %v8939 = vunpack.c.l.b16 %v7231
    %v8940 = vunpack.c.l.b16 %v7232
    %v8941 = vunpack.c.l.b16 %v7233
    %v8942 = vunpack.c.l.b16 %v7234
    %v8943 = vunpack.c.l.b16 %v7235
    %v8944 = vunpack.c.l.b16 %v7236
    %v8945 = vunpack.c.l.b16 %v7237
    %v8946 = vunpack.c.l.b16 %v7238
    %v8947 = vunpack.c.l.b16 %v7239
    %v8948 = vunpack.c.l.b16 %v7240
    %v8949 = vunpack.c.l.b16 %v7241
    %v8950 = vunpack.c.l.b16 %v7242
    %v8951 = vunpack.c.l.b16 %v7243
    %v8952 = vunpack.c.l.b16 %v7244
    %v8953 = vunpack.c.l.b16 %v7245
    %v8954 = vunpack.c.l.b16 %v7246
    %v8955 = vunpack.c.l.b16 %v7247
    %v8956 = vunpack.c.l.b16 %v7248
    %v8957 = vunpack.c.l.b16 %v7249
    %v8958 = vunpack.c.l.b16 %v7250
    %v8959 = vunpack.c.l.b16 %v7251
    %v8960 = vunpack.c.l.b16 %v7252
    %v8961 = vunpack.c.l.b16 %v7253
    %v8962 = vunpack.c.l.b16 %v7254
    %v8963 = vunpack.c.l.b16 %v7255
    %v8964 = vunpack.c.l.b16 %v7256
    %v8965 = vunpack.c.l.b16 %v7257
    %v8966 = vunpack.c.l.b16 %v7258
    %v8967 = vunpack.c.l.b16 %v7259
    %v8968 = vunpack.c.l.b16 %v7260
    %v8969 = vunpack.c.l.b16 %v7261
    %v8970 = vunpack.c.l.b16 %v7262
    %v8971 = vunpack.c.l.b16 %v7263
    %v8972 = vunpack.c.l.b16 %v7264
    %v8973 = vunpack.c.l.b16 %v7265
    %v8974 = vunpack.c.l.b16 %v7266
    %v8975 = vunpack.c.l.b16 %v7267
    %v8976 = vunpack.c.l.b16 %v7268
    %v8977 = vunpack.c.l.b16 %v7269
    %v8978 = vunpack.c.l.b16 %v7270
    %v8979 = vunpack.c.l.b16 %v7271
    %v8980 = vunpack.c.l.b16 %v7272
    %v8981 = vunpack.c.l.b16 %v7273
    %v8982 = vunpack.c.l.b16 %v7274
    %v8983 = vunpack.c.l.b16 %v7275
    %v8984 = vunpack.c.l.b16 %v7276
    %v8985 = vunpack.c.l.b16 %v7277
    %v8986 = vunpack.c.l.b16 %v7278
    %v8987 = vunpack.c.l.b16 %v7279
    %v8988 = vunpack.c.l.b16 %v7280
    %v8989 = vunpack.c.l.b16 %v7281
    %v8990 = vunpack.c.l.b16 %v7282
    %v8991 = vunpack.c.l.b16 %v7283
    %v8992 = vunpack.c.l.b16 %v7284
    %v8993 = vunpack.c.l.b16 %v7285
    %v8994 = vunpack.c.l.b16 %v7286
    %v8995 = vunpack.c.l.b16 %v7287
    %v8996 = vunpack.c.l.b16 %v7288
    %v8997 = vunpack.c.l.b16 %v7289
    %v8998 = vunpack.c.l.b16 %v7290
    %v8999 = vunpack.c.l.b16 %v7291
    %v9000 = vunpack.c.l.b16 %v7292
    %v9001 = vunpack.c.l.b16 %v7293
    %v9002 = vpack.c.b16 %v8235, %v8234
    %v9003 = vpack.c.b16 %v8237, %v8236
    %v9004 = vpack.c.b16 %v8239, %v8238
    %v9005 = vpack.c.b16 %v8241, %v8240
    %v9006 = vpack.c.b16 %v8243, %v8242
    %v9007 = vpack.c.b16 %v8245, %v8244
    %v9008 = vpack.c.b16 %v8247, %v8246
    %v9009 = vpack.c.b16 %v8249, %v8248
    %v9010 = vpack.c.b16 %v8251, %v8250
    %v9011 = vpack.c.b16 %v8253, %v8252
    %v9012 = vpack.c.b16 %v8255, %v8254
    %v9013 = vpack.c.b16 %v8257, %v8256
    %v9014 = vpack.c.b16 %v8259, %v8258
    %v9015 = vpack.c.b16 %v8261, %v8260
    %v9016 = vpack.c.b16 %v8263, %v8262
    %v9017 = vpack.c.b16 %v8265, %v8264
    %v9018 = vpack.c.b16 %v8267, %v8266
    %v9019 = vpack.c.b16 %v8269, %v8268
    %v9020 = vpack.c.b16 %v8271, %v8270
    %v9021 = vpack.c.b16 %v8273, %v8272
    %v9022 = vpack.c.b16 %v8275, %v8274
    %v9023 = vpack.c.b16 %v8277, %v8276
    %v9024 = vpack.c.b16 %v8279, %v8278
    %v9025 = vpack.c.b16 %v8281, %v8280
    %v9026 = vpack.c.b16 %v8283, %v8282
    %v9027 = vpack.c.b16 %v8285, %v8284
    %v9028 = vpack.c.b16 %v8287, %v8286
    %v9029 = vpack.c.b16 %v8289, %v8288
    %v9030 = vpack.c.b16 %v8291, %v8290
    %v9031 = vpack.c.b16 %v8293, %v8292
    %v9032 = vpack.c.b16 %v8295, %v8294
    %v9033 = vpack.c.b16 %v8297, %v8296
    %v9034 = vpack.c.b16 %v8299, %v8298
    %v9035 = vpack.c.b16 %v8301, %v8300
    %v9036 = vpack.c.b16 %v8303, %v8302
    %v9037 = vpack.c.b16 %v8305, %v8304
    %v9038 = vpack.c.b16 %v8307, %v8306
    %v9039 = vpack.c.b16 %v8309, %v8308
    %v9040 = vpack.c.b16 %v8311, %v8310
    %v9041 = vpack.c.b16 %v8313, %v8312
    %v9042 = vpack.c.b16 %v8315, %v8314
    %v9043 = vpack.c.b16 %v8317, %v8316
    %v9044 = vpack.c.b16 %v8319, %v8318
    %v9045 = vpack.c.b16 %v8321, %v8320
    %v9046 = vpack.c.b16 %v8323, %v8322
    %v9047 = vpack.c.b16 %v8325, %v8324
    %v9048 = vpack.c.b16 %v8327, %v8326
    %v9049 = vpack.c.b16 %v8329, %v8328
    %v9050 = vpack.c.b16 %v8331, %v8330
    %v9051 = vpack.c.b16 %v8333, %v8332
    %v9052 = vpack.c.b16 %v8335, %v8334
    %v9053 = vpack.c.b16 %v8337, %v8336
    %v9054 = vpack.c.b16 %v8339, %v8338
    %v9055 = vpack.c.b16 %v8341, %v8340
    %v9056 = vpack.c.b16 %v8343, %v8342
    %v9057 = vpack.c.b16 %v8345, %v8344
    %v9058 = vpack.c.b16 %v8347, %v8346
    %v9059 = vpack.c.b16 %v8349, %v8348
    %v9060 = vpack.c.b16 %v8351, %v8350
    %v9061 = vpack.c.b16 %v8353, %v8352
    %v9062 = vpack.c.b16 %v8355, %v8354
    %v9063 = vpack.c.b16 %v8357, %v8356
    %v9064 = vpack.c.b16 %v8359, %v8358
    %v9065 = vpack.c.b16 %v8361, %v8360
    %v9066 = vpack.c.b16 %v8363, %v8362
    %v9067 = vpack.c.b16 %v8365, %v8364
    %v9068 = vpack.c.b16 %v8367, %v8366
    %v9069 = vpack.c.b16 %v8369, %v8368
    %v9070 = vpack.c.b16 %v8371, %v8370
    %v9071 = vpack.c.b16 %v8373, %v8372
    %v9072 = vpack.c.b16 %v8375, %v8374
    %v9073 = vpack.c.b16 %v8377, %v8376
    %v9074 = vpack.c.b16 %v8379, %v8378
    %v9075 = vpack.c.b16 %v8381, %v8380
    %v9076 = vpack.c.b16 %v8383, %v8382
    %v9077 = vpack.c.b16 %v8385, %v8384
    %v9078 = vpack.c.b16 %v8387, %v8386
    %v9079 = vpack.c.b16 %v8389, %v8388
    %v9080 = vpack.c.b16 %v8391, %v8390
    %v9081 = vpack.c.b16 %v8393, %v8392
    %v9082 = vpack.c.b16 %v8395, %v8394
    %v9083 = vpack.c.b16 %v8397, %v8396
    %v9084 = vpack.c.b16 %v8399, %v8398
    %v9085 = vpack.c.b16 %v8401, %v8400
    %v9086 = vpack.c.b16 %v8403, %v8402
    %v9087 = vpack.c.b16 %v8405, %v8404
    %v9088 = vpack.c.b16 %v8407, %v8406
    %v9089 = vpack.c.b16 %v8409, %v8408
    %v9090 = vpack.c.b16 %v8411, %v8410
    %v9091 = vpack.c.b16 %v8413, %v8412
    %v9092 = vpack.c.b16 %v8415, %v8414
    %v9093 = vpack.c.b16 %v8417, %v8416
    %v9094 = vpack.c.b16 %v8419, %v8418
    %v9095 = vpack.c.b16 %v8421, %v8420
    %v9096 = vpack.c.b16 %v8423, %v8422
    %v9097 = vpack.c.b16 %v8425, %v8424
    %v9098 = vpack.c.b16 %v8427, %v8426
    %v9099 = vpack.c.b16 %v8429, %v8428
    %v9100 = vpack.c.b16 %v8431, %v8430
    %v9101 = vpack.c.b16 %v8433, %v8432
    %v9102 = vpack.c.b16 %v8435, %v8434
    %v9103 = vpack.c.b16 %v8437, %v8436
    %v9104 = vpack.c.b16 %v8439, %v8438
    %v9105 = vpack.c.b16 %v8441, %v8440
    %v9106 = vpack.c.b16 %v8443, %v8442
    %v9107 = vpack.c.b16 %v8445, %v8444
    %v9108 = vpack.c.b16 %v8447, %v8446
    %v9109 = vpack.c.b16 %v8449, %v8448
    %v9110 = vpack.c.b16 %v8451, %v8450
    %v9111 = vpack.c.b16 %v8453, %v8452
    %v9112 = vpack.c.b16 %v8455, %v8454
    %v9113 = vpack.c.b16 %v8457, %v8456
    %v9114 = vpack.c.b16 %v8459, %v8458
    %v9115 = vpack.c.b16 %v8461, %v8460
    %v9116 = vpack.c.b16 %v8463, %v8462
    %v9117 = vpack.c.b16 %v8465, %v8464
    %v9118 = vpack.c.b16 %v8467, %v8466
    %v9119 = vpack.c.b16 %v8469, %v8468
    %v9120 = vpack.c.b16 %v8471, %v8470
    %v9121 = vpack.c.b16 %v8473, %v8472
    %v9122 = vpack.c.b16 %v8475, %v8474
    %v9123 = vpack.c.b16 %v8477, %v8476
    %v9124 = vpack.c.b16 %v8479, %v8478
    %v9125 = vpack.c.b16 %v8481, %v8480
    %v9126 = vpack.c.b16 %v8483, %v8482
    %v9127 = vpack.c.b16 %v8485, %v8484
    %v9128 = vpack.c.b16 %v8487, %v8486
    %v9129 = vpack.c.b16 %v8489, %v8488
    %v9130 = vpack.c.b16 %v8491, %v8490
    %v9131 = vpack.c.b16 %v8493, %v8492
    %v9132 = vpack.c.b16 %v8495, %v8494
    %v9133 = vpack.c.b16 %v8497, %v8496
    %v9134 = vpack.c.b16 %v8499, %v8498
    %v9135 = vpack.c.b16 %v8501, %v8500
    %v9136 = vpack.c.b16 %v8503, %v8502
    %v9137 = vpack.c.b16 %v8505, %v8504
    %v9138 = vpack.c.b16 %v8507, %v8506
    %v9139 = vpack.c.b16 %v8509, %v8508
    %v9140 = vpack.c.b16 %v8511, %v8510
    %v9141 = vpack.c.b16 %v8513, %v8512
    %v9142 = vpack.c.b16 %v8515, %v8514
    %v9143 = vpack.c.b16 %v8517, %v8516
    %v9144 = vpack.c.b16 %v8519, %v8518
    %v9145 = vpack.c.b16 %v8521, %v8520
    %v9146 = vpack.c.b16 %v8523, %v8522
    %v9147 = vpack.c.b16 %v8525, %v8524
    %v9148 = vpack.c.b16 %v8527, %v8526
    %v9149 = vpack.c.b16 %v8529, %v8528
    %v9150 = vpack.c.b16 %v8531, %v8530
    %v9151 = vpack.c.b16 %v8533, %v8532
    %v9152 = vpack.c.b16 %v8535, %v8534
    %v9153 = vpack.c.b16 %v8537, %v8536
    %v9154 = vpack.c.b16 %v8539, %v8538
    %v9155 = vpack.c.b16 %v8541, %v8540
    %v9156 = vpack.c.b16 %v8543, %v8542
    %v9157 = vpack.c.b16 %v8545, %v8544
    %v9158 = vpack.c.b16 %v8547, %v8546
    %v9159 = vpack.c.b16 %v8549, %v8548
    %v9160 = vpack.c.b16 %v8551, %v8550
    %v9161 = vpack.c.b16 %v8553, %v8552
    %v9162 = vpack.c.b16 %v8555, %v8554
    %v9163 = vpack.c.b16 %v8557, %v8556
    %v9164 = vpack.c.b16 %v8559, %v8558
    %v9165 = vpack.c.b16 %v8561, %v8560
    %v9166 = vpack.c.b16 %v8563, %v8562
    %v9167 = vpack.c.b16 %v8565, %v8564
    %v9168 = vpack.c.b16 %v8567, %v8566
    %v9169 = vpack.c.b16 %v8569, %v8568
    %v9170 = vpack.c.b16 %v8571, %v8570
    %v9171 = vpack.c.b16 %v8573, %v8572
    %v9172 = vpack.c.b16 %v8575, %v8574
    %v9173 = vpack.c.b16 %v8577, %v8576
    %v9174 = vpack.c.b16 %v8579, %v8578
    %v9175 = vpack.c.b16 %v8581, %v8580
    %v9176 = vpack.c.b16 %v8583, %v8582
    %v9177 = vpack.c.b16 %v8585, %v8584
    %v9178 = vpack.c.b16 %v8587, %v8586
    %v9179 = vpack.c.b16 %v8589, %v8588
    %v9180 = vpack.c.b16 %v8591, %v8590
    %v9181 = vpack.c.b16 %v8593, %v8592
    %v9182 = vpack.c.b16 %v8595, %v8594
    %v9183 = vpack.c.b16 %v8597, %v8596
    %v9184 = vpack.c.b16 %v8599, %v8598
    %v9185 = vpack.c.b16 %v8601, %v8600
    %v9186 = vpack.c.b16 %v8603, %v8602
    %v9187 = vpack.c.b16 %v8605, %v8604
    %v9188 = vpack.c.b16 %v8607, %v8606
    %v9189 = vpack.c.b16 %v8609, %v8608
    %v9190 = vpack.c.b16 %v8611, %v8610
    %v9191 = vpack.c.b16 %v8613, %v8612
    %v9192 = vpack.c.b16 %v8615, %v8614
    %v9193 = vpack.c.b16 %v8617, %v8616
    %v9194 = vpack.c.b16 %v8619, %v8618
    %v9195 = vpack.c.b16 %v8621, %v8620
    %v9196 = vpack.c.b16 %v8623, %v8622
    %v9197 = vpack.c.b16 %v8625, %v8624
    %v9198 = vpack.c.b16 %v8627, %v8626
    %v9199 = vpack.c.b16 %v8629, %v8628
    %v9200 = vpack.c.b16 %v8631, %v8630
    %v9201 = vpack.c.b16 %v8633, %v8632
    %v9202 = vpack.c.b16 %v8635, %v8634
    %v9203 = vpack.c.b16 %v8637, %v8636
    %v9204 = vpack.c.b16 %v8639, %v8638
    %v9205 = vpack.c.b16 %v8641, %v8640
    %v9206 = vpack.c.b16 %v8643, %v8642
    %v9207 = vpack.c.b16 %v8645, %v8644
    %v9208 = vpack.c.b16 %v8647, %v8646
    %v9209 = vpack.c.b16 %v8649, %v8648
    %v9210 = vpack.c.b16 %v8651, %v8650
    %v9211 = vpack.c.b16 %v8653, %v8652
    %v9212 = vpack.c.b16 %v8655, %v8654
    %v9213 = vpack.c.b16 %v8657, %v8656
    %v9214 = vpack.c.b16 %v8659, %v8658
    %v9215 = vpack.c.b16 %v8661, %v8660
    %v9216 = vpack.c.b16 %v8663, %v8662
    %v9217 = vpack.c.b16 %v8665, %v8664
    %v9218 = vpack.c.b16 %v8667, %v8666
    %v9219 = vpack.c.b16 %v8669, %v8668
    %v9220 = vpack.c.b16 %v8671, %v8670
    %v9221 = vpack.c.b16 %v8673, %v8672
    %v9222 = vpack.c.b16 %v8675, %v8674
    %v9223 = vpack.c.b16 %v8677, %v8676
    %v9224 = vpack.c.b16 %v8679, %v8678
    %v9225 = vpack.c.b16 %v8681, %v8680
    %v9226 = vpack.c.b16 %v8683, %v8682
    %v9227 = vpack.c.b16 %v8685, %v8684
    %v9228 = vpack.c.b16 %v8687, %v8686
    %v9229 = vpack.c.b16 %v8689, %v8688
    %v9230 = vpack.c.b16 %v8691, %v8690
    %v9231 = vpack.c.b16 %v8693, %v8692
    %v9232 = vpack.c.b16 %v8695, %v8694
    %v9233 = vpack.c.b16 %v8697, %v8696
    %v9234 = vpack.c.b16 %v8699, %v8698
    %v9235 = vpack.c.b16 %v8701, %v8700
    %v9236 = vpack.c.b16 %v8703, %v8702
    %v9237 = vpack.c.b16 %v8705, %v8704
    %v9238 = vpack.c.b16 %v8707, %v8706
    %v9239 = vpack.c.b16 %v8709, %v8708
    %v9240 = vpack.c.b16 %v8711, %v8710
    %v9241 = vpack.c.b16 %v8713, %v8712
    %v9242 = vpack.c.b16 %v8715, %v8714
    %v9243 = vpack.c.b16 %v8717, %v8716
    %v9244 = vpack.c.b16 %v8719, %v8718
    %v9245 = vpack.c.b16 %v8721, %v8720
    %v9246 = vpack.c.b16 %v8723, %v8722
    %v9247 = vpack.c.b16 %v8725, %v8724
    %v9248 = vpack.c.b16 %v8727, %v8726
    %v9249 = vpack.c.b16 %v8729, %v8728
    %v9250 = vpack.c.b16 %v8731, %v8730
    %v9251 = vpack.c.b16 %v8733, %v8732
    %v9252 = vpack.c.b16 %v8735, %v8734
    %v9253 = vpack.c.b16 %v8737, %v8736
    %v9254 = vpack.c.b16 %v8739, %v8738
    %v9255 = vpack.c.b16 %v8741, %v8740
    %v9256 = vpack.c.b16 %v8743, %v8742
    %v9257 = vpack.c.b16 %v8745, %v8744
    %v9258 = vpack.c.b16 %v8747, %v8746
    %v9259 = vpack.c.b16 %v8749, %v8748
    %v9260 = vpack.c.b16 %v8751, %v8750
    %v9261 = vpack.c.b16 %v8753, %v8752
    %v9262 = vpack.c.b16 %v8755, %v8754
    %v9263 = vpack.c.b16 %v8757, %v8756
    %v9264 = vpack.c.b16 %v8759, %v8758
    %v9265 = vpack.c.b16 %v8761, %v8760
    %v9266 = vpack.c.b16 %v8763, %v8762
    %v9267 = vpack.c.b16 %v8765, %v8764
    %v9268 = vpack.c.b16 %v8767, %v8766
    %v9269 = vpack.c.b16 %v8769, %v8768
    %v9270 = vpack.c.b16 %v8771, %v8770
    %v9271 = vpack.c.b16 %v8773, %v8772
    %v9272 = vpack.c.b16 %v8775, %v8774
    %v9273 = vpack.c.b16 %v8777, %v8776
    %v9274 = vpack.c.b16 %v8779, %v8778
    %v9275 = vpack.c.b16 %v8781, %v8780
    %v9276 = vpack.c.b16 %v8783, %v8782
    %v9277 = vpack.c.b16 %v8785, %v8784
    %v9278 = vpack.c.b16 %v8787, %v8786
    %v9279 = vpack.c.b16 %v8789, %v8788
    %v9280 = vpack.c.b16 %v8791, %v8790
    %v9281 = vpack.c.b16 %v8793, %v8792
    %v9282 = vpack.c.b16 %v8795, %v8794
    %v9283 = vpack.c.b16 %v8797, %v8796
    %v9284 = vpack.c.b16 %v8799, %v8798
    %v9285 = vpack.c.b16 %v8801, %v8800
    %v9286 = vpack.c.b16 %v8803, %v8802
    %v9287 = vpack.c.b16 %v8805, %v8804
    %v9288 = vpack.c.b16 %v8807, %v8806
    %v9289 = vpack.c.b16 %v8809, %v8808
    %v9290 = vpack.c.b16 %v8811, %v8810
    %v9291 = vpack.c.b16 %v8813, %v8812
    %v9292 = vpack.c.b16 %v8815, %v8814
    %v9293 = vpack.c.b16 %v8817, %v8816
    %v9294 = vpack.c.b16 %v8819, %v8818
    %v9295 = vpack.c.b16 %v8821, %v8820
    %v9296 = vpack.c.b16 %v8823, %v8822
    %v9297 = vpack.c.b16 %v8825, %v8824
    %v9298 = vpack.c.b16 %v8827, %v8826
    %v9299 = vpack.c.b16 %v8829, %v8828
    %v9300 = vpack.c.b16 %v8831, %v8830
    %v9301 = vpack.c.b16 %v8833, %v8832
    %v9302 = vpack.c.b16 %v8835, %v8834
    %v9303 = vpack.c.b16 %v8837, %v8836
    %v9304 = vpack.c.b16 %v8839, %v8838
    %v9305 = vpack.c.b16 %v8841, %v8840
    %v9306 = vpack.c.b16 %v8843, %v8842
    %v9307 = vpack.c.b16 %v8845, %v8844
    %v9308 = vpack.c.b16 %v8847, %v8846
    %v9309 = vpack.c.b16 %v8849, %v8848
    %v9310 = vpack.c.b16 %v8851, %v8850
    %v9311 = vpack.c.b16 %v8853, %v8852
    %v9312 = vpack.c.b16 %v8855, %v8854
    %v9313 = vpack.c.b16 %v8857, %v8856
    %v9314 = vpack.c.b16 %v8859, %v8858
    %v9315 = vpack.c.b16 %v8861, %v8860
    %v9316 = vpack.c.b16 %v8863, %v8862
    %v9317 = vpack.c.b16 %v8865, %v8864
    %v9318 = vpack.c.b16 %v8867, %v8866
    %v9319 = vpack.c.b16 %v8869, %v8868
    %v9320 = vpack.c.b16 %v8871, %v8870
    %v9321 = vpack.c.b16 %v8873, %v8872
    %v9322 = vpack.c.b16 %v8875, %v8874
    %v9323 = vpack.c.b16 %v8877, %v8876
    %v9324 = vpack.c.b16 %v8879, %v8878
    %v9325 = vpack.c.b16 %v8881, %v8880
    %v9326 = vpack.c.b16 %v8883, %v8882
    %v9327 = vpack.c.b16 %v8885, %v8884
    %v9328 = vpack.c.b16 %v8887, %v8886
    %v9329 = vpack.c.b16 %v8889, %v8888
    %v9330 = vpack.c.b16 %v8891, %v8890
    %v9331 = vpack.c.b16 %v8893, %v8892
    %v9332 = vpack.c.b16 %v8895, %v8894
    %v9333 = vpack.c.b16 %v8897, %v8896
    %v9334 = vpack.c.b16 %v8899, %v8898
    %v9335 = vpack.c.b16 %v8901, %v8900
    %v9336 = vpack.c.b16 %v8903, %v8902
    %v9337 = vpack.c.b16 %v8905, %v8904
    %v9338 = vpack.c.b16 %v8907, %v8906
    %v9339 = vpack.c.b16 %v8909, %v8908
    %v9340 = vpack.c.b16 %v8911, %v8910
    %v9341 = vpack.c.b16 %v8913, %v8912
    %v9342 = vpack.c.b16 %v8915, %v8914
    %v9343 = vpack.c.b16 %v8917, %v8916
    %v9344 = vpack.c.b16 %v8919, %v8918
    %v9345 = vpack.c.b16 %v8921, %v8920
    %v9346 = vpack.c.b16 %v8923, %v8922
    %v9347 = vpack.c.b16 %v8925, %v8924
    %v9348 = vpack.c.b16 %v8927, %v8926
    %v9349 = vpack.c.b16 %v8929, %v8928
    %v9350 = vpack.c.b16 %v8931, %v8930
    %v9351 = vpack.c.b16 %v8933, %v8932
    %v9352 = vpack.c.b16 %v8935, %v8934
    %v9353 = vpack.c.b16 %v8937, %v8936
    %v9354 = vpack.c.b16 %v8939, %v8938
    %v9355 = vpack.c.b16 %v8941, %v8940
    %v9356 = vpack.c.b16 %v8943, %v8942
    %v9357 = vpack.c.b16 %v8945, %v8944
    %v9358 = vpack.c.b16 %v8947, %v8946
    %v9359 = vpack.c.b16 %v8949, %v8948
    %v9360 = vpack.c.b16 %v8951, %v8950
    %v9361 = vpack.c.b16 %v8953, %v8952
    %v9362 = vpack.c.b16 %v8955, %v8954
    %v9363 = vpack.c.b16 %v8957, %v8956
    %v9364 = vpack.c.b16 %v8959, %v8958
    %v9365 = vpack.c.b16 %v8961, %v8960
    %v9366 = vpack.c.b16 %v8963, %v8962
    %v9367 = vpack.c.b16 %v8965, %v8964
    %v9368 = vpack.c.b16 %v8967, %v8966
    %v9369 = vpack.c.b16 %v8969, %v8968
    %v9370 = vpack.c.b16 %v8971, %v8970
    %v9371 = vpack.c.b16 %v8973, %v8972
    %v9372 = vpack.c.b16 %v8975, %v8974
    %v9373 = vpack.c.b16 %v8977, %v8976
    %v9374 = vpack.c.b16 %v8979, %v8978
    %v9375 = vpack.c.b16 %v8981, %v8980
    %v9376 = vpack.c.b16 %v8983, %v8982
    %v9377 = vpack.c.b16 %v8985, %v8984
    %v9378 = vpack.c.b16 %v8987, %v8986
    %v9379 = vpack.c.b16 %v8989, %v8988
    %v9380 = vpack.c.b16 %v8991, %v8990
    %v9381 = vpack.c.b16 %v8993, %v8992
    %v9382 = vpack.c.b16 %v8995, %v8994
    %v9383 = vpack.c.b16 %v8997, %v8996
    %v9384 = vpack.c.b16 %v8999, %v8998
    %v9385 = vpack.c.b16 %v9001, %v9000
    %9770 = vmatpush.bf16.msra.mxu0 %v9009
    %9771 = vmatpush.bf16.msra.mxu0 %v9008
    %9772 = vmatpush.bf16.msra.mxu0 %v9007
    %9773 = vmatpush.bf16.msra.mxu0 %v9006
    %9774 = vmatpush.bf16.msra.mxu0 %v9005
    %9775 = vmatpush.bf16.msra.mxu0 %v9004
    %9776 = vmatpush.bf16.msra.mxu0 %v9003
    %9777 = vmatpush.bf16.msra.mxu0 %v9002
    %9778 = vmatmul.bf16.gmra.mxu0 %v7370
    %v9779 = vpop.f32.mrf.mxu0
    %v9780 = vadd.f32 %v7296, %v9779
    %v9781 = vpop.f32.mrf.mxu0
    %9782 = vdwg.mxu0
    %9783 = vmatpush.bf16.msra.mxu0 %v9017
    %9784 = vmatpush.bf16.msra.mxu0 %v9016
    %9785 = vmatpush.bf16.msra.mxu0 %v9015
    %9786 = vmatpush.bf16.msra.mxu0 %v9014
    %9787 = vmatpush.bf16.msra.mxu0 %v9013
    %9788 = vmatpush.bf16.msra.mxu0 %v9012
    %9789 = vmatpush.bf16.msra.mxu0 %v9011
    %9790 = vmatpush.bf16.msra.mxu0 %v9010
    %9791 = vmatmul.bf16.gmra.mxu0 %v7371
    %v9792 = vpop.f32.mrf.mxu0
    %v9793 = vadd.f32 %v9780, %v9792
    %v9794 = vpop.f32.mrf.mxu0
    %9795 = vdwg.mxu0
    %9796 = vmatpush.bf16.msra.mxu0 %v9025
    %9797 = vmatpush.bf16.msra.mxu0 %v9024
    %9798 = vmatpush.bf16.msra.mxu0 %v9023
    %9799 = vmatpush.bf16.msra.mxu0 %v9022
    %9800 = vmatpush.bf16.msra.mxu0 %v9021
    %9801 = vmatpush.bf16.msra.mxu0 %v9020
    %9802 = vmatpush.bf16.msra.mxu0 %v9019
    %9803 = vmatpush.bf16.msra.mxu0 %v9018
    %9804 = vmatmul.bf16.gmra.mxu0 %v7372
    %v9805 = vpop.f32.mrf.mxu0
    %v9806 = vadd.f32 %v9793, %v9805
    %v9807 = vpop.f32.mrf.mxu0
    %9808 = vdwg.mxu0
    %9809 = vmatpush.bf16.msra.mxu0 %v9033
    %9810 = vmatpush.bf16.msra.mxu0 %v9032
    %9811 = vmatpush.bf16.msra.mxu0 %v9031
    %9812 = vmatpush.bf16.msra.mxu0 %v9030
    %9813 = vmatpush.bf16.msra.mxu0 %v9029
    %9814 = vmatpush.bf16.msra.mxu0 %v9028
    %9815 = vmatpush.bf16.msra.mxu0 %v9027
    %9816 = vmatpush.bf16.msra.mxu0 %v9026
    %9817 = vmatmul.bf16.gmra.mxu0 %v7373
    %v9818 = vpop.f32.mrf.mxu0
    %v9819 = vadd.f32 %v9806, %v9818
    %v9820 = vpop.f32.mrf.mxu0
    %9821 = vdwg.mxu0
    %9822 = vmatpush.bf16.msra.mxu0 %v9041
    %9823 = vmatpush.bf16.msra.mxu0 %v9040
    %9824 = vmatpush.bf16.msra.mxu0 %v9039
    %9825 = vmatpush.bf16.msra.mxu0 %v9038
    %9826 = vmatpush.bf16.msra.mxu0 %v9037
    %9827 = vmatpush.bf16.msra.mxu0 %v9036
    %9828 = vmatpush.bf16.msra.mxu0 %v9035
    %9829 = vmatpush.bf16.msra.mxu0 %v9034
    %9830 = vmatmul.bf16.gmra.mxu0 %v7374
    %v9831 = vpop.f32.mrf.mxu0
    %v9832 = vadd.f32 %v9819, %v9831
    %v9833 = vpop.f32.mrf.mxu0
    %9834 = vdwg.mxu0
    %9835 = vmatpush.bf16.msra.mxu0 %v9049
    %9836 = vmatpush.bf16.msra.mxu0 %v9048
    %9837 = vmatpush.bf16.msra.mxu0 %v9047
    %9838 = vmatpush.bf16.msra.mxu0 %v9046
    %9839 = vmatpush.bf16.msra.mxu0 %v9045
    %9840 = vmatpush.bf16.msra.mxu0 %v9044
    %9841 = vmatpush.bf16.msra.mxu0 %v9043
    %9842 = vmatpush.bf16.msra.mxu0 %v9042
    %9843 = vmatmul.bf16.gmra.mxu0 %v7375
    %v9844 = vpop.f32.mrf.mxu0
    %v9845 = vadd.f32 %v9832, %v9844
    %v9846 = vpop.f32.mrf.mxu0
    %9847 = vdwg.mxu0
    %9848 = vmatpush.bf16.msra.mxu0 %v9057
    %9849 = vmatpush.bf16.msra.mxu0 %v9056
    %9850 = vmatpush.bf16.msra.mxu0 %v9055
    %9851 = vmatpush.bf16.msra.mxu0 %v9054
    %9852 = vmatpush.bf16.msra.mxu0 %v9053
    %9853 = vmatpush.bf16.msra.mxu0 %v9052
    %9854 = vmatpush.bf16.msra.mxu0 %v9051
    %9855 = vmatpush.bf16.msra.mxu0 %v9050
    %9856 = vmatmul.bf16.gmra.mxu0 %v7376
    %v9857 = vpop.f32.mrf.mxu0
    %v9858 = vadd.f32 %v9845, %v9857
    %v9859 = vpop.f32.mrf.mxu0
    %9860 = vdwg.mxu0
    %9861 = vmatpush.bf16.msra.mxu0 %v9065
    %9862 = vmatpush.bf16.msra.mxu0 %v9064
    %9863 = vmatpush.bf16.msra.mxu0 %v9063
    %9864 = vmatpush.bf16.msra.mxu0 %v9062
    %9865 = vmatpush.bf16.msra.mxu0 %v9061
    %9866 = vmatpush.bf16.msra.mxu0 %v9060
    %9867 = vmatpush.bf16.msra.mxu0 %v9059
    %9868 = vmatpush.bf16.msra.mxu0 %v9058
    %9869 = vmatmul.bf16.gmra.mxu0 %v7377
    %v9870 = vpop.f32.mrf.mxu0
    %v9871 = vadd.f32 %v9858, %v9870
    %v9872 = vpop.f32.mrf.mxu0
    %9873 = vdwg.mxu0
    %9874 = vmatpush.bf16.msra.mxu0 %v9073
    %9875 = vmatpush.bf16.msra.mxu0 %v9072
    %9876 = vmatpush.bf16.msra.mxu0 %v9071
    %9877 = vmatpush.bf16.msra.mxu0 %v9070
    %9878 = vmatpush.bf16.msra.mxu0 %v9069
    %9879 = vmatpush.bf16.msra.mxu0 %v9068
    %9880 = vmatpush.bf16.msra.mxu0 %v9067
    %9881 = vmatpush.bf16.msra.mxu0 %v9066
    %9882 = vmatmul.bf16.gmra.mxu0 %v7378
    %v9883 = vpop.f32.mrf.mxu0
    %v9884 = vadd.f32 %v9871, %v9883
    %v9885 = vpop.f32.mrf.mxu0
    %9886 = vdwg.mxu0
    %9887 = vmatpush.bf16.msra.mxu0 %v9081
    %9888 = vmatpush.bf16.msra.mxu0 %v9080
    %9889 = vmatpush.bf16.msra.mxu0 %v9079
    %9890 = vmatpush.bf16.msra.mxu0 %v9078
    %9891 = vmatpush.bf16.msra.mxu0 %v9077
    %9892 = vmatpush.bf16.msra.mxu0 %v9076
    %9893 = vmatpush.bf16.msra.mxu0 %v9075
    %9894 = vmatpush.bf16.msra.mxu0 %v9074
    %9895 = vmatmul.bf16.gmra.mxu0 %v7379
    %v9896 = vpop.f32.mrf.mxu0
    %v9897 = vadd.f32 %v9884, %v9896
    %v9898 = vpop.f32.mrf.mxu0
    %9899 = vdwg.mxu0
    %9900 = vmatpush.bf16.msra.mxu0 %v9089
    %9901 = vmatpush.bf16.msra.mxu0 %v9088
    %9902 = vmatpush.bf16.msra.mxu0 %v9087
    %9903 = vmatpush.bf16.msra.mxu0 %v9086
    %9904 = vmatpush.bf16.msra.mxu0 %v9085
    %9905 = vmatpush.bf16.msra.mxu0 %v9084
    %9906 = vmatpush.bf16.msra.mxu0 %v9083
    %9907 = vmatpush.bf16.msra.mxu0 %v9082
    %9908 = vmatmul.bf16.gmra.mxu0 %v7380
    %v9909 = vpop.f32.mrf.mxu0
    %v9910 = vadd.f32 %v9897, %v9909
    %v9911 = vpop.f32.mrf.mxu0
    %9912 = vdwg.mxu0
    %9913 = vmatpush.bf16.msra.mxu0 %v9097
    %9914 = vmatpush.bf16.msra.mxu0 %v9096
    %9915 = vmatpush.bf16.msra.mxu0 %v9095
    %9916 = vmatpush.bf16.msra.mxu0 %v9094
    %9917 = vmatpush.bf16.msra.mxu0 %v9093
    %9918 = vmatpush.bf16.msra.mxu0 %v9092
    %9919 = vmatpush.bf16.msra.mxu0 %v9091
    %9920 = vmatpush.bf16.msra.mxu0 %v9090
    %9921 = vmatmul.bf16.gmra.mxu0 %v7381
    %v9922 = vpop.f32.mrf.mxu0
    %v9923 = vadd.f32 %v9910, %v9922
    %v9924 = vpop.f32.mrf.mxu0
    %9925 = vdwg.mxu0
    %9926 = vmatpush.bf16.msra.mxu0 %v9105
    %9927 = vmatpush.bf16.msra.mxu0 %v9104
    %9928 = vmatpush.bf16.msra.mxu0 %v9103
    %9929 = vmatpush.bf16.msra.mxu0 %v9102
    %9930 = vmatpush.bf16.msra.mxu0 %v9101
    %9931 = vmatpush.bf16.msra.mxu0 %v9100
    %9932 = vmatpush.bf16.msra.mxu0 %v9099
    %9933 = vmatpush.bf16.msra.mxu0 %v9098
    %9934 = vmatmul.bf16.gmra.mxu0 %v7382
    %v9935 = vpop.f32.mrf.mxu0
    %v9936 = vadd.f32 %v9923, %v9935
    %v9937 = vpop.f32.mrf.mxu0
    %9938 = vdwg.mxu0
    %9939 = vmatpush.bf16.msra.mxu0 %v9113
    %9940 = vmatpush.bf16.msra.mxu0 %v9112
    %9941 = vmatpush.bf16.msra.mxu0 %v9111
    %9942 = vmatpush.bf16.msra.mxu0 %v9110
    %9943 = vmatpush.bf16.msra.mxu0 %v9109
    %9944 = vmatpush.bf16.msra.mxu0 %v9108
    %9945 = vmatpush.bf16.msra.mxu0 %v9107
    %9946 = vmatpush.bf16.msra.mxu0 %v9106
    %9947 = vmatmul.bf16.gmra.mxu0 %v7383
    %v9948 = vpop.f32.mrf.mxu0
    %v9949 = vadd.f32 %v9936, %v9948
    %v9950 = vpop.f32.mrf.mxu0
    %9951 = vdwg.mxu0
    %9952 = vmatpush.bf16.msra.mxu0 %v9121
    %9953 = vmatpush.bf16.msra.mxu0 %v9120
    %9954 = vmatpush.bf16.msra.mxu0 %v9119
    %9955 = vmatpush.bf16.msra.mxu0 %v9118
    %9956 = vmatpush.bf16.msra.mxu0 %v9117
    %9957 = vmatpush.bf16.msra.mxu0 %v9116
    %9958 = vmatpush.bf16.msra.mxu0 %v9115
    %9959 = vmatpush.bf16.msra.mxu0 %v9114
    %9960 = vmatmul.bf16.gmra.mxu0 %v7384
    %v9961 = vpop.f32.mrf.mxu0
    %v9962 = vadd.f32 %v9949, %v9961
    %v9963 = vpop.f32.mrf.mxu0
    %9964 = vdwg.mxu0
    %9965 = vmatpush.bf16.msra.mxu0 %v9129
    %9966 = vmatpush.bf16.msra.mxu0 %v9128
    %9967 = vmatpush.bf16.msra.mxu0 %v9127
    %9968 = vmatpush.bf16.msra.mxu0 %v9126
    %9969 = vmatpush.bf16.msra.mxu0 %v9125
    %9970 = vmatpush.bf16.msra.mxu0 %v9124
    %9971 = vmatpush.bf16.msra.mxu0 %v9123
    %9972 = vmatpush.bf16.msra.mxu0 %v9122
    %9973 = vmatmul.bf16.gmra.mxu0 %v7385
    %v9974 = vpop.f32.mrf.mxu0
    %v9975 = vadd.f32 %v9962, %v9974
    %v9976 = vpop.f32.mrf.mxu0
    %9977 = vdwg.mxu0
    %9978 = vmatpush.bf16.msra.mxu0 %v9137
    %9979 = vmatpush.bf16.msra.mxu0 %v9136
    %9980 = vmatpush.bf16.msra.mxu0 %v9135
    %9981 = vmatpush.bf16.msra.mxu0 %v9134
    %9982 = vmatpush.bf16.msra.mxu0 %v9133
    %9983 = vmatpush.bf16.msra.mxu0 %v9132
    %9984 = vmatpush.bf16.msra.mxu0 %v9131
    %9985 = vmatpush.bf16.msra.mxu0 %v9130
    %9986 = vmatmul.bf16.gmra.mxu0 %v7386
    %v9987 = vpop.f32.mrf.mxu0
    %v9988 = vadd.f32 %v9975, %v9987
    %v9989 = vpop.f32.mrf.mxu0
    %9990 = vdwg.mxu0
    %9991 = vmatpush.bf16.msra.mxu0 %v9145
    %9992 = vmatpush.bf16.msra.mxu0 %v9144
    %9993 = vmatpush.bf16.msra.mxu0 %v9143
    %9994 = vmatpush.bf16.msra.mxu0 %v9142
    %9995 = vmatpush.bf16.msra.mxu0 %v9141
    %9996 = vmatpush.bf16.msra.mxu0 %v9140
    %9997 = vmatpush.bf16.msra.mxu0 %v9139
    %9998 = vmatpush.bf16.msra.mxu0 %v9138
    %9999 = vmatmul.bf16.gmra.mxu0 %v7387
    %v10000 = vpop.f32.mrf.mxu0
    %v10001 = vadd.f32 %v9988, %v10000
    %v10002 = vpop.f32.mrf.mxu0
    %10003 = vdwg.mxu0
    %10004 = vmatpush.bf16.msra.mxu0 %v9153
    %10005 = vmatpush.bf16.msra.mxu0 %v9152
    %10006 = vmatpush.bf16.msra.mxu0 %v9151
    %10007 = vmatpush.bf16.msra.mxu0 %v9150
    %10008 = vmatpush.bf16.msra.mxu0 %v9149
    %10009 = vmatpush.bf16.msra.mxu0 %v9148
    %10010 = vmatpush.bf16.msra.mxu0 %v9147
    %10011 = vmatpush.bf16.msra.mxu0 %v9146
    %10012 = vmatmul.bf16.gmra.mxu0 %v7388
    %v10013 = vpop.f32.mrf.mxu0
    %v10014 = vadd.f32 %v10001, %v10013
    %v10015 = vpop.f32.mrf.mxu0
    %10016 = vdwg.mxu0
    %10017 = vmatpush.bf16.msra.mxu0 %v9161
    %10018 = vmatpush.bf16.msra.mxu0 %v9160
    %10019 = vmatpush.bf16.msra.mxu0 %v9159
    %10020 = vmatpush.bf16.msra.mxu0 %v9158
    %10021 = vmatpush.bf16.msra.mxu0 %v9157
    %10022 = vmatpush.bf16.msra.mxu0 %v9156
    %10023 = vmatpush.bf16.msra.mxu0 %v9155
    %10024 = vmatpush.bf16.msra.mxu0 %v9154
    %10025 = vmatmul.bf16.gmra.mxu0 %v7389
    %v10026 = vpop.f32.mrf.mxu0
    %v10027 = vadd.f32 %v10014, %v10026
    %v10028 = vpop.f32.mrf.mxu0
    %10029 = vdwg.mxu0
    %10030 = vmatpush.bf16.msra.mxu0 %v9169
    %10031 = vmatpush.bf16.msra.mxu0 %v9168
    %10032 = vmatpush.bf16.msra.mxu0 %v9167
    %10033 = vmatpush.bf16.msra.mxu0 %v9166
    %10034 = vmatpush.bf16.msra.mxu0 %v9165
    %10035 = vmatpush.bf16.msra.mxu0 %v9164
    %10036 = vmatpush.bf16.msra.mxu0 %v9163
    %10037 = vmatpush.bf16.msra.mxu0 %v9162
    %10038 = vmatmul.bf16.gmra.mxu0 %v7390
    %v10039 = vpop.f32.mrf.mxu0
    %v10040 = vadd.f32 %v10027, %v10039
    %v10041 = vpop.f32.mrf.mxu0
    %10042 = vdwg.mxu0
    %10043 = vmatpush.bf16.msra.mxu0 %v9177
    %10044 = vmatpush.bf16.msra.mxu0 %v9176
    %10045 = vmatpush.bf16.msra.mxu0 %v9175
    %10046 = vmatpush.bf16.msra.mxu0 %v9174
    %10047 = vmatpush.bf16.msra.mxu0 %v9173
    %10048 = vmatpush.bf16.msra.mxu0 %v9172
    %10049 = vmatpush.bf16.msra.mxu0 %v9171
    %10050 = vmatpush.bf16.msra.mxu0 %v9170
    %10051 = vmatmul.bf16.gmra.mxu0 %v7391
    %v10052 = vpop.f32.mrf.mxu0
    %v10053 = vadd.f32 %v10040, %v10052
    %v10054 = vpop.f32.mrf.mxu0
    %10055 = vdwg.mxu0
    %10056 = vmatpush.bf16.msra.mxu0 %v9185
    %10057 = vmatpush.bf16.msra.mxu0 %v9184
    %10058 = vmatpush.bf16.msra.mxu0 %v9183
    %10059 = vmatpush.bf16.msra.mxu0 %v9182
    %10060 = vmatpush.bf16.msra.mxu0 %v9181
    %10061 = vmatpush.bf16.msra.mxu0 %v9180
    %10062 = vmatpush.bf16.msra.mxu0 %v9179
    %10063 = vmatpush.bf16.msra.mxu0 %v9178
    %10064 = vmatmul.bf16.gmra.mxu0 %v7392
    %v10065 = vpop.f32.mrf.mxu0
    %v10066 = vadd.f32 %v10053, %v10065
    %v10067 = vpop.f32.mrf.mxu0
    %10068 = vdwg.mxu0
    %10069 = vmatpush.bf16.msra.mxu0 %v9193
    %10070 = vmatpush.bf16.msra.mxu0 %v9192
    %10071 = vmatpush.bf16.msra.mxu0 %v9191
    %10072 = vmatpush.bf16.msra.mxu0 %v9190
    %10073 = vmatpush.bf16.msra.mxu0 %v9189
    %10074 = vmatpush.bf16.msra.mxu0 %v9188
    %10075 = vmatpush.bf16.msra.mxu0 %v9187
    %10076 = vmatpush.bf16.msra.mxu0 %v9186
    %10077 = vmatmul.bf16.gmra.mxu0 %v7393
    %v10078 = vpop.f32.mrf.mxu0
    %v10079 = vadd.f32 %v10066, %v10078
    %v10080 = vpop.f32.mrf.mxu0
    %10081 = vdwg.mxu0
    %10082 = vmatpush.bf16.msra.mxu0 %v9201
    %10083 = vmatpush.bf16.msra.mxu0 %v9200
    %10084 = vmatpush.bf16.msra.mxu0 %v9199
    %10085 = vmatpush.bf16.msra.mxu0 %v9198
    %10086 = vmatpush.bf16.msra.mxu0 %v9197
    %10087 = vmatpush.bf16.msra.mxu0 %v9196
    %10088 = vmatpush.bf16.msra.mxu0 %v9195
    %10089 = vmatpush.bf16.msra.mxu0 %v9194
    %10090 = vmatmul.bf16.gmra.mxu0 %v7394
    %v10091 = vpop.f32.mrf.mxu0
    %v10092 = vadd.f32 %v10079, %v10091
    %v10093 = vpop.f32.mrf.mxu0
    %10094 = vdwg.mxu0
    %10095 = vmatpush.bf16.msra.mxu0 %v9209
    %10096 = vmatpush.bf16.msra.mxu0 %v9208
    %10097 = vmatpush.bf16.msra.mxu0 %v9207
    %10098 = vmatpush.bf16.msra.mxu0 %v9206
    %10099 = vmatpush.bf16.msra.mxu0 %v9205
    %10100 = vmatpush.bf16.msra.mxu0 %v9204
    %10101 = vmatpush.bf16.msra.mxu0 %v9203
    %10102 = vmatpush.bf16.msra.mxu0 %v9202
    %10103 = vmatmul.bf16.gmra.mxu0 %v7395
    %v10104 = vpop.f32.mrf.mxu0
    %v10105 = vadd.f32 %v10092, %v10104
    %v10106 = vpop.f32.mrf.mxu0
    %10107 = vdwg.mxu0
    %10108 = vmatpush.bf16.msra.mxu0 %v9217
    %10109 = vmatpush.bf16.msra.mxu0 %v9216
    %10110 = vmatpush.bf16.msra.mxu0 %v9215
    %10111 = vmatpush.bf16.msra.mxu0 %v9214
    %10112 = vmatpush.bf16.msra.mxu0 %v9213
    %10113 = vmatpush.bf16.msra.mxu0 %v9212
    %10114 = vmatpush.bf16.msra.mxu0 %v9211
    %10115 = vmatpush.bf16.msra.mxu0 %v9210
    %10116 = vmatmul.bf16.gmra.mxu0 %v7396
    %v10117 = vpop.f32.mrf.mxu0
    %v10118 = vadd.f32 %v10105, %v10117
    %v10119 = vpop.f32.mrf.mxu0
    %10120 = vdwg.mxu0
    %10121 = vmatpush.bf16.msra.mxu0 %v9225
    %10122 = vmatpush.bf16.msra.mxu0 %v9224
    %10123 = vmatpush.bf16.msra.mxu0 %v9223
    %10124 = vmatpush.bf16.msra.mxu0 %v9222
    %10125 = vmatpush.bf16.msra.mxu0 %v9221
    %10126 = vmatpush.bf16.msra.mxu0 %v9220
    %10127 = vmatpush.bf16.msra.mxu0 %v9219
    %10128 = vmatpush.bf16.msra.mxu0 %v9218
    %10129 = vmatmul.bf16.gmra.mxu0 %v7397
    %v10130 = vpop.f32.mrf.mxu0
    %v10131 = vadd.f32 %v10118, %v10130
    %v10132 = vpop.f32.mrf.mxu0
    %10133 = vdwg.mxu0
    %10134 = vmatpush.bf16.msra.mxu0 %v9233
    %10135 = vmatpush.bf16.msra.mxu0 %v9232
    %10136 = vmatpush.bf16.msra.mxu0 %v9231
    %10137 = vmatpush.bf16.msra.mxu0 %v9230
    %10138 = vmatpush.bf16.msra.mxu0 %v9229
    %10139 = vmatpush.bf16.msra.mxu0 %v9228
    %10140 = vmatpush.bf16.msra.mxu0 %v9227
    %10141 = vmatpush.bf16.msra.mxu0 %v9226
    %10142 = vmatmul.bf16.gmra.mxu0 %v7398
    %v10143 = vpop.f32.mrf.mxu0
    %v10144 = vadd.f32 %v10131, %v10143
    %v10145 = vpop.f32.mrf.mxu0
    %10146 = vdwg.mxu0
    %10147 = vmatpush.bf16.msra.mxu0 %v9241
    %10148 = vmatpush.bf16.msra.mxu0 %v9240
    %10149 = vmatpush.bf16.msra.mxu0 %v9239
    %10150 = vmatpush.bf16.msra.mxu0 %v9238
    %10151 = vmatpush.bf16.msra.mxu0 %v9237
    %10152 = vmatpush.bf16.msra.mxu0 %v9236
    %10153 = vmatpush.bf16.msra.mxu0 %v9235
    %10154 = vmatpush.bf16.msra.mxu0 %v9234
    %10155 = vmatmul.bf16.gmra.mxu0 %v7399
    %v10156 = vpop.f32.mrf.mxu0
    %v10157 = vadd.f32 %v10144, %v10156
    %v10158 = vpop.f32.mrf.mxu0
    %10159 = vdwg.mxu0
    %10160 = vmatpush.bf16.msra.mxu0 %v9249
    %10161 = vmatpush.bf16.msra.mxu0 %v9248
    %10162 = vmatpush.bf16.msra.mxu0 %v9247
    %10163 = vmatpush.bf16.msra.mxu0 %v9246
    %10164 = vmatpush.bf16.msra.mxu0 %v9245
    %10165 = vmatpush.bf16.msra.mxu0 %v9244
    %10166 = vmatpush.bf16.msra.mxu0 %v9243
    %10167 = vmatpush.bf16.msra.mxu0 %v9242
    %10168 = vmatmul.bf16.gmra.mxu0 %v7400
    %v10169 = vpop.f32.mrf.mxu0
    %v10170 = vadd.f32 %v10157, %v10169
    %v10171 = vpop.f32.mrf.mxu0
    %10172 = vdwg.mxu0
    %10173 = vmatpush.bf16.msra.mxu0 %v9257
    %10174 = vmatpush.bf16.msra.mxu0 %v9256
    %10175 = vmatpush.bf16.msra.mxu0 %v9255
    %10176 = vmatpush.bf16.msra.mxu0 %v9254
    %10177 = vmatpush.bf16.msra.mxu0 %v9253
    %10178 = vmatpush.bf16.msra.mxu0 %v9252
    %10179 = vmatpush.bf16.msra.mxu0 %v9251
    %10180 = vmatpush.bf16.msra.mxu0 %v9250
    %10181 = vmatmul.bf16.gmra.mxu0 %v7401
    %v10182 = vpop.f32.mrf.mxu0
    %v10183 = vadd.f32 %v10170, %v10182
    %v10184 = vpop.f32.mrf.mxu0
    %10185 = vdwg.mxu0
    %10186 = vmatpush.bf16.msra.mxu0 %v9265
    %10187 = vmatpush.bf16.msra.mxu0 %v9264
    %10188 = vmatpush.bf16.msra.mxu0 %v9263
    %10189 = vmatpush.bf16.msra.mxu0 %v9262
    %10190 = vmatpush.bf16.msra.mxu0 %v9261
    %10191 = vmatpush.bf16.msra.mxu0 %v9260
    %10192 = vmatpush.bf16.msra.mxu0 %v9259
    %10193 = vmatpush.bf16.msra.mxu0 %v9258
    %10194 = vmatmul.bf16.gmra.mxu0 %v7402
    %v10195 = vpop.f32.mrf.mxu0
    %v10196 = vadd.f32 %v10183, %v10195
    %v10197 = vpop.f32.mrf.mxu0
    %10198 = vdwg.mxu0
    %10199 = vmatpush.bf16.msra.mxu0 %v9273
    %10200 = vmatpush.bf16.msra.mxu0 %v9272
    %10201 = vmatpush.bf16.msra.mxu0 %v9271
    %10202 = vmatpush.bf16.msra.mxu0 %v9270
    %10203 = vmatpush.bf16.msra.mxu0 %v9269
    %10204 = vmatpush.bf16.msra.mxu0 %v9268
    %10205 = vmatpush.bf16.msra.mxu0 %v9267
    %10206 = vmatpush.bf16.msra.mxu0 %v9266
    %10207 = vmatmul.bf16.gmra.mxu0 %v7403
    %v10208 = vpop.f32.mrf.mxu0
    %v10209 = vadd.f32 %v10196, %v10208
    %v10210 = vpop.f32.mrf.mxu0
    %10211 = vdwg.mxu0
    %10212 = vmatpush.bf16.msra.mxu0 %v9281
    %10213 = vmatpush.bf16.msra.mxu0 %v9280
    %10214 = vmatpush.bf16.msra.mxu0 %v9279
    %10215 = vmatpush.bf16.msra.mxu0 %v9278
    %10216 = vmatpush.bf16.msra.mxu0 %v9277
    %10217 = vmatpush.bf16.msra.mxu0 %v9276
    %10218 = vmatpush.bf16.msra.mxu0 %v9275
    %10219 = vmatpush.bf16.msra.mxu0 %v9274
    %10220 = vmatmul.bf16.gmra.mxu0 %v7404
    %v10221 = vpop.f32.mrf.mxu0
    %v10222 = vadd.f32 %v10209, %v10221
    %v10223 = vpop.f32.mrf.mxu0
    %10224 = vdwg.mxu0
    %10225 = vmatpush.bf16.msra.mxu0 %v9289
    %10226 = vmatpush.bf16.msra.mxu0 %v9288
    %10227 = vmatpush.bf16.msra.mxu0 %v9287
    %10228 = vmatpush.bf16.msra.mxu0 %v9286
    %10229 = vmatpush.bf16.msra.mxu0 %v9285
    %10230 = vmatpush.bf16.msra.mxu0 %v9284
    %10231 = vmatpush.bf16.msra.mxu0 %v9283
    %10232 = vmatpush.bf16.msra.mxu0 %v9282
    %10233 = vmatmul.bf16.gmra.mxu0 %v7405
    %v10234 = vpop.f32.mrf.mxu0
    %v10235 = vadd.f32 %v10222, %v10234
    %v10236 = vpop.f32.mrf.mxu0
    %10237 = vdwg.mxu0
    %10238 = vmatpush.bf16.msra.mxu0 %v9297
    %10239 = vmatpush.bf16.msra.mxu0 %v9296
    %10240 = vmatpush.bf16.msra.mxu0 %v9295
    %10241 = vmatpush.bf16.msra.mxu0 %v9294
    %10242 = vmatpush.bf16.msra.mxu0 %v9293
    %10243 = vmatpush.bf16.msra.mxu0 %v9292
    %10244 = vmatpush.bf16.msra.mxu0 %v9291
    %10245 = vmatpush.bf16.msra.mxu0 %v9290
    %10246 = vmatmul.bf16.gmra.mxu0 %v7406
    %v10247 = vpop.f32.mrf.mxu0
    %v10248 = vadd.f32 %v10235, %v10247
    %v10249 = vpop.f32.mrf.mxu0
    %10250 = vdwg.mxu0
    %10251 = vmatpush.bf16.msra.mxu0 %v9305
    %10252 = vmatpush.bf16.msra.mxu0 %v9304
    %10253 = vmatpush.bf16.msra.mxu0 %v9303
    %10254 = vmatpush.bf16.msra.mxu0 %v9302
    %10255 = vmatpush.bf16.msra.mxu0 %v9301
    %10256 = vmatpush.bf16.msra.mxu0 %v9300
    %10257 = vmatpush.bf16.msra.mxu0 %v9299
    %10258 = vmatpush.bf16.msra.mxu0 %v9298
    %10259 = vmatmul.bf16.gmra.mxu0 %v7407
    %v10260 = vpop.f32.mrf.mxu0
    %v10261 = vadd.f32 %v10248, %v10260
    %v10262 = vpop.f32.mrf.mxu0
    %10263 = vdwg.mxu0
    %10264 = vmatpush.bf16.msra.mxu0 %v9313
    %10265 = vmatpush.bf16.msra.mxu0 %v9312
    %10266 = vmatpush.bf16.msra.mxu0 %v9311
    %10267 = vmatpush.bf16.msra.mxu0 %v9310
    %10268 = vmatpush.bf16.msra.mxu0 %v9309
    %10269 = vmatpush.bf16.msra.mxu0 %v9308
    %10270 = vmatpush.bf16.msra.mxu0 %v9307
    %10271 = vmatpush.bf16.msra.mxu0 %v9306
    %10272 = vmatmul.bf16.gmra.mxu0 %v7408
    %v10273 = vpop.f32.mrf.mxu0
    %v10274 = vadd.f32 %v10261, %v10273
    %v10275 = vpop.f32.mrf.mxu0
    %10276 = vdwg.mxu0
    %10277 = vmatpush.bf16.msra.mxu0 %v9321
    %10278 = vmatpush.bf16.msra.mxu0 %v9320
    %10279 = vmatpush.bf16.msra.mxu0 %v9319
    %10280 = vmatpush.bf16.msra.mxu0 %v9318
    %10281 = vmatpush.bf16.msra.mxu0 %v9317
    %10282 = vmatpush.bf16.msra.mxu0 %v9316
    %10283 = vmatpush.bf16.msra.mxu0 %v9315
    %10284 = vmatpush.bf16.msra.mxu0 %v9314
    %10285 = vmatmul.bf16.gmra.mxu0 %v7409
    %v10286 = vpop.f32.mrf.mxu0
    %v10287 = vadd.f32 %v10274, %v10286
    %v10288 = vpop.f32.mrf.mxu0
    %10289 = vdwg.mxu0
    %10290 = vmatpush.bf16.msra.mxu0 %v9329
    %10291 = vmatpush.bf16.msra.mxu0 %v9328
    %10292 = vmatpush.bf16.msra.mxu0 %v9327
    %10293 = vmatpush.bf16.msra.mxu0 %v9326
    %10294 = vmatpush.bf16.msra.mxu0 %v9325
    %10295 = vmatpush.bf16.msra.mxu0 %v9324
    %10296 = vmatpush.bf16.msra.mxu0 %v9323
    %10297 = vmatpush.bf16.msra.mxu0 %v9322
    %10298 = vmatmul.bf16.gmra.mxu0 %v7410
    %v10299 = vpop.f32.mrf.mxu0
    %v10300 = vadd.f32 %v10287, %v10299
    %v10301 = vpop.f32.mrf.mxu0
    %10302 = vdwg.mxu0
    %10303 = vmatpush.bf16.msra.mxu0 %v9337
    %10304 = vmatpush.bf16.msra.mxu0 %v9336
    %10305 = vmatpush.bf16.msra.mxu0 %v9335
    %10306 = vmatpush.bf16.msra.mxu0 %v9334
    %10307 = vmatpush.bf16.msra.mxu0 %v9333
    %10308 = vmatpush.bf16.msra.mxu0 %v9332
    %10309 = vmatpush.bf16.msra.mxu0 %v9331
    %10310 = vmatpush.bf16.msra.mxu0 %v9330
    %10311 = vmatmul.bf16.gmra.mxu0 %v7411
    %v10312 = vpop.f32.mrf.mxu0
    %v10313 = vadd.f32 %v10300, %v10312
    %v10314 = vpop.f32.mrf.mxu0
    %10315 = vdwg.mxu0
    %10316 = vmatpush.bf16.msra.mxu0 %v9345
    %10317 = vmatpush.bf16.msra.mxu0 %v9344
    %10318 = vmatpush.bf16.msra.mxu0 %v9343
    %10319 = vmatpush.bf16.msra.mxu0 %v9342
    %10320 = vmatpush.bf16.msra.mxu0 %v9341
    %10321 = vmatpush.bf16.msra.mxu0 %v9340
    %10322 = vmatpush.bf16.msra.mxu0 %v9339
    %10323 = vmatpush.bf16.msra.mxu0 %v9338
    %10324 = vmatmul.bf16.gmra.mxu0 %v7412
    %v10325 = vpop.f32.mrf.mxu0
    %v10326 = vadd.f32 %v10313, %v10325
    %v10327 = vpop.f32.mrf.mxu0
    %10328 = vdwg.mxu0
    %10329 = vmatpush.bf16.msra.mxu0 %v9353
    %10330 = vmatpush.bf16.msra.mxu0 %v9352
    %10331 = vmatpush.bf16.msra.mxu0 %v9351
    %10332 = vmatpush.bf16.msra.mxu0 %v9350
    %10333 = vmatpush.bf16.msra.mxu0 %v9349
    %10334 = vmatpush.bf16.msra.mxu0 %v9348
    %10335 = vmatpush.bf16.msra.mxu0 %v9347
    %10336 = vmatpush.bf16.msra.mxu0 %v9346
    %10337 = vmatmul.bf16.gmra.mxu0 %v7413
    %v10338 = vpop.f32.mrf.mxu0
    %v10339 = vadd.f32 %v10326, %v10338
    %v10340 = vpop.f32.mrf.mxu0
    %10341 = vdwg.mxu0
    %10342 = vmatpush.bf16.msra.mxu0 %v9361
    %10343 = vmatpush.bf16.msra.mxu0 %v9360
    %10344 = vmatpush.bf16.msra.mxu0 %v9359
    %10345 = vmatpush.bf16.msra.mxu0 %v9358
    %10346 = vmatpush.bf16.msra.mxu0 %v9357
    %10347 = vmatpush.bf16.msra.mxu0 %v9356
    %10348 = vmatpush.bf16.msra.mxu0 %v9355
    %10349 = vmatpush.bf16.msra.mxu0 %v9354
    %10350 = vmatmul.bf16.gmra.mxu0 %v7414
    %v10351 = vpop.f32.mrf.mxu0
    %v10352 = vadd.f32 %v10339, %v10351
    %v10353 = vpop.f32.mrf.mxu0
    %10354 = vdwg.mxu0
    %10355 = vmatpush.bf16.msra.mxu0 %v9369
    %10356 = vmatpush.bf16.msra.mxu0 %v9368
    %10357 = vmatpush.bf16.msra.mxu0 %v9367
    %10358 = vmatpush.bf16.msra.mxu0 %v9366
    %10359 = vmatpush.bf16.msra.mxu0 %v9365
    %10360 = vmatpush.bf16.msra.mxu0 %v9364
    %10361 = vmatpush.bf16.msra.mxu0 %v9363
    %10362 = vmatpush.bf16.msra.mxu0 %v9362
    %10363 = vmatmul.bf16.gmra.mxu0 %v7415
    %v10364 = vpop.f32.mrf.mxu0
    %v10365 = vadd.f32 %v10352, %v10364
    %v10366 = vpop.f32.mrf.mxu0
    %10367 = vdwg.mxu0
    %10368 = vmatpush.bf16.msra.mxu0 %v9377
    %10369 = vmatpush.bf16.msra.mxu0 %v9376
    %10370 = vmatpush.bf16.msra.mxu0 %v9375
    %10371 = vmatpush.bf16.msra.mxu0 %v9374
    %10372 = vmatpush.bf16.msra.mxu0 %v9373
    %10373 = vmatpush.bf16.msra.mxu0 %v9372
    %10374 = vmatpush.bf16.msra.mxu0 %v9371
    %10375 = vmatpush.bf16.msra.mxu0 %v9370
    %10376 = vmatmul.bf16.gmra.mxu0 %v7416
    %v10377 = vpop.f32.mrf.mxu0
    %v10378 = vadd.f32 %v10365, %v10377
    %v10379 = vpop.f32.mrf.mxu0
    %10380 = vdwg.mxu0
    %10381 = vmatpush.bf16.msra.mxu0 %v9385
    %10382 = vmatpush.bf16.msra.mxu0 %v9384
    %10383 = vmatpush.bf16.msra.mxu0 %v9383
    %10384 = vmatpush.bf16.msra.mxu0 %v9382
    %10385 = vmatpush.bf16.msra.mxu0 %v9381
    %10386 = vmatpush.bf16.msra.mxu0 %v9380
    %10387 = vmatpush.bf16.msra.mxu0 %v9379
    %10388 = vmatpush.bf16.msra.mxu0 %v9378
    %10389 = vmatmul.bf16.gmra.mxu0 %v7417
    %v10390 = vpop.f32.mrf.mxu0
    %v10391 = vadd.f32 %v10378, %v10390
    %v10392 = vpop.f32.mrf.mxu0
    %10393 = vdwg.mxu0
    %v10394 = vpack.c.bf16 %v10391, %v10391
    %v10395 = vld [vmem:[%s7] sm:$0xf]
    %v10396 = vld [vmem:[%s7 + $0x4] sm:$0xf]
    %v10397 = vld [vmem:[%s7 + $0x8] sm:$0xf]
    %v10398 = vld [vmem:[%s7 + $0xc] sm:$0xf]
    %v10399 = vld [vmem:[%s7 + $0x10] sm:$0xf]
    %v10400 = vld [vmem:[%s7 + $0x14] sm:$0xf]
    %v10401 = vld [vmem:[%s7 + $0x18] sm:$0xf]
    %v10402 = vld [vmem:[%s7 + $0x1c] sm:$0xf]
    %v10403 = vld [vmem:[%s7 + $0x20] sm:$0xf]
    %v10404 = vld [vmem:[%s7 + $0x24] sm:$0xf]
    %v10405 = vld [vmem:[%s7 + $0x28] sm:$0xf]
    %v10406 = vld [vmem:[%s7 + $0x2c] sm:$0xf]
    %v10407 = vld [vmem:[%s7 + $0x30] sm:$0xf]
    %v10408 = vld [vmem:[%s7 + $0x34] sm:$0xf]
    %v10409 = vld [vmem:[%s7 + $0x38] sm:$0xf]
    %v10410 = vld [vmem:[%s7 + $0x3c] sm:$0xf]
    %v10411 = vld [vmem:[%s8] sm:$0x1]
    %v10413 = vperm.slane %v10411, 0
    %v10431 = vunpack.c.l.b16 %v10395
    %v10432 = vunpack.c.l.b16 %v10396
    %v10433 = vunpack.c.l.b16 %v10397
    %v10434 = vunpack.c.l.b16 %v10398
    %v10435 = vunpack.c.l.b16 %v10399
    %v10436 = vunpack.c.l.b16 %v10400
    %v10437 = vunpack.c.l.b16 %v10401
    %v10438 = vunpack.c.l.b16 %v10402
    %v10439 = vunpack.c.l.b16 %v10403
    %v10440 = vunpack.c.l.b16 %v10404
    %v10441 = vunpack.c.l.b16 %v10405
    %v10442 = vunpack.c.l.b16 %v10406
    %v10443 = vunpack.c.l.b16 %v10407
    %v10444 = vunpack.c.l.b16 %v10408
    %v10445 = vunpack.c.l.b16 %v10409
    %v10446 = vunpack.c.l.b16 %v10410
    %v10447 = vpack.c.b16 %v10432, %v10431
    %v10448 = vpack.c.b16 %v10434, %v10433
    %v10449 = vpack.c.b16 %v10436, %v10435
    %v10450 = vpack.c.b16 %v10438, %v10437
    %v10451 = vpack.c.b16 %v10440, %v10439
    %v10452 = vpack.c.b16 %v10442, %v10441
    %v10453 = vpack.c.b16 %v10444, %v10443
    %v10454 = vpack.c.b16 %v10446, %v10445
    %10463 = vmatpush.bf16.msra.mxu0 %v10454
    %10464 = vmatpush.bf16.msra.mxu0 %v10453
    %10465 = vmatpush.bf16.msra.mxu0 %v10452
    %10466 = vmatpush.bf16.msra.mxu0 %v10451
    %10467 = vmatpush.bf16.msra.mxu0 %v10450
    %10468 = vmatpush.bf16.msra.mxu0 %v10449
    %10469 = vmatpush.bf16.msra.mxu0 %v10448
    %10470 = vmatpush.bf16.msra.mxu0 %v10447
    %10471 = vmatmul.bf16.gmra.mxu0 %v10394
    %v10472 = vpop.f32.mrf.mxu0
    %v10473 = vadd.f32 %v10413, %v10472
    %v10474 = vpop.f32.mrf.mxu0
    %10475 = vdwg.mxu0
    %v10476 = vxor.u32 %v10473, 2147483648
    %v10477 = vmul.f32 %v10476, 1.442695
    %v10478 = vpow.pop %v10477
    %v10479 = vadd.f32 %v10478, 1.0
    %v10480 = vrcp.pop %v10479
    %v10481 = vmul.f32 %v10479, %v10480
    %v10482 = vsub.f32 1.0, %v10481
    %v10483 = vmul.f32 %v10480, %v10482
    %v10484 = vadd.f32 %v10480, %v10483
    %vm10485 = vweird.f32 %v10479
    %vm10486 = vweird.f32 %v10480
    %vm10487 = vmor %vm10485, %vm10486
    %v10488 = vsel %vm10487, %v10480, %v10484
    %v10489 = vand.u32 2147483647, %v10479
    %vm10490 = vcmp.eq.f32.partialorder %v10489, 8.507059e+37
    %v10491 = vand.u32 %v10479, 2147483648
    %v10492 = vor.u32 1.1754944e-38, %v10491
    %v10493 = vsel %vm10490, %v10492, %v10488
    %v10494 = vmul.f32 1.0, %v10493
    %10495 = vst [vmem:[#allocation3] sm:$0xff] %v10494
    // Predicated region
    $region38: #{tc_cnn_forward.1} parent=1 // pred_check
      _
    $region39: #{tc_cnn_forward.1} parent=1 // pred_check_branch
      %10497 = sbr.rel (0) target = $region41
    $region40: #{tc_cnn_forward.1} parent=1 // pred_region
      %10499 = vsyncadd [#allocation4], 0
      %s10501 = sshll.u32 [#allocation3], 4
      %s10502 = int_to_ptr.vmem [resolvable:$true] %s10501
      %s10503 = sshll.u32 %s9, 4
      %s10504 = int_to_ptr.hbm [resolvable:$true] %s10503
      %10506 = dma.vmem_to_hbm [thread:$0]  %s10502, 128, %s10504, [#allocation4]
    $region41: #{tc_cnn_forward.1} parent=1 // pred_fallthru
      _
    // Predicated region
    $region42: #{tc_cnn_forward.1} parent=1 // pred_check
      _
    $region43: #{tc_cnn_forward.1} parent=1 // pred_check_branch
      %10508 = sbr.rel (0) target = $region45
    $region44: #{tc_cnn_forward.1} parent=1 // pred_region
      %10510 = dma.done [#allocation4], 128
    $region45: #{tc_cnn_forward.1} parent=1 // pred_fallthru
      _
    %10511 = vsyncpa [#allocation4], 1

</llo_original>
